<compile_context>
chip_gen: v6e
topology: v6e:2x2x1
jax: 0.10.0
libtpu: 0.0.40
codegen_flags: <defaults>
</compile_context>

<pallas_src>
import functools
import numpy as np

import jax
import jax.numpy as jnp
from jax import lax
from jax.experimental import pallas as pl
from jax.experimental import pallas as _pl_unused  # noqa: F401
from jax.experimental.pallas import tpu as pltpu   # noqa: F401  (not required at toy shapes)


# ----------------------------------------------------------------------------
# Config (small, synthetic)
# ----------------------------------------------------------------------------
CFG = dict(
    input_dim=20,          # freq features
    encoder_dim=32,
    num_layers=2,
    num_heads=4,
    ff_expansion=4,
    conv_expansion=2,      # pointwise conv expansion (GLU halves it back)
    conv_kernel_size=7,    # depthwise conv kernel (odd)
    num_classes=10,
    blank_id=0,
)

_EPS = 1e-5


# ----------------------------------------------------------------------------
# Small helpers
# ----------------------------------------------------------------------------
def _full_spec(a):
    """BlockSpec that maps the whole array as a single VMEM block."""
    nd = a.ndim
    return pl.BlockSpec(a.shape, lambda i, _nd=nd: (0,) * _nd)


def _ln(x, g, b, eps):
    mean = jnp.mean(x, axis=-1, keepdims=True)
    var = jnp.mean((x - mean) ** 2, axis=-1, keepdims=True)
    return (x - mean) * lax.rsqrt(var + eps) * g + b


def _swish(y):
    return y * (1.0 / (1.0 + jnp.exp(-y)))


# ----------------------------------------------------------------------------
# Pallas kernels
# ----------------------------------------------------------------------------
def _dense_kernel(x_ref, w_ref, b_ref, o_ref, *, activation):
    y = jnp.dot(x_ref[...], w_ref[...], preferred_element_type=jnp.float32)
    y = y + b_ref[...]
    if activation == "relu":
        y = jnp.maximum(y, 0.0)
    o_ref[...] = y


def dense(x, w, b, activation=None):
    """y = act(x @ w + b); x: (..., K), w: (K, N), b: (N,)."""
    orig = x.shape
    K = orig[-1]
    M = int(np.prod(orig[:-1]))
    N = w.shape[1]
    args = [x.reshape(M, K), w, b.reshape(1, N)]
    out = pl.pallas_call(
        functools.partial(_dense_kernel, activation=activation),
        out_shape=jax.ShapeDtypeStruct((M, N), jnp.float32),
        grid=(1,),
        in_specs=[_full_spec(a) for a in args],
        out_specs=pl.BlockSpec((M, N), lambda i: (0, 0)),
    )(*args)
    return out.reshape(orig[:-1] + (N,))


def _encoder_kernel(
    x_ref, pw_ref, pb_ref, pos_ref,
    # ff1 (stacked over layers)
    f1g_ref, f1b_ref, f1w1_ref, f1b1_ref, f1w2_ref, f1b2_ref,
    # mhsa (stacked over layers)
    ag_ref, ab_ref, wqkv_ref, bqkv_ref, wp_ref, au_ref, av_ref, wo_ref, bo_ref,
    # conv (stacked over layers)
    cg_ref, cb_ref, cw1_ref, cb1_ref, cwd_ref, cbng_ref, cbnb_ref, cw2_ref, cb2_ref,
    # ff2 (stacked over layers)
    f2g_ref, f2b_ref, f2w1_ref, f2b1_ref, f2w2_ref, f2b2_ref,
    # final block LayerNorm (stacked over layers)
    blg_ref, blb_ref,
    # structural constants
    r_ref, rt_ref, rtp_ref, rT_ref, s_ref, hsum_ref, hexp_ref, sh_ref,
    # classifier
    fc_ref,
    # outputs
    enc_ref, logits_ref, logp_ref,
    *, num_layers, D, K, scale, eps):
    """Fused Conformer encoder (+ classifier).

    Input projection, then per layer:
      FF half-step -> relative MHSA -> conv module -> FF half-step -> LayerNorm,
    then the bias-less classifier Linear + log-softmax.

    The relative attention works in a "flattened score" layout of shape
    (B*T*T, H): precomputed 0/1 operators R / Rt / RtP expand rows, Hsum
    reduces the dh lanes of each head, S applies the exact openspeech
    relative shift, and R^T performs the per-(batch,row) softmax sum and the
    attn@V contraction.  Depthwise conv is K banded shift-matrix matmuls.
    Everything is MXU matmuls + elementwise VPU/EUP ops: no reshapes,
    transposes, gathers or per-head loops inside the kernel.
    """
    f32 = jnp.float32

    # --- input projection (dropout = identity) ---
    x = jnp.dot(x_ref[...], pw_ref[...], preferred_element_type=f32) + pb_ref[...]

    pos_all = pos_ref[...]
    R = r_ref[...]          # (MF, M)  flat row -> query row
    Rt = rt_ref[...]        # (MF, M)  flat row -> key/value row
    RtP = rtp_ref[...]      # (MF, T)  flat row -> positional row
    RT = rT_ref[...]        # (M, MF)  per-(b,i) reduction over j
    S = s_ref[...]          # (MF, MF) relative shift
    Hsum = hsum_ref[...]    # (D, H)   sum lanes of each head
    Hexp = hexp_ref[...]    # (H, D)   broadcast head value over its lanes

    def ffn(h, g, b, w1, b1, w2, b2):
        y = _ln(h, g, b, eps)
        y = jnp.dot(y, w1, preferred_element_type=f32) + b1
        y = _swish(y)
        y = jnp.dot(y, w2, preferred_element_type=f32) + b2
        return y

    for l in range(num_layers):
        # ---------------- feed-forward half-step residual ----------------
        x = x + 0.5 * ffn(x, f1g_ref[l], f1b_ref[l], f1w1_ref[l], f1b1_ref[l],
                          f1w2_ref[l], f1b2_ref[l])

        # ---------------- relative multi-head self-attention --------------
        xn = _ln(x, ag_ref[l], ab_ref[l], eps)
        qkv = jnp.dot(xn, wqkv_ref[l], preferred_element_type=f32) + bqkv_ref[l]
        q = qkv[:, :D]
        k = qkv[:, D:2 * D]
        v = qkv[:, 2 * D:]
        pe = jnp.dot(pos_all, wp_ref[l], preferred_element_type=f32)     # no bias

        qu_e = jnp.dot(R, q + au_ref[l], preferred_element_type=f32)     # (MF, D)
        qv_e = jnp.dot(R, q + av_ref[l], preferred_element_type=f32)     # (MF, D)
        k_e = jnp.dot(Rt, k, preferred_element_type=f32)                 # (MF, D)
        v_e = jnp.dot(Rt, v, preferred_element_type=f32)                 # (MF, D)
        pe_e = jnp.dot(RtP, pe, preferred_element_type=f32)              # (MF, D)

        content = jnp.dot(qu_e * k_e, Hsum, preferred_element_type=f32)  # (MF, H)
        pos_raw = jnp.dot(qv_e * pe_e, Hsum, preferred_element_type=f32)
        pos_shift = jnp.dot(S, pos_raw, preferred_element_type=f32)

        score = (content + pos_shift) * scale
        # Global max is a per-softmax-row constant -> mathematically identical
        # stabilization, avoids a segmented max.
        gmax = jnp.max(jnp.max(score, axis=-1, keepdims=True),
                       axis=0, keepdims=True)
        e = jnp.exp(score - gmax)
        row_sum = jnp.dot(RT, e, preferred_element_type=f32)             # (M, H)
        denom = jnp.dot(R, row_sum, preferred_element_type=f32)          # (MF, H)
        attn = e * pl.reciprocal(denom, approx=False)                    # softmax

        w_ctx = jnp.dot(attn, Hexp, preferred_element_type=f32) * v_e    # (MF, D)
        ctx = jnp.dot(RT, w_ctx, preferred_element_type=f32)             # (M, D)
        x = x + jnp.dot(ctx, wo_ref[l], preferred_element_type=f32) + bo_ref[l]

        # ---------------- convolution module ------------------------------
        h = _ln(x, cg_ref[l], cb_ref[l], eps)
        h = jnp.dot(h, cw1_ref[l], preferred_element_type=f32) + cb1_ref[l]  # (M, 2D)
        a = h[:, :D]
        g = h[:, D:]
        h = a * (1.0 / (1.0 + jnp.exp(-g)))                                  # GLU

        wdw = cwd_ref[l]                                                     # (K, D)
        acc = jnp.zeros_like(h)
        for kk in range(K):
            acc = acc + jnp.dot(sh_ref[kk], h,
                                preferred_element_type=f32) * wdw[kk:kk + 1, :]

        # BatchNorm1d (training batch statistics over B*T rows) + Swish.
        mean = jnp.mean(acc, axis=0, keepdims=True)
        var = jnp.mean((acc - mean) ** 2, axis=0, keepdims=True)
        y = (acc - mean) * lax.rsqrt(var + eps) * cbng_ref[l] + cbnb_ref[l]
        y = _swish(y)
        y = jnp.dot(y, cw2_ref[l], preferred_element_type=f32) + cb2_ref[l]
        x = x + y

        # ---------------- feed-forward half-step + block LayerNorm --------
        x = x + 0.5 * ffn(x, f2g_ref[l], f2b_ref[l], f2w1_ref[l], f2b1_ref[l],
                          f2w2_ref[l], f2b2_ref[l])
        x = _ln(x, blg_ref[l], blb_ref[l], eps)

    enc_ref[...] = x

    # --------------- classifier: bias-less Linear + log-softmax -----------
    logits = jnp.dot(x, fc_ref[...], preferred_element_type=f32)
    logits_ref[...] = logits
    m = jnp.max(logits, axis=-1, keepdims=True)
    s = jnp.sum(jnp.exp(logits - m), axis=-1, keepdims=True)
    logp_ref[...] = (logits - m) - jnp.log(s)


def encoder_and_classifier(h2_flat, params, pos_emb, consts, conv_sh, cfg, B, T):
    """Single fused pallas_call over the whole encoder stack + classifier."""
    D = cfg['encoder_dim']
    K = cfg['conv_kernel_size']
    C = cfg['num_classes']
    L = cfg['num_layers']
    M = B * T
    layers = params['layers']

    def stack(fn):
        return jnp.stack([fn(lp) for lp in layers], axis=0)

    args = [
        h2_flat,
        params['proj']['w'], params['proj']['b'].reshape(1, D),
        pos_emb,
        # ff1
        stack(lambda lp: lp['ff1']['ln_g'].reshape(1, D)),
        stack(lambda lp: lp['ff1']['ln_b'].reshape(1, D)),
        stack(lambda lp: lp['ff1']['w1']),
        stack(lambda lp: lp['ff1']['b1'].reshape(1, -1)),
        stack(lambda lp: lp['ff1']['w2']),
        stack(lambda lp: lp['ff1']['b2'].reshape(1, D)),
        # mhsa
        stack(lambda lp: lp['mhsa']['ln_g'].reshape(1, D)),
        stack(lambda lp: lp['mhsa']['ln_b'].reshape(1, D)),
        stack(lambda lp: jnp.concatenate(
            [lp['mhsa']['wq'], lp['mhsa']['wk'], lp['mhsa']['wv']], axis=1)),
        stack(lambda lp: jnp.concatenate(
            [lp['mhsa']['bq'], lp['mhsa']['bk'], lp['mhsa']['bv']],
            axis=0).reshape(1, 3 * D)),
        stack(lambda lp: lp['mhsa']['wp']),
        stack(lambda lp: lp['mhsa']['u_bias'].reshape(1, D)),
        stack(lambda lp: lp['mhsa']['v_bias'].reshape(1, D)),
        stack(lambda lp: lp['mhsa']['wo']),
        stack(lambda lp: lp['mhsa']['bo'].reshape(1, D)),
        # conv
        stack(lambda lp: lp['conv']['ln_g'].reshape(1, D)),
        stack(lambda lp: lp['conv']['ln_b'].reshape(1, D)),
        stack(lambda lp: lp['conv']['w_pw1']),
        stack(lambda lp: lp['conv']['b_pw1'].reshape(1, -1)),
        stack(lambda lp: lp['conv']['w_dw']),
        stack(lambda lp: lp['conv']['bn_g'].reshape(1, D)),
        stack(lambda lp: lp['conv']['bn_b'].reshape(1, D)),
        stack(lambda lp: lp['conv']['w_pw2']),
        stack(lambda lp: lp['conv']['b_pw2'].reshape(1, D)),
        # ff2
        stack(lambda lp: lp['ff2']['ln_g'].reshape(1, D)),
        stack(lambda lp: lp['ff2']['ln_b'].reshape(1, D)),
        stack(lambda lp: lp['ff2']['w1']),
        stack(lambda lp: lp['ff2']['b1'].reshape(1, -1)),
        stack(lambda lp: lp['ff2']['w2']),
        stack(lambda lp: lp['ff2']['b2'].reshape(1, D)),
        # final block LN
        stack(lambda lp: lp['ln_g'].reshape(1, D)),
        stack(lambda lp: lp['ln_b'].reshape(1, D)),
        # structural constants
        consts['R'], consts['Rt'], consts['RtP'], consts['RT'], consts['S'],
        consts['Hsum'], consts['Hexp'], conv_sh,
        # classifier
        params['fc_w'],
    ]

    enc, logits, logp = pl.pallas_call(
        functools.partial(_encoder_kernel, num_layers=L, D=D, K=K,
                          scale=1.0 / float(np.sqrt(D)), eps=_EPS),
        out_shape=(jax.ShapeDtypeStruct((M, D), jnp.float32),
                   jax.ShapeDtypeStruct((M, C), jnp.float32),
                   jax.ShapeDtypeStruct((M, C), jnp.float32)),
        grid=(1,),
        in_specs=[_full_spec(a) for a in args],
        out_specs=[pl.BlockSpec((M, D), lambda i: (0, 0)),
                   pl.BlockSpec((M, C), lambda i: (0, 0)),
                   pl.BlockSpec((M, C), lambda i: (0, 0))],
    )(*args)
    return (enc.reshape(B, T, D),
            logits.reshape(B, T, C),
            logp.reshape(B, T, C))


# ----------------------------------------------------------------------------
# Precomputed structural operators (trace-time numpy -> constants)
# ----------------------------------------------------------------------------
def make_mhsa_constants(B, T, H, dh):
    """0/1 matrices so that relative MHSA is pure matmul + elementwise.

    Flat layout index r = b*T*T + i*T + j  (query position i, key/pos index j).
    S encodes the exact openspeech _relative_shift:
        out[i, j] = pos[i, j-i+T-1]   if j <= i
                  = 0                 if j == i+1
                  = pos[i+1, j-i-2]   if j >= i+2
    """
    D = H * dh
    F = T * T
    MF = B * F
    M = B * T
    R = np.zeros((MF, M), np.float32)
    Rt = np.zeros((MF, M), np.float32)
    RtP = np.zeros((MF, T), np.float32)
    S = np.zeros((MF, MF), np.float32)
    for b in range(B):
        for i in range(T):
            for j in range(T):
                r = b * F + i * T + j
                R[r, b * T + i] = 1.0
                Rt[r, b * T + j] = 1.0
                RtP[r, j] = 1.0
                if j <= i:
                    S[r, b * F + i * T + (j - i + T - 1)] = 1.0
                elif j >= i + 2:
                    S[r, b * F + (i + 1) * T + (j - i - 2)] = 1.0
    Hsum = np.zeros((D, H), np.float32)
    Hexp = np.zeros((H, D), np.float32)
    for h in range(H):
        Hsum[h * dh:(h + 1) * dh, h] = 1.0
        Hexp[h, h * dh:(h + 1) * dh] = 1.0
    return dict(R=jnp.asarray(R), Rt=jnp.asarray(Rt), RtP=jnp.asarray(RtP),
                RT=jnp.asarray(R.T.copy()), S=jnp.asarray(S),
                Hsum=jnp.asarray(Hsum), Hexp=jnp.asarray(Hexp))


def make_dwconv_shift(B, T, K):
    """(K, M, M) banded shift matrices with zero-padding / batch-boundary
    masking baked in: out = sum_k (SH[k] @ x) * w[k]."""
    M = B * T
    pad = (K - 1) // 2
    SH = np.zeros((K, M, M), np.float32)
    for k in range(K):
        s = k - pad
        for m in range(M):
            n = m + s
            if 0 <= n < M and (m // T) == (n // T):
                SH[k, m, n] = 1.0
    return jnp.asarray(SH)


# ----------------------------------------------------------------------------
# Glue helpers (plain JAX, outside kernels)
# ----------------------------------------------------------------------------
def extract_patches(x, k=3, s=2):
    """x: (B, C, H, W) -> (B, Ho, Wo, C*k*k) patches (ci, kh, kw order)."""
    B, C, H, W = x.shape
    Ho = (H - k) // s + 1
    Wo = (W - k) // s + 1
    cols = []
    for ci in range(C):
        for kh in range(k):
            for kw in range(k):
                cols.append(x[:, ci, kh:kh + s * (Ho - 1) + 1:s,
                              kw:kw + s * (Wo - 1) + 1:s])
    return jnp.stack(cols, axis=-1)


def sinusoidal_pos(length, d_model):
    position = jnp.arange(length, dtype=jnp.float32)[:, None]
    div_term = jnp.exp(jnp.arange(0, d_model, 2, dtype=jnp.float32)
                       * -(np.log(10000.0) / d_model))
    pe = jnp.zeros((length, d_model), jnp.float32)
    pe = pe.at[:, 0::2].set(jnp.sin(position * div_term))
    pe = pe.at[:, 1::2].set(jnp.cos(position * div_term))
    return pe


# ----------------------------------------------------------------------------
# CTC loss (plain JAX DP on top of the Pallas log-softmax)
# ----------------------------------------------------------------------------
def ctc_loss(log_probs, input_lengths, targets, target_lengths, blank=0):
    B, T, C = log_probs.shape
    L = targets.shape[1]
    S = 2 * L + 1
    NEG = jnp.float32(-1e30)

    def lse3(a, b, c):
        m = jnp.maximum(jnp.maximum(a, b), c)
        return m + jnp.log(jnp.exp(a - m) + jnp.exp(b - m) + jnp.exp(c - m))

    def single(lp, il, tgt, tl):
        ext = jnp.full((S,), blank, dtype=jnp.int32).at[1::2].set(tgt)
        em = lp[:, ext]                                   # (T, S)
        prev2 = jnp.concatenate([jnp.array([blank, blank], jnp.int32), ext[:-2]])
        can_skip = (ext != blank) & (ext != prev2)

        alpha = jnp.full((S,), NEG)
        alpha = alpha.at[0].set(em[0, 0])
        alpha = alpha.at[1].set(jnp.where(tl > 0, em[0, 1], NEG))

        def step(t, alpha):
            a1 = jnp.concatenate([jnp.array([NEG]), alpha[:-1]])
            a2 = jnp.concatenate([jnp.array([NEG, NEG]), alpha[:-2]])
            a2 = jnp.where(can_skip, a2, NEG)
            new = lse3(alpha, a1, a2) + em[t]
            return jnp.where(t < il, new, alpha)

        alpha = lax.fori_loop(1, T, step, alpha)
        end1 = alpha[2 * tl]
        end2 = jnp.where(tl > 0, alpha[2 * tl - 1], NEG)
        return -jnp.logaddexp(end1, end2)

    losses = jax.vmap(single)(log_probs, input_lengths, targets, target_lengths)
    # torch.nn.CTCLoss(reduction='mean'): divide by target lengths, mean over batch
    losses = losses / jnp.maximum(target_lengths, 1).astype(losses.dtype)
    return jnp.mean(losses)


# ----------------------------------------------------------------------------
# Full ConformerCTC forward
# ----------------------------------------------------------------------------
def conformer_ctc_forward(params, inputs, input_lengths, targets, target_lengths, cfg):
    B, T, F = inputs.shape
    D = cfg['encoder_dim']
    H = cfg['num_heads']
    K = cfg['conv_kernel_size']

    # --- Conv2dSubsampling: 2 x (Conv2d k=3 s=2 + ReLU), im2col + fused matmul ---
    x = inputs[:, None, :, :]                               # (B, 1, T, F)
    p1 = extract_patches(x)                                 # (B, T1, F1, 9)
    _, T1, F1, P1 = p1.shape
    h1 = dense(p1.reshape(B * T1 * F1, P1), params['sub']['w1'],
               params['sub']['b1'], activation="relu")
    h1 = h1.reshape(B, T1, F1, D).transpose(0, 3, 1, 2)     # (B, C, T1, F1)
    p2 = extract_patches(h1)                                # (B, T2, F2, C*9)
    _, T2, F2, P2 = p2.shape
    h2 = dense(p2.reshape(B * T2 * F2, P2), params['sub']['w2'],
               params['sub']['b2'], activation="relu")
    # (B, C, T2, F2).permute(0,2,1,3).view(B, T2, C*F2)
    h2 = h2.reshape(B, T2, F2, D).transpose(0, 1, 3, 2).reshape(B, T2, D * F2)
    output_lengths = (input_lengths >> 2) - 1               # openspeech convention

    # --- single fused encoder (+ classifier) pallas_call ---
    pos_emb = sinusoidal_pos(T2, D)
    attn_consts = make_mhsa_constants(B, T2, H, D // H)
    conv_sh = make_dwconv_shift(B, T2, K)

    encoder_outputs, logits, log_probs = encoder_and_classifier(
        h2.reshape(B * T2, D * F2), params, pos_emb, attn_consts, conv_sh,
        cfg, B, T2)

    loss = ctc_loss(log_probs, output_lengths, targets, target_lengths,
                    blank=cfg['blank_id'])
    return dict(loss=loss, logits=logits, output_lengths=output_lengths,
                encoder_outputs=encoder_outputs)


# ----------------------------------------------------------------------------
# Deterministic parameter initialization
# ----------------------------------------------------------------------------
def init_params(key, cfg):
    D = cfg['encoder_dim']
    H = cfg['num_heads']
    dh = D // H
    F = cfg['input_dim']
    F1 = (F - 1) // 2
    F2 = (F1 - 1) // 2
    ffD = D * cfg['ff_expansion']
    K = cfg['conv_kernel_size']
    C = cfg['num_classes']

    keys = jax.random.split(key, 256)
    ctr = iter(range(256))

    def nrm(shape, scale=0.05):
        return scale * jax.random.normal(keys[next(ctr)], shape, jnp.float32)

    def zeros(shape):
        return jnp.zeros(shape, jnp.float32)

    def ones(shape):
        return jnp.ones(shape, jnp.float32)

    def ff_params():
        return {'ln_g': ones((D,)), 'ln_b': zeros((D,)),
                'w1': nrm((D, ffD)), 'b1': zeros((ffD,)),
                'w2': nrm((ffD, D)), 'b2': zeros((D,))}

    params = {
        'sub': {'w1': nrm((9, D)), 'b1': zeros((D,)),
                'w2': nrm((D * 9, D)), 'b2': zeros((D,))},
        'proj': {'w': nrm((D * F2, D)), 'b': zeros((D,))},
        'layers': [],
        'fc_w': nrm((D, C)),
    }
    for _ in range(cfg['num_layers']):
        params['layers'].append({
            'ff1': ff_params(),
            'mhsa': {'ln_g': ones((D,)), 'ln_b': zeros((D,)),
                     'wq': nrm((D, D)), 'bq': zeros((D,)),
                     'wk': nrm((D, D)), 'bk': zeros((D,)),
                     'wv': nrm((D, D)), 'bv': zeros((D,)),
                     'wp': nrm((D, D)),
                     'u_bias': nrm((H, dh)), 'v_bias': nrm((H, dh)),
                     'wo': nrm((D, D)), 'bo': zeros((D,))},
            'conv': {'ln_g': ones((D,)), 'ln_b': zeros((D,)),
                     'w_pw1': nrm((D, 2 * D)), 'b_pw1': zeros((2 * D,)),
                     'w_dw': nrm((K, D)),
                     'bn_g': ones((D,)), 'bn_b': zeros((D,)),
                     'w_pw2': nrm((D, D)), 'b_pw2': zeros((D,))},
            'ff2': ff_params(),
            'ln_g': ones((D,)), 'ln_b': zeros((D,)),
        })
    return params


# ----------------------------------------------------------------------------
# Main
# ----------------------------------------------------------------------------
if __name__ == "__main__":
    key = jax.random.PRNGKey(0)
    k_param, k_in, k_tgt = jax.random.split(key, 3)

    B, T, F = 2, 32, CFG['input_dim']
    params = init_params(k_param, CFG)
    inputs = jax.random.normal(k_in, (B, T, F), jnp.float32)
    input_lengths = jnp.array([32, 24], jnp.int32)
    targets = jax.random.randint(k_tgt, (B, 5), 1, CFG['num_classes']).astype(jnp.int32)
    target_lengths = jnp.array([5, 3], jnp.int32)

    @jax.jit
    def run(params, inputs, input_lengths, targets, target_lengths):
        return conformer_ctc_forward(params, inputs, input_lengths, targets,
                                     target_lengths, CFG)

    result = run(params, inputs, input_lengths, targets, target_lengths)
    jax.block_until_ready(result['loss'])
    jax.block_until_ready(result['logits'])
    assert result['logits'].shape == (B, 7, CFG['num_classes'])
    assert result['encoder_outputs'].shape == (B, 7, CFG['encoder_dim'])
    assert bool(jnp.isfinite(result['loss']))
    print("KERNEL_OK")
</pallas_src>

<mosaic_0001>
module attributes {stable_mosaic.version = 11 : i64} {
  func.func @_dense_kernel(%arg0: i32, %arg1: memref<270x9xf32, #tpu.memory_space<vmem>>, %arg2: memref<9x32xf32, #tpu.memory_space<vmem>>, %arg3: memref<1x32xf32, #tpu.memory_space<vmem>>, %arg4: memref<270x32xf32, #tpu.memory_space<vmem>>) attributes {dimension_semantics = [#tpu.dimension_semantics<arbitrary>], iteration_bounds = array<i64: 1>, scalar_prefetch = 0 : i64, scratch_operands = 0 : i64, tpu.core_type = #tpu.core_type<tc>, window_params = [{pipeline_mode = #tpu.pipeline_mode<synchronous>, transform_indices = @transform_0, window_bounds = array<i64: 270, 9>}, {pipeline_mode = #tpu.pipeline_mode<synchronous>, transform_indices = @transform_1, window_bounds = array<i64: 9, 32>}, {pipeline_mode = #tpu.pipeline_mode<synchronous>, transform_indices = @transform_2, window_bounds = array<i64: 1, 32>}, {pipeline_mode = #tpu.pipeline_mode<synchronous>, transform_indices = @transform_3, window_bounds = array<i64: 270, 32>}]} {
    %c0 = arith.constant 0 : index
    %c0_0 = arith.constant 0 : index
    %0 = vector.load %arg1[%c0, %c0_0] : memref<270x9xf32, #tpu.memory_space<vmem>>, vector<270x9xf32>
    %c0_1 = arith.constant 0 : index
    %c0_2 = arith.constant 0 : index
    %1 = vector.load %arg2[%c0_1, %c0_2] : memref<9x32xf32, #tpu.memory_space<vmem>>, vector<9x32xf32>
    %cst = arith.constant dense<0.000000e+00> : vector<270x32xf32>
    %2 = tpu.matmul %0, %1, %cst {dimension_numbers = #tpu.dot_dimension_numbers<[1], [0], [0], [1], [0, 0, 1, 1], [], []>} : vector<270x9xf32>, vector<9x32xf32>, vector<270x32xf32> -> vector<270x32xf32>
    %c0_3 = arith.constant 0 : index
    %c0_4 = arith.constant 0 : index
    %3 = vector.load %arg3[%c0_3, %c0_4] : memref<1x32xf32, #tpu.memory_space<vmem>>, vector<1x32xf32>
    %4 = vector.broadcast %3 : vector<1x32xf32> to vector<270x32xf32>
    %5 = arith.addf %2, %4 : vector<270x32xf32>
    %cst_5 = arith.constant 0.000000e+00 : f32
    %6 = vector.broadcast %cst_5 : f32 to vector<270x32xf32>
    %7 = arith.maximumf %5, %6 : vector<270x32xf32>
    %c0_6 = arith.constant 0 : index
    %c0_7 = arith.constant 0 : index
    %8 = vector.load %arg4[%c0_6, %c0_7] : memref<270x32xf32, #tpu.memory_space<vmem>>, vector<270x32xf32>
    tpu.vector_store %arg4[%c0_6, %c0_7], %7 {strides = array<i32>} : memref<270x32xf32, #tpu.memory_space<vmem>>, vector<270x32xf32>,
    return
  }
  func.func @transform_0(%arg0: i32) -> (i32, i32) {
    %c0_i32 = arith.constant 0 : i32
    %c0_i32_0 = arith.constant 0 : i32
    %c0_i32_1 = arith.constant 0 : i32
    return %c0_i32, %c0_i32_0 : i32, i32
  }
  func.func @transform_1(%arg0: i32) -> (i32, i32) {
    %c0_i32 = arith.constant 0 : i32
    %c0_i32_0 = arith.constant 0 : i32
    %c0_i32_1 = arith.constant 0 : i32
    return %c0_i32, %c0_i32_0 : i32, i32
  }
  func.func @transform_2(%arg0: i32) -> (i32, i32) {
    %c0_i32 = arith.constant 0 : i32
    %c0_i32_0 = arith.constant 0 : i32
    %c0_i32_1 = arith.constant 0 : i32
    return %c0_i32, %c0_i32_0 : i32, i32
  }
  func.func @transform_3(%arg0: i32) -> (i32, i32) {
    %c0_i32 = arith.constant 0 : i32
    %c0_i32_0 = arith.constant 0 : i32
    %c0_i32_1 = arith.constant 0 : i32
    return %c0_i32, %c0_i32_0 : i32, i32
  }
}

module attributes {stable_mosaic.version = 11 : i64} {
  func.func @_dense_kernel(%arg0: i32, %arg1: memref<56x288xf32, #tpu.memory_space<vmem>>, %arg2: memref<288x32xf32, #tpu.memory_space<vmem>>, %arg3: memref<1x32xf32, #tpu.memory_space<vmem>>, %arg4: memref<56x32xf32, #tpu.memory_space<vmem>>) attributes {dimension_semantics = [#tpu.dimension_semantics<arbitrary>], iteration_bounds = array<i64: 1>, scalar_prefetch = 0 : i64, scratch_operands = 0 : i64, tpu.core_type = #tpu.core_type<tc>, window_params = [{pipeline_mode = #tpu.pipeline_mode<synchronous>, transform_indices = @transform_0, window_bounds = array<i64: 56, 288>}, {pipeline_mode = #tpu.pipeline_mode<synchronous>, transform_indices = @transform_1, window_bounds = array<i64: 288, 32>}, {pipeline_mode = #tpu.pipeline_mode<synchronous>, transform_indices = @transform_2, window_bounds = array<i64: 1, 32>}, {pipeline_mode = #tpu.pipeline_mode<synchronous>, transform_indices = @transform_3, window_bounds = array<i64: 56, 32>}]} {
    %c0 = arith.constant 0 : index
    %c0_0 = arith.constant 0 : index
    %0 = vector.load %arg1[%c0, %c0_0] : memref<56x288xf32, #tpu.memory_space<vmem>>, vector<56x288xf32>
    %c0_1 = arith.constant 0 : index
    %c0_2 = arith.constant 0 : index
    %1 = vector.load %arg2[%c0_1, %c0_2] : memref<288x32xf32, #tpu.memory_space<vmem>>, vector<288x32xf32>
    %cst = arith.constant dense<0.000000e+00> : vector<56x32xf32>
    %2 = tpu.matmul %0, %1, %cst {dimension_numbers = #tpu.dot_dimension_numbers<[1], [0], [0], [1], [0, 0, 1, 1], [], []>} : vector<56x288xf32>, vector<288x32xf32>, vector<56x32xf32> -> vector<56x32xf32>
    %c0_3 = arith.constant 0 : index
    %c0_4 = arith.constant 0 : index
    %3 = vector.load %arg3[%c0_3, %c0_4] : memref<1x32xf32, #tpu.memory_space<vmem>>, vector<1x32xf32>
    %4 = vector.broadcast %3 : vector<1x32xf32> to vector<56x32xf32>
    %5 = arith.addf %2, %4 : vector<56x32xf32>
    %cst_5 = arith.constant 0.000000e+00 : f32
    %6 = vector.broadcast %cst_5 : f32 to vector<56x32xf32>
    %7 = arith.maximumf %5, %6 : vector<56x32xf32>
    %c0_6 = arith.constant 0 : index
    %c0_7 = arith.constant 0 : index
    %8 = vector.load %arg4[%c0_6, %c0_7] : memref<56x32xf32, #tpu.memory_space<vmem>>, vector<56x32xf32>
    tpu.vector_store %arg4[%c0_6, %c0_7], %7 {strides = array<i32>} : memref<56x32xf32, #tpu.memory_space<vmem>>, vector<56x32xf32>,
    return
  }
  func.func @transform_0(%arg0: i32) -> (i32, i32) {
    %c0_i32 = arith.constant 0 : i32
    %c0_i32_0 = arith.constant 0 : i32
    %c0_i32_1 = arith.constant 0 : i32
    return %c0_i32, %c0_i32_0 : i32, i32
  }
  func.func @transform_1(%arg0: i32) -> (i32, i32) {
    %c0_i32 = arith.constant 0 : i32
    %c0_i32_0 = arith.constant 0 : i32
    %c0_i32_1 = arith.constant 0 : i32
    return %c0_i32, %c0_i32_0 : i32, i32
  }
  func.func @transform_2(%arg0: i32) -> (i32, i32) {
    %c0_i32 = arith.constant 0 : i32
    %c0_i32_0 = arith.constant 0 : i32
    %c0_i32_1 = arith.constant 0 : i32
    return %c0_i32, %c0_i32_0 : i32, i32
  }
  func.func @transform_3(%arg0: i32) -> (i32, i32) {
    %c0_i32 = arith.constant 0 : i32
    %c0_i32_0 = arith.constant 0 : i32
    %c0_i32_1 = arith.constant 0 : i32
    return %c0_i32, %c0_i32_0 : i32, i32
  }
}

module attributes {stable_mosaic.version = 11 : i64} {
  func.func @_encoder_kernel(%arg0: i32, %arg1: memref<14x128xf32, #tpu.memory_space<vmem>>, %arg2: memref<128x32xf32, #tpu.memory_space<vmem>>, %arg3: memref<1x32xf32, #tpu.memory_space<vmem>>, %arg4: memref<7x32xf32, #tpu.memory_space<vmem>>, %arg5: memref<2x1x32xf32, #tpu.memory_space<vmem>>, %arg6: memref<2x1x32xf32, #tpu.memory_space<vmem>>, %arg7: memref<2x32x128xf32, #tpu.memory_space<vmem>>, %arg8: memref<2x1x128xf32, #tpu.memory_space<vmem>>, %arg9: memref<2x128x32xf32, #tpu.memory_space<vmem>>, %arg10: memref<2x1x32xf32, #tpu.memory_space<vmem>>, %arg11: memref<2x1x32xf32, #tpu.memory_space<vmem>>, %arg12: memref<2x1x32xf32, #tpu.memory_space<vmem>>, %arg13: memref<2x32x96xf32, #tpu.memory_space<vmem>>, %arg14: memref<2x1x96xf32, #tpu.memory_space<vmem>>, %arg15: memref<2x32x32xf32, #tpu.memory_space<vmem>>, %arg16: memref<2x1x32xf32, #tpu.memory_space<vmem>>, %arg17: memref<2x1x32xf32, #tpu.memory_space<vmem>>, %arg18: memref<2x32x32xf32, #tpu.memory_space<vmem>>, %arg19: memref<2x1x32xf32, #tpu.memory_space<vmem>>, %arg20: memref<2x1x32xf32, #tpu.memory_space<vmem>>, %arg21: memref<2x1x32xf32, #tpu.memory_space<vmem>>, %arg22: memref<2x32x64xf32, #tpu.memory_space<vmem>>, %arg23: memref<2x1x64xf32, #tpu.memory_space<vmem>>, %arg24: memref<2x7x32xf32, #tpu.memory_space<vmem>>, %arg25: memref<2x1x32xf32, #tpu.memory_space<vmem>>, %arg26: memref<2x1x32xf32, #tpu.memory_space<vmem>>, %arg27: memref<2x32x32xf32, #tpu.memory_space<vmem>>, %arg28: memref<2x1x32xf32, #tpu.memory_space<vmem>>, %arg29: memref<2x1x32xf32, #tpu.memory_space<vmem>>, %arg30: memref<2x1x32xf32, #tpu.memory_space<vmem>>, %arg31: memref<2x32x128xf32, #tpu.memory_space<vmem>>, %arg32: memref<2x1x128xf32, #tpu.memory_space<vmem>>, %arg33: memref<2x128x32xf32, #tpu.memory_space<vmem>>, %arg34: memref<2x1x32xf32, #tpu.memory_space<vmem>>, %arg35: memref<2x1x32xf32, #tpu.memory_space<vmem>>, %arg36: memref<2x1x32xf32, #tpu.memory_space<vmem>>, %arg37: memref<98x14xf32, #tpu.memory_space<vmem>>, %arg38: memref<98x14xf32, #tpu.memory_space<vmem>>, %arg39: memref<98x7xf32, #tpu.memory_space<vmem>>, %arg40: memref<14x98xf32, #tpu.memory_space<vmem>>, %arg41: memref<98x98xf32, #tpu.memory_space<vmem>>, %arg42: memref<32x4xf32, #tpu.memory_space<vmem>>, %arg43: memref<4x32xf32, #tpu.memory_space<vmem>>, %arg44: memref<7x14x14xf32, #tpu.memory_space<vmem>>, %arg45: memref<32x10xf32, #tpu.memory_space<vmem>>, %arg46: memref<14x32xf32, #tpu.memory_space<vmem>>, %arg47: memref<14x10xf32, #tpu.memory_space<vmem>>, %arg48: memref<14x10xf32, #tpu.memory_space<vmem>>) attributes {dimension_semantics = [#tpu.dimension_semantics<arbitrary>], iteration_bounds = array<i64: 1>, scalar_prefetch = 0 : i64, scratch_operands = 0 : i64, tpu.core_type = #tpu.core_type<tc>, window_params = [{pipeline_mode = #tpu.pipeline_mode<synchronous>, transform_indices = @transform_0, window_bounds = array<i64: 14, 128>}, {pipeline_mode = #tpu.pipeline_mode<synchronous>, transform_indices = @transform_1, window_bounds = array<i64: 128, 32>}, {pipeline_mode = #tpu.pipeline_mode<synchronous>, transform_indices = @transform_2, window_bounds = array<i64: 1, 32>}, {pipeline_mode = #tpu.pipeline_mode<synchronous>, transform_indices = @transform_3, window_bounds = array<i64: 7, 32>}, {pipeline_mode = #tpu.pipeline_mode<synchronous>, transform_indices = @transform_4, window_bounds = array<i64: 2, 1, 32>}, {pipeline_mode = #tpu.pipeline_mode<synchronous>, transform_indices = @transform_5, window_bounds = array<i64: 2, 1, 32>}, {pipeline_mode = #tpu.pipeline_mode<synchronous>, transform_indices = @transform_6, window_bounds = array<i64: 2, 32, 128>}, {pipeline_mode = #tpu.pipeline_mode<synchronous>, transform_indices = @transform_7, window_bounds = array<i64: 2, 1, 128>}, {pipeline_mode = #tpu.pipeline_mode<synchronous>, transform_indices = @transform_8, window_bounds = array<i64: 2, 128, 32>}, {pipeline_mode = #tpu.pipeline_mode<synchronous>, transform_indices = @transform_9, window_bounds = array<i64: 2, 1, 32>}, {pipeline_mode = #tpu.pipeline_mode<synchronous>, transform_indices = @transform_10, window_bounds = array<i64: 2, 1, 32>}, {pipeline_mode = #tpu.pipeline_mode<synchronous>, transform_indices = @transform_11, window_bounds = array<i64: 2, 1, 32>}, {pipeline_mode = #tpu.pipeline_mode<synchronous>, transform_indices = @transform_12, window_bounds = array<i64: 2, 32, 96>}, {pipeline_mode = #tpu.pipeline_mode<synchronous>, transform_indices = @transform_13, window_bounds = array<i64: 2, 1, 96>}, {pipeline_mode = #tpu.pipeline_mode<synchronous>, transform_indices = @transform_14, window_bounds = array<i64: 2, 32, 32>}, {pipeline_mode = #tpu.pipeline_mode<synchronous>, transform_indices = @transform_15, window_bounds = array<i64: 2, 1, 32>}, {pipeline_mode = #tpu.pipeline_mode<synchronous>, transform_indices = @transform_16, window_bounds = array<i64: 2, 1, 32>}, {pipeline_mode = #tpu.pipeline_mode<synchronous>, transform_indices = @transform_17, window_bounds = array<i64: 2, 32, 32>}, {pipeline_mode = #tpu.pipeline_mode<synchronous>, transform_indices = @transform_18, window_bounds = array<i64: 2, 1, 32>}, {pipeline_mode = #tpu.pipeline_mode<synchronous>, transform_indices = @transform_19, window_bounds = array<i64: 2, 1, 32>}, {pipeline_mode = #tpu.pipeline_mode<synchronous>, transform_indices = @transform_20, window_bounds = array<i64: 2, 1, 32>}, {pipeline_mode = #tpu.pipeline_mode<synchronous>, transform_indices = @transform_21, window_bounds = array<i64: 2, 32, 64>}, {pipeline_mode = #tpu.pipeline_mode<synchronous>, transform_indices = @transform_22, window_bounds = array<i64: 2, 1, 64>}, {pipeline_mode = #tpu.pipeline_mode<synchronous>, transform_indices = @transform_23, window_bounds = array<i64: 2, 7, 32>}, {pipeline_mode = #tpu.pipeline_mode<synchronous>, transform_indices = @transform_24, window_bounds = array<i64: 2, 1, 32>}, {pipeline_mode = #tpu.pipeline_mode<synchronous>, transform_indices = @transform_25, window_bounds = array<i64: 2, 1, 32>}, {pipeline_mode = #tpu.pipeline_mode<synchronous>, transform_indices = @transform_26, window_bounds = array<i64: 2, 32, 32>}, {pipeline_mode = #tpu.pipeline_mode<synchronous>, transform_indices = @transform_27, window_bounds = array<i64: 2, 1, 32>}, {pipeline_mode = #tpu.pipeline_mode<synchronous>, transform_indices = @transform_28, window_bounds = array<i64: 2, 1, 32>}, {pipeline_mode = #tpu.pipeline_mode<synchronous>, transform_indices = @transform_29, window_bounds = array<i64: 2, 1, 32>}, {pipeline_mode = #tpu.pipeline_mode<synchronous>, transform_indices = @transform_30, window_bounds = array<i64: 2, 32, 128>}, {pipeline_mode = #tpu.pipeline_mode<synchronous>, transform_indices = @transform_31, window_bounds = array<i64: 2, 1, 128>}, {pipeline_mode = #tpu.pipeline_mode<synchronous>, transform_indices = @transform_32, window_bounds = array<i64: 2, 128, 32>}, {pipeline_mode = #tpu.pipeline_mode<synchronous>, transform_indices = @transform_33, window_bounds = array<i64: 2, 1, 32>}, {pipeline_mode = #tpu.pipeline_mode<synchronous>, transform_indices = @transform_34, window_bounds = array<i64: 2, 1, 32>}, {pipeline_mode = #tpu.pipeline_mode<synchronous>, transform_indices = @transform_35, window_bounds = array<i64: 2, 1, 32>}, {pipeline_mode = #tpu.pipeline_mode<synchronous>, transform_indices = @transform_36, window_bounds = array<i64: 98, 14>}, {pipeline_mode = #tpu.pipeline_mode<synchronous>, transform_indices = @transform_37, window_bounds = array<i64: 98, 14>}, {pipeline_mode = #tpu.pipeline_mode<synchronous>, transform_indices = @transform_38, window_bounds = array<i64: 98, 7>}, {pipeline_mode = #tpu.pipeline_mode<synchronous>, transform_indices = @transform_39, window_bounds = array<i64: 14, 98>}, {pipeline_mode = #tpu.pipeline_mode<synchronous>, transform_indices = @transform_40, window_bounds = array<i64: 98, 98>}, {pipeline_mode = #tpu.pipeline_mode<synchronous>, transform_indices = @transform_41, window_bounds = array<i64: 32, 4>}, {pipeline_mode = #tpu.pipeline_mode<synchronous>, transform_indices = @transform_42, window_bounds = array<i64: 4, 32>}, {pipeline_mode = #tpu.pipeline_mode<synchronous>, transform_indices = @transform_43, window_bounds = array<i64: 7, 14, 14>}, {pipeline_mode = #tpu.pipeline_mode<synchronous>, transform_indices = @transform_44, window_bounds = array<i64: 32, 10>}, {pipeline_mode = #tpu.pipeline_mode<synchronous>, transform_indices = @transform_45, window_bounds = array<i64: 14, 32>}, {pipeline_mode = #tpu.pipeline_mode<synchronous>, transform_indices = @transform_46, window_bounds = array<i64: 14, 10>}, {pipeline_mode = #tpu.pipeline_mode<synchronous>, transform_indices = @transform_47, window_bounds = array<i64: 14, 10>}]} {
    %c0 = arith.constant 0 : index
    %c0_0 = arith.constant 0 : index
    %0 = vector.load %arg1[%c0, %c0_0] : memref<14x128xf32, #tpu.memory_space<vmem>>, vector<14x128xf32>
    %c0_1 = arith.constant 0 : index
    %c0_2 = arith.constant 0 : index
    %1 = vector.load %arg2[%c0_1, %c0_2] : memref<128x32xf32, #tpu.memory_space<vmem>>, vector<128x32xf32>
    %cst = arith.constant dense<0.000000e+00> : vector<14x32xf32>
    %2 = tpu.matmul %0, %1, %cst {dimension_numbers = #tpu.dot_dimension_numbers<[1], [0], [0], [1], [0, 0, 1, 1], [], []>} : vector<14x128xf32>, vector<128x32xf32>, vector<14x32xf32> -> vector<14x32xf32>
    %c0_3 = arith.constant 0 : index
    %c0_4 = arith.constant 0 : index
    %3 = vector.load %arg3[%c0_3, %c0_4] : memref<1x32xf32, #tpu.memory_space<vmem>>, vector<1x32xf32>
    %4 = vector.broadcast %3 : vector<1x32xf32> to vector<14x32xf32>
    %5 = arith.addf %2, %4 : vector<14x32xf32>
    %c0_5 = arith.constant 0 : index
    %c0_6 = arith.constant 0 : index
    %6 = vector.load %arg4[%c0_5, %c0_6] : memref<7x32xf32, #tpu.memory_space<vmem>>, vector<7x32xf32>
    %c0_7 = arith.constant 0 : index
    %c0_8 = arith.constant 0 : index
    %7 = vector.load %arg37[%c0_7, %c0_8] : memref<98x14xf32, #tpu.memory_space<vmem>>, vector<98x14xf32>
    %c0_9 = arith.constant 0 : index
    %c0_10 = arith.constant 0 : index
    %8 = vector.load %arg38[%c0_9, %c0_10] : memref<98x14xf32, #tpu.memory_space<vmem>>, vector<98x14xf32>
    %c0_11 = arith.constant 0 : index
    %c0_12 = arith.constant 0 : index
    %9 = vector.load %arg39[%c0_11, %c0_12] : memref<98x7xf32, #tpu.memory_space<vmem>>, vector<98x7xf32>
    %c0_13 = arith.constant 0 : index
    %c0_14 = arith.constant 0 : index
    %10 = vector.load %arg40[%c0_13, %c0_14] : memref<14x98xf32, #tpu.memory_space<vmem>>, vector<14x98xf32>
    %c0_15 = arith.constant 0 : index
    %c0_16 = arith.constant 0 : index
    %11 = vector.load %arg41[%c0_15, %c0_16] : memref<98x98xf32, #tpu.memory_space<vmem>>, vector<98x98xf32>
    %c0_17 = arith.constant 0 : index
    %c0_18 = arith.constant 0 : index
    %12 = vector.load %arg42[%c0_17, %c0_18] : memref<32x4xf32, #tpu.memory_space<vmem>>, vector<32x4xf32>
    %c0_19 = arith.constant 0 : index
    %c0_20 = arith.constant 0 : index
    %13 = vector.load %arg43[%c0_19, %c0_20] : memref<4x32xf32, #tpu.memory_space<vmem>>, vector<4x32xf32>
    %c0_21 = arith.constant 0 : index
    %c0_22 = arith.constant 0 : index
    %c0_23 = arith.constant 0 : index
    %14 = vector.load %arg5[%c0_21, %c0_22, %c0_23] : memref<2x1x32xf32, #tpu.memory_space<vmem>>, vector<1x1x32xf32>
    %15 = vector.shape_cast %14 : vector<1x1x32xf32> to vector<1x32xf32>
    %c0_24 = arith.constant 0 : index
    %c0_25 = arith.constant 0 : index
    %c0_26 = arith.constant 0 : index
    %16 = vector.load %arg6[%c0_24, %c0_25, %c0_26] : memref<2x1x32xf32, #tpu.memory_space<vmem>>, vector<1x1x32xf32>
    %17 = vector.shape_cast %16 : vector<1x1x32xf32> to vector<1x32xf32>
    %c0_27 = arith.constant 0 : index
    %c0_28 = arith.constant 0 : index
    %c0_29 = arith.constant 0 : index
    %18 = vector.load %arg7[%c0_27, %c0_28, %c0_29] : memref<2x32x128xf32, #tpu.memory_space<vmem>>, vector<1x32x128xf32>
    %19 = vector.shape_cast %18 : vector<1x32x128xf32> to vector<32x128xf32>
    %c0_30 = arith.constant 0 : index
    %c0_31 = arith.constant 0 : index
    %c0_32 = arith.constant 0 : index
    %20 = vector.load %arg8[%c0_30, %c0_31, %c0_32] : memref<2x1x128xf32, #tpu.memory_space<vmem>>, vector<1x1x128xf32>
    %21 = vector.shape_cast %20 : vector<1x1x128xf32> to vector<1x128xf32>
    %c0_33 = arith.constant 0 : index
    %c0_34 = arith.constant 0 : index
    %c0_35 = arith.constant 0 : index
    %22 = vector.load %arg9[%c0_33, %c0_34, %c0_35] : memref<2x128x32xf32, #tpu.memory_space<vmem>>, vector<1x128x32xf32>
    %23 = vector.shape_cast %22 : vector<1x128x32xf32> to vector<128x32xf32>
    %c0_36 = arith.constant 0 : index
    %c0_37 = arith.constant 0 : index
    %c0_38 = arith.constant 0 : index
    %24 = vector.load %arg10[%c0_36, %c0_37, %c0_38] : memref<2x1x32xf32, #tpu.memory_space<vmem>>, vector<1x1x32xf32>
    %25 = vector.shape_cast %24 : vector<1x1x32xf32> to vector<1x32xf32>
    %cst_39 = arith.constant dense<0.000000e+00> : vector<14xf32>
    %26 = vector.multi_reduction <add>, %5, %cst_39 [1] : vector<14x32xf32> to vector<14xf32>
    %27 = vector.shape_cast %26 : vector<14xf32> to vector<14x1xf32>
    %cst_40 = arith.constant 3.200000e+01 : f32
    %28 = vector.broadcast %cst_40 : f32 to vector<14x1xf32>
    %29 = arith.divf %27, %28 : vector<14x1xf32>
    %30 = vector.broadcast %29 : vector<14x1xf32> to vector<14x32xf32>
    %31 = arith.subf %5, %30 : vector<14x32xf32>
    %32 = arith.mulf %31, %31 : vector<14x32xf32>
    %cst_41 = arith.constant dense<0.000000e+00> : vector<14xf32>
    %33 = vector.multi_reduction <add>, %32, %cst_41 [1] : vector<14x32xf32> to vector<14xf32>
    %34 = vector.shape_cast %33 : vector<14xf32> to vector<14x1xf32>
    %cst_42 = arith.constant 3.200000e+01 : f32
    %35 = vector.broadcast %cst_42 : f32 to vector<14x1xf32>
    %36 = arith.divf %34, %35 : vector<14x1xf32>
    %37 = vector.broadcast %29 : vector<14x1xf32> to vector<14x32xf32>
    %38 = arith.subf %5, %37 : vector<14x32xf32>
    %cst_43 = arith.constant 9.99999974E-6 : f32
    %39 = vector.broadcast %cst_43 : f32 to vector<14x1xf32>
    %40 = arith.addf %36, %39 : vector<14x1xf32>
    %41 = math.rsqrt %40 : vector<14x1xf32>
    %42 = vector.broadcast %41 : vector<14x1xf32> to vector<14x32xf32>
    %43 = arith.mulf %38, %42 : vector<14x32xf32>
    %44 = vector.broadcast %15 : vector<1x32xf32> to vector<14x32xf32>
    %45 = arith.mulf %43, %44 : vector<14x32xf32>
    %46 = vector.broadcast %17 : vector<1x32xf32> to vector<14x32xf32>
    %47 = arith.addf %45, %46 : vector<14x32xf32>
    %cst_44 = arith.constant dense<0.000000e+00> : vector<14x128xf32>
    %48 = tpu.matmul %47, %19, %cst_44 {dimension_numbers = #tpu.dot_dimension_numbers<[1], [0], [0], [1], [0, 0, 1, 1], [], []>} : vector<14x32xf32>, vector<32x128xf32>, vector<14x128xf32> -> vector<14x128xf32>
    %49 = vector.broadcast %21 : vector<1x128xf32> to vector<14x128xf32>
    %50 = arith.addf %48, %49 : vector<14x128xf32>
    %cst_45 = arith.constant 0.000000e+00 : f32
    %51 = vector.broadcast %cst_45 : f32 to vector<14x128xf32>
    %52 = arith.subf %51, %50 : vector<14x128xf32>
    %53 = math.exp %52 : vector<14x128xf32>
    %cst_46 = arith.constant 1.000000e+00 : f32
    %54 = vector.broadcast %cst_46 : f32 to vector<14x128xf32>
    %55 = arith.addf %54, %53 : vector<14x128xf32>
    %cst_47 = arith.constant 1.000000e+00 : f32
    %56 = vector.broadcast %cst_47 : f32 to vector<14x128xf32>
    %57 = arith.divf %56, %55 : vector<14x128xf32>
    %58 = arith.mulf %50, %57 : vector<14x128xf32>
    %cst_48 = arith.constant dense<0.000000e+00> : vector<14x32xf32>
    %59 = tpu.matmul %58, %23, %cst_48 {dimension_numbers = #tpu.dot_dimension_numbers<[1], [0], [0], [1], [0, 0, 1, 1], [], []>} : vector<14x128xf32>, vector<128x32xf32>, vector<14x32xf32> -> vector<14x32xf32>
    %60 = vector.broadcast %25 : vector<1x32xf32> to vector<14x32xf32>
    %61 = arith.addf %59, %60 : vector<14x32xf32>
    %cst_49 = arith.constant 5.000000e-01 : f32
    %62 = vector.broadcast %cst_49 : f32 to vector<14x32xf32>
    %63 = arith.mulf %62, %61 : vector<14x32xf32>
    %64 = arith.addf %5, %63 : vector<14x32xf32>
    %c0_50 = arith.constant 0 : index
    %c0_51 = arith.constant 0 : index
    %c0_52 = arith.constant 0 : index
    %65 = vector.load %arg11[%c0_50, %c0_51, %c0_52] : memref<2x1x32xf32, #tpu.memory_space<vmem>>, vector<1x1x32xf32>
    %66 = vector.shape_cast %65 : vector<1x1x32xf32> to vector<1x32xf32>
    %c0_53 = arith.constant 0 : index
    %c0_54 = arith.constant 0 : index
    %c0_55 = arith.constant 0 : index
    %67 = vector.load %arg12[%c0_53, %c0_54, %c0_55] : memref<2x1x32xf32, #tpu.memory_space<vmem>>, vector<1x1x32xf32>
    %68 = vector.shape_cast %67 : vector<1x1x32xf32> to vector<1x32xf32>
    %cst_56 = arith.constant dense<0.000000e+00> : vector<14xf32>
    %69 = vector.multi_reduction <add>, %64, %cst_56 [1] : vector<14x32xf32> to vector<14xf32>
    %70 = vector.shape_cast %69 : vector<14xf32> to vector<14x1xf32>
    %cst_57 = arith.constant 3.200000e+01 : f32
    %71 = vector.broadcast %cst_57 : f32 to vector<14x1xf32>
    %72 = arith.divf %70, %71 : vector<14x1xf32>
    %73 = vector.broadcast %72 : vector<14x1xf32> to vector<14x32xf32>
    %74 = arith.subf %64, %73 : vector<14x32xf32>
    %75 = arith.mulf %74, %74 : vector<14x32xf32>
    %cst_58 = arith.constant dense<0.000000e+00> : vector<14xf32>
    %76 = vector.multi_reduction <add>, %75, %cst_58 [1] : vector<14x32xf32> to vector<14xf32>
    %77 = vector.shape_cast %76 : vector<14xf32> to vector<14x1xf32>
    %cst_59 = arith.constant 3.200000e+01 : f32
    %78 = vector.broadcast %cst_59 : f32 to vector<14x1xf32>
    %79 = arith.divf %77, %78 : vector<14x1xf32>
    %80 = vector.broadcast %72 : vector<14x1xf32> to vector<14x32xf32>
    %81 = arith.subf %64, %80 : vector<14x32xf32>
    %cst_60 = arith.constant 9.99999974E-6 : f32
    %82 = vector.broadcast %cst_60 : f32 to vector<14x1xf32>
    %83 = arith.addf %79, %82 : vector<14x1xf32>
    %84 = math.rsqrt %83 : vector<14x1xf32>
    %85 = vector.broadcast %84 : vector<14x1xf32> to vector<14x32xf32>
    %86 = arith.mulf %81, %85 : vector<14x32xf32>
    %87 = vector.broadcast %66 : vector<1x32xf32> to vector<14x32xf32>
    %88 = arith.mulf %86, %87 : vector<14x32xf32>
    %89 = vector.broadcast %68 : vector<1x32xf32> to vector<14x32xf32>
    %90 = arith.addf %88, %89 : vector<14x32xf32>
    %c0_61 = arith.constant 0 : index
    %c0_62 = arith.constant 0 : index
    %c0_63 = arith.constant 0 : index
    %91 = vector.load %arg13[%c0_61, %c0_62, %c0_63] : memref<2x32x96xf32, #tpu.memory_space<vmem>>, vector<1x32x96xf32>
    %92 = vector.shape_cast %91 : vector<1x32x96xf32> to vector<32x96xf32>
    %cst_64 = arith.constant dense<0.000000e+00> : vector<14x96xf32>
    %93 = tpu.matmul %90, %92, %cst_64 {dimension_numbers = #tpu.dot_dimension_numbers<[1], [0], [0], [1], [0, 0, 1, 1], [], []>} : vector<14x32xf32>, vector<32x96xf32>, vector<14x96xf32> -> vector<14x96xf32>
    %c0_65 = arith.constant 0 : index
    %c0_66 = arith.constant 0 : index
    %c0_67 = arith.constant 0 : index
    %94 = vector.load %arg14[%c0_65, %c0_66, %c0_67] : memref<2x1x96xf32, #tpu.memory_space<vmem>>, vector<1x1x96xf32>
    %95 = vector.shape_cast %94 : vector<1x1x96xf32> to vector<1x96xf32>
    %96 = vector.broadcast %95 : vector<1x96xf32> to vector<14x96xf32>
    %97 = arith.addf %93, %96 : vector<14x96xf32>
    %98 = vector.extract_strided_slice %97 {offsets = [0, 0], sizes = [14, 32], strides = [1, 1]} : vector<14x96xf32> to vector<14x32xf32>
    %99 = vector.extract_strided_slice %97 {offsets = [0, 32], sizes = [14, 32], strides = [1, 1]} : vector<14x96xf32> to vector<14x32xf32>
    %100 = vector.extract_strided_slice %97 {offsets = [0, 64], sizes = [14, 32], strides = [1, 1]} : vector<14x96xf32> to vector<14x32xf32>
    %c0_68 = arith.constant 0 : index
    %c0_69 = arith.constant 0 : index
    %c0_70 = arith.constant 0 : index
    %101 = vector.load %arg15[%c0_68, %c0_69, %c0_70] : memref<2x32x32xf32, #tpu.memory_space<vmem>>, vector<1x32x32xf32>
    %102 = vector.shape_cast %101 : vector<1x32x32xf32> to vector<32x32xf32>
    %cst_71 = arith.constant dense<0.000000e+00> : vector<7x32xf32>
    %103 = tpu.matmul %6, %102, %cst_71 {dimension_numbers = #tpu.dot_dimension_numbers<[1], [0], [0], [1], [0, 0, 1, 1], [], []>} : vector<7x32xf32>, vector<32x32xf32>, vector<7x32xf32> -> vector<7x32xf32>
    %c0_72 = arith.constant 0 : index
    %c0_73 = arith.constant 0 : index
    %c0_74 = arith.constant 0 : index
    %104 = vector.load %arg16[%c0_72, %c0_73, %c0_74] : memref<2x1x32xf32, #tpu.memory_space<vmem>>, vector<1x1x32xf32>
    %105 = vector.shape_cast %104 : vector<1x1x32xf32> to vector<1x32xf32>
    %106 = vector.broadcast %105 : vector<1x32xf32> to vector<14x32xf32>
    %107 = arith.addf %98, %106 : vector<14x32xf32>
    %cst_75 = arith.constant dense<0.000000e+00> : vector<98x32xf32>
    %108 = tpu.matmul %7, %107, %cst_75 {dimension_numbers = #tpu.dot_dimension_numbers<[1], [0], [0], [1], [0, 0, 1, 1], [], []>} : vector<98x14xf32>, vector<14x32xf32>, vector<98x32xf32> -> vector<98x32xf32>
    %c0_76 = arith.constant 0 : index
    %c0_77 = arith.constant 0 : index
    %c0_78 = arith.constant 0 : index
    %109 = vector.load %arg17[%c0_76, %c0_77, %c0_78] : memref<2x1x32xf32, #tpu.memory_space<vmem>>, vector<1x1x32xf32>
    %110 = vector.shape_cast %109 : vector<1x1x32xf32> to vector<1x32xf32>
    %111 = vector.broadcast %110 : vector<1x32xf32> to vector<14x32xf32>
    %112 = arith.addf %98, %111 : vector<14x32xf32>
    %cst_79 = arith.constant dense<0.000000e+00> : vector<98x32xf32>
    %113 = tpu.matmul %7, %112, %cst_79 {dimension_numbers = #tpu.dot_dimension_numbers<[1], [0], [0], [1], [0, 0, 1, 1], [], []>} : vector<98x14xf32>, vector<14x32xf32>, vector<98x32xf32> -> vector<98x32xf32>
    %cst_80 = arith.constant dense<0.000000e+00> : vector<98x32xf32>
    %114 = tpu.matmul %8, %99, %cst_80 {dimension_numbers = #tpu.dot_dimension_numbers<[1], [0], [0], [1], [0, 0, 1, 1], [], []>} : vector<98x14xf32>, vector<14x32xf32>, vector<98x32xf32> -> vector<98x32xf32>
    %cst_81 = arith.constant dense<0.000000e+00> : vector<98x32xf32>
    %115 = tpu.matmul %8, %100, %cst_81 {dimension_numbers = #tpu.dot_dimension_numbers<[1], [0], [0], [1], [0, 0, 1, 1], [], []>} : vector<98x14xf32>, vector<14x32xf32>, vector<98x32xf32> -> vector<98x32xf32>
    %cst_82 = arith.constant dense<0.000000e+00> : vector<98x32xf32>
    %116 = tpu.matmul %9, %103, %cst_82 {dimension_numbers = #tpu.dot_dimension_numbers<[1], [0], [0], [1], [0, 0, 1, 1], [], []>} : vector<98x7xf32>, vector<7x32xf32>, vector<98x32xf32> -> vector<98x32xf32>
    %117 = arith.mulf %108, %114 : vector<98x32xf32>
    %cst_83 = arith.constant dense<0.000000e+00> : vector<98x4xf32>
    %118 = tpu.matmul %117, %12, %cst_83 {dimension_numbers = #tpu.dot_dimension_numbers<[1], [0], [0], [1], [0, 0, 1, 1], [], []>} : vector<98x32xf32>, vector<32x4xf32>, vector<98x4xf32> -> vector<98x4xf32>
    %119 = arith.mulf %113, %116 : vector<98x32xf32>
    %cst_84 = arith.constant dense<0.000000e+00> : vector<98x4xf32>
    %120 = tpu.matmul %119, %12, %cst_84 {dimension_numbers = #tpu.dot_dimension_numbers<[1], [0], [0], [1], [0, 0, 1, 1], [], []>} : vector<98x32xf32>, vector<32x4xf32>, vector<98x4xf32> -> vector<98x4xf32>
    %cst_85 = arith.constant dense<0.000000e+00> : vector<98x4xf32>
    %121 = tpu.matmul %11, %120, %cst_85 {dimension_numbers = #tpu.dot_dimension_numbers<[1], [0], [0], [1], [0, 0, 1, 1], [], []>} : vector<98x98xf32>, vector<98x4xf32>, vector<98x4xf32> -> vector<98x4xf32>
    %122 = arith.addf %118, %121 : vector<98x4xf32>
    %cst_86 = arith.constant 0.176776692 : f32
    %123 = vector.broadcast %cst_86 : f32 to vector<98x4xf32>
    %124 = arith.mulf %122, %123 : vector<98x4xf32>
    %cst_87 = arith.constant dense<0xFF800000> : vector<98xf32>
    %125 = vector.multi_reduction <maximumf>, %124, %cst_87 [1] : vector<98x4xf32> to vector<98xf32>
    %126 = vector.shape_cast %125 : vector<98xf32> to vector<98x1xf32>
    %cst_88 = arith.constant dense<0xFF800000> : vector<1xf32>
    %127 = vector.multi_reduction <maximumf>, %126, %cst_88 [0] : vector<98x1xf32> to vector<1xf32>
    %128 = vector.shape_cast %127 : vector<1xf32> to vector<1x1xf32>
    %129 = vector.broadcast %128 : vector<1x1xf32> to vector<98x4xf32>
    %130 = arith.subf %124, %129 : vector<98x4xf32>
    %131 = math.exp %130 : vector<98x4xf32>
    %cst_89 = arith.constant dense<0.000000e+00> : vector<14x4xf32>
    %132 = tpu.matmul %10, %131, %cst_89 {dimension_numbers = #tpu.dot_dimension_numbers<[1], [0], [0], [1], [0, 0, 1, 1], [], []>} : vector<14x98xf32>, vector<98x4xf32>, vector<14x4xf32> -> vector<14x4xf32>
    %cst_90 = arith.constant dense<0.000000e+00> : vector<98x4xf32>
    %133 = tpu.matmul %7, %132, %cst_90 {dimension_numbers = #tpu.dot_dimension_numbers<[1], [0], [0], [1], [0, 0, 1, 1], [], []>} : vector<98x14xf32>, vector<14x4xf32>, vector<98x4xf32> -> vector<98x4xf32>
    %134 = tpu.reciprocal %133 : vector<98x4xf32> -> vector<98x4xf32>
    %135 = arith.mulf %131, %134 : vector<98x4xf32>
    %cst_91 = arith.constant dense<0.000000e+00> : vector<98x32xf32>
    %136 = tpu.matmul %135, %13, %cst_91 {dimension_numbers = #tpu.dot_dimension_numbers<[1], [0], [0], [1], [0, 0, 1, 1], [], []>} : vector<98x4xf32>, vector<4x32xf32>, vector<98x32xf32> -> vector<98x32xf32>
    %137 = arith.mulf %136, %115 : vector<98x32xf32>
    %cst_92 = arith.constant dense<0.000000e+00> : vector<14x32xf32>
    %138 = tpu.matmul %10, %137, %cst_92 {dimension_numbers = #tpu.dot_dimension_numbers<[1], [0], [0], [1], [0, 0, 1, 1], [], []>} : vector<14x98xf32>, vector<98x32xf32>, vector<14x32xf32> -> vector<14x32xf32>
    %c0_93 = arith.constant 0 : index
    %c0_94 = arith.constant 0 : index
    %c0_95 = arith.constant 0 : index
    %139 = vector.load %arg18[%c0_93, %c0_94, %c0_95] : memref<2x32x32xf32, #tpu.memory_space<vmem>>, vector<1x32x32xf32>
    %140 = vector.shape_cast %139 : vector<1x32x32xf32> to vector<32x32xf32>
    %cst_96 = arith.constant dense<0.000000e+00> : vector<14x32xf32>
    %141 = tpu.matmul %138, %140, %cst_96 {dimension_numbers = #tpu.dot_dimension_numbers<[1], [0], [0], [1], [0, 0, 1, 1], [], []>} : vector<14x32xf32>, vector<32x32xf32>, vector<14x32xf32> -> vector<14x32xf32>
    %142 = arith.addf %64, %141 : vector<14x32xf32>
    %c0_97 = arith.constant 0 : index
    %c0_98 = arith.constant 0 : index
    %c0_99 = arith.constant 0 : index
    %143 = vector.load %arg19[%c0_97, %c0_98, %c0_99] : memref<2x1x32xf32, #tpu.memory_space<vmem>>, vector<1x1x32xf32>
    %144 = vector.shape_cast %143 : vector<1x1x32xf32> to vector<1x32xf32>
    %145 = vector.broadcast %144 : vector<1x32xf32> to vector<14x32xf32>
    %146 = arith.addf %142, %145 : vector<14x32xf32>
    %c0_100 = arith.constant 0 : index
    %c0_101 = arith.constant 0 : index
    %c0_102 = arith.constant 0 : index
    %147 = vector.load %arg20[%c0_100, %c0_101, %c0_102] : memref<2x1x32xf32, #tpu.memory_space<vmem>>, vector<1x1x32xf32>
    %148 = vector.shape_cast %147 : vector<1x1x32xf32> to vector<1x32xf32>
    %c0_103 = arith.constant 0 : index
    %c0_104 = arith.constant 0 : index
    %c0_105 = arith.constant 0 : index
    %149 = vector.load %arg21[%c0_103, %c0_104, %c0_105] : memref<2x1x32xf32, #tpu.memory_space<vmem>>, vector<1x1x32xf32>
    %150 = vector.shape_cast %149 : vector<1x1x32xf32> to vector<1x32xf32>
    %cst_106 = arith.constant dense<0.000000e+00> : vector<14xf32>
    %151 = vector.multi_reduction <add>, %146, %cst_106 [1] : vector<14x32xf32> to vector<14xf32>
    %152 = vector.shape_cast %151 : vector<14xf32> to vector<14x1xf32>
    %cst_107 = arith.constant 3.200000e+01 : f32
    %153 = vector.broadcast %cst_107 : f32 to vector<14x1xf32>
    %154 = arith.divf %152, %153 : vector<14x1xf32>
    %155 = vector.broadcast %154 : vector<14x1xf32> to vector<14x32xf32>
    %156 = arith.subf %146, %155 : vector<14x32xf32>
    %157 = arith.mulf %156, %156 : vector<14x32xf32>
    %cst_108 = arith.constant dense<0.000000e+00> : vector<14xf32>
    %158 = vector.multi_reduction <add>, %157, %cst_108 [1] : vector<14x32xf32> to vector<14xf32>
    %159 = vector.shape_cast %158 : vector<14xf32> to vector<14x1xf32>
    %cst_109 = arith.constant 3.200000e+01 : f32
    %160 = vector.broadcast %cst_109 : f32 to vector<14x1xf32>
    %161 = arith.divf %159, %160 : vector<14x1xf32>
    %162 = vector.broadcast %154 : vector<14x1xf32> to vector<14x32xf32>
    %163 = arith.subf %146, %162 : vector<14x32xf32>
    %cst_110 = arith.constant 9.99999974E-6 : f32
    %164 = vector.broadcast %cst_110 : f32 to vector<14x1xf32>
    %165 = arith.addf %161, %164 : vector<14x1xf32>
    %166 = math.rsqrt %165 : vector<14x1xf32>
    %167 = vector.broadcast %166 : vector<14x1xf32> to vector<14x32xf32>
    %168 = arith.mulf %163, %167 : vector<14x32xf32>
    %169 = vector.broadcast %148 : vector<1x32xf32> to vector<14x32xf32>
    %170 = arith.mulf %168, %169 : vector<14x32xf32>
    %171 = vector.broadcast %150 : vector<1x32xf32> to vector<14x32xf32>
    %172 = arith.addf %170, %171 : vector<14x32xf32>
    %c0_111 = arith.constant 0 : index
    %c0_112 = arith.constant 0 : index
    %c0_113 = arith.constant 0 : index
    %173 = vector.load %arg22[%c0_111, %c0_112, %c0_113] : memref<2x32x64xf32, #tpu.memory_space<vmem>>, vector<1x32x64xf32>
    %174 = vector.shape_cast %173 : vector<1x32x64xf32> to vector<32x64xf32>
    %cst_114 = arith.constant dense<0.000000e+00> : vector<14x64xf32>
    %175 = tpu.matmul %172, %174, %cst_114 {dimension_numbers = #tpu.dot_dimension_numbers<[1], [0], [0], [1], [0, 0, 1, 1], [], []>} : vector<14x32xf32>, vector<32x64xf32>, vector<14x64xf32> -> vector<14x64xf32>
    %c0_115 = arith.constant 0 : index
    %c0_116 = arith.constant 0 : index
    %c0_117 = arith.constant 0 : index
    %176 = vector.load %arg23[%c0_115, %c0_116, %c0_117] : memref<2x1x64xf32, #tpu.memory_space<vmem>>, vector<1x1x64xf32>
    %177 = vector.shape_cast %176 : vector<1x1x64xf32> to vector<1x64xf32>
    %178 = vector.broadcast %177 : vector<1x64xf32> to vector<14x64xf32>
    %179 = arith.addf %175, %178 : vector<14x64xf32>
    %180 = vector.extract_strided_slice %179 {offsets = [0, 0], sizes = [14, 32], strides = [1, 1]} : vector<14x64xf32> to vector<14x32xf32>
    %181 = vector.extract_strided_slice %179 {offsets = [0, 32], sizes = [14, 32], strides = [1, 1]} : vector<14x64xf32> to vector<14x32xf32>
    %cst_118 = arith.constant 0.000000e+00 : f32
    %182 = vector.broadcast %cst_118 : f32 to vector<14x32xf32>
    %183 = arith.subf %182, %181 : vector<14x32xf32>
    %184 = math.exp %183 : vector<14x32xf32>
    %cst_119 = arith.constant 1.000000e+00 : f32
    %185 = vector.broadcast %cst_119 : f32 to vector<14x32xf32>
    %186 = arith.addf %185, %184 : vector<14x32xf32>
    %cst_120 = arith.constant 1.000000e+00 : f32
    %187 = vector.broadcast %cst_120 : f32 to vector<14x32xf32>
    %188 = arith.divf %187, %186 : vector<14x32xf32>
    %189 = arith.mulf %180, %188 : vector<14x32xf32>
    %c0_121 = arith.constant 0 : index
    %c0_122 = arith.constant 0 : index
    %c0_123 = arith.constant 0 : index
    %190 = vector.load %arg24[%c0_121, %c0_122, %c0_123] : memref<2x7x32xf32, #tpu.memory_space<vmem>>, vector<1x7x32xf32>
    %191 = vector.shape_cast %190 : vector<1x7x32xf32> to vector<7x32xf32>
    %cst_124 = arith.constant 0.000000e+00 : f32
    %192 = vector.broadcast %cst_124 : f32 to vector<14x32xf32>
    %c0_125 = arith.constant 0 : index
    %c0_126 = arith.constant 0 : index
    %c0_127 = arith.constant 0 : index
    %193 = vector.load %arg44[%c0_125, %c0_126, %c0_127] : memref<7x14x14xf32, #tpu.memory_space<vmem>>, vector<1x14x14xf32>
    %194 = vector.shape_cast %193 : vector<1x14x14xf32> to vector<14x14xf32>
    %cst_128 = arith.constant dense<0.000000e+00> : vector<14x32xf32>
    %195 = tpu.matmul %194, %189, %cst_128 {dimension_numbers = #tpu.dot_dimension_numbers<[1], [0], [0], [1], [0, 0, 1, 1], [], []>} : vector<14x14xf32>, vector<14x32xf32>, vector<14x32xf32> -> vector<14x32xf32>
    %196 = vector.extract_strided_slice %191 {offsets = [0, 0], sizes = [1, 32], strides = [1, 1]} : vector<7x32xf32> to vector<1x32xf32>
    %197 = vector.broadcast %196 : vector<1x32xf32> to vector<14x32xf32>
    %198 = arith.mulf %195, %197 : vector<14x32xf32>
    %199 = arith.addf %192, %198 : vector<14x32xf32>
    %c1 = arith.constant 1 : index
    %c0_129 = arith.constant 0 : index
    %c0_130 = arith.constant 0 : index
    %200 = vector.load %arg44[%c1, %c0_129, %c0_130] : memref<7x14x14xf32, #tpu.memory_space<vmem>>, vector<1x14x14xf32>
    %201 = vector.shape_cast %200 : vector<1x14x14xf32> to vector<14x14xf32>
    %cst_131 = arith.constant dense<0.000000e+00> : vector<14x32xf32>
    %202 = tpu.matmul %201, %189, %cst_131 {dimension_numbers = #tpu.dot_dimension_numbers<[1], [0], [0], [1], [0, 0, 1, 1], [], []>} : vector<14x14xf32>, vector<14x32xf32>, vector<14x32xf32> -> vector<14x32xf32>
    %203 = vector.extract_strided_slice %191 {offsets = [1, 0], sizes = [1, 32], strides = [1, 1]} : vector<7x32xf32> to vector<1x32xf32>
    %204 = vector.broadcast %203 : vector<1x32xf32> to vector<14x32xf32>
    %205 = arith.mulf %202, %204 : vector<14x32xf32>
    %206 = arith.addf %199, %205 : vector<14x32xf32>
    %c2 = arith.constant 2 : index
    %c0_132 = arith.constant 0 : index
    %c0_133 = arith.constant 0 : index
    %207 = vector.load %arg44[%c2, %c0_132, %c0_133] : memref<7x14x14xf32, #tpu.memory_space<vmem>>, vector<1x14x14xf32>
    %208 = vector.shape_cast %207 : vector<1x14x14xf32> to vector<14x14xf32>
    %cst_134 = arith.constant dense<0.000000e+00> : vector<14x32xf32>
    %209 = tpu.matmul %208, %189, %cst_134 {dimension_numbers = #tpu.dot_dimension_numbers<[1], [0], [0], [1], [0, 0, 1, 1], [], []>} : vector<14x14xf32>, vector<14x32xf32>, vector<14x32xf32> -> vector<14x32xf32>
    %210 = vector.extract_strided_slice %191 {offsets = [2, 0], sizes = [1, 32], strides = [1, 1]} : vector<7x32xf32> to vector<1x32xf32>
    %211 = vector.broadcast %210 : vector<1x32xf32> to vector<14x32xf32>
    %212 = arith.mulf %209, %211 : vector<14x32xf32>
    %213 = arith.addf %206, %212 : vector<14x32xf32>
    %c3 = arith.constant 3 : index
    %c0_135 = arith.constant 0 : index
    %c0_136 = arith.constant 0 : index
    %214 = vector.load %arg44[%c3, %c0_135, %c0_136] : memref<7x14x14xf32, #tpu.memory_space<vmem>>, vector<1x14x14xf32>
    %215 = vector.shape_cast %214 : vector<1x14x14xf32> to vector<14x14xf32>
    %cst_137 = arith.constant dense<0.000000e+00> : vector<14x32xf32>
    %216 = tpu.matmul %215, %189, %cst_137 {dimension_numbers = #tpu.dot_dimension_numbers<[1], [0], [0], [1], [0, 0, 1, 1], [], []>} : vector<14x14xf32>, vector<14x32xf32>, vector<14x32xf32> -> vector<14x32xf32>
    %217 = vector.extract_strided_slice %191 {offsets = [3, 0], sizes = [1, 32], strides = [1, 1]} : vector<7x32xf32> to vector<1x32xf32>
    %218 = vector.broadcast %217 : vector<1x32xf32> to vector<14x32xf32>
    %219 = arith.mulf %216, %218 : vector<14x32xf32>
    %220 = arith.addf %213, %219 : vector<14x32xf32>
    %c4 = arith.constant 4 : index
    %c0_138 = arith.constant 0 : index
    %c0_139 = arith.constant 0 : index
    %221 = vector.load %arg44[%c4, %c0_138, %c0_139] : memref<7x14x14xf32, #tpu.memory_space<vmem>>, vector<1x14x14xf32>
    %222 = vector.shape_cast %221 : vector<1x14x14xf32> to vector<14x14xf32>
    %cst_140 = arith.constant dense<0.000000e+00> : vector<14x32xf32>
    %223 = tpu.matmul %222, %189, %cst_140 {dimension_numbers = #tpu.dot_dimension_numbers<[1], [0], [0], [1], [0, 0, 1, 1], [], []>} : vector<14x14xf32>, vector<14x32xf32>, vector<14x32xf32> -> vector<14x32xf32>
    %224 = vector.extract_strided_slice %191 {offsets = [4, 0], sizes = [1, 32], strides = [1, 1]} : vector<7x32xf32> to vector<1x32xf32>
    %225 = vector.broadcast %224 : vector<1x32xf32> to vector<14x32xf32>
    %226 = arith.mulf %223, %225 : vector<14x32xf32>
    %227 = arith.addf %220, %226 : vector<14x32xf32>
    %c5 = arith.constant 5 : index
    %c0_141 = arith.constant 0 : index
    %c0_142 = arith.constant 0 : index
    %228 = vector.load %arg44[%c5, %c0_141, %c0_142] : memref<7x14x14xf32, #tpu.memory_space<vmem>>, vector<1x14x14xf32>
    %229 = vector.shape_cast %228 : vector<1x14x14xf32> to vector<14x14xf32>
    %cst_143 = arith.constant dense<0.000000e+00> : vector<14x32xf32>
    %230 = tpu.matmul %229, %189, %cst_143 {dimension_numbers = #tpu.dot_dimension_numbers<[1], [0], [0], [1], [0, 0, 1, 1], [], []>} : vector<14x14xf32>, vector<14x32xf32>, vector<14x32xf32> -> vector<14x32xf32>
    %231 = vector.extract_strided_slice %191 {offsets = [5, 0], sizes = [1, 32], strides = [1, 1]} : vector<7x32xf32> to vector<1x32xf32>
    %232 = vector.broadcast %231 : vector<1x32xf32> to vector<14x32xf32>
    %233 = arith.mulf %230, %232 : vector<14x32xf32>
    %234 = arith.addf %227, %233 : vector<14x32xf32>
    %c6 = arith.constant 6 : index
    %c0_144 = arith.constant 0 : index
    %c0_145 = arith.constant 0 : index
    %235 = vector.load %arg44[%c6, %c0_144, %c0_145] : memref<7x14x14xf32, #tpu.memory_space<vmem>>, vector<1x14x14xf32>
    %236 = vector.shape_cast %235 : vector<1x14x14xf32> to vector<14x14xf32>
    %cst_146 = arith.constant dense<0.000000e+00> : vector<14x32xf32>
    %237 = tpu.matmul %236, %189, %cst_146 {dimension_numbers = #tpu.dot_dimension_numbers<[1], [0], [0], [1], [0, 0, 1, 1], [], []>} : vector<14x14xf32>, vector<14x32xf32>, vector<14x32xf32> -> vector<14x32xf32>
    %238 = vector.extract_strided_slice %191 {offsets = [6, 0], sizes = [1, 32], strides = [1, 1]} : vector<7x32xf32> to vector<1x32xf32>
    %239 = vector.broadcast %238 : vector<1x32xf32> to vector<14x32xf32>
    %240 = arith.mulf %237, %239 : vector<14x32xf32>
    %241 = arith.addf %234, %240 : vector<14x32xf32>
    %cst_147 = arith.constant dense<0.000000e+00> : vector<32xf32>
    %242 = vector.multi_reduction <add>, %241, %cst_147 [0] : vector<14x32xf32> to vector<32xf32>
    %243 = vector.shape_cast %242 : vector<32xf32> to vector<1x32xf32>
    %cst_148 = arith.constant 1.400000e+01 : f32
    %244 = vector.broadcast %cst_148 : f32 to vector<1x32xf32>
    %245 = arith.divf %243, %244 : vector<1x32xf32>
    %246 = vector.broadcast %245 : vector<1x32xf32> to vector<14x32xf32>
    %247 = arith.subf %241, %246 : vector<14x32xf32>
    %248 = arith.mulf %247, %247 : vector<14x32xf32>
    %cst_149 = arith.constant dense<0.000000e+00> : vector<32xf32>
    %249 = vector.multi_reduction <add>, %248, %cst_149 [0] : vector<14x32xf32> to vector<32xf32>
    %250 = vector.shape_cast %249 : vector<32xf32> to vector<1x32xf32>
    %cst_150 = arith.constant 1.400000e+01 : f32
    %251 = vector.broadcast %cst_150 : f32 to vector<1x32xf32>
    %252 = arith.divf %250, %251 : vector<1x32xf32>
    %253 = vector.broadcast %245 : vector<1x32xf32> to vector<14x32xf32>
    %254 = arith.subf %241, %253 : vector<14x32xf32>
    %cst_151 = arith.constant 9.99999974E-6 : f32
    %255 = vector.broadcast %cst_151 : f32 to vector<1x32xf32>
    %256 = arith.addf %252, %255 : vector<1x32xf32>
    %257 = math.rsqrt %256 : vector<1x32xf32>
    %258 = vector.broadcast %257 : vector<1x32xf32> to vector<14x32xf32>
    %259 = arith.mulf %254, %258 : vector<14x32xf32>
    %c0_152 = arith.constant 0 : index
    %c0_153 = arith.constant 0 : index
    %c0_154 = arith.constant 0 : index
    %260 = vector.load %arg25[%c0_152, %c0_153, %c0_154] : memref<2x1x32xf32, #tpu.memory_space<vmem>>, vector<1x1x32xf32>
    %261 = vector.shape_cast %260 : vector<1x1x32xf32> to vector<1x32xf32>
    %262 = vector.broadcast %261 : vector<1x32xf32> to vector<14x32xf32>
    %263 = arith.mulf %259, %262 : vector<14x32xf32>
    %c0_155 = arith.constant 0 : index
    %c0_156 = arith.constant 0 : index
    %c0_157 = arith.constant 0 : index
    %264 = vector.load %arg26[%c0_155, %c0_156, %c0_157] : memref<2x1x32xf32, #tpu.memory_space<vmem>>, vector<1x1x32xf32>
    %265 = vector.shape_cast %264 : vector<1x1x32xf32> to vector<1x32xf32>
    %266 = vector.broadcast %265 : vector<1x32xf32> to vector<14x32xf32>
    %267 = arith.addf %263, %266 : vector<14x32xf32>
    %cst_158 = arith.constant 0.000000e+00 : f32
    %268 = vector.broadcast %cst_158 : f32 to vector<14x32xf32>
    %269 = arith.subf %268, %267 : vector<14x32xf32>
    %270 = math.exp %269 : vector<14x32xf32>
    %cst_159 = arith.constant 1.000000e+00 : f32
    %271 = vector.broadcast %cst_159 : f32 to vector<14x32xf32>
    %272 = arith.addf %271, %270 : vector<14x32xf32>
    %cst_160 = arith.constant 1.000000e+00 : f32
    %273 = vector.broadcast %cst_160 : f32 to vector<14x32xf32>
    %274 = arith.divf %273, %272 : vector<14x32xf32>
    %275 = arith.mulf %267, %274 : vector<14x32xf32>
    %c0_161 = arith.constant 0 : index
    %c0_162 = arith.constant 0 : index
    %c0_163 = arith.constant 0 : index
    %276 = vector.load %arg27[%c0_161, %c0_162, %c0_163] : memref<2x32x32xf32, #tpu.memory_space<vmem>>, vector<1x32x32xf32>
    %277 = vector.shape_cast %276 : vector<1x32x32xf32> to vector<32x32xf32>
    %cst_164 = arith.constant dense<0.000000e+00> : vector<14x32xf32>
    %278 = tpu.matmul %275, %277, %cst_164 {dimension_numbers = #tpu.dot_dimension_numbers<[1], [0], [0], [1], [0, 0, 1, 1], [], []>} : vector<14x32xf32>, vector<32x32xf32>, vector<14x32xf32> -> vector<14x32xf32>
    %c0_165 = arith.constant 0 : index
    %c0_166 = arith.constant 0 : index
    %c0_167 = arith.constant 0 : index
    %279 = vector.load %arg28[%c0_165, %c0_166, %c0_167] : memref<2x1x32xf32, #tpu.memory_space<vmem>>, vector<1x1x32xf32>
    %280 = vector.shape_cast %279 : vector<1x1x32xf32> to vector<1x32xf32>
    %281 = vector.broadcast %280 : vector<1x32xf32> to vector<14x32xf32>
    %282 = arith.addf %278, %281 : vector<14x32xf32>
    %283 = arith.addf %146, %282 : vector<14x32xf32>
    %c0_168 = arith.constant 0 : index
    %c0_169 = arith.constant 0 : index
    %c0_170 = arith.constant 0 : index
    %284 = vector.load %arg29[%c0_168, %c0_169, %c0_170] : memref<2x1x32xf32, #tpu.memory_space<vmem>>, vector<1x1x32xf32>
    %285 = vector.shape_cast %284 : vector<1x1x32xf32> to vector<1x32xf32>
    %c0_171 = arith.constant 0 : index
    %c0_172 = arith.constant 0 : index
    %c0_173 = arith.constant 0 : index
    %286 = vector.load %arg30[%c0_171, %c0_172, %c0_173] : memref<2x1x32xf32, #tpu.memory_space<vmem>>, vector<1x1x32xf32>
    %287 = vector.shape_cast %286 : vector<1x1x32xf32> to vector<1x32xf32>
    %c0_174 = arith.constant 0 : index
    %c0_175 = arith.constant 0 : index
    %c0_176 = arith.constant 0 : index
    %288 = vector.load %arg31[%c0_174, %c0_175, %c0_176] : memref<2x32x128xf32, #tpu.memory_space<vmem>>, vector<1x32x128xf32>
    %289 = vector.shape_cast %288 : vector<1x32x128xf32> to vector<32x128xf32>
    %c0_177 = arith.constant 0 : index
    %c0_178 = arith.constant 0 : index
    %c0_179 = arith.constant 0 : index
    %290 = vector.load %arg32[%c0_177, %c0_178, %c0_179] : memref<2x1x128xf32, #tpu.memory_space<vmem>>, vector<1x1x128xf32>
    %291 = vector.shape_cast %290 : vector<1x1x128xf32> to vector<1x128xf32>
    %c0_180 = arith.constant 0 : index
    %c0_181 = arith.constant 0 : index
    %c0_182 = arith.constant 0 : index
    %292 = vector.load %arg33[%c0_180, %c0_181, %c0_182] : memref<2x128x32xf32, #tpu.memory_space<vmem>>, vector<1x128x32xf32>
    %293 = vector.shape_cast %292 : vector<1x128x32xf32> to vector<128x32xf32>
    %c0_183 = arith.constant 0 : index
    %c0_184 = arith.constant 0 : index
    %c0_185 = arith.constant 0 : index
    %294 = vector.load %arg34[%c0_183, %c0_184, %c0_185] : memref<2x1x32xf32, #tpu.memory_space<vmem>>, vector<1x1x32xf32>
    %295 = vector.shape_cast %294 : vector<1x1x32xf32> to vector<1x32xf32>
    %cst_186 = arith.constant dense<0.000000e+00> : vector<14xf32>
    %296 = vector.multi_reduction <add>, %283, %cst_186 [1] : vector<14x32xf32> to vector<14xf32>
    %297 = vector.shape_cast %296 : vector<14xf32> to vector<14x1xf32>
    %cst_187 = arith.constant 3.200000e+01 : f32
    %298 = vector.broadcast %cst_187 : f32 to vector<14x1xf32>
    %299 = arith.divf %297, %298 : vector<14x1xf32>
    %300 = vector.broadcast %299 : vector<14x1xf32> to vector<14x32xf32>
    %301 = arith.subf %283, %300 : vector<14x32xf32>
    %302 = arith.mulf %301, %301 : vector<14x32xf32>
    %cst_188 = arith.constant dense<0.000000e+00> : vector<14xf32>
    %303 = vector.multi_reduction <add>, %302, %cst_188 [1] : vector<14x32xf32> to vector<14xf32>
    %304 = vector.shape_cast %303 : vector<14xf32> to vector<14x1xf32>
    %cst_189 = arith.constant 3.200000e+01 : f32
    %305 = vector.broadcast %cst_189 : f32 to vector<14x1xf32>
    %306 = arith.divf %304, %305 : vector<14x1xf32>
    %307 = vector.broadcast %299 : vector<14x1xf32> to vector<14x32xf32>
    %308 = arith.subf %283, %307 : vector<14x32xf32>
    %cst_190 = arith.constant 9.99999974E-6 : f32
    %309 = vector.broadcast %cst_190 : f32 to vector<14x1xf32>
    %310 = arith.addf %306, %309 : vector<14x1xf32>
    %311 = math.rsqrt %310 : vector<14x1xf32>
    %312 = vector.broadcast %311 : vector<14x1xf32> to vector<14x32xf32>
    %313 = arith.mulf %308, %312 : vector<14x32xf32>
    %314 = vector.broadcast %285 : vector<1x32xf32> to vector<14x32xf32>
    %315 = arith.mulf %313, %314 : vector<14x32xf32>
    %316 = vector.broadcast %287 : vector<1x32xf32> to vector<14x32xf32>
    %317 = arith.addf %315, %316 : vector<14x32xf32>
    %cst_191 = arith.constant dense<0.000000e+00> : vector<14x128xf32>
    %318 = tpu.matmul %317, %289, %cst_191 {dimension_numbers = #tpu.dot_dimension_numbers<[1], [0], [0], [1], [0, 0, 1, 1], [], []>} : vector<14x32xf32>, vector<32x128xf32>, vector<14x128xf32> -> vector<14x128xf32>
    %319 = vector.broadcast %291 : vector<1x128xf32> to vector<14x128xf32>
    %320 = arith.addf %318, %319 : vector<14x128xf32>
    %cst_192 = arith.constant 0.000000e+00 : f32
    %321 = vector.broadcast %cst_192 : f32 to vector<14x128xf32>
    %322 = arith.subf %321, %320 : vector<14x128xf32>
    %323 = math.exp %322 : vector<14x128xf32>
    %cst_193 = arith.constant 1.000000e+00 : f32
    %324 = vector.broadcast %cst_193 : f32 to vector<14x128xf32>
    %325 = arith.addf %324, %323 : vector<14x128xf32>
    %cst_194 = arith.constant 1.000000e+00 : f32
    %326 = vector.broadcast %cst_194 : f32 to vector<14x128xf32>
    %327 = arith.divf %326, %325 : vector<14x128xf32>
    %328 = arith.mulf %320, %327 : vector<14x128xf32>
    %cst_195 = arith.constant dense<0.000000e+00> : vector<14x32xf32>
    %329 = tpu.matmul %328, %293, %cst_195 {dimension_numbers = #tpu.dot_dimension_numbers<[1], [0], [0], [1], [0, 0, 1, 1], [], []>} : vector<14x128xf32>, vector<128x32xf32>, vector<14x32xf32> -> vector<14x32xf32>
    %330 = vector.broadcast %295 : vector<1x32xf32> to vector<14x32xf32>
    %331 = arith.addf %329, %330 : vector<14x32xf32>
    %cst_196 = arith.constant 5.000000e-01 : f32
    %332 = vector.broadcast %cst_196 : f32 to vector<14x32xf32>
    %333 = arith.mulf %332, %331 : vector<14x32xf32>
    %334 = arith.addf %283, %333 : vector<14x32xf32>
    %c0_197 = arith.constant 0 : index
    %c0_198 = arith.constant 0 : index
    %c0_199 = arith.constant 0 : index
    %335 = vector.load %arg35[%c0_197, %c0_198, %c0_199] : memref<2x1x32xf32, #tpu.memory_space<vmem>>, vector<1x1x32xf32>
    %336 = vector.shape_cast %335 : vector<1x1x32xf32> to vector<1x32xf32>
    %c0_200 = arith.constant 0 : index
    %c0_201 = arith.constant 0 : index
    %c0_202 = arith.constant 0 : index
    %337 = vector.load %arg36[%c0_200, %c0_201, %c0_202] : memref<2x1x32xf32, #tpu.memory_space<vmem>>, vector<1x1x32xf32>
    %338 = vector.shape_cast %337 : vector<1x1x32xf32> to vector<1x32xf32>
    %cst_203 = arith.constant dense<0.000000e+00> : vector<14xf32>
    %339 = vector.multi_reduction <add>, %334, %cst_203 [1] : vector<14x32xf32> to vector<14xf32>
    %340 = vector.shape_cast %339 : vector<14xf32> to vector<14x1xf32>
    %cst_204 = arith.constant 3.200000e+01 : f32
    %341 = vector.broadcast %cst_204 : f32 to vector<14x1xf32>
    %342 = arith.divf %340, %341 : vector<14x1xf32>
    %343 = vector.broadcast %342 : vector<14x1xf32> to vector<14x32xf32>
    %344 = arith.subf %334, %343 : vector<14x32xf32>
    %345 = arith.mulf %344, %344 : vector<14x32xf32>
    %cst_205 = arith.constant dense<0.000000e+00> : vector<14xf32>
    %346 = vector.multi_reduction <add>, %345, %cst_205 [1] : vector<14x32xf32> to vector<14xf32>
    %347 = vector.shape_cast %346 : vector<14xf32> to vector<14x1xf32>
    %cst_206 = arith.constant 3.200000e+01 : f32
    %348 = vector.broadcast %cst_206 : f32 to vector<14x1xf32>
    %349 = arith.divf %347, %348 : vector<14x1xf32>
    %350 = vector.broadcast %342 : vector<14x1xf32> to vector<14x32xf32>
    %351 = arith.subf %334, %350 : vector<14x32xf32>
    %cst_207 = arith.constant 9.99999974E-6 : f32
    %352 = vector.broadcast %cst_207 : f32 to vector<14x1xf32>
    %353 = arith.addf %349, %352 : vector<14x1xf32>
    %354 = math.rsqrt %353 : vector<14x1xf32>
    %355 = vector.broadcast %354 : vector<14x1xf32> to vector<14x32xf32>
    %356 = arith.mulf %351, %355 : vector<14x32xf32>
    %357 = vector.broadcast %336 : vector<1x32xf32> to vector<14x32xf32>
    %358 = arith.mulf %356, %357 : vector<14x32xf32>
    %359 = vector.broadcast %338 : vector<1x32xf32> to vector<14x32xf32>
    %360 = arith.addf %358, %359 : vector<14x32xf32>
    %c1_208 = arith.constant 1 : index
    %c0_209 = arith.constant 0 : index
    %c0_210 = arith.constant 0 : index
    %361 = vector.load %arg5[%c1_208, %c0_209, %c0_210] : memref<2x1x32xf32, #tpu.memory_space<vmem>>, vector<1x1x32xf32>
    %362 = vector.shape_cast %361 : vector<1x1x32xf32> to vector<1x32xf32>
    %c1_211 = arith.constant 1 : index
    %c0_212 = arith.constant 0 : index
    %c0_213 = arith.constant 0 : index
    %363 = vector.load %arg6[%c1_211, %c0_212, %c0_213] : memref<2x1x32xf32, #tpu.memory_space<vmem>>, vector<1x1x32xf32>
    %364 = vector.shape_cast %363 : vector<1x1x32xf32> to vector<1x32xf32>
    %c1_214 = arith.constant 1 : index
    %c0_215 = arith.constant 0 : index
    %c0_216 = arith.constant 0 : index
    %365 = vector.load %arg7[%c1_214, %c0_215, %c0_216] : memref<2x32x128xf32, #tpu.memory_space<vmem>>, vector<1x32x128xf32>
    %366 = vector.shape_cast %365 : vector<1x32x128xf32> to vector<32x128xf32>
    %c1_217 = arith.constant 1 : index
    %c0_218 = arith.constant 0 : index
    %c0_219 = arith.constant 0 : index
    %367 = vector.load %arg8[%c1_217, %c0_218, %c0_219] : memref<2x1x128xf32, #tpu.memory_space<vmem>>, vector<1x1x128xf32>
    %368 = vector.shape_cast %367 : vector<1x1x128xf32> to vector<1x128xf32>
    %c1_220 = arith.constant 1 : index
    %c0_221 = arith.constant 0 : index
    %c0_222 = arith.constant 0 : index
    %369 = vector.load %arg9[%c1_220, %c0_221, %c0_222] : memref<2x128x32xf32, #tpu.memory_space<vmem>>, vector<1x128x32xf32>
    %370 = vector.shape_cast %369 : vector<1x128x32xf32> to vector<128x32xf32>
    %c1_223 = arith.constant 1 : index
    %c0_224 = arith.constant 0 : index
    %c0_225 = arith.constant 0 : index
    %371 = vector.load %arg10[%c1_223, %c0_224, %c0_225] : memref<2x1x32xf32, #tpu.memory_space<vmem>>, vector<1x1x32xf32>
    %372 = vector.shape_cast %371 : vector<1x1x32xf32> to vector<1x32xf32>
    %cst_226 = arith.constant dense<0.000000e+00> : vector<14xf32>
    %373 = vector.multi_reduction <add>, %360, %cst_226 [1] : vector<14x32xf32> to vector<14xf32>
    %374 = vector.shape_cast %373 : vector<14xf32> to vector<14x1xf32>
    %cst_227 = arith.constant 3.200000e+01 : f32
    %375 = vector.broadcast %cst_227 : f32 to vector<14x1xf32>
    %376 = arith.divf %374, %375 : vector<14x1xf32>
    %377 = vector.broadcast %376 : vector<14x1xf32> to vector<14x32xf32>
    %378 = arith.subf %360, %377 : vector<14x32xf32>
    %379 = arith.mulf %378, %378 : vector<14x32xf32>
    %cst_228 = arith.constant dense<0.000000e+00> : vector<14xf32>
    %380 = vector.multi_reduction <add>, %379, %cst_228 [1] : vector<14x32xf32> to vector<14xf32>
    %381 = vector.shape_cast %380 : vector<14xf32> to vector<14x1xf32>
    %cst_229 = arith.constant 3.200000e+01 : f32
    %382 = vector.broadcast %cst_229 : f32 to vector<14x1xf32>
    %383 = arith.divf %381, %382 : vector<14x1xf32>
    %384 = vector.broadcast %376 : vector<14x1xf32> to vector<14x32xf32>
    %385 = arith.subf %360, %384 : vector<14x32xf32>
    %cst_230 = arith.constant 9.99999974E-6 : f32
    %386 = vector.broadcast %cst_230 : f32 to vector<14x1xf32>
    %387 = arith.addf %383, %386 : vector<14x1xf32>
    %388 = math.rsqrt %387 : vector<14x1xf32>
    %389 = vector.broadcast %388 : vector<14x1xf32> to vector<14x32xf32>
    %390 = arith.mulf %385, %389 : vector<14x32xf32>
    %391 = vector.broadcast %362 : vector<1x32xf32> to vector<14x32xf32>
    %392 = arith.mulf %390, %391 : vector<14x32xf32>
    %393 = vector.broadcast %364 : vector<1x32xf32> to vector<14x32xf32>
    %394 = arith.addf %392, %393 : vector<14x32xf32>
    %cst_231 = arith.constant dense<0.000000e+00> : vector<14x128xf32>
    %395 = tpu.matmul %394, %366, %cst_231 {dimension_numbers = #tpu.dot_dimension_numbers<[1], [0], [0], [1], [0, 0, 1, 1], [], []>} : vector<14x32xf32>, vector<32x128xf32>, vector<14x128xf32> -> vector<14x128xf32>
    %396 = vector.broadcast %368 : vector<1x128xf32> to vector<14x128xf32>
    %397 = arith.addf %395, %396 : vector<14x128xf32>
    %cst_232 = arith.constant 0.000000e+00 : f32
    %398 = vector.broadcast %cst_232 : f32 to vector<14x128xf32>
    %399 = arith.subf %398, %397 : vector<14x128xf32>
    %400 = math.exp %399 : vector<14x128xf32>
    %cst_233 = arith.constant 1.000000e+00 : f32
    %401 = vector.broadcast %cst_233 : f32 to vector<14x128xf32>
    %402 = arith.addf %401, %400 : vector<14x128xf32>
    %cst_234 = arith.constant 1.000000e+00 : f32
    %403 = vector.broadcast %cst_234 : f32 to vector<14x128xf32>
    %404 = arith.divf %403, %402 : vector<14x128xf32>
    %405 = arith.mulf %397, %404 : vector<14x128xf32>
    %cst_235 = arith.constant dense<0.000000e+00> : vector<14x32xf32>
    %406 = tpu.matmul %405, %370, %cst_235 {dimension_numbers = #tpu.dot_dimension_numbers<[1], [0], [0], [1], [0, 0, 1, 1], [], []>} : vector<14x128xf32>, vector<128x32xf32>, vector<14x32xf32> -> vector<14x32xf32>
    %407 = vector.broadcast %372 : vector<1x32xf32> to vector<14x32xf32>
    %408 = arith.addf %406, %407 : vector<14x32xf32>
    %cst_236 = arith.constant 5.000000e-01 : f32
    %409 = vector.broadcast %cst_236 : f32 to vector<14x32xf32>
    %410 = arith.mulf %409, %408 : vector<14x32xf32>
    %411 = arith.addf %360, %410 : vector<14x32xf32>
    %c1_237 = arith.constant 1 : index
    %c0_238 = arith.constant 0 : index
    %c0_239 = arith.constant 0 : index
    %412 = vector.load %arg11[%c1_237, %c0_238, %c0_239] : memref<2x1x32xf32, #tpu.memory_space<vmem>>, vector<1x1x32xf32>
    %413 = vector.shape_cast %412 : vector<1x1x32xf32> to vector<1x32xf32>
    %c1_240 = arith.constant 1 : index
    %c0_241 = arith.constant 0 : index
    %c0_242 = arith.constant 0 : index
    %414 = vector.load %arg12[%c1_240, %c0_241, %c0_242] : memref<2x1x32xf32, #tpu.memory_space<vmem>>, vector<1x1x32xf32>
    %415 = vector.shape_cast %414 : vector<1x1x32xf32> to vector<1x32xf32>
    %cst_243 = arith.constant dense<0.000000e+00> : vector<14xf32>
    %416 = vector.multi_reduction <add>, %411, %cst_243 [1] : vector<14x32xf32> to vector<14xf32>
    %417 = vector.shape_cast %416 : vector<14xf32> to vector<14x1xf32>
    %cst_244 = arith.constant 3.200000e+01 : f32
    %418 = vector.broadcast %cst_244 : f32 to vector<14x1xf32>
    %419 = arith.divf %417, %418 : vector<14x1xf32>
    %420 = vector.broadcast %419 : vector<14x1xf32> to vector<14x32xf32>
    %421 = arith.subf %411, %420 : vector<14x32xf32>
    %422 = arith.mulf %421, %421 : vector<14x32xf32>
    %cst_245 = arith.constant dense<0.000000e+00> : vector<14xf32>
    %423 = vector.multi_reduction <add>, %422, %cst_245 [1] : vector<14x32xf32> to vector<14xf32>
    %424 = vector.shape_cast %423 : vector<14xf32> to vector<14x1xf32>
    %cst_246 = arith.constant 3.200000e+01 : f32
    %425 = vector.broadcast %cst_246 : f32 to vector<14x1xf32>
    %426 = arith.divf %424, %425 : vector<14x1xf32>
    %427 = vector.broadcast %419 : vector<14x1xf32> to vector<14x32xf32>
    %428 = arith.subf %411, %427 : vector<14x32xf32>
    %cst_247 = arith.constant 9.99999974E-6 : f32
    %429 = vector.broadcast %cst_247 : f32 to vector<14x1xf32>
    %430 = arith.addf %426, %429 : vector<14x1xf32>
    %431 = math.rsqrt %430 : vector<14x1xf32>
    %432 = vector.broadcast %431 : vector<14x1xf32> to vector<14x32xf32>
    %433 = arith.mulf %428, %432 : vector<14x32xf32>
    %434 = vector.broadcast %413 : vector<1x32xf32> to vector<14x32xf32>
    %435 = arith.mulf %433, %434 : vector<14x32xf32>
    %436 = vector.broadcast %415 : vector<1x32xf32> to vector<14x32xf32>
    %437 = arith.addf %435, %436 : vector<14x32xf32>
    %c1_248 = arith.constant 1 : index
    %c0_249 = arith.constant 0 : index
    %c0_250 = arith.constant 0 : index
    %438 = vector.load %arg13[%c1_248, %c0_249, %c0_250] : memref<2x32x96xf32, #tpu.memory_space<vmem>>, vector<1x32x96xf32>
    %439 = vector.shape_cast %438 : vector<1x32x96xf32> to vector<32x96xf32>
    %cst_251 = arith.constant dense<0.000000e+00> : vector<14x96xf32>
    %440 = tpu.matmul %437, %439, %cst_251 {dimension_numbers = #tpu.dot_dimension_numbers<[1], [0], [0], [1], [0, 0, 1, 1], [], []>} : vector<14x32xf32>, vector<32x96xf32>, vector<14x96xf32> -> vector<14x96xf32>
    %c1_252 = arith.constant 1 : index
    %c0_253 = arith.constant 0 : index
    %c0_254 = arith.constant 0 : index
    %441 = vector.load %arg14[%c1_252, %c0_253, %c0_254] : memref<2x1x96xf32, #tpu.memory_space<vmem>>, vector<1x1x96xf32>
    %442 = vector.shape_cast %441 : vector<1x1x96xf32> to vector<1x96xf32>
    %443 = vector.broadcast %442 : vector<1x96xf32> to vector<14x96xf32>
    %444 = arith.addf %440, %443 : vector<14x96xf32>
    %445 = vector.extract_strided_slice %444 {offsets = [0, 0], sizes = [14, 32], strides = [1, 1]} : vector<14x96xf32> to vector<14x32xf32>
    %446 = vector.extract_strided_slice %444 {offsets = [0, 32], sizes = [14, 32], strides = [1, 1]} : vector<14x96xf32> to vector<14x32xf32>
    %447 = vector.extract_strided_slice %444 {offsets = [0, 64], sizes = [14, 32], strides = [1, 1]} : vector<14x96xf32> to vector<14x32xf32>
    %c1_255 = arith.constant 1 : index
    %c0_256 = arith.constant 0 : index
    %c0_257 = arith.constant 0 : index
    %448 = vector.load %arg15[%c1_255, %c0_256, %c0_257] : memref<2x32x32xf32, #tpu.memory_space<vmem>>, vector<1x32x32xf32>
    %449 = vector.shape_cast %448 : vector<1x32x32xf32> to vector<32x32xf32>
    %cst_258 = arith.constant dense<0.000000e+00> : vector<7x32xf32>
    %450 = tpu.matmul %6, %449, %cst_258 {dimension_numbers = #tpu.dot_dimension_numbers<[1], [0], [0], [1], [0, 0, 1, 1], [], []>} : vector<7x32xf32>, vector<32x32xf32>, vector<7x32xf32> -> vector<7x32xf32>
    %c1_259 = arith.constant 1 : index
    %c0_260 = arith.constant 0 : index
    %c0_261 = arith.constant 0 : index
    %451 = vector.load %arg16[%c1_259, %c0_260, %c0_261] : memref<2x1x32xf32, #tpu.memory_space<vmem>>, vector<1x1x32xf32>
    %452 = vector.shape_cast %451 : vector<1x1x32xf32> to vector<1x32xf32>
    %453 = vector.broadcast %452 : vector<1x32xf32> to vector<14x32xf32>
    %454 = arith.addf %445, %453 : vector<14x32xf32>
    %cst_262 = arith.constant dense<0.000000e+00> : vector<98x32xf32>
    %455 = tpu.matmul %7, %454, %cst_262 {dimension_numbers = #tpu.dot_dimension_numbers<[1], [0], [0], [1], [0, 0, 1, 1], [], []>} : vector<98x14xf32>, vector<14x32xf32>, vector<98x32xf32> -> vector<98x32xf32>
    %c1_263 = arith.constant 1 : index
    %c0_264 = arith.constant 0 : index
    %c0_265 = arith.constant 0 : index
    %456 = vector.load %arg17[%c1_263, %c0_264, %c0_265] : memref<2x1x32xf32, #tpu.memory_space<vmem>>, vector<1x1x32xf32>
    %457 = vector.shape_cast %456 : vector<1x1x32xf32> to vector<1x32xf32>
    %458 = vector.broadcast %457 : vector<1x32xf32> to vector<14x32xf32>
    %459 = arith.addf %445, %458 : vector<14x32xf32>
    %cst_266 = arith.constant dense<0.000000e+00> : vector<98x32xf32>
    %460 = tpu.matmul %7, %459, %cst_266 {dimension_numbers = #tpu.dot_dimension_numbers<[1], [0], [0], [1], [0, 0, 1, 1], [], []>} : vector<98x14xf32>, vector<14x32xf32>, vector<98x32xf32> -> vector<98x32xf32>
    %cst_267 = arith.constant dense<0.000000e+00> : vector<98x32xf32>
    %461 = tpu.matmul %8, %446, %cst_267 {dimension_numbers = #tpu.dot_dimension_numbers<[1], [0], [0], [1], [0, 0, 1, 1], [], []>} : vector<98x14xf32>, vector<14x32xf32>, vector<98x32xf32> -> vector<98x32xf32>
    %cst_268 = arith.constant dense<0.000000e+00> : vector<98x32xf32>
    %462 = tpu.matmul %8, %447, %cst_268 {dimension_numbers = #tpu.dot_dimension_numbers<[1], [0], [0], [1], [0, 0, 1, 1], [], []>} : vector<98x14xf32>, vector<14x32xf32>, vector<98x32xf32> -> vector<98x32xf32>
    %cst_269 = arith.constant dense<0.000000e+00> : vector<98x32xf32>
    %463 = tpu.matmul %9, %450, %cst_269 {dimension_numbers = #tpu.dot_dimension_numbers<[1], [0], [0], [1], [0, 0, 1, 1], [], []>} : vector<98x7xf32>, vector<7x32xf32>, vector<98x32xf32> -> vector<98x32xf32>
    %464 = arith.mulf %455, %461 : vector<98x32xf32>
    %cst_270 = arith.constant dense<0.000000e+00> : vector<98x4xf32>
    %465 = tpu.matmul %464, %12, %cst_270 {dimension_numbers = #tpu.dot_dimension_numbers<[1], [0], [0], [1], [0, 0, 1, 1], [], []>} : vector<98x32xf32>, vector<32x4xf32>, vector<98x4xf32> -> vector<98x4xf32>
    %466 = arith.mulf %460, %463 : vector<98x32xf32>
    %cst_271 = arith.constant dense<0.000000e+00> : vector<98x4xf32>
    %467 = tpu.matmul %466, %12, %cst_271 {dimension_numbers = #tpu.dot_dimension_numbers<[1], [0], [0], [1], [0, 0, 1, 1], [], []>} : vector<98x32xf32>, vector<32x4xf32>, vector<98x4xf32> -> vector<98x4xf32>
    %cst_272 = arith.constant dense<0.000000e+00> : vector<98x4xf32>
    %468 = tpu.matmul %11, %467, %cst_272 {dimension_numbers = #tpu.dot_dimension_numbers<[1], [0], [0], [1], [0, 0, 1, 1], [], []>} : vector<98x98xf32>, vector<98x4xf32>, vector<98x4xf32> -> vector<98x4xf32>
    %469 = arith.addf %465, %468 : vector<98x4xf32>
    %cst_273 = arith.constant 0.176776692 : f32
    %470 = vector.broadcast %cst_273 : f32 to vector<98x4xf32>
    %471 = arith.mulf %469, %470 : vector<98x4xf32>
    %cst_274 = arith.constant dense<0xFF800000> : vector<98xf32>
    %472 = vector.multi_reduction <maximumf>, %471, %cst_274 [1] : vector<98x4xf32> to vector<98xf32>
    %473 = vector.shape_cast %472 : vector<98xf32> to vector<98x1xf32>
    %cst_275 = arith.constant dense<0xFF800000> : vector<1xf32>
    %474 = vector.multi_reduction <maximumf>, %473, %cst_275 [0] : vector<98x1xf32> to vector<1xf32>
    %475 = vector.shape_cast %474 : vector<1xf32> to vector<1x1xf32>
    %476 = vector.broadcast %475 : vector<1x1xf32> to vector<98x4xf32>
    %477 = arith.subf %471, %476 : vector<98x4xf32>
    %478 = math.exp %477 : vector<98x4xf32>
    %cst_276 = arith.constant dense<0.000000e+00> : vector<14x4xf32>
    %479 = tpu.matmul %10, %478, %cst_276 {dimension_numbers = #tpu.dot_dimension_numbers<[1], [0], [0], [1], [0, 0, 1, 1], [], []>} : vector<14x98xf32>, vector<98x4xf32>, vector<14x4xf32> -> vector<14x4xf32>
    %cst_277 = arith.constant dense<0.000000e+00> : vector<98x4xf32>
    %480 = tpu.matmul %7, %479, %cst_277 {dimension_numbers = #tpu.dot_dimension_numbers<[1], [0], [0], [1], [0, 0, 1, 1], [], []>} : vector<98x14xf32>, vector<14x4xf32>, vector<98x4xf32> -> vector<98x4xf32>
    %481 = tpu.reciprocal %480 : vector<98x4xf32> -> vector<98x4xf32>
    %482 = arith.mulf %478, %481 : vector<98x4xf32>
    %cst_278 = arith.constant dense<0.000000e+00> : vector<98x32xf32>
    %483 = tpu.matmul %482, %13, %cst_278 {dimension_numbers = #tpu.dot_dimension_numbers<[1], [0], [0], [1], [0, 0, 1, 1], [], []>} : vector<98x4xf32>, vector<4x32xf32>, vector<98x32xf32> -> vector<98x32xf32>
    %484 = arith.mulf %483, %462 : vector<98x32xf32>
    %cst_279 = arith.constant dense<0.000000e+00> : vector<14x32xf32>
    %485 = tpu.matmul %10, %484, %cst_279 {dimension_numbers = #tpu.dot_dimension_numbers<[1], [0], [0], [1], [0, 0, 1, 1], [], []>} : vector<14x98xf32>, vector<98x32xf32>, vector<14x32xf32> -> vector<14x32xf32>
    %c1_280 = arith.constant 1 : index
    %c0_281 = arith.constant 0 : index
    %c0_282 = arith.constant 0 : index
    %486 = vector.load %arg18[%c1_280, %c0_281, %c0_282] : memref<2x32x32xf32, #tpu.memory_space<vmem>>, vector<1x32x32xf32>
    %487 = vector.shape_cast %486 : vector<1x32x32xf32> to vector<32x32xf32>
    %cst_283 = arith.constant dense<0.000000e+00> : vector<14x32xf32>
    %488 = tpu.matmul %485, %487, %cst_283 {dimension_numbers = #tpu.dot_dimension_numbers<[1], [0], [0], [1], [0, 0, 1, 1], [], []>} : vector<14x32xf32>, vector<32x32xf32>, vector<14x32xf32> -> vector<14x32xf32>
    %489 = arith.addf %411, %488 : vector<14x32xf32>
    %c1_284 = arith.constant 1 : index
    %c0_285 = arith.constant 0 : index
    %c0_286 = arith.constant 0 : index
    %490 = vector.load %arg19[%c1_284, %c0_285, %c0_286] : memref<2x1x32xf32, #tpu.memory_space<vmem>>, vector<1x1x32xf32>
    %491 = vector.shape_cast %490 : vector<1x1x32xf32> to vector<1x32xf32>
    %492 = vector.broadcast %491 : vector<1x32xf32> to vector<14x32xf32>
    %493 = arith.addf %489, %492 : vector<14x32xf32>
    %c1_287 = arith.constant 1 : index
    %c0_288 = arith.constant 0 : index
    %c0_289 = arith.constant 0 : index
    %494 = vector.load %arg20[%c1_287, %c0_288, %c0_289] : memref<2x1x32xf32, #tpu.memory_space<vmem>>, vector<1x1x32xf32>
    %495 = vector.shape_cast %494 : vector<1x1x32xf32> to vector<1x32xf32>
    %c1_290 = arith.constant 1 : index
    %c0_291 = arith.constant 0 : index
    %c0_292 = arith.constant 0 : index
    %496 = vector.load %arg21[%c1_290, %c0_291, %c0_292] : memref<2x1x32xf32, #tpu.memory_space<vmem>>, vector<1x1x32xf32>
    %497 = vector.shape_cast %496 : vector<1x1x32xf32> to vector<1x32xf32>
    %cst_293 = arith.constant dense<0.000000e+00> : vector<14xf32>
    %498 = vector.multi_reduction <add>, %493, %cst_293 [1] : vector<14x32xf32> to vector<14xf32>
    %499 = vector.shape_cast %498 : vector<14xf32> to vector<14x1xf32>
    %cst_294 = arith.constant 3.200000e+01 : f32
    %500 = vector.broadcast %cst_294 : f32 to vector<14x1xf32>
    %501 = arith.divf %499, %500 : vector<14x1xf32>
    %502 = vector.broadcast %501 : vector<14x1xf32> to vector<14x32xf32>
    %503 = arith.subf %493, %502 : vector<14x32xf32>
    %504 = arith.mulf %503, %503 : vector<14x32xf32>
    %cst_295 = arith.constant dense<0.000000e+00> : vector<14xf32>
    %505 = vector.multi_reduction <add>, %504, %cst_295 [1] : vector<14x32xf32> to vector<14xf32>
    %506 = vector.shape_cast %505 : vector<14xf32> to vector<14x1xf32>
    %cst_296 = arith.constant 3.200000e+01 : f32
    %507 = vector.broadcast %cst_296 : f32 to vector<14x1xf32>
    %508 = arith.divf %506, %507 : vector<14x1xf32>
    %509 = vector.broadcast %501 : vector<14x1xf32> to vector<14x32xf32>
    %510 = arith.subf %493, %509 : vector<14x32xf32>
    %cst_297 = arith.constant 9.99999974E-6 : f32
    %511 = vector.broadcast %cst_297 : f32 to vector<14x1xf32>
    %512 = arith.addf %508, %511 : vector<14x1xf32>
    %513 = math.rsqrt %512 : vector<14x1xf32>
    %514 = vector.broadcast %513 : vector<14x1xf32> to vector<14x32xf32>
    %515 = arith.mulf %510, %514 : vector<14x32xf32>
    %516 = vector.broadcast %495 : vector<1x32xf32> to vector<14x32xf32>
    %517 = arith.mulf %515, %516 : vector<14x32xf32>
    %518 = vector.broadcast %497 : vector<1x32xf32> to vector<14x32xf32>
    %519 = arith.addf %517, %518 : vector<14x32xf32>
    %c1_298 = arith.constant 1 : index
    %c0_299 = arith.constant 0 : index
    %c0_300 = arith.constant 0 : index
    %520 = vector.load %arg22[%c1_298, %c0_299, %c0_300] : memref<2x32x64xf32, #tpu.memory_space<vmem>>, vector<1x32x64xf32>
    %521 = vector.shape_cast %520 : vector<1x32x64xf32> to vector<32x64xf32>
    %cst_301 = arith.constant dense<0.000000e+00> : vector<14x64xf32>
    %522 = tpu.matmul %519, %521, %cst_301 {dimension_numbers = #tpu.dot_dimension_numbers<[1], [0], [0], [1], [0, 0, 1, 1], [], []>} : vector<14x32xf32>, vector<32x64xf32>, vector<14x64xf32> -> vector<14x64xf32>
    %c1_302 = arith.constant 1 : index
    %c0_303 = arith.constant 0 : index
    %c0_304 = arith.constant 0 : index
    %523 = vector.load %arg23[%c1_302, %c0_303, %c0_304] : memref<2x1x64xf32, #tpu.memory_space<vmem>>, vector<1x1x64xf32>
    %524 = vector.shape_cast %523 : vector<1x1x64xf32> to vector<1x64xf32>
    %525 = vector.broadcast %524 : vector<1x64xf32> to vector<14x64xf32>
    %526 = arith.addf %522, %525 : vector<14x64xf32>
    %527 = vector.extract_strided_slice %526 {offsets = [0, 0], sizes = [14, 32], strides = [1, 1]} : vector<14x64xf32> to vector<14x32xf32>
    %528 = vector.extract_strided_slice %526 {offsets = [0, 32], sizes = [14, 32], strides = [1, 1]} : vector<14x64xf32> to vector<14x32xf32>
    %cst_305 = arith.constant 0.000000e+00 : f32
    %529 = vector.broadcast %cst_305 : f32 to vector<14x32xf32>
    %530 = arith.subf %529, %528 : vector<14x32xf32>
    %531 = math.exp %530 : vector<14x32xf32>
    %cst_306 = arith.constant 1.000000e+00 : f32
    %532 = vector.broadcast %cst_306 : f32 to vector<14x32xf32>
    %533 = arith.addf %532, %531 : vector<14x32xf32>
    %cst_307 = arith.constant 1.000000e+00 : f32
    %534 = vector.broadcast %cst_307 : f32 to vector<14x32xf32>
    %535 = arith.divf %534, %533 : vector<14x32xf32>
    %536 = arith.mulf %527, %535 : vector<14x32xf32>
    %c1_308 = arith.constant 1 : index
    %c0_309 = arith.constant 0 : index
    %c0_310 = arith.constant 0 : index
    %537 = vector.load %arg24[%c1_308, %c0_309, %c0_310] : memref<2x7x32xf32, #tpu.memory_space<vmem>>, vector<1x7x32xf32>
    %538 = vector.shape_cast %537 : vector<1x7x32xf32> to vector<7x32xf32>
    %cst_311 = arith.constant 0.000000e+00 : f32
    %539 = vector.broadcast %cst_311 : f32 to vector<14x32xf32>
    %c0_312 = arith.constant 0 : index
    %c0_313 = arith.constant 0 : index
    %c0_314 = arith.constant 0 : index
    %540 = vector.load %arg44[%c0_312, %c0_313, %c0_314] : memref<7x14x14xf32, #tpu.memory_space<vmem>>, vector<1x14x14xf32>
    %541 = vector.shape_cast %540 : vector<1x14x14xf32> to vector<14x14xf32>
    %cst_315 = arith.constant dense<0.000000e+00> : vector<14x32xf32>
    %542 = tpu.matmul %541, %536, %cst_315 {dimension_numbers = #tpu.dot_dimension_numbers<[1], [0], [0], [1], [0, 0, 1, 1], [], []>} : vector<14x14xf32>, vector<14x32xf32>, vector<14x32xf32> -> vector<14x32xf32>
    %543 = vector.extract_strided_slice %538 {offsets = [0, 0], sizes = [1, 32], strides = [1, 1]} : vector<7x32xf32> to vector<1x32xf32>
    %544 = vector.broadcast %543 : vector<1x32xf32> to vector<14x32xf32>
    %545 = arith.mulf %542, %544 : vector<14x32xf32>
    %546 = arith.addf %539, %545 : vector<14x32xf32>
    %c1_316 = arith.constant 1 : index
    %c0_317 = arith.constant 0 : index
    %c0_318 = arith.constant 0 : index
    %547 = vector.load %arg44[%c1_316, %c0_317, %c0_318] : memref<7x14x14xf32, #tpu.memory_space<vmem>>, vector<1x14x14xf32>
    %548 = vector.shape_cast %547 : vector<1x14x14xf32> to vector<14x14xf32>
    %cst_319 = arith.constant dense<0.000000e+00> : vector<14x32xf32>
    %549 = tpu.matmul %548, %536, %cst_319 {dimension_numbers = #tpu.dot_dimension_numbers<[1], [0], [0], [1], [0, 0, 1, 1], [], []>} : vector<14x14xf32>, vector<14x32xf32>, vector<14x32xf32> -> vector<14x32xf32>
    %550 = vector.extract_strided_slice %538 {offsets = [1, 0], sizes = [1, 32], strides = [1, 1]} : vector<7x32xf32> to vector<1x32xf32>
    %551 = vector.broadcast %550 : vector<1x32xf32> to vector<14x32xf32>
    %552 = arith.mulf %549, %551 : vector<14x32xf32>
    %553 = arith.addf %546, %552 : vector<14x32xf32>
    %c2_320 = arith.constant 2 : index
    %c0_321 = arith.constant 0 : index
    %c0_322 = arith.constant 0 : index
    %554 = vector.load %arg44[%c2_320, %c0_321, %c0_322] : memref<7x14x14xf32, #tpu.memory_space<vmem>>, vector<1x14x14xf32>
    %555 = vector.shape_cast %554 : vector<1x14x14xf32> to vector<14x14xf32>
    %cst_323 = arith.constant dense<0.000000e+00> : vector<14x32xf32>
    %556 = tpu.matmul %555, %536, %cst_323 {dimension_numbers = #tpu.dot_dimension_numbers<[1], [0], [0], [1], [0, 0, 1, 1], [], []>} : vector<14x14xf32>, vector<14x32xf32>, vector<14x32xf32> -> vector<14x32xf32>
    %557 = vector.extract_strided_slice %538 {offsets = [2, 0], sizes = [1, 32], strides = [1, 1]} : vector<7x32xf32> to vector<1x32xf32>
    %558 = vector.broadcast %557 : vector<1x32xf32> to vector<14x32xf32>
    %559 = arith.mulf %556, %558 : vector<14x32xf32>
    %560 = arith.addf %553, %559 : vector<14x32xf32>
    %c3_324 = arith.constant 3 : index
    %c0_325 = arith.constant 0 : index
    %c0_326 = arith.constant 0 : index
    %561 = vector.load %arg44[%c3_324, %c0_325, %c0_326] : memref<7x14x14xf32, #tpu.memory_space<vmem>>, vector<1x14x14xf32>
    %562 = vector.shape_cast %561 : vector<1x14x14xf32> to vector<14x14xf32>
    %cst_327 = arith.constant dense<0.000000e+00> : vector<14x32xf32>
    %563 = tpu.matmul %562, %536, %cst_327 {dimension_numbers = #tpu.dot_dimension_numbers<[1], [0], [0], [1], [0, 0, 1, 1], [], []>} : vector<14x14xf32>, vector<14x32xf32>, vector<14x32xf32> -> vector<14x32xf32>
    %564 = vector.extract_strided_slice %538 {offsets = [3, 0], sizes = [1, 32], strides = [1, 1]} : vector<7x32xf32> to vector<1x32xf32>
    %565 = vector.broadcast %564 : vector<1x32xf32> to vector<14x32xf32>
    %566 = arith.mulf %563, %565 : vector<14x32xf32>
    %567 = arith.addf %560, %566 : vector<14x32xf32>
    %c4_328 = arith.constant 4 : index
    %c0_329 = arith.constant 0 : index
    %c0_330 = arith.constant 0 : index
    %568 = vector.load %arg44[%c4_328, %c0_329, %c0_330] : memref<7x14x14xf32, #tpu.memory_space<vmem>>, vector<1x14x14xf32>
    %569 = vector.shape_cast %568 : vector<1x14x14xf32> to vector<14x14xf32>
    %cst_331 = arith.constant dense<0.000000e+00> : vector<14x32xf32>
    %570 = tpu.matmul %569, %536, %cst_331 {dimension_numbers = #tpu.dot_dimension_numbers<[1], [0], [0], [1], [0, 0, 1, 1], [], []>} : vector<14x14xf32>, vector<14x32xf32>, vector<14x32xf32> -> vector<14x32xf32>
    %571 = vector.extract_strided_slice %538 {offsets = [4, 0], sizes = [1, 32], strides = [1, 1]} : vector<7x32xf32> to vector<1x32xf32>
    %572 = vector.broadcast %571 : vector<1x32xf32> to vector<14x32xf32>
    %573 = arith.mulf %570, %572 : vector<14x32xf32>
    %574 = arith.addf %567, %573 : vector<14x32xf32>
    %c5_332 = arith.constant 5 : index
    %c0_333 = arith.constant 0 : index
    %c0_334 = arith.constant 0 : index
    %575 = vector.load %arg44[%c5_332, %c0_333, %c0_334] : memref<7x14x14xf32, #tpu.memory_space<vmem>>, vector<1x14x14xf32>
    %576 = vector.shape_cast %575 : vector<1x14x14xf32> to vector<14x14xf32>
    %cst_335 = arith.constant dense<0.000000e+00> : vector<14x32xf32>
    %577 = tpu.matmul %576, %536, %cst_335 {dimension_numbers = #tpu.dot_dimension_numbers<[1], [0], [0], [1], [0, 0, 1, 1], [], []>} : vector<14x14xf32>, vector<14x32xf32>, vector<14x32xf32> -> vector<14x32xf32>
    %578 = vector.extract_strided_slice %538 {offsets = [5, 0], sizes = [1, 32], strides = [1, 1]} : vector<7x32xf32> to vector<1x32xf32>
    %579 = vector.broadcast %578 : vector<1x32xf32> to vector<14x32xf32>
    %580 = arith.mulf %577, %579 : vector<14x32xf32>
    %581 = arith.addf %574, %580 : vector<14x32xf32>
    %c6_336 = arith.constant 6 : index
    %c0_337 = arith.constant 0 : index
    %c0_338 = arith.constant 0 : index
    %582 = vector.load %arg44[%c6_336, %c0_337, %c0_338] : memref<7x14x14xf32, #tpu.memory_space<vmem>>, vector<1x14x14xf32>
    %583 = vector.shape_cast %582 : vector<1x14x14xf32> to vector<14x14xf32>
    %cst_339 = arith.constant dense<0.000000e+00> : vector<14x32xf32>
    %584 = tpu.matmul %583, %536, %cst_339 {dimension_numbers = #tpu.dot_dimension_numbers<[1], [0], [0], [1], [0, 0, 1, 1], [], []>} : vector<14x14xf32>, vector<14x32xf32>, vector<14x32xf32> -> vector<14x32xf32>
    %585 = vector.extract_strided_slice %538 {offsets = [6, 0], sizes = [1, 32], strides = [1, 1]} : vector<7x32xf32> to vector<1x32xf32>
    %586 = vector.broadcast %585 : vector<1x32xf32> to vector<14x32xf32>
    %587 = arith.mulf %584, %586 : vector<14x32xf32>
    %588 = arith.addf %581, %587 : vector<14x32xf32>
    %cst_340 = arith.constant dense<0.000000e+00> : vector<32xf32>
    %589 = vector.multi_reduction <add>, %588, %cst_340 [0] : vector<14x32xf32> to vector<32xf32>
    %590 = vector.shape_cast %589 : vector<32xf32> to vector<1x32xf32>
    %cst_341 = arith.constant 1.400000e+01 : f32
    %591 = vector.broadcast %cst_341 : f32 to vector<1x32xf32>
    %592 = arith.divf %590, %591 : vector<1x32xf32>
    %593 = vector.broadcast %592 : vector<1x32xf32> to vector<14x32xf32>
    %594 = arith.subf %588, %593 : vector<14x32xf32>
    %595 = arith.mulf %594, %594 : vector<14x32xf32>
    %cst_342 = arith.constant dense<0.000000e+00> : vector<32xf32>
    %596 = vector.multi_reduction <add>, %595, %cst_342 [0] : vector<14x32xf32> to vector<32xf32>
    %597 = vector.shape_cast %596 : vector<32xf32> to vector<1x32xf32>
    %cst_343 = arith.constant 1.400000e+01 : f32
    %598 = vector.broadcast %cst_343 : f32 to vector<1x32xf32>
    %599 = arith.divf %597, %598 : vector<1x32xf32>
    %600 = vector.broadcast %592 : vector<1x32xf32> to vector<14x32xf32>
    %601 = arith.subf %588, %600 : vector<14x32xf32>
    %cst_344 = arith.constant 9.99999974E-6 : f32
    %602 = vector.broadcast %cst_344 : f32 to vector<1x32xf32>
    %603 = arith.addf %599, %602 : vector<1x32xf32>
    %604 = math.rsqrt %603 : vector<1x32xf32>
    %605 = vector.broadcast %604 : vector<1x32xf32> to vector<14x32xf32>
    %606 = arith.mulf %601, %605 : vector<14x32xf32>
    %c1_345 = arith.constant 1 : index
    %c0_346 = arith.constant 0 : index
    %c0_347 = arith.constant 0 : index
    %607 = vector.load %arg25[%c1_345, %c0_346, %c0_347] : memref<2x1x32xf32, #tpu.memory_space<vmem>>, vector<1x1x32xf32>
    %608 = vector.shape_cast %607 : vector<1x1x32xf32> to vector<1x32xf32>
    %609 = vector.broadcast %608 : vector<1x32xf32> to vector<14x32xf32>
    %610 = arith.mulf %606, %609 : vector<14x32xf32>
    %c1_348 = arith.constant 1 : index
    %c0_349 = arith.constant 0 : index
    %c0_350 = arith.constant 0 : index
    %611 = vector.load %arg26[%c1_348, %c0_349, %c0_350] : memref<2x1x32xf32, #tpu.memory_space<vmem>>, vector<1x1x32xf32>
    %612 = vector.shape_cast %611 : vector<1x1x32xf32> to vector<1x32xf32>
    %613 = vector.broadcast %612 : vector<1x32xf32> to vector<14x32xf32>
    %614 = arith.addf %610, %613 : vector<14x32xf32>
    %cst_351 = arith.constant 0.000000e+00 : f32
    %615 = vector.broadcast %cst_351 : f32 to vector<14x32xf32>
    %616 = arith.subf %615, %614 : vector<14x32xf32>
    %617 = math.exp %616 : vector<14x32xf32>
    %cst_352 = arith.constant 1.000000e+00 : f32
    %618 = vector.broadcast %cst_352 : f32 to vector<14x32xf32>
    %619 = arith.addf %618, %617 : vector<14x32xf32>
    %cst_353 = arith.constant 1.000000e+00 : f32
    %620 = vector.broadcast %cst_353 : f32 to vector<14x32xf32>
    %621 = arith.divf %620, %619 : vector<14x32xf32>
    %622 = arith.mulf %614, %621 : vector<14x32xf32>
    %c1_354 = arith.constant 1 : index
    %c0_355 = arith.constant 0 : index
    %c0_356 = arith.constant 0 : index
    %623 = vector.load %arg27[%c1_354, %c0_355, %c0_356] : memref<2x32x32xf32, #tpu.memory_space<vmem>>, vector<1x32x32xf32>
    %624 = vector.shape_cast %623 : vector<1x32x32xf32> to vector<32x32xf32>
    %cst_357 = arith.constant dense<0.000000e+00> : vector<14x32xf32>
    %625 = tpu.matmul %622, %624, %cst_357 {dimension_numbers = #tpu.dot_dimension_numbers<[1], [0], [0], [1], [0, 0, 1, 1], [], []>} : vector<14x32xf32>, vector<32x32xf32>, vector<14x32xf32> -> vector<14x32xf32>
    %c1_358 = arith.constant 1 : index
    %c0_359 = arith.constant 0 : index
    %c0_360 = arith.constant 0 : index
    %626 = vector.load %arg28[%c1_358, %c0_359, %c0_360] : memref<2x1x32xf32, #tpu.memory_space<vmem>>, vector<1x1x32xf32>
    %627 = vector.shape_cast %626 : vector<1x1x32xf32> to vector<1x32xf32>
    %628 = vector.broadcast %627 : vector<1x32xf32> to vector<14x32xf32>
    %629 = arith.addf %625, %628 : vector<14x32xf32>
    %630 = arith.addf %493, %629 : vector<14x32xf32>
    %c1_361 = arith.constant 1 : index
    %c0_362 = arith.constant 0 : index
    %c0_363 = arith.constant 0 : index
    %631 = vector.load %arg29[%c1_361, %c0_362, %c0_363] : memref<2x1x32xf32, #tpu.memory_space<vmem>>, vector<1x1x32xf32>
    %632 = vector.shape_cast %631 : vector<1x1x32xf32> to vector<1x32xf32>
    %c1_364 = arith.constant 1 : index
    %c0_365 = arith.constant 0 : index
    %c0_366 = arith.constant 0 : index
    %633 = vector.load %arg30[%c1_364, %c0_365, %c0_366] : memref<2x1x32xf32, #tpu.memory_space<vmem>>, vector<1x1x32xf32>
    %634 = vector.shape_cast %633 : vector<1x1x32xf32> to vector<1x32xf32>
    %c1_367 = arith.constant 1 : index
    %c0_368 = arith.constant 0 : index
    %c0_369 = arith.constant 0 : index
    %635 = vector.load %arg31[%c1_367, %c0_368, %c0_369] : memref<2x32x128xf32, #tpu.memory_space<vmem>>, vector<1x32x128xf32>
    %636 = vector.shape_cast %635 : vector<1x32x128xf32> to vector<32x128xf32>
    %c1_370 = arith.constant 1 : index
    %c0_371 = arith.constant 0 : index
    %c0_372 = arith.constant 0 : index
    %637 = vector.load %arg32[%c1_370, %c0_371, %c0_372] : memref<2x1x128xf32, #tpu.memory_space<vmem>>, vector<1x1x128xf32>
    %638 = vector.shape_cast %637 : vector<1x1x128xf32> to vector<1x128xf32>
    %c1_373 = arith.constant 1 : index
    %c0_374 = arith.constant 0 : index
    %c0_375 = arith.constant 0 : index
    %639 = vector.load %arg33[%c1_373, %c0_374, %c0_375] : memref<2x128x32xf32, #tpu.memory_space<vmem>>, vector<1x128x32xf32>
    %640 = vector.shape_cast %639 : vector<1x128x32xf32> to vector<128x32xf32>
    %c1_376 = arith.constant 1 : index
    %c0_377 = arith.constant 0 : index
    %c0_378 = arith.constant 0 : index
    %641 = vector.load %arg34[%c1_376, %c0_377, %c0_378] : memref<2x1x32xf32, #tpu.memory_space<vmem>>, vector<1x1x32xf32>
    %642 = vector.shape_cast %641 : vector<1x1x32xf32> to vector<1x32xf32>
    %cst_379 = arith.constant dense<0.000000e+00> : vector<14xf32>
    %643 = vector.multi_reduction <add>, %630, %cst_379 [1] : vector<14x32xf32> to vector<14xf32>
    %644 = vector.shape_cast %643 : vector<14xf32> to vector<14x1xf32>
    %cst_380 = arith.constant 3.200000e+01 : f32
    %645 = vector.broadcast %cst_380 : f32 to vector<14x1xf32>
    %646 = arith.divf %644, %645 : vector<14x1xf32>
    %647 = vector.broadcast %646 : vector<14x1xf32> to vector<14x32xf32>
    %648 = arith.subf %630, %647 : vector<14x32xf32>
    %649 = arith.mulf %648, %648 : vector<14x32xf32>
    %cst_381 = arith.constant dense<0.000000e+00> : vector<14xf32>
    %650 = vector.multi_reduction <add>, %649, %cst_381 [1] : vector<14x32xf32> to vector<14xf32>
    %651 = vector.shape_cast %650 : vector<14xf32> to vector<14x1xf32>
    %cst_382 = arith.constant 3.200000e+01 : f32
    %652 = vector.broadcast %cst_382 : f32 to vector<14x1xf32>
    %653 = arith.divf %651, %652 : vector<14x1xf32>
    %654 = vector.broadcast %646 : vector<14x1xf32> to vector<14x32xf32>
    %655 = arith.subf %630, %654 : vector<14x32xf32>
    %cst_383 = arith.constant 9.99999974E-6 : f32
    %656 = vector.broadcast %cst_383 : f32 to vector<14x1xf32>
    %657 = arith.addf %653, %656 : vector<14x1xf32>
    %658 = math.rsqrt %657 : vector<14x1xf32>
    %659 = vector.broadcast %658 : vector<14x1xf32> to vector<14x32xf32>
    %660 = arith.mulf %655, %659 : vector<14x32xf32>
    %661 = vector.broadcast %632 : vector<1x32xf32> to vector<14x32xf32>
    %662 = arith.mulf %660, %661 : vector<14x32xf32>
    %663 = vector.broadcast %634 : vector<1x32xf32> to vector<14x32xf32>
    %664 = arith.addf %662, %663 : vector<14x32xf32>
    %cst_384 = arith.constant dense<0.000000e+00> : vector<14x128xf32>
    %665 = tpu.matmul %664, %636, %cst_384 {dimension_numbers = #tpu.dot_dimension_numbers<[1], [0], [0], [1], [0, 0, 1, 1], [], []>} : vector<14x32xf32>, vector<32x128xf32>, vector<14x128xf32> -> vector<14x128xf32>
    %666 = vector.broadcast %638 : vector<1x128xf32> to vector<14x128xf32>
    %667 = arith.addf %665, %666 : vector<14x128xf32>
    %cst_385 = arith.constant 0.000000e+00 : f32
    %668 = vector.broadcast %cst_385 : f32 to vector<14x128xf32>
    %669 = arith.subf %668, %667 : vector<14x128xf32>
    %670 = math.exp %669 : vector<14x128xf32>
    %cst_386 = arith.constant 1.000000e+00 : f32
    %671 = vector.broadcast %cst_386 : f32 to vector<14x128xf32>
    %672 = arith.addf %671, %670 : vector<14x128xf32>
    %cst_387 = arith.constant 1.000000e+00 : f32
    %673 = vector.broadcast %cst_387 : f32 to vector<14x128xf32>
    %674 = arith.divf %673, %672 : vector<14x128xf32>
    %675 = arith.mulf %667, %674 : vector<14x128xf32>
    %cst_388 = arith.constant dense<0.000000e+00> : vector<14x32xf32>
    %676 = tpu.matmul %675, %640, %cst_388 {dimension_numbers = #tpu.dot_dimension_numbers<[1], [0], [0], [1], [0, 0, 1, 1], [], []>} : vector<14x128xf32>, vector<128x32xf32>, vector<14x32xf32> -> vector<14x32xf32>
    %677 = vector.broadcast %642 : vector<1x32xf32> to vector<14x32xf32>
    %678 = arith.addf %676, %677 : vector<14x32xf32>
    %cst_389 = arith.constant 5.000000e-01 : f32
    %679 = vector.broadcast %cst_389 : f32 to vector<14x32xf32>
    %680 = arith.mulf %679, %678 : vector<14x32xf32>
    %681 = arith.addf %630, %680 : vector<14x32xf32>
    %c1_390 = arith.constant 1 : index
    %c0_391 = arith.constant 0 : index
    %c0_392 = arith.constant 0 : index
    %682 = vector.load %arg35[%c1_390, %c0_391, %c0_392] : memref<2x1x32xf32, #tpu.memory_space<vmem>>, vector<1x1x32xf32>
    %683 = vector.shape_cast %682 : vector<1x1x32xf32> to vector<1x32xf32>
    %c1_393 = arith.constant 1 : index
    %c0_394 = arith.constant 0 : index
    %c0_395 = arith.constant 0 : index
    %684 = vector.load %arg36[%c1_393, %c0_394, %c0_395] : memref<2x1x32xf32, #tpu.memory_space<vmem>>, vector<1x1x32xf32>
    %685 = vector.shape_cast %684 : vector<1x1x32xf32> to vector<1x32xf32>
    %cst_396 = arith.constant dense<0.000000e+00> : vector<14xf32>
    %686 = vector.multi_reduction <add>, %681, %cst_396 [1] : vector<14x32xf32> to vector<14xf32>
    %687 = vector.shape_cast %686 : vector<14xf32> to vector<14x1xf32>
    %cst_397 = arith.constant 3.200000e+01 : f32
    %688 = vector.broadcast %cst_397 : f32 to vector<14x1xf32>
    %689 = arith.divf %687, %688 : vector<14x1xf32>
    %690 = vector.broadcast %689 : vector<14x1xf32> to vector<14x32xf32>
    %691 = arith.subf %681, %690 : vector<14x32xf32>
    %692 = arith.mulf %691, %691 : vector<14x32xf32>
    %cst_398 = arith.constant dense<0.000000e+00> : vector<14xf32>
    %693 = vector.multi_reduction <add>, %692, %cst_398 [1] : vector<14x32xf32> to vector<14xf32>
    %694 = vector.shape_cast %693 : vector<14xf32> to vector<14x1xf32>
    %cst_399 = arith.constant 3.200000e+01 : f32
    %695 = vector.broadcast %cst_399 : f32 to vector<14x1xf32>
    %696 = arith.divf %694, %695 : vector<14x1xf32>
    %697 = vector.broadcast %689 : vector<14x1xf32> to vector<14x32xf32>
    %698 = arith.subf %681, %697 : vector<14x32xf32>
    %cst_400 = arith.constant 9.99999974E-6 : f32
    %699 = vector.broadcast %cst_400 : f32 to vector<14x1xf32>
    %700 = arith.addf %696, %699 : vector<14x1xf32>
    %701 = math.rsqrt %700 : vector<14x1xf32>
    %702 = vector.broadcast %701 : vector<14x1xf32> to vector<14x32xf32>
    %703 = arith.mulf %698, %702 : vector<14x32xf32>
    %704 = vector.broadcast %683 : vector<1x32xf32> to vector<14x32xf32>
    %705 = arith.mulf %703, %704 : vector<14x32xf32>
    %706 = vector.broadcast %685 : vector<1x32xf32> to vector<14x32xf32>
    %707 = arith.addf %705, %706 : vector<14x32xf32>
    %c0_401 = arith.constant 0 : index
    %c0_402 = arith.constant 0 : index
    %708 = vector.load %arg46[%c0_401, %c0_402] : memref<14x32xf32, #tpu.memory_space<vmem>>, vector<14x32xf32>
    tpu.vector_store %arg46[%c0_401, %c0_402], %707 {strides = array<i32>} : memref<14x32xf32, #tpu.memory_space<vmem>>, vector<14x32xf32>,
    %c0_403 = arith.constant 0 : index
    %c0_404 = arith.constant 0 : index
    %709 = vector.load %arg45[%c0_403, %c0_404] : memref<32x10xf32, #tpu.memory_space<vmem>>, vector<32x10xf32>
    %cst_405 = arith.constant dense<0.000000e+00> : vector<14x10xf32>
    %710 = tpu.matmul %707, %709, %cst_405 {dimension_numbers = #tpu.dot_dimension_numbers<[1], [0], [0], [1], [0, 0, 1, 1], [], []>} : vector<14x32xf32>, vector<32x10xf32>, vector<14x10xf32> -> vector<14x10xf32>
    %c0_406 = arith.constant 0 : index
    %c0_407 = arith.constant 0 : index
    %711 = vector.load %arg47[%c0_406, %c0_407] : memref<14x10xf32, #tpu.memory_space<vmem>>, vector<14x10xf32>
    tpu.vector_store %arg47[%c0_406, %c0_407], %710 {strides = array<i32>} : memref<14x10xf32, #tpu.memory_space<vmem>>, vector<14x10xf32>,
    %cst_408 = arith.constant dense<0xFF800000> : vector<14xf32>
    %712 = vector.multi_reduction <maximumf>, %710, %cst_408 [1] : vector<14x10xf32> to vector<14xf32>
    %713 = vector.shape_cast %712 : vector<14xf32> to vector<14x1xf32>
    %714 = vector.broadcast %713 : vector<14x1xf32> to vector<14x10xf32>
    %715 = arith.subf %710, %714 : vector<14x10xf32>
    %716 = math.exp %715 : vector<14x10xf32>
    %cst_409 = arith.constant dense<0.000000e+00> : vector<14xf32>
    %717 = vector.multi_reduction <add>, %716, %cst_409 [1] : vector<14x10xf32> to vector<14xf32>
    %718 = vector.shape_cast %717 : vector<14xf32> to vector<14x1xf32>
    %719 = vector.broadcast %713 : vector<14x1xf32> to vector<14x10xf32>
    %720 = arith.subf %710, %719 : vector<14x10xf32>
    %721 = math.log %718 : vector<14x1xf32>
    %722 = vector.broadcast %721 : vector<14x1xf32> to vector<14x10xf32>
    %723 = arith.subf %720, %722 : vector<14x10xf32>
    %c0_410 = arith.constant 0 : index
    %c0_411 = arith.constant 0 : index
    %724 = vector.load %arg48[%c0_410, %c0_411] : memref<14x10xf32, #tpu.memory_space<vmem>>, vector<14x10xf32>
    tpu.vector_store %arg48[%c0_410, %c0_411], %723 {strides = array<i32>} : memref<14x10xf32, #tpu.memory_space<vmem>>, vector<14x10xf32>,
    return
  }
  func.func @transform_0(%arg0: i32) -> (i32, i32) {
    %c0_i32 = arith.constant 0 : i32
    %c0_i32_0 = arith.constant 0 : i32
    %c0_i32_1 = arith.constant 0 : i32
    return %c0_i32, %c0_i32_0 : i32, i32
  }
  func.func @transform_1(%arg0: i32) -> (i32, i32) {
    %c0_i32 = arith.constant 0 : i32
    %c0_i32_0 = arith.constant 0 : i32
    %c0_i32_1 = arith.constant 0 : i32
    return %c0_i32, %c0_i32_0 : i32, i32
  }
  func.func @transform_2(%arg0: i32) -> (i32, i32) {
    %c0_i32 = arith.constant 0 : i32
    %c0_i32_0 = arith.constant 0 : i32
    %c0_i32_1 = arith.constant 0 : i32
    return %c0_i32, %c0_i32_0 : i32, i32
  }
  func.func @transform_3(%arg0: i32) -> (i32, i32) {
    %c0_i32 = arith.constant 0 : i32
    %c0_i32_0 = arith.constant 0 : i32
    %c0_i32_1 = arith.constant 0 : i32
    return %c0_i32, %c0_i32_0 : i32, i32
  }
  func.func @transform_4(%arg0: i32) -> (i32, i32, i32) {
    %c0_i32 = arith.constant 0 : i32
    %c0_i32_0 = arith.constant 0 : i32
    %c0_i32_1 = arith.constant 0 : i32
    %c0_i32_2 = arith.constant 0 : i32
    return %c0_i32, %c0_i32_0, %c0_i32_1 : i32, i32, i32
  }
  func.func @transform_5(%arg0: i32) -> (i32, i32, i32) {
    %c0_i32 = arith.constant 0 : i32
    %c0_i32_0 = arith.constant 0 : i32
    %c0_i32_1 = arith.constant 0 : i32
    %c0_i32_2 = arith.constant 0 : i32
    return %c0_i32, %c0_i32_0, %c0_i32_1 : i32, i32, i32
  }
  func.func @transform_6(%arg0: i32) -> (i32, i32, i32) {
    %c0_i32 = arith.constant 0 : i32
    %c0_i32_0 = arith.constant 0 : i32
    %c0_i32_1 = arith.constant 0 : i32
    %c0_i32_2 = arith.constant 0 : i32
    return %c0_i32, %c0_i32_0, %c0_i32_1 : i32, i32, i32
  }
  func.func @transform_7(%arg0: i32) -> (i32, i32, i32) {
    %c0_i32 = arith.constant 0 : i32
    %c0_i32_0 = arith.constant 0 : i32
    %c0_i32_1 = arith.constant 0 : i32
    %c0_i32_2 = arith.constant 0 : i32
    return %c0_i32, %c0_i32_0, %c0_i32_1 : i32, i32, i32
  }
  func.func @transform_8(%arg0: i32) -> (i32, i32, i32) {
    %c0_i32 = arith.constant 0 : i32
    %c0_i32_0 = arith.constant 0 : i32
    %c0_i32_1 = arith.constant 0 : i32
    %c0_i32_2 = arith.constant 0 : i32
    return %c0_i32, %c0_i32_0, %c0_i32_1 : i32, i32, i32
  }
  func.func @transform_9(%arg0: i32) -> (i32, i32, i32) {
    %c0_i32 = arith.constant 0 : i32
    %c0_i32_0 = arith.constant 0 : i32
    %c0_i32_1 = arith.constant 0 : i32
    %c0_i32_2 = arith.constant 0 : i32
    return %c0_i32, %c0_i32_0, %c0_i32_1 : i32, i32, i32
  }
  func.func @transform_10(%arg0: i32) -> (i32, i32, i32) {
    %c0_i32 = arith.constant 0 : i32
    %c0_i32_0 = arith.constant 0 : i32
    %c0_i32_1 = arith.constant 0 : i32
    %c0_i32_2 = arith.constant 0 : i32
    return %c0_i32, %c0_i32_0, %c0_i32_1 : i32, i32, i32
  }
  func.func @transform_11(%arg0: i32) -> (i32, i32, i32) {
    %c0_i32 = arith.constant 0 : i32
    %c0_i32_0 = arith.constant 0 : i32
    %c0_i32_1 = arith.constant 0 : i32
    %c0_i32_2 = arith.constant 0 : i32
    return %c0_i32, %c0_i32_0, %c0_i32_1 : i32, i32, i32
  }
  func.func @transform_12(%arg0: i32) -> (i32, i32, i32) {
    %c0_i32 = arith.constant 0 : i32
    %c0_i32_0 = arith.constant 0 : i32
    %c0_i32_1 = arith.constant 0 : i32
    %c0_i32_2 = arith.constant 0 : i32
    return %c0_i32, %c0_i32_0, %c0_i32_1 : i32, i32, i32
  }
  func.func @transform_13(%arg0: i32) -> (i32, i32, i32) {
    %c0_i32 = arith.constant 0 : i32
    %c0_i32_0 = arith.constant 0 : i32
    %c0_i32_1 = arith.constant 0 : i32
    %c0_i32_2 = arith.constant 0 : i32
    return %c0_i32, %c0_i32_0, %c0_i32_1 : i32, i32, i32
  }
  func.func @transform_14(%arg0: i32) -> (i32, i32, i32) {
    %c0_i32 = arith.constant 0 : i32
    %c0_i32_0 = arith.constant 0 : i32
    %c0_i32_1 = arith.constant 0 : i32
    %c0_i32_2 = arith.constant 0 : i32
    return %c0_i32, %c0_i32_0, %c0_i32_1 : i32, i32, i32
  }
  func.func @transform_15(%arg0: i32) -> (i32, i32, i32) {
    %c0_i32 = arith.constant 0 : i32
    %c0_i32_0 = arith.constant 0 : i32
    %c0_i32_1 = arith.constant 0 : i32
    %c0_i32_2 = arith.constant 0 : i32
    return %c0_i32, %c0_i32_0, %c0_i32_1 : i32, i32, i32
  }
  func.func @transform_16(%arg0: i32) -> (i32, i32, i32) {
    %c0_i32 = arith.constant 0 : i32
    %c0_i32_0 = arith.constant 0 : i32
    %c0_i32_1 = arith.constant 0 : i32
    %c0_i32_2 = arith.constant 0 : i32
    return %c0_i32, %c0_i32_0, %c0_i32_1 : i32, i32, i32
  }
  func.func @transform_17(%arg0: i32) -> (i32, i32, i32) {
    %c0_i32 = arith.constant 0 : i32
    %c0_i32_0 = arith.constant 0 : i32
    %c0_i32_1 = arith.constant 0 : i32
    %c0_i32_2 = arith.constant 0 : i32
    return %c0_i32, %c0_i32_0, %c0_i32_1 : i32, i32, i32
  }
  func.func @transform_18(%arg0: i32) -> (i32, i32, i32) {
    %c0_i32 = arith.constant 0 : i32
    %c0_i32_0 = arith.constant 0 : i32
    %c0_i32_1 = arith.constant 0 : i32
    %c0_i32_2 = arith.constant 0 : i32
    return %c0_i32, %c0_i32_0, %c0_i32_1 : i32, i32, i32
  }
  func.func @transform_19(%arg0: i32) -> (i32, i32, i32) {
    %c0_i32 = arith.constant 0 : i32
    %c0_i32_0 = arith.constant 0 : i32
    %c0_i32_1 = arith.constant 0 : i32
    %c0_i32_2 = arith.constant 0 : i32
    return %c0_i32, %c0_i32_0, %c0_i32_1 : i32, i32, i32
  }
  func.func @transform_20(%arg0: i32) -> (i32, i32, i32) {
    %c0_i32 = arith.constant 0 : i32
    %c0_i32_0 = arith.constant 0 : i32
    %c0_i32_1 = arith.constant 0 : i32
    %c0_i32_2 = arith.constant 0 : i32
    return %c0_i32, %c0_i32_0, %c0_i32_1 : i32, i32, i32
  }
  func.func @transform_21(%arg0: i32) -> (i32, i32, i32) {
    %c0_i32 = arith.constant 0 : i32
    %c0_i32_0 = arith.constant 0 : i32
    %c0_i32_1 = arith.constant 0 : i32
    %c0_i32_2 = arith.constant 0 : i32
    return %c0_i32, %c0_i32_0, %c0_i32_1 : i32, i32, i32
  }
  func.func @transform_22(%arg0: i32) -> (i32, i32, i32) {
    %c0_i32 = arith.constant 0 : i32
    %c0_i32_0 = arith.constant 0 : i32
    %c0_i32_1 = arith.constant 0 : i32
    %c0_i32_2 = arith.constant 0 : i32
    return %c0_i32, %c0_i32_0, %c0_i32_1 : i32, i32, i32
  }
  func.func @transform_23(%arg0: i32) -> (i32, i32, i32) {
    %c0_i32 = arith.constant 0 : i32
    %c0_i32_0 = arith.constant 0 : i32
    %c0_i32_1 = arith.constant 0 : i32
    %c0_i32_2 = arith.constant 0 : i32
    return %c0_i32, %c0_i32_0, %c0_i32_1 : i32, i32, i32
  }
  func.func @transform_24(%arg0: i32) -> (i32, i32, i32) {
    %c0_i32 = arith.constant 0 : i32
    %c0_i32_0 = arith.constant 0 : i32
    %c0_i32_1 = arith.constant 0 : i32
    %c0_i32_2 = arith.constant 0 : i32
    return %c0_i32, %c0_i32_0, %c0_i32_1 : i32, i32, i32
  }
  func.func @transform_25(%arg0: i32) -> (i32, i32, i32) {
    %c0_i32 = arith.constant 0 : i32
    %c0_i32_0 = arith.constant 0 : i32
    %c0_i32_1 = arith.constant 0 : i32
    %c0_i32_2 = arith.constant 0 : i32
    return %c0_i32, %c0_i32_0, %c0_i32_1 : i32, i32, i32
  }
  func.func @transform_26(%arg0: i32) -> (i32, i32, i32) {
    %c0_i32 = arith.constant 0 : i32
    %c0_i32_0 = arith.constant 0 : i32
    %c0_i32_1 = arith.constant 0 : i32
    %c0_i32_2 = arith.constant 0 : i32
    return %c0_i32, %c0_i32_0, %c0_i32_1 : i32, i32, i32
  }
  func.func @transform_27(%arg0: i32) -> (i32, i32, i32) {
    %c0_i32 = arith.constant 0 : i32
    %c0_i32_0 = arith.constant 0 : i32
    %c0_i32_1 = arith.constant 0 : i32
    %c0_i32_2 = arith.constant 0 : i32
    return %c0_i32, %c0_i32_0, %c0_i32_1 : i32, i32, i32
  }
  func.func @transform_28(%arg0: i32) -> (i32, i32, i32) {
    %c0_i32 = arith.constant 0 : i32
    %c0_i32_0 = arith.constant 0 : i32
    %c0_i32_1 = arith.constant 0 : i32
    %c0_i32_2 = arith.constant 0 : i32
    return %c0_i32, %c0_i32_0, %c0_i32_1 : i32, i32, i32
  }
  func.func @transform_29(%arg0: i32) -> (i32, i32, i32) {
    %c0_i32 = arith.constant 0 : i32
    %c0_i32_0 = arith.constant 0 : i32
    %c0_i32_1 = arith.constant 0 : i32
    %c0_i32_2 = arith.constant 0 : i32
    return %c0_i32, %c0_i32_0, %c0_i32_1 : i32, i32, i32
  }
  func.func @transform_30(%arg0: i32) -> (i32, i32, i32) {
    %c0_i32 = arith.constant 0 : i32
    %c0_i32_0 = arith.constant 0 : i32
    %c0_i32_1 = arith.constant 0 : i32
    %c0_i32_2 = arith.constant 0 : i32
    return %c0_i32, %c0_i32_0, %c0_i32_1 : i32, i32, i32
  }
  func.func @transform_31(%arg0: i32) -> (i32, i32, i32) {
    %c0_i32 = arith.constant 0 : i32
    %c0_i32_0 = arith.constant 0 : i32
    %c0_i32_1 = arith.constant 0 : i32
    %c0_i32_2 = arith.constant 0 : i32
    return %c0_i32, %c0_i32_0, %c0_i32_1 : i32, i32, i32
  }
  func.func @transform_32(%arg0: i32) -> (i32, i32, i32) {
    %c0_i32 = arith.constant 0 : i32
    %c0_i32_0 = arith.constant 0 : i32
    %c0_i32_1 = arith.constant 0 : i32
    %c0_i32_2 = arith.constant 0 : i32
    return %c0_i32, %c0_i32_0, %c0_i32_1 : i32, i32, i32
  }
  func.func @transform_33(%arg0: i32) -> (i32, i32, i32) {
    %c0_i32 = arith.constant 0 : i32
    %c0_i32_0 = arith.constant 0 : i32
    %c0_i32_1 = arith.constant 0 : i32
    %c0_i32_2 = arith.constant 0 : i32
    return %c0_i32, %c0_i32_0, %c0_i32_1 : i32, i32, i32
  }
  func.func @transform_34(%arg0: i32) -> (i32, i32, i32) {
    %c0_i32 = arith.constant 0 : i32
    %c0_i32_0 = arith.constant 0 : i32
    %c0_i32_1 = arith.constant 0 : i32
    %c0_i32_2 = arith.constant 0 : i32
    return %c0_i32, %c0_i32_0, %c0_i32_1 : i32, i32, i32
  }
  func.func @transform_35(%arg0: i32) -> (i32, i32, i32) {
    %c0_i32 = arith.constant 0 : i32
    %c0_i32_0 = arith.constant 0 : i32
    %c0_i32_1 = arith.constant 0 : i32
    %c0_i32_2 = arith.constant 0 : i32
    return %c0_i32, %c0_i32_0, %c0_i32_1 : i32, i32, i32
  }
  func.func @transform_36(%arg0: i32) -> (i32, i32) {
    %c0_i32 = arith.constant 0 : i32
    %c0_i32_0 = arith.constant 0 : i32
    %c0_i32_1 = arith.constant 0 : i32
    return %c0_i32, %c0_i32_0 : i32, i32
  }
  func.func @transform_37(%arg0: i32) -> (i32, i32) {
    %c0_i32 = arith.constant 0 : i32
    %c0_i32_0 = arith.constant 0 : i32
    %c0_i32_1 = arith.constant 0 : i32
    return %c0_i32, %c0_i32_0 : i32, i32
  }
  func.func @transform_38(%arg0: i32) -> (i32, i32) {
    %c0_i32 = arith.constant 0 : i32
    %c0_i32_0 = arith.constant 0 : i32
    %c0_i32_1 = arith.constant 0 : i32
    return %c0_i32, %c0_i32_0 : i32, i32
  }
  func.func @transform_39(%arg0: i32) -> (i32, i32) {
    %c0_i32 = arith.constant 0 : i32
    %c0_i32_0 = arith.constant 0 : i32
    %c0_i32_1 = arith.constant 0 : i32
    return %c0_i32, %c0_i32_0 : i32, i32
  }
  func.func @transform_40(%arg0: i32) -> (i32, i32) {
    %c0_i32 = arith.constant 0 : i32
    %c0_i32_0 = arith.constant 0 : i32
    %c0_i32_1 = arith.constant 0 : i32
    return %c0_i32, %c0_i32_0 : i32, i32
  }
  func.func @transform_41(%arg0: i32) -> (i32, i32) {
    %c0_i32 = arith.constant 0 : i32
    %c0_i32_0 = arith.constant 0 : i32
    %c0_i32_1 = arith.constant 0 : i32
    return %c0_i32, %c0_i32_0 : i32, i32
  }
  func.func @transform_42(%arg0: i32) -> (i32, i32) {
    %c0_i32 = arith.constant 0 : i32
    %c0_i32_0 = arith.constant 0 : i32
    %c0_i32_1 = arith.constant 0 : i32
    return %c0_i32, %c0_i32_0 : i32, i32
  }
  func.func @transform_43(%arg0: i32) -> (i32, i32, i32) {
    %c0_i32 = arith.constant 0 : i32
    %c0_i32_0 = arith.constant 0 : i32
    %c0_i32_1 = arith.constant 0 : i32
    %c0_i32_2 = arith.constant 0 : i32
    return %c0_i32, %c0_i32_0, %c0_i32_1 : i32, i32, i32
  }
  func.func @transform_44(%arg0: i32) -> (i32, i32) {
    %c0_i32 = arith.constant 0 : i32
    %c0_i32_0 = arith.constant 0 : i32
    %c0_i32_1 = arith.constant 0 : i32
    return %c0_i32, %c0_i32_0 : i32, i32
  }
  func.func @transform_45(%arg0: i32) -> (i32, i32) {
    %c0_i32 = arith.constant 0 : i32
    %c0_i32_0 = arith.constant 0 : i32
    %c0_i32_1 = arith.constant 0 : i32
    return %c0_i32, %c0_i32_0 : i32, i32
  }
  func.func @transform_46(%arg0: i32) -> (i32, i32) {
    %c0_i32 = arith.constant 0 : i32
    %c0_i32_0 = arith.constant 0 : i32
    %c0_i32_1 = arith.constant 0 : i32
    return %c0_i32, %c0_i32_0 : i32, i32
  }
  func.func @transform_47(%arg0: i32) -> (i32, i32) {
    %c0_i32 = arith.constant 0 : i32
    %c0_i32_0 = arith.constant 0 : i32
    %c0_i32_1 = arith.constant 0 : i32
    return %c0_i32, %c0_i32_0 : i32, i32
  }
}

</mosaic_0001>

<llo_original>
// kernel: run.3
$region0: #{run.3}
  #allocation0 [shape = 'u32[]', space=smem, size = 0x4, offset = 0x4, fixed_abs, tag = 'smem constant byte address 0x4 - core index']
  #allocation1 [shape = 'u32[144,128]{1,0:T(1,128)}', space=vmem, size = 0x12000, scoped, tag = 'internal scratch']
  %s0 = inlined_call_operand.vmem [shape: f32[270,9], index: 0, kind: input, shape index: {}]
  %s1 = inlined_call_operand.vmem [shape: f32[9,32], index: 1, kind: input, shape index: {}]
  %s2 = inlined_call_operand.vmem [shape: f32[1,32], index: 2, kind: input, shape index: {}]
  %s3 = inlined_call_operand.vmem [shape: f32[270,32], index: 3, kind: output, shape index: {}]
  %s4 = sld [smem:[#allocation0]]
  $region22: #{run.3} parent=0
    _
  %s6 = ssub.s32 1, %s4
  %s7 = scalar_select 0, %s6, %s4
  // Predicated region
  $region2: #{run.3} parent=0 // pred_check
    _
  $region3: #{run.3} parent=0 // pred_check_branch
    %9 = sbr.rel (0) target = $region5
  $region4: #{run.3} parent=0 // pred_region
    _
  $region5: #{run.3} parent=0 // pred_fallthru
    _
  // Predicated region
  $region6: #{run.3} parent=0 // pred_check
    _
  $region7: #{run.3} parent=0 // pred_check_branch
    %11 = sbr.rel (0) target = $region9
  $region8: #{run.3} parent=0 // pred_region
    _
  $region9: #{run.3} parent=0 // pred_fallthru
    _
  // Predicated region
  $region10: #{run.3} parent=0 // pred_check
    _
  $region11: #{run.3} parent=0 // pred_check_branch
    %13 = sbr.rel (0) target = $region13
  $region12: #{run.3} parent=0 // pred_region
    _
  $region13: #{run.3} parent=0 // pred_fallthru
    _
  %v14 = vld [vmem:[%s0] sm:$0xff]
  %v15 = vld [vmem:[%s0 + $0x8] sm:$0xff]
  %v16 = vld [vmem:[%s0 + $0x10] sm:$0xff]
  %v17 = vld [vmem:[%s0 + $0x18] sm:$0xff]
  %v18 = vld [vmem:[%s0 + $0x20] sm:$0xff]
  %v19 = vld [vmem:[%s0 + $0x28] sm:$0xff]
  %v20 = vld [vmem:[%s0 + $0x30] sm:$0xff]
  %v21 = vld [vmem:[%s0 + $0x38] sm:$0xff]
  %v22 = vld [vmem:[%s0 + $0x40] sm:$0xff]
  %v23 = vld [vmem:[%s0 + $0x48] sm:$0xff]
  %v24 = vld [vmem:[%s0 + $0x50] sm:$0xff]
  %v25 = vld [vmem:[%s0 + $0x58] sm:$0xff]
  %v26 = vld [vmem:[%s0 + $0x60] sm:$0xff]
  %v27 = vld [vmem:[%s0 + $0x68] sm:$0xff]
  %v28 = vld [vmem:[%s0 + $0x70] sm:$0xff]
  %v29 = vld [vmem:[%s0 + $0x78] sm:$0xff]
  %v30 = vld [vmem:[%s0 + $0x80] sm:$0xff]
  %v31 = vld [vmem:[%s0 + $0x88] sm:$0xff]
  %v32 = vld [vmem:[%s0 + $0x90] sm:$0xff]
  %v33 = vld [vmem:[%s0 + $0x98] sm:$0xff]
  %v34 = vld [vmem:[%s0 + $0xa0] sm:$0xff]
  %v35 = vld [vmem:[%s0 + $0xa8] sm:$0xff]
  %v36 = vld [vmem:[%s0 + $0xb0] sm:$0xff]
  %v37 = vld [vmem:[%s0 + $0xb8] sm:$0xff]
  %v38 = vld [vmem:[%s0 + $0xc0] sm:$0xff]
  %v39 = vld [vmem:[%s0 + $0xc8] sm:$0xff]
  %v40 = vld [vmem:[%s0 + $0xd0] sm:$0xff]
  %v41 = vld [vmem:[%s0 + $0xd8] sm:$0xff]
  %v42 = vld [vmem:[%s0 + $0xe0] sm:$0xff]
  %v43 = vld [vmem:[%s0 + $0xe8] sm:$0xff]
  %v44 = vld [vmem:[%s0 + $0xf0] sm:$0xff]
  %v45 = vld [vmem:[%s0 + $0xf8] sm:$0xff]
  %v46 = vld [vmem:[%s0 + $0x100] sm:$0xff]
  %v47 = vld [vmem:[%s0 + $0x108] sm:$0x3f]
  %v48 = vld [vmem:[%s1] sm:$0xff]
  %v49 = vld [vmem:[%s1 + $0x8] sm:$0x1]
  %v50 = vld [vmem:[%s2] sm:$0x1]
  %v52 = vlaneseq
  %v53 = vshrl.u32 %v52, 7
  %v54 = vsub.s32 0, %v53
  %v55 = vrot.slane %v50, %v54
  %vm57 = vcmask 72704
  %v59 = vsel %vm57, %v14, 0
  %v62 = vsel %vm57, %v15, 0
  %v65 = vsel %vm57, %v16, 0
  %v68 = vsel %vm57, %v17, 0
  %v71 = vsel %vm57, %v18, 0
  %v74 = vsel %vm57, %v19, 0
  %v77 = vsel %vm57, %v20, 0
  %v80 = vsel %vm57, %v21, 0
  %v83 = vsel %vm57, %v22, 0
  %v86 = vsel %vm57, %v23, 0
  %v89 = vsel %vm57, %v24, 0
  %v92 = vsel %vm57, %v25, 0
  %v95 = vsel %vm57, %v26, 0
  %v98 = vsel %vm57, %v27, 0
  %v101 = vsel %vm57, %v28, 0
  %v104 = vsel %vm57, %v29, 0
  %v107 = vsel %vm57, %v30, 0
  %v110 = vsel %vm57, %v31, 0
  %v113 = vsel %vm57, %v32, 0
  %v116 = vsel %vm57, %v33, 0
  %v119 = vsel %vm57, %v34, 0
  %v122 = vsel %vm57, %v35, 0
  %v125 = vsel %vm57, %v36, 0
  %v128 = vsel %vm57, %v37, 0
  %v131 = vsel %vm57, %v38, 0
  %v134 = vsel %vm57, %v39, 0
  %v137 = vsel %vm57, %v40, 0
  %v140 = vsel %vm57, %v41, 0
  %v143 = vsel %vm57, %v42, 0
  %v146 = vsel %vm57, %v43, 0
  %v149 = vsel %vm57, %v44, 0
  %v152 = vsel %vm57, %v45, 0
  %v155 = vsel %vm57, %v46, 0
  %v158 = vsel %vm57, %v47, 0
  %vm160 = vcmask 1040384
  %v162 = vsel %vm160, %v49, 0
  %164 = vmatprep.subr.mxu0 0.0
  %165 = vmatpush1.msra.mxu0 0.0
  %166 = vmatprep.subr.mxu0 0.0
  %167 = vmatpush1.msra.mxu0 0.0
  %168 = vmatprep.subr.mxu0 0.0
  %169 = vmatpush1.msra.mxu0 0.0
  %170 = vmatprep.subr.mxu0 0.0
  %171 = vmatpush1.msra.mxu0 0.0
  %172 = vmatprep.subr.mxu0 0.0
  %173 = vmatpush1.msra.mxu0 0.0
  %174 = vmatprep.subr.mxu0 0.0
  %175 = vmatpush1.msra.mxu0 0.0
  %176 = vmatprep.subr.mxu0 0.0
  %177 = vmatpush1.msra.mxu0 0.0
  %178 = vmatprep.subr.mxu0 0.0
  %179 = vmatpush1.msra.mxu0 0.0
  %180 = vmatprep.subr.mxu0 0.0
  %181 = vmatpush1.msra.mxu0 0.0
  %182 = vmatprep.subr.mxu0 0.0
  %183 = vmatpush1.msra.mxu0 0.0
  %184 = vmatprep.subr.mxu0 0.0
  %185 = vmatpush1.msra.mxu0 0.0
  %186 = vmatprep.subr.mxu0 0.0
  %187 = vmatpush1.msra.mxu0 0.0
  %188 = vmatprep.subr.mxu0 0.0
  %189 = vmatpush1.msra.mxu0 0.0
  %190 = vmatprep.subr.mxu0 0.0
  %191 = vmatpush1.msra.mxu0 0.0
  %192 = vmatprep.subr.mxu0 0.0
  %193 = vmatpush1.msra.mxu0 %v162
  %194 = vmatprep.subr.mxu0 0.0
  %195 = vmatpush1.msra.mxu0 %v48
  %196 = vmatprep.subr.mxu0 0.0
  %197 = vmatpush2.msra.mxu0 0.0
  %198 = vmatprep.subr.mxu0 0.0
  %199 = vmatpush2.msra.mxu0 0.0
  %200 = vmatprep.subr.mxu0 0.0
  %201 = vmatpush2.msra.mxu0 0.0
  %202 = vmatprep.subr.mxu0 0.0
  %203 = vmatpush2.msra.mxu0 0.0
  %204 = vmatprep.subr.mxu0 0.0
  %205 = vmatpush2.msra.mxu0 0.0
  %206 = vmatprep.subr.mxu0 0.0
  %207 = vmatpush2.msra.mxu0 0.0
  %208 = vmatprep.subr.mxu0 0.0
  %209 = vmatpush2.msra.mxu0 0.0
  %210 = vmatprep.subr.mxu0 0.0
  %211 = vmatpush2.msra.mxu0 0.0
  %212 = vmatprep.subr.mxu0 0.0
  %213 = vmatpush2.msra.mxu0 0.0
  %214 = vmatprep.subr.mxu0 0.0
  %215 = vmatpush2.msra.mxu0 0.0
  %216 = vmatprep.subr.mxu0 0.0
  %217 = vmatpush2.msra.mxu0 0.0
  %218 = vmatprep.subr.mxu0 0.0
  %219 = vmatpush2.msra.mxu0 0.0
  %220 = vmatprep.subr.mxu0 0.0
  %221 = vmatpush2.msra.mxu0 0.0
  %222 = vmatprep.subr.mxu0 0.0
  %223 = vmatpush2.msra.mxu0 0.0
  %224 = vmatprep.subr.mxu0 0.0
  %225 = vmatpush2.msra.mxu0 0.0
  %226 = vmatprep.subr.mxu0 0.0
  %227 = vmatpush2.msra.mxu0 0.0
  %228 = vmatprep.mubr.f32.mxu0 0.0
  %229 = vmatmul.mubr.f32.gmra.mxu0 %v59
  %v230 = vpop.f32.mrf.mxu0
  %v231 = vadd.f32 %v55, %v230
  %v232 = vpop.f32.mrf.mxu0
  %233 = vmatprep.mubr.f32.mxu0 0.0
  %234 = vmatmul.mubr.f32.gmra.mxu0 %v62
  %v235 = vpop.f32.mrf.mxu0
  %v236 = vadd.f32 %v55, %v235
  %v237 = vpop.f32.mrf.mxu0
  %238 = vmatprep.mubr.f32.mxu0 0.0
  %239 = vmatmul.mubr.f32.gmra.mxu0 %v65
  %v240 = vpop.f32.mrf.mxu0
  %v241 = vadd.f32 %v55, %v240
  %v242 = vpop.f32.mrf.mxu0
  %243 = vmatprep.mubr.f32.mxu0 0.0
  %244 = vmatmul.mubr.f32.gmra.mxu0 %v68
  %v245 = vpop.f32.mrf.mxu0
  %v246 = vadd.f32 %v55, %v245
  %v247 = vpop.f32.mrf.mxu0
  %248 = vmatprep.mubr.f32.mxu0 0.0
  %249 = vmatmul.mubr.f32.gmra.mxu0 %v71
  %v250 = vpop.f32.mrf.mxu0
  %v251 = vadd.f32 %v55, %v250
  %v252 = vpop.f32.mrf.mxu0
  %253 = vmatprep.mubr.f32.mxu0 0.0
  %254 = vmatmul.mubr.f32.gmra.mxu0 %v74
  %v255 = vpop.f32.mrf.mxu0
  %v256 = vadd.f32 %v55, %v255
  %v257 = vpop.f32.mrf.mxu0
  %258 = vmatprep.mubr.f32.mxu0 0.0
  %259 = vmatmul.mubr.f32.gmra.mxu0 %v77
  %v260 = vpop.f32.mrf.mxu0
  %v261 = vadd.f32 %v55, %v260
  %v262 = vpop.f32.mrf.mxu0
  %263 = vmatprep.mubr.f32.mxu0 0.0
  %264 = vmatmul.mubr.f32.gmra.mxu0 %v80
  %v265 = vpop.f32.mrf.mxu0
  %v266 = vadd.f32 %v55, %v265
  %v267 = vpop.f32.mrf.mxu0
  %268 = vmatprep.mubr.f32.mxu0 0.0
  %269 = vmatmul.mubr.f32.gmra.mxu0 %v83
  %v270 = vpop.f32.mrf.mxu0
  %v271 = vadd.f32 %v55, %v270
  %v272 = vpop.f32.mrf.mxu0
  %273 = vmatprep.mubr.f32.mxu0 0.0
  %274 = vmatmul.mubr.f32.gmra.mxu0 %v86
  %v275 = vpop.f32.mrf.mxu0
  %v276 = vadd.f32 %v55, %v275
  %v277 = vpop.f32.mrf.mxu0
  %278 = vmatprep.mubr.f32.mxu0 0.0
  %279 = vmatmul.mubr.f32.gmra.mxu0 %v89
  %v280 = vpop.f32.mrf.mxu0
  %v281 = vadd.f32 %v55, %v280
  %v282 = vpop.f32.mrf.mxu0
  %283 = vmatprep.mubr.f32.mxu0 0.0
  %284 = vmatmul.mubr.f32.gmra.mxu0 %v92
  %v285 = vpop.f32.mrf.mxu0
  %v286 = vadd.f32 %v55, %v285
  %v287 = vpop.f32.mrf.mxu0
  %288 = vmatprep.mubr.f32.mxu0 0.0
  %289 = vmatmul.mubr.f32.gmra.mxu0 %v95
  %v290 = vpop.f32.mrf.mxu0
  %v291 = vadd.f32 %v55, %v290
  %v292 = vpop.f32.mrf.mxu0
  %293 = vmatprep.mubr.f32.mxu0 0.0
  %294 = vmatmul.mubr.f32.gmra.mxu0 %v98
  %v295 = vpop.f32.mrf.mxu0
  %v296 = vadd.f32 %v55, %v295
  %v297 = vpop.f32.mrf.mxu0
  %298 = vmatprep.mubr.f32.mxu0 0.0
  %299 = vmatmul.mubr.f32.gmra.mxu0 %v101
  %v300 = vpop.f32.mrf.mxu0
  %v301 = vadd.f32 %v55, %v300
  %v302 = vpop.f32.mrf.mxu0
  %303 = vmatprep.mubr.f32.mxu0 0.0
  %304 = vmatmul.mubr.f32.gmra.mxu0 %v104
  %v305 = vpop.f32.mrf.mxu0
  %v306 = vadd.f32 %v55, %v305
  %v307 = vpop.f32.mrf.mxu0
  %308 = vmatprep.mubr.f32.mxu0 0.0
  %309 = vmatmul.mubr.f32.gmra.mxu0 %v107
  %v310 = vpop.f32.mrf.mxu0
  %v311 = vadd.f32 %v55, %v310
  %v312 = vpop.f32.mrf.mxu0
  %313 = vmatprep.mubr.f32.mxu0 0.0
  %314 = vmatmul.mubr.f32.gmra.mxu0 %v110
  %v315 = vpop.f32.mrf.mxu0
  %v316 = vadd.f32 %v55, %v315
  %v317 = vpop.f32.mrf.mxu0
  %318 = vmatprep.mubr.f32.mxu0 0.0
  %319 = vmatmul.mubr.f32.gmra.mxu0 %v113
  %v320 = vpop.f32.mrf.mxu0
  %v321 = vadd.f32 %v55, %v320
  %v322 = vpop.f32.mrf.mxu0
  %323 = vmatprep.mubr.f32.mxu0 0.0
  %324 = vmatmul.mubr.f32.gmra.mxu0 %v116
  %v325 = vpop.f32.mrf.mxu0
  %v326 = vadd.f32 %v55, %v325
  %v327 = vpop.f32.mrf.mxu0
  %328 = vmatprep.mubr.f32.mxu0 0.0
  %329 = vmatmul.mubr.f32.gmra.mxu0 %v119
  %v330 = vpop.f32.mrf.mxu0
  %v331 = vadd.f32 %v55, %v330
  %v332 = vpop.f32.mrf.mxu0
  %333 = vmatprep.mubr.f32.mxu0 0.0
  %334 = vmatmul.mubr.f32.gmra.mxu0 %v122
  %v335 = vpop.f32.mrf.mxu0
  %v336 = vadd.f32 %v55, %v335
  %v337 = vpop.f32.mrf.mxu0
  %338 = vmatprep.mubr.f32.mxu0 0.0
  %339 = vmatmul.mubr.f32.gmra.mxu0 %v125
  %v340 = vpop.f32.mrf.mxu0
  %v341 = vadd.f32 %v55, %v340
  %v342 = vpop.f32.mrf.mxu0
  %343 = vmatprep.mubr.f32.mxu0 0.0
  %344 = vmatmul.mubr.f32.gmra.mxu0 %v128
  %v345 = vpop.f32.mrf.mxu0
  %v346 = vadd.f32 %v55, %v345
  %v347 = vpop.f32.mrf.mxu0
  %348 = vmatprep.mubr.f32.mxu0 0.0
  %349 = vmatmul.mubr.f32.gmra.mxu0 %v131
  %v350 = vpop.f32.mrf.mxu0
  %v351 = vadd.f32 %v55, %v350
  %v352 = vpop.f32.mrf.mxu0
  %353 = vmatprep.mubr.f32.mxu0 0.0
  %354 = vmatmul.mubr.f32.gmra.mxu0 %v134
  %v355 = vpop.f32.mrf.mxu0
  %v356 = vadd.f32 %v55, %v355
  %v357 = vpop.f32.mrf.mxu0
  %358 = vmatprep.mubr.f32.mxu0 0.0
  %359 = vmatmul.mubr.f32.gmra.mxu0 %v137
  %v360 = vpop.f32.mrf.mxu0
  %v361 = vadd.f32 %v55, %v360
  %v362 = vpop.f32.mrf.mxu0
  %363 = vmatprep.mubr.f32.mxu0 0.0
  %364 = vmatmul.mubr.f32.gmra.mxu0 %v140
  %v365 = vpop.f32.mrf.mxu0
  %v366 = vadd.f32 %v55, %v365
  %v367 = vpop.f32.mrf.mxu0
  %368 = vmatprep.mubr.f32.mxu0 0.0
  %369 = vmatmul.mubr.f32.gmra.mxu0 %v143
  %v370 = vpop.f32.mrf.mxu0
  %v371 = vadd.f32 %v55, %v370
  %v372 = vpop.f32.mrf.mxu0
  %373 = vmatprep.mubr.f32.mxu0 0.0
  %374 = vmatmul.mubr.f32.gmra.mxu0 %v146
  %v375 = vpop.f32.mrf.mxu0
  %v376 = vadd.f32 %v55, %v375
  %v377 = vpop.f32.mrf.mxu0
  %378 = vmatprep.mubr.f32.mxu0 0.0
  %379 = vmatmul.mubr.f32.gmra.mxu0 %v149
  %v380 = vpop.f32.mrf.mxu0
  %v381 = vadd.f32 %v55, %v380
  %v382 = vpop.f32.mrf.mxu0
  %383 = vmatprep.mubr.f32.mxu0 0.0
  %384 = vmatmul.mubr.f32.gmra.mxu0 %v152
  %v385 = vpop.f32.mrf.mxu0
  %v386 = vadd.f32 %v55, %v385
  %v387 = vpop.f32.mrf.mxu0
  %388 = vmatprep.mubr.f32.mxu0 0.0
  %389 = vmatmul.mubr.f32.gmra.mxu0 %v155
  %v390 = vpop.f32.mrf.mxu0
  %v391 = vadd.f32 %v55, %v390
  %v392 = vpop.f32.mrf.mxu0
  %393 = vmatprep.mubr.f32.mxu0 0.0
  %394 = vmatmul.mubr.f32.gmra.mxu0 %v158
  %v395 = vpop.f32.mrf.mxu0
  %v396 = vadd.f32 %v55, %v395
  %v397 = vpop.f32.mrf.mxu0
  %398 = vdwg.mxu0
  %v399 = vmax.f32 %v231, 0.0
  %v400 = vmax.f32 %v236, 0.0
  %v401 = vmax.f32 %v241, 0.0
  %v402 = vmax.f32 %v246, 0.0
  %v403 = vmax.f32 %v251, 0.0
  %v404 = vmax.f32 %v256, 0.0
  %v405 = vmax.f32 %v261, 0.0
  %v406 = vmax.f32 %v266, 0.0
  %v407 = vmax.f32 %v271, 0.0
  %v408 = vmax.f32 %v276, 0.0
  %v409 = vmax.f32 %v281, 0.0
  %v410 = vmax.f32 %v286, 0.0
  %v411 = vmax.f32 %v291, 0.0
  %v412 = vmax.f32 %v296, 0.0
  %v413 = vmax.f32 %v301, 0.0
  %v414 = vmax.f32 %v306, 0.0
  %v415 = vmax.f32 %v311, 0.0
  %v416 = vmax.f32 %v316, 0.0
  %v417 = vmax.f32 %v321, 0.0
  %v418 = vmax.f32 %v326, 0.0
  %v419 = vmax.f32 %v331, 0.0
  %v420 = vmax.f32 %v336, 0.0
  %v421 = vmax.f32 %v341, 0.0
  %v422 = vmax.f32 %v346, 0.0
  %v423 = vmax.f32 %v351, 0.0
  %v424 = vmax.f32 %v356, 0.0
  %v425 = vmax.f32 %v361, 0.0
  %v426 = vmax.f32 %v366, 0.0
  %v427 = vmax.f32 %v371, 0.0
  %v428 = vmax.f32 %v376, 0.0
  %v429 = vmax.f32 %v381, 0.0
  %v430 = vmax.f32 %v386, 0.0
  %v431 = vmax.f32 %v391, 0.0
  %v432 = vmax.f32 %v396, 0.0
  %vm433 = vcmask 261120
  %434 = vst.msk [vmem:[%s3] sm:$0xff] %vm433, %v399
  %435 = vst.msk [vmem:[%s3 + $0x8] sm:$0xff] %vm433, %v400
  %436 = vst.msk [vmem:[%s3 + $0x10] sm:$0xff] %vm433, %v401
  %437 = vst.msk [vmem:[%s3 + $0x18] sm:$0xff] %vm433, %v402
  %438 = vst.msk [vmem:[%s3 + $0x20] sm:$0xff] %vm433, %v403
  %439 = vst.msk [vmem:[%s3 + $0x28] sm:$0xff] %vm433, %v404
  %440 = vst.msk [vmem:[%s3 + $0x30] sm:$0xff] %vm433, %v405
  %441 = vst.msk [vmem:[%s3 + $0x38] sm:$0xff] %vm433, %v406
  %442 = vst.msk [vmem:[%s3 + $0x40] sm:$0xff] %vm433, %v407
  %443 = vst.msk [vmem:[%s3 + $0x48] sm:$0xff] %vm433, %v408
  %444 = vst.msk [vmem:[%s3 + $0x50] sm:$0xff] %vm433, %v409
  %445 = vst.msk [vmem:[%s3 + $0x58] sm:$0xff] %vm433, %v410
  %446 = vst.msk [vmem:[%s3 + $0x60] sm:$0xff] %vm433, %v411
  %447 = vst.msk [vmem:[%s3 + $0x68] sm:$0xff] %vm433, %v412
  %448 = vst.msk [vmem:[%s3 + $0x70] sm:$0xff] %vm433, %v413
  %449 = vst.msk [vmem:[%s3 + $0x78] sm:$0xff] %vm433, %v414
  %450 = vst.msk [vmem:[%s3 + $0x80] sm:$0xff] %vm433, %v415
  %451 = vst.msk [vmem:[%s3 + $0x88] sm:$0xff] %vm433, %v416
  %452 = vst.msk [vmem:[%s3 + $0x90] sm:$0xff] %vm433, %v417
  %453 = vst.msk [vmem:[%s3 + $0x98] sm:$0xff] %vm433, %v418
  %454 = vst.msk [vmem:[%s3 + $0xa0] sm:$0xff] %vm433, %v419
  %455 = vst.msk [vmem:[%s3 + $0xa8] sm:$0xff] %vm433, %v420
  %456 = vst.msk [vmem:[%s3 + $0xb0] sm:$0xff] %vm433, %v421
  %457 = vst.msk [vmem:[%s3 + $0xb8] sm:$0xff] %vm433, %v422
  %458 = vst.msk [vmem:[%s3 + $0xc0] sm:$0xff] %vm433, %v423
  %459 = vst.msk [vmem:[%s3 + $0xc8] sm:$0xff] %vm433, %v424
  %460 = vst.msk [vmem:[%s3 + $0xd0] sm:$0xff] %vm433, %v425
  %461 = vst.msk [vmem:[%s3 + $0xd8] sm:$0xff] %vm433, %v426
  %462 = vst.msk [vmem:[%s3 + $0xe0] sm:$0xff] %vm433, %v427
  %463 = vst.msk [vmem:[%s3 + $0xe8] sm:$0xff] %vm433, %v428
  %464 = vst.msk [vmem:[%s3 + $0xf0] sm:$0xff] %vm433, %v429
  %465 = vst.msk [vmem:[%s3 + $0xf8] sm:$0xff] %vm433, %v430
  %466 = vst.msk [vmem:[%s3 + $0x100] sm:$0xff] %vm433, %v431
  %vm467 = vcmask 259072
  %468 = vst.msk [vmem:[%s3 + $0x108] sm:$0x3f] %vm467, %v432
  // Predicated region
  $region14: #{run.3} parent=0 // pred_check
    _
  $region15: #{run.3} parent=0 // pred_check_branch
    %470 = sbr.rel (0) target = $region17
  $region16: #{run.3} parent=0 // pred_region
    _
  $region17: #{run.3} parent=0 // pred_fallthru
    _
  // Predicated region
  $region18: #{run.3} parent=0 // pred_check
    _
  $region19: #{run.3} parent=0 // pred_check_branch
    %472 = sbr.rel (0) target = $region21
  $region20: #{run.3} parent=0 // pred_region
    _
  $region21: #{run.3} parent=0 // pred_fallthru
    _

// kernel: run.4
$region0: #{run.4}
  #allocation0 [shape = 'u32[]', space=smem, size = 0x4, offset = 0x4, fixed_abs, tag = 'smem constant byte address 0x4 - core index']
  #allocation1 [shape = 'u32[144,128]{1,0:T(1,128)}', space=vmem, size = 0x12000, scoped, tag = 'internal scratch']
  %s0 = inlined_call_operand.vmem [shape: f32[56,288], index: 0, kind: input, shape index: {}]
  %s1 = inlined_call_operand.vmem [shape: f32[288,32], index: 1, kind: input, shape index: {}]
  %s2 = inlined_call_operand.vmem [shape: f32[1,32], index: 2, kind: input, shape index: {}]
  %s3 = inlined_call_operand.vmem [shape: f32[56,32], index: 3, kind: output, shape index: {}]
  %s4 = sld [smem:[#allocation0]]
  $region22: #{run.4} parent=0
    _
  %s6 = ssub.s32 1, %s4
  %s7 = scalar_select 0, %s6, %s4
  // Predicated region
  $region2: #{run.4} parent=0 // pred_check
    _
  $region3: #{run.4} parent=0 // pred_check_branch
    %9 = sbr.rel (0) target = $region5
  $region4: #{run.4} parent=0 // pred_region
    _
  $region5: #{run.4} parent=0 // pred_fallthru
    _
  // Predicated region
  $region6: #{run.4} parent=0 // pred_check
    _
  $region7: #{run.4} parent=0 // pred_check_branch
    %11 = sbr.rel (0) target = $region9
  $region8: #{run.4} parent=0 // pred_region
    _
  $region9: #{run.4} parent=0 // pred_fallthru
    _
  // Predicated region
  $region10: #{run.4} parent=0 // pred_check
    _
  $region11: #{run.4} parent=0 // pred_check_branch
    %13 = sbr.rel (0) target = $region13
  $region12: #{run.4} parent=0 // pred_region
    _
  $region13: #{run.4} parent=0 // pred_fallthru
    _
  %v14 = vld [vmem:[%s0] sm:$0xff]
  %v15 = vld [vmem:[%s0 + $0x8] sm:$0xff]
  %v16 = vld [vmem:[%s0 + $0x10] sm:$0xff]
  %v17 = vld [vmem:[%s0 + $0x18] sm:$0xff]
  %v18 = vld [vmem:[%s0 + $0x20] sm:$0xff]
  %v19 = vld [vmem:[%s0 + $0x28] sm:$0xff]
  %v20 = vld [vmem:[%s0 + $0x30] sm:$0xff]
  %v21 = vld [vmem:[%s0 + $0x38] sm:$0xff]
  %v22 = vld [vmem:[%s0 + $0x40] sm:$0xff]
  %v23 = vld [vmem:[%s0 + $0x48] sm:$0xff]
  %v24 = vld [vmem:[%s0 + $0x50] sm:$0xff]
  %v25 = vld [vmem:[%s0 + $0x58] sm:$0xff]
  %v26 = vld [vmem:[%s0 + $0x60] sm:$0xff]
  %v27 = vld [vmem:[%s0 + $0x68] sm:$0xff]
  %v28 = vld [vmem:[%s0 + $0x70] sm:$0xff]
  %v29 = vld [vmem:[%s0 + $0x78] sm:$0xff]
  %v30 = vld [vmem:[%s0 + $0x80] sm:$0xff]
  %v31 = vld [vmem:[%s0 + $0x88] sm:$0xff]
  %v32 = vld [vmem:[%s0 + $0x90] sm:$0xff]
  %v33 = vld [vmem:[%s0 + $0x98] sm:$0xff]
  %v34 = vld [vmem:[%s0 + $0xa0] sm:$0xff]
  %v35 = vld [vmem:[%s1] sm:$0xff]
  %v36 = vld [vmem:[%s1 + $0x8] sm:$0xff]
  %v37 = vld [vmem:[%s1 + $0x10] sm:$0xff]
  %v38 = vld [vmem:[%s1 + $0x18] sm:$0xff]
  %v39 = vld [vmem:[%s1 + $0x20] sm:$0xff]
  %v40 = vld [vmem:[%s1 + $0x28] sm:$0xff]
  %v41 = vld [vmem:[%s1 + $0x30] sm:$0xff]
  %v42 = vld [vmem:[%s1 + $0x38] sm:$0xff]
  %v43 = vld [vmem:[%s1 + $0x40] sm:$0xff]
  %v44 = vld [vmem:[%s1 + $0x48] sm:$0xff]
  %v45 = vld [vmem:[%s1 + $0x50] sm:$0xff]
  %v46 = vld [vmem:[%s1 + $0x58] sm:$0xff]
  %v47 = vld [vmem:[%s1 + $0x60] sm:$0xff]
  %v48 = vld [vmem:[%s1 + $0x68] sm:$0xff]
  %v49 = vld [vmem:[%s1 + $0x70] sm:$0xff]
  %v50 = vld [vmem:[%s1 + $0x78] sm:$0xff]
  %v51 = vld [vmem:[%s1 + $0x80] sm:$0xff]
  %v52 = vld [vmem:[%s1 + $0x88] sm:$0xff]
  %v53 = vld [vmem:[%s1 + $0x90] sm:$0xff]
  %v54 = vld [vmem:[%s1 + $0x98] sm:$0xff]
  %v55 = vld [vmem:[%s1 + $0xa0] sm:$0xff]
  %v56 = vld [vmem:[%s1 + $0xa8] sm:$0xff]
  %v57 = vld [vmem:[%s1 + $0xb0] sm:$0xff]
  %v58 = vld [vmem:[%s1 + $0xb8] sm:$0xff]
  %v59 = vld [vmem:[%s1 + $0xc0] sm:$0xff]
  %v60 = vld [vmem:[%s1 + $0xc8] sm:$0xff]
  %v61 = vld [vmem:[%s1 + $0xd0] sm:$0xff]
  %v62 = vld [vmem:[%s1 + $0xd8] sm:$0xff]
  %v63 = vld [vmem:[%s1 + $0xe0] sm:$0xff]
  %v64 = vld [vmem:[%s1 + $0xe8] sm:$0xff]
  %v65 = vld [vmem:[%s1 + $0xf0] sm:$0xff]
  %v66 = vld [vmem:[%s1 + $0xf8] sm:$0xff]
  %v67 = vld [vmem:[%s1 + $0x100] sm:$0xff]
  %v68 = vld [vmem:[%s1 + $0x108] sm:$0xff]
  %v69 = vld [vmem:[%s1 + $0x110] sm:$0xff]
  %v70 = vld [vmem:[%s1 + $0x118] sm:$0xff]
  %v71 = vld [vmem:[%s2] sm:$0x1]
  %v73 = vlaneseq
  %v74 = vshrl.u32 %v73, 7
  %v75 = vsub.s32 0, %v74
  %v76 = vrot.slane %v71, %v75
  %vm78 = vcmask 261120
  %v80 = vsel %vm78, %v16, 0
  %v83 = vsel %vm78, %v19, 0
  %v86 = vsel %vm78, %v22, 0
  %v89 = vsel %vm78, %v25, 0
  %v92 = vsel %vm78, %v28, 0
  %v95 = vsel %vm78, %v31, 0
  %v98 = vsel %vm78, %v34, 0
  %100 = vmatprep.subr.mxu0 0.0
  %101 = vmatpush1.msra.mxu0 %v50
  %102 = vmatprep.subr.mxu0 0.0
  %103 = vmatpush1.msra.mxu0 %v49
  %104 = vmatprep.subr.mxu0 0.0
  %105 = vmatpush1.msra.mxu0 %v48
  %106 = vmatprep.subr.mxu0 0.0
  %107 = vmatpush1.msra.mxu0 %v47
  %108 = vmatprep.subr.mxu0 0.0
  %109 = vmatpush1.msra.mxu0 %v46
  %110 = vmatprep.subr.mxu0 0.0
  %111 = vmatpush1.msra.mxu0 %v45
  %112 = vmatprep.subr.mxu0 0.0
  %113 = vmatpush1.msra.mxu0 %v44
  %114 = vmatprep.subr.mxu0 0.0
  %115 = vmatpush1.msra.mxu0 %v43
  %116 = vmatprep.subr.mxu0 0.0
  %117 = vmatpush1.msra.mxu0 %v42
  %118 = vmatprep.subr.mxu0 0.0
  %119 = vmatpush1.msra.mxu0 %v41
  %120 = vmatprep.subr.mxu0 0.0
  %121 = vmatpush1.msra.mxu0 %v40
  %122 = vmatprep.subr.mxu0 0.0
  %123 = vmatpush1.msra.mxu0 %v39
  %124 = vmatprep.subr.mxu0 0.0
  %125 = vmatpush1.msra.mxu0 %v38
  %126 = vmatprep.subr.mxu0 0.0
  %127 = vmatpush1.msra.mxu0 %v37
  %128 = vmatprep.subr.mxu0 0.0
  %129 = vmatpush1.msra.mxu0 %v36
  %130 = vmatprep.subr.mxu0 0.0
  %131 = vmatpush1.msra.mxu0 %v35
  %132 = vmatprep.subr.mxu0 0.0
  %133 = vmatpush2.msra.mxu0 %v66
  %134 = vmatprep.subr.mxu0 0.0
  %135 = vmatpush2.msra.mxu0 %v65
  %136 = vmatprep.subr.mxu0 0.0
  %137 = vmatpush2.msra.mxu0 %v64
  %138 = vmatprep.subr.mxu0 0.0
  %139 = vmatpush2.msra.mxu0 %v63
  %140 = vmatprep.subr.mxu0 0.0
  %141 = vmatpush2.msra.mxu0 %v62
  %142 = vmatprep.subr.mxu0 0.0
  %143 = vmatpush2.msra.mxu0 %v61
  %144 = vmatprep.subr.mxu0 0.0
  %145 = vmatpush2.msra.mxu0 %v60
  %146 = vmatprep.subr.mxu0 0.0
  %147 = vmatpush2.msra.mxu0 %v59
  %148 = vmatprep.subr.mxu0 0.0
  %149 = vmatpush2.msra.mxu0 %v58
  %150 = vmatprep.subr.mxu0 0.0
  %151 = vmatpush2.msra.mxu0 %v57
  %152 = vmatprep.subr.mxu0 0.0
  %153 = vmatpush2.msra.mxu0 %v56
  %154 = vmatprep.subr.mxu0 0.0
  %155 = vmatpush2.msra.mxu0 %v55
  %156 = vmatprep.subr.mxu0 0.0
  %157 = vmatpush2.msra.mxu0 %v54
  %158 = vmatprep.subr.mxu0 0.0
  %159 = vmatpush2.msra.mxu0 %v53
  %160 = vmatprep.subr.mxu0 0.0
  %161 = vmatpush2.msra.mxu0 %v52
  %162 = vmatprep.subr.mxu0 0.0
  %163 = vmatpush2.msra.mxu0 %v51
  %164 = vmatprep.mubr.f32.mxu0 %v15
  %165 = vmatmul.mubr.f32.gmra.mxu0 %v14
  %v166 = vpop.f32.mrf.mxu0
  %v167 = vadd.f32 %v76, %v166
  %v168 = vpop.f32.mrf.mxu0
  %169 = vmatprep.mubr.f32.mxu0 %v18
  %170 = vmatmul.mubr.f32.gmra.mxu0 %v17
  %v171 = vpop.f32.mrf.mxu0
  %v172 = vadd.f32 %v76, %v171
  %v173 = vpop.f32.mrf.mxu0
  %174 = vmatprep.mubr.f32.mxu0 %v21
  %175 = vmatmul.mubr.f32.gmra.mxu0 %v20
  %v176 = vpop.f32.mrf.mxu0
  %v177 = vadd.f32 %v76, %v176
  %v178 = vpop.f32.mrf.mxu0
  %179 = vmatprep.mubr.f32.mxu0 %v24
  %180 = vmatmul.mubr.f32.gmra.mxu0 %v23
  %v181 = vpop.f32.mrf.mxu0
  %v182 = vadd.f32 %v76, %v181
  %v183 = vpop.f32.mrf.mxu0
  %184 = vmatprep.mubr.f32.mxu0 %v27
  %185 = vmatmul.mubr.f32.gmra.mxu0 %v26
  %v186 = vpop.f32.mrf.mxu0
  %v187 = vadd.f32 %v76, %v186
  %v188 = vpop.f32.mrf.mxu0
  %189 = vmatprep.mubr.f32.mxu0 %v30
  %190 = vmatmul.mubr.f32.gmra.mxu0 %v29
  %v191 = vpop.f32.mrf.mxu0
  %v192 = vadd.f32 %v76, %v191
  %v193 = vpop.f32.mrf.mxu0
  %194 = vmatprep.mubr.f32.mxu0 %v33
  %195 = vmatmul.mubr.f32.gmra.mxu0 %v32
  %v196 = vpop.f32.mrf.mxu0
  %v197 = vadd.f32 %v76, %v196
  %v198 = vpop.f32.mrf.mxu0
  %199 = vdwg.mxu0
  %200 = vmatprep.subr.mxu0 0.0
  %201 = vmatpush1.msra.mxu0 0.0
  %202 = vmatprep.subr.mxu0 0.0
  %203 = vmatpush1.msra.mxu0 0.0
  %204 = vmatprep.subr.mxu0 0.0
  %205 = vmatpush1.msra.mxu0 0.0
  %206 = vmatprep.subr.mxu0 0.0
  %207 = vmatpush1.msra.mxu0 0.0
  %208 = vmatprep.subr.mxu0 0.0
  %209 = vmatpush1.msra.mxu0 0.0
  %210 = vmatprep.subr.mxu0 0.0
  %211 = vmatpush1.msra.mxu0 0.0
  %212 = vmatprep.subr.mxu0 0.0
  %213 = vmatpush1.msra.mxu0 0.0
  %214 = vmatprep.subr.mxu0 0.0
  %215 = vmatpush1.msra.mxu0 0.0
  %216 = vmatprep.subr.mxu0 0.0
  %217 = vmatpush1.msra.mxu0 0.0
  %218 = vmatprep.subr.mxu0 0.0
  %219 = vmatpush1.msra.mxu0 0.0
  %220 = vmatprep.subr.mxu0 0.0
  %221 = vmatpush1.msra.mxu0 0.0
  %222 = vmatprep.subr.mxu0 0.0
  %223 = vmatpush1.msra.mxu0 0.0
  %224 = vmatprep.subr.mxu0 0.0
  %225 = vmatpush1.msra.mxu0 %v70
  %226 = vmatprep.subr.mxu0 0.0
  %227 = vmatpush1.msra.mxu0 %v69
  %228 = vmatprep.subr.mxu0 0.0
  %229 = vmatpush1.msra.mxu0 %v68
  %230 = vmatprep.subr.mxu0 0.0
  %231 = vmatpush1.msra.mxu0 %v67
  %232 = vmatprep.subr.mxu0 0.0
  %233 = vmatpush2.msra.mxu0 0.0
  %234 = vmatprep.subr.mxu0 0.0
  %235 = vmatpush2.msra.mxu0 0.0
  %236 = vmatprep.subr.mxu0 0.0
  %237 = vmatpush2.msra.mxu0 0.0
  %238 = vmatprep.subr.mxu0 0.0
  %239 = vmatpush2.msra.mxu0 0.0
  %240 = vmatprep.subr.mxu0 0.0
  %241 = vmatpush2.msra.mxu0 0.0
  %242 = vmatprep.subr.mxu0 0.0
  %243 = vmatpush2.msra.mxu0 0.0
  %244 = vmatprep.subr.mxu0 0.0
  %245 = vmatpush2.msra.mxu0 0.0
  %246 = vmatprep.subr.mxu0 0.0
  %247 = vmatpush2.msra.mxu0 0.0
  %248 = vmatprep.subr.mxu0 0.0
  %249 = vmatpush2.msra.mxu0 0.0
  %250 = vmatprep.subr.mxu0 0.0
  %251 = vmatpush2.msra.mxu0 0.0
  %252 = vmatprep.subr.mxu0 0.0
  %253 = vmatpush2.msra.mxu0 0.0
  %254 = vmatprep.subr.mxu0 0.0
  %255 = vmatpush2.msra.mxu0 0.0
  %256 = vmatprep.subr.mxu0 0.0
  %257 = vmatpush2.msra.mxu0 0.0
  %258 = vmatprep.subr.mxu0 0.0
  %259 = vmatpush2.msra.mxu0 0.0
  %260 = vmatprep.subr.mxu0 0.0
  %261 = vmatpush2.msra.mxu0 0.0
  %262 = vmatprep.subr.mxu0 0.0
  %263 = vmatpush2.msra.mxu0 0.0
  %264 = vmatprep.mubr.f32.mxu0 0.0
  %265 = vmatmul.mubr.f32.gmra.mxu0 %v80
  %v266 = vpop.f32.mrf.mxu0
  %v267 = vadd.f32 %v167, %v266
  %v268 = vpop.f32.mrf.mxu0
  %269 = vmatprep.mubr.f32.mxu0 0.0
  %270 = vmatmul.mubr.f32.gmra.mxu0 %v83
  %v271 = vpop.f32.mrf.mxu0
  %v272 = vadd.f32 %v172, %v271
  %v273 = vpop.f32.mrf.mxu0
  %274 = vmatprep.mubr.f32.mxu0 0.0
  %275 = vmatmul.mubr.f32.gmra.mxu0 %v86
  %v276 = vpop.f32.mrf.mxu0
  %v277 = vadd.f32 %v177, %v276
  %v278 = vpop.f32.mrf.mxu0
  %279 = vmatprep.mubr.f32.mxu0 0.0
  %280 = vmatmul.mubr.f32.gmra.mxu0 %v89
  %v281 = vpop.f32.mrf.mxu0
  %v282 = vadd.f32 %v182, %v281
  %v283 = vpop.f32.mrf.mxu0
  %284 = vmatprep.mubr.f32.mxu0 0.0
  %285 = vmatmul.mubr.f32.gmra.mxu0 %v92
  %v286 = vpop.f32.mrf.mxu0
  %v287 = vadd.f32 %v187, %v286
  %v288 = vpop.f32.mrf.mxu0
  %289 = vmatprep.mubr.f32.mxu0 0.0
  %290 = vmatmul.mubr.f32.gmra.mxu0 %v95
  %v291 = vpop.f32.mrf.mxu0
  %v292 = vadd.f32 %v192, %v291
  %v293 = vpop.f32.mrf.mxu0
  %294 = vmatprep.mubr.f32.mxu0 0.0
  %295 = vmatmul.mubr.f32.gmra.mxu0 %v98
  %v296 = vpop.f32.mrf.mxu0
  %v297 = vadd.f32 %v197, %v296
  %v298 = vpop.f32.mrf.mxu0
  %299 = vdwg.mxu0
  %v300 = vmax.f32 %v267, 0.0
  %v301 = vmax.f32 %v272, 0.0
  %v302 = vmax.f32 %v277, 0.0
  %v303 = vmax.f32 %v282, 0.0
  %v304 = vmax.f32 %v287, 0.0
  %v305 = vmax.f32 %v292, 0.0
  %v306 = vmax.f32 %v297, 0.0
  %307 = vst.msk [vmem:[%s3] sm:$0xff] %vm78, %v300
  %308 = vst.msk [vmem:[%s3 + $0x8] sm:$0xff] %vm78, %v301
  %309 = vst.msk [vmem:[%s3 + $0x10] sm:$0xff] %vm78, %v302
  %310 = vst.msk [vmem:[%s3 + $0x18] sm:$0xff] %vm78, %v303
  %311 = vst.msk [vmem:[%s3 + $0x20] sm:$0xff] %vm78, %v304
  %312 = vst.msk [vmem:[%s3 + $0x28] sm:$0xff] %vm78, %v305
  %313 = vst.msk [vmem:[%s3 + $0x30] sm:$0xff] %vm78, %v306
  // Predicated region
  $region14: #{run.4} parent=0 // pred_check
    _
  $region15: #{run.4} parent=0 // pred_check_branch
    %315 = sbr.rel (0) target = $region17
  $region16: #{run.4} parent=0 // pred_region
    _
  $region17: #{run.4} parent=0 // pred_fallthru
    _
  // Predicated region
  $region18: #{run.4} parent=0 // pred_check
    _
  $region19: #{run.4} parent=0 // pred_check_branch
    %317 = sbr.rel (0) target = $region21
  $region20: #{run.4} parent=0 // pred_region
    _
  $region21: #{run.4} parent=0 // pred_fallthru
    _

// kernel: run.5
$region0: #{run.5}
  #allocation0 [shape = 'u32[]', space=smem, size = 0x4, offset = 0x4, fixed_abs, tag = 'smem constant byte address 0x4 - core index']
  #allocation1 [shape = 'u32[144,128]{1,0:T(1,128)}', space=vmem, size = 0x12000, scoped, tag = 'internal scratch']
  %s0 = inlined_call_operand.smem [shape: u32[48], index: -1, kind: input, shape index: {}]
  %s1 = sld [smem:[%s0]]
  %s2 = scalar_lea.smem %s0, 1
  %s3 = sld [smem:[%s2]]
  %s4 = scalar_lea.smem %s0, 2
  %s5 = sld [smem:[%s4]]
  %s6 = scalar_lea.smem %s0, 3
  %s7 = sld [smem:[%s6]]
  %s8 = scalar_lea.smem %s0, 4
  %s9 = sld [smem:[%s8]]
  %s10 = scalar_lea.smem %s0, 5
  %s11 = sld [smem:[%s10]]
  %s12 = scalar_lea.smem %s0, 6
  %s13 = sld [smem:[%s12]]
  %s14 = scalar_lea.smem %s0, 7
  %s15 = sld [smem:[%s14]]
  %s16 = scalar_lea.smem %s0, 8
  %s17 = sld [smem:[%s16]]
  %s18 = scalar_lea.smem %s0, 9
  %s19 = sld [smem:[%s18]]
  %s20 = scalar_lea.smem %s0, 10
  %s21 = sld [smem:[%s20]]
  %s22 = scalar_lea.smem %s0, 11
  %s23 = sld [smem:[%s22]]
  %s24 = scalar_lea.smem %s0, 12
  %s25 = sld [smem:[%s24]]
  %s26 = scalar_lea.smem %s0, 13
  %s27 = sld [smem:[%s26]]
  %s28 = scalar_lea.smem %s0, 14
  %s29 = sld [smem:[%s28]]
  %s30 = scalar_lea.smem %s0, 15
  %s31 = sld [smem:[%s30]]
  %s32 = scalar_lea.smem %s0, 16
  %s33 = sld [smem:[%s32]]
  %s34 = scalar_lea.smem %s0, 17
  %s35 = sld [smem:[%s34]]
  %s36 = scalar_lea.smem %s0, 18
  %s37 = sld [smem:[%s36]]
  %s38 = scalar_lea.smem %s0, 19
  %s39 = sld [smem:[%s38]]
  %s40 = scalar_lea.smem %s0, 20
  %s41 = sld [smem:[%s40]]
  %s42 = scalar_lea.smem %s0, 21
  %s43 = sld [smem:[%s42]]
  %s44 = scalar_lea.smem %s0, 22
  %s45 = sld [smem:[%s44]]
  %s46 = scalar_lea.smem %s0, 23
  %s47 = sld [smem:[%s46]]
  %s48 = scalar_lea.smem %s0, 24
  %s49 = sld [smem:[%s48]]
  %s50 = scalar_lea.smem %s0, 25
  %s51 = sld [smem:[%s50]]
  %s52 = scalar_lea.smem %s0, 26
  %s53 = sld [smem:[%s52]]
  %s54 = scalar_lea.smem %s0, 27
  %s55 = sld [smem:[%s54]]
  %s56 = scalar_lea.smem %s0, 28
  %s57 = sld [smem:[%s56]]
  %s58 = scalar_lea.smem %s0, 29
  %s59 = sld [smem:[%s58]]
  %s60 = scalar_lea.smem %s0, 30
  %s61 = sld [smem:[%s60]]
  %s62 = scalar_lea.smem %s0, 31
  %s63 = sld [smem:[%s62]]
  %s64 = scalar_lea.smem %s0, 32
  %s65 = sld [smem:[%s64]]
  %s66 = scalar_lea.smem %s0, 33
  %s67 = sld [smem:[%s66]]
  %s68 = scalar_lea.smem %s0, 34
  %s69 = sld [smem:[%s68]]
  %s70 = scalar_lea.smem %s0, 35
  %s71 = sld [smem:[%s70]]
  %s72 = scalar_lea.smem %s0, 36
  %s73 = sld [smem:[%s72]]
  %s74 = scalar_lea.smem %s0, 37
  %s75 = sld [smem:[%s74]]
  %s76 = scalar_lea.smem %s0, 38
  %s77 = sld [smem:[%s76]]
  %s78 = scalar_lea.smem %s0, 39
  %s79 = sld [smem:[%s78]]
  %s80 = scalar_lea.smem %s0, 40
  %s81 = sld [smem:[%s80]]
  %s82 = scalar_lea.smem %s0, 41
  %s83 = sld [smem:[%s82]]
  %s84 = scalar_lea.smem %s0, 42
  %s85 = sld [smem:[%s84]]
  %s86 = scalar_lea.smem %s0, 43
  %s87 = sld [smem:[%s86]]
  %s88 = scalar_lea.smem %s0, 44
  %s89 = sld [smem:[%s88]]
  %s90 = scalar_lea.smem %s0, 45
  %s91 = sld [smem:[%s90]]
  %s92 = scalar_lea.smem %s0, 46
  %s93 = sld [smem:[%s92]]
  %s94 = scalar_lea.smem %s0, 47
  %s95 = sld [smem:[%s94]]
  %96 = xla_tuple %s91, %s93, %s95
  %s97 = sld [smem:[#allocation0]]
  $region206: #{run.5} parent=0
    _
  %s99 = ssub.s32 1, %s97
  %s100 = scalar_select 0, %s99, %s97
  // Predicated region
  $region2: #{run.5} parent=0 // pred_check
    _
  $region3: #{run.5} parent=0 // pred_check_branch
    %102 = sbr.rel (0) target = $region5
  $region4: #{run.5} parent=0 // pred_region
    _
  $region5: #{run.5} parent=0 // pred_fallthru
    _
  // Predicated region
  $region6: #{run.5} parent=0 // pred_check
    _
  $region7: #{run.5} parent=0 // pred_check_branch
    %104 = sbr.rel (0) target = $region9
  $region8: #{run.5} parent=0 // pred_region
    _
  $region9: #{run.5} parent=0 // pred_fallthru
    _
  // Predicated region
  $region10: #{run.5} parent=0 // pred_check
    _
  $region11: #{run.5} parent=0 // pred_check_branch
    %106 = sbr.rel (0) target = $region13
  $region12: #{run.5} parent=0 // pred_region
    _
  $region13: #{run.5} parent=0 // pred_fallthru
    _
  // Predicated region
  $region14: #{run.5} parent=0 // pred_check
    _
  $region15: #{run.5} parent=0 // pred_check_branch
    %108 = sbr.rel (0) target = $region17
  $region16: #{run.5} parent=0 // pred_region
    _
  $region17: #{run.5} parent=0 // pred_fallthru
    _
  // Predicated region
  $region18: #{run.5} parent=0 // pred_check
    _
  $region19: #{run.5} parent=0 // pred_check_branch
    %110 = sbr.rel (0) target = $region21
  $region20: #{run.5} parent=0 // pred_region
    _
  $region21: #{run.5} parent=0 // pred_fallthru
    _
  // Predicated region
  $region22: #{run.5} parent=0 // pred_check
    _
  $region23: #{run.5} parent=0 // pred_check_branch
    %112 = sbr.rel (0) target = $region25
  $region24: #{run.5} parent=0 // pred_region
    _
  $region25: #{run.5} parent=0 // pred_fallthru
    _
  // Predicated region
  $region26: #{run.5} parent=0 // pred_check
    _
  $region27: #{run.5} parent=0 // pred_check_branch
    %114 = sbr.rel (0) target = $region29
  $region28: #{run.5} parent=0 // pred_region
    _
  $region29: #{run.5} parent=0 // pred_fallthru
    _
  // Predicated region
  $region30: #{run.5} parent=0 // pred_check
    _
  $region31: #{run.5} parent=0 // pred_check_branch
    %116 = sbr.rel (0) target = $region33
  $region32: #{run.5} parent=0 // pred_region
    _
  $region33: #{run.5} parent=0 // pred_fallthru
    _
  // Predicated region
  $region34: #{run.5} parent=0 // pred_check
    _
  $region35: #{run.5} parent=0 // pred_check_branch
    %118 = sbr.rel (0) target = $region37
  $region36: #{run.5} parent=0 // pred_region
    _
  $region37: #{run.5} parent=0 // pred_fallthru
    _
  // Predicated region
  $region38: #{run.5} parent=0 // pred_check
    _
  $region39: #{run.5} parent=0 // pred_check_branch
    %120 = sbr.rel (0) target = $region41
  $region40: #{run.5} parent=0 // pred_region
    _
  $region41: #{run.5} parent=0 // pred_fallthru
    _
  // Predicated region
  $region42: #{run.5} parent=0 // pred_check
    _
  $region43: #{run.5} parent=0 // pred_check_branch
    %122 = sbr.rel (0) target = $region45
  $region44: #{run.5} parent=0 // pred_region
    _
  $region45: #{run.5} parent=0 // pred_fallthru
    _
  // Predicated region
  $region46: #{run.5} parent=0 // pred_check
    _
  $region47: #{run.5} parent=0 // pred_check_branch
    %124 = sbr.rel (0) target = $region49
  $region48: #{run.5} parent=0 // pred_region
    _
  $region49: #{run.5} parent=0 // pred_fallthru
    _
  // Predicated region
  $region50: #{run.5} parent=0 // pred_check
    _
  $region51: #{run.5} parent=0 // pred_check_branch
    %126 = sbr.rel (0) target = $region53
  $region52: #{run.5} parent=0 // pred_region
    _
  $region53: #{run.5} parent=0 // pred_fallthru
    _
  // Predicated region
  $region54: #{run.5} parent=0 // pred_check
    _
  $region55: #{run.5} parent=0 // pred_check_branch
    %128 = sbr.rel (0) target = $region57
  $region56: #{run.5} parent=0 // pred_region
    _
  $region57: #{run.5} parent=0 // pred_fallthru
    _
  // Predicated region
  $region58: #{run.5} parent=0 // pred_check
    _
  $region59: #{run.5} parent=0 // pred_check_branch
    %130 = sbr.rel (0) target = $region61
  $region60: #{run.5} parent=0 // pred_region
    _
  $region61: #{run.5} parent=0 // pred_fallthru
    _
  // Predicated region
  $region62: #{run.5} parent=0 // pred_check
    _
  $region63: #{run.5} parent=0 // pred_check_branch
    %132 = sbr.rel (0) target = $region65
  $region64: #{run.5} parent=0 // pred_region
    _
  $region65: #{run.5} parent=0 // pred_fallthru
    _
  // Predicated region
  $region66: #{run.5} parent=0 // pred_check
    _
  $region67: #{run.5} parent=0 // pred_check_branch
    %134 = sbr.rel (0) target = $region69
  $region68: #{run.5} parent=0 // pred_region
    _
  $region69: #{run.5} parent=0 // pred_fallthru
    _
  // Predicated region
  $region70: #{run.5} parent=0 // pred_check
    _
  $region71: #{run.5} parent=0 // pred_check_branch
    %136 = sbr.rel (0) target = $region73
  $region72: #{run.5} parent=0 // pred_region
    _
  $region73: #{run.5} parent=0 // pred_fallthru
    _
  // Predicated region
  $region74: #{run.5} parent=0 // pred_check
    _
  $region75: #{run.5} parent=0 // pred_check_branch
    %138 = sbr.rel (0) target = $region77
  $region76: #{run.5} parent=0 // pred_region
    _
  $region77: #{run.5} parent=0 // pred_fallthru
    _
  // Predicated region
  $region78: #{run.5} parent=0 // pred_check
    _
  $region79: #{run.5} parent=0 // pred_check_branch
    %140 = sbr.rel (0) target = $region81
  $region80: #{run.5} parent=0 // pred_region
    _
  $region81: #{run.5} parent=0 // pred_fallthru
    _
  // Predicated region
  $region82: #{run.5} parent=0 // pred_check
    _
  $region83: #{run.5} parent=0 // pred_check_branch
    %142 = sbr.rel (0) target = $region85
  $region84: #{run.5} parent=0 // pred_region
    _
  $region85: #{run.5} parent=0 // pred_fallthru
    _
  // Predicated region
  $region86: #{run.5} parent=0 // pred_check
    _
  $region87: #{run.5} parent=0 // pred_check_branch
    %144 = sbr.rel (0) target = $region89
  $region88: #{run.5} parent=0 // pred_region
    _
  $region89: #{run.5} parent=0 // pred_fallthru
    _
  // Predicated region
  $region90: #{run.5} parent=0 // pred_check
    _
  $region91: #{run.5} parent=0 // pred_check_branch
    %146 = sbr.rel (0) target = $region93
  $region92: #{run.5} parent=0 // pred_region
    _
  $region93: #{run.5} parent=0 // pred_fallthru
    _
  // Predicated region
  $region94: #{run.5} parent=0 // pred_check
    _
  $region95: #{run.5} parent=0 // pred_check_branch
    %148 = sbr.rel (0) target = $region97
  $region96: #{run.5} parent=0 // pred_region
    _
  $region97: #{run.5} parent=0 // pred_fallthru
    _
  // Predicated region
  $region98: #{run.5} parent=0 // pred_check
    _
  $region99: #{run.5} parent=0 // pred_check_branch
    %150 = sbr.rel (0) target = $region101
  $region100: #{run.5} parent=0 // pred_region
    _
  $region101: #{run.5} parent=0 // pred_fallthru
    _
  // Predicated region
  $region102: #{run.5} parent=0 // pred_check
    _
  $region103: #{run.5} parent=0 // pred_check_branch
    %152 = sbr.rel (0) target = $region105
  $region104: #{run.5} parent=0 // pred_region
    _
  $region105: #{run.5} parent=0 // pred_fallthru
    _
  // Predicated region
  $region106: #{run.5} parent=0 // pred_check
    _
  $region107: #{run.5} parent=0 // pred_check_branch
    %154 = sbr.rel (0) target = $region109
  $region108: #{run.5} parent=0 // pred_region
    _
  $region109: #{run.5} parent=0 // pred_fallthru
    _
  // Predicated region
  $region110: #{run.5} parent=0 // pred_check
    _
  $region111: #{run.5} parent=0 // pred_check_branch
    %156 = sbr.rel (0) target = $region113
  $region112: #{run.5} parent=0 // pred_region
    _
  $region113: #{run.5} parent=0 // pred_fallthru
    _
  // Predicated region
  $region114: #{run.5} parent=0 // pred_check
    _
  $region115: #{run.5} parent=0 // pred_check_branch
    %158 = sbr.rel (0) target = $region117
  $region116: #{run.5} parent=0 // pred_region
    _
  $region117: #{run.5} parent=0 // pred_fallthru
    _
  // Predicated region
  $region118: #{run.5} parent=0 // pred_check
    _
  $region119: #{run.5} parent=0 // pred_check_branch
    %160 = sbr.rel (0) target = $region121
  $region120: #{run.5} parent=0 // pred_region
    _
  $region121: #{run.5} parent=0 // pred_fallthru
    _
  // Predicated region
  $region122: #{run.5} parent=0 // pred_check
    _
  $region123: #{run.5} parent=0 // pred_check_branch
    %162 = sbr.rel (0) target = $region125
  $region124: #{run.5} parent=0 // pred_region
    _
  $region125: #{run.5} parent=0 // pred_fallthru
    _
  // Predicated region
  $region126: #{run.5} parent=0 // pred_check
    _
  $region127: #{run.5} parent=0 // pred_check_branch
    %164 = sbr.rel (0) target = $region129
  $region128: #{run.5} parent=0 // pred_region
    _
  $region129: #{run.5} parent=0 // pred_fallthru
    _
  // Predicated region
  $region130: #{run.5} parent=0 // pred_check
    _
  $region131: #{run.5} parent=0 // pred_check_branch
    %166 = sbr.rel (0) target = $region133
  $region132: #{run.5} parent=0 // pred_region
    _
  $region133: #{run.5} parent=0 // pred_fallthru
    _
  // Predicated region
  $region134: #{run.5} parent=0 // pred_check
    _
  $region135: #{run.5} parent=0 // pred_check_branch
    %168 = sbr.rel (0) target = $region137
  $region136: #{run.5} parent=0 // pred_region
    _
  $region137: #{run.5} parent=0 // pred_fallthru
    _
  // Predicated region
  $region138: #{run.5} parent=0 // pred_check
    _
  $region139: #{run.5} parent=0 // pred_check_branch
    %170 = sbr.rel (0) target = $region141
  $region140: #{run.5} parent=0 // pred_region
    _
  $region141: #{run.5} parent=0 // pred_fallthru
    _
  // Predicated region
  $region142: #{run.5} parent=0 // pred_check
    _
  $region143: #{run.5} parent=0 // pred_check_branch
    %172 = sbr.rel (0) target = $region145
  $region144: #{run.5} parent=0 // pred_region
    _
  $region145: #{run.5} parent=0 // pred_fallthru
    _
  // Predicated region
  $region146: #{run.5} parent=0 // pred_check
    _
  $region147: #{run.5} parent=0 // pred_check_branch
    %174 = sbr.rel (0) target = $region149
  $region148: #{run.5} parent=0 // pred_region
    _
  $region149: #{run.5} parent=0 // pred_fallthru
    _
  // Predicated region
  $region150: #{run.5} parent=0 // pred_check
    _
  $region151: #{run.5} parent=0 // pred_check_branch
    %176 = sbr.rel (0) target = $region153
  $region152: #{run.5} parent=0 // pred_region
    _
  $region153: #{run.5} parent=0 // pred_fallthru
    _
  // Predicated region
  $region154: #{run.5} parent=0 // pred_check
    _
  $region155: #{run.5} parent=0 // pred_check_branch
    %178 = sbr.rel (0) target = $region157
  $region156: #{run.5} parent=0 // pred_region
    _
  $region157: #{run.5} parent=0 // pred_fallthru
    _
  // Predicated region
  $region158: #{run.5} parent=0 // pred_check
    _
  $region159: #{run.5} parent=0 // pred_check_branch
    %180 = sbr.rel (0) target = $region161
  $region160: #{run.5} parent=0 // pred_region
    _
  $region161: #{run.5} parent=0 // pred_fallthru
    _
  // Predicated region
  $region162: #{run.5} parent=0 // pred_check
    _
  $region163: #{run.5} parent=0 // pred_check_branch
    %182 = sbr.rel (0) target = $region165
  $region164: #{run.5} parent=0 // pred_region
    _
  $region165: #{run.5} parent=0 // pred_fallthru
    _
  // Predicated region
  $region166: #{run.5} parent=0 // pred_check
    _
  $region167: #{run.5} parent=0 // pred_check_branch
    %184 = sbr.rel (0) target = $region169
  $region168: #{run.5} parent=0 // pred_region
    _
  $region169: #{run.5} parent=0 // pred_fallthru
    _
  // Predicated region
  $region170: #{run.5} parent=0 // pred_check
    _
  $region171: #{run.5} parent=0 // pred_check_branch
    %186 = sbr.rel (0) target = $region173
  $region172: #{run.5} parent=0 // pred_region
    _
  $region173: #{run.5} parent=0 // pred_fallthru
    _
  // Predicated region
  $region174: #{run.5} parent=0 // pred_check
    _
  $region175: #{run.5} parent=0 // pred_check_branch
    %188 = sbr.rel (0) target = $region177
  $region176: #{run.5} parent=0 // pred_region
    _
  $region177: #{run.5} parent=0 // pred_fallthru
    _
  // Predicated region
  $region178: #{run.5} parent=0 // pred_check
    _
  $region179: #{run.5} parent=0 // pred_check_branch
    %190 = sbr.rel (0) target = $region181
  $region180: #{run.5} parent=0 // pred_region
    _
  $region181: #{run.5} parent=0 // pred_fallthru
    _
  %v191 = vld [vmem:[%s1] sm:$0xff]
  %v192 = vld [vmem:[%s1 + $0x8] sm:$0x3f]
  %v193 = vld [vmem:[%s3] sm:$0xff]
  %v194 = vld [vmem:[%s3 + $0x8] sm:$0xff]
  %v195 = vld [vmem:[%s3 + $0x10] sm:$0xff]
  %v196 = vld [vmem:[%s3 + $0x18] sm:$0xff]
  %v197 = vld [vmem:[%s3 + $0x20] sm:$0xff]
  %v198 = vld [vmem:[%s3 + $0x28] sm:$0xff]
  %v199 = vld [vmem:[%s3 + $0x30] sm:$0xff]
  %v200 = vld [vmem:[%s3 + $0x38] sm:$0xff]
  %v201 = vld [vmem:[%s3 + $0x40] sm:$0xff]
  %v202 = vld [vmem:[%s3 + $0x48] sm:$0xff]
  %v203 = vld [vmem:[%s3 + $0x50] sm:$0xff]
  %v204 = vld [vmem:[%s3 + $0x58] sm:$0xff]
  %v205 = vld [vmem:[%s3 + $0x60] sm:$0xff]
  %v206 = vld [vmem:[%s3 + $0x68] sm:$0xff]
  %v207 = vld [vmem:[%s3 + $0x70] sm:$0xff]
  %v208 = vld [vmem:[%s3 + $0x78] sm:$0xff]
  %v209 = vld [vmem:[%s5] sm:$0x1]
  %v211 = vlaneseq
  %v212 = vshrl.u32 %v211, 7
  %v213 = vsub.s32 0, %v212
  %v214 = vrot.slane %v209, %v213
  %216 = vmatprep.subr.mxu0 0.0
  %217 = vmatpush1.msra.mxu0 %v208
  %218 = vmatprep.subr.mxu0 0.0
  %219 = vmatpush1.msra.mxu0 %v207
  %220 = vmatprep.subr.mxu0 0.0
  %221 = vmatpush1.msra.mxu0 %v206
  %222 = vmatprep.subr.mxu0 0.0
  %223 = vmatpush1.msra.mxu0 %v205
  %224 = vmatprep.subr.mxu0 0.0
  %225 = vmatpush1.msra.mxu0 %v204
  %226 = vmatprep.subr.mxu0 0.0
  %227 = vmatpush1.msra.mxu0 %v203
  %228 = vmatprep.subr.mxu0 0.0
  %229 = vmatpush1.msra.mxu0 %v202
  %230 = vmatprep.subr.mxu0 0.0
  %231 = vmatpush1.msra.mxu0 %v201
  %232 = vmatprep.subr.mxu0 0.0
  %233 = vmatpush1.msra.mxu0 %v200
  %234 = vmatprep.subr.mxu0 0.0
  %235 = vmatpush1.msra.mxu0 %v199
  %236 = vmatprep.subr.mxu0 0.0
  %237 = vmatpush1.msra.mxu0 %v198
  %238 = vmatprep.subr.mxu0 0.0
  %239 = vmatpush1.msra.mxu0 %v197
  %240 = vmatprep.subr.mxu0 0.0
  %241 = vmatpush1.msra.mxu0 %v196
  %242 = vmatprep.subr.mxu0 0.0
  %243 = vmatpush1.msra.mxu0 %v195
  %244 = vmatprep.subr.mxu0 0.0
  %245 = vmatpush1.msra.mxu0 %v194
  %246 = vmatprep.subr.mxu0 0.0
  %247 = vmatpush1.msra.mxu0 %v193
  %248 = vmatprep.subr.mxu0 0.0
  %249 = vmatpush2.msra.mxu0 0.0
  %250 = vmatprep.subr.mxu0 0.0
  %251 = vmatpush2.msra.mxu0 0.0
  %252 = vmatprep.subr.mxu0 0.0
  %253 = vmatpush2.msra.mxu0 0.0
  %254 = vmatprep.subr.mxu0 0.0
  %255 = vmatpush2.msra.mxu0 0.0
  %256 = vmatprep.subr.mxu0 0.0
  %257 = vmatpush2.msra.mxu0 0.0
  %258 = vmatprep.subr.mxu0 0.0
  %259 = vmatpush2.msra.mxu0 0.0
  %260 = vmatprep.subr.mxu0 0.0
  %261 = vmatpush2.msra.mxu0 0.0
  %262 = vmatprep.subr.mxu0 0.0
  %263 = vmatpush2.msra.mxu0 0.0
  %264 = vmatprep.subr.mxu0 0.0
  %265 = vmatpush2.msra.mxu0 0.0
  %266 = vmatprep.subr.mxu0 0.0
  %267 = vmatpush2.msra.mxu0 0.0
  %268 = vmatprep.subr.mxu0 0.0
  %269 = vmatpush2.msra.mxu0 0.0
  %270 = vmatprep.subr.mxu0 0.0
  %271 = vmatpush2.msra.mxu0 0.0
  %272 = vmatprep.subr.mxu0 0.0
  %273 = vmatpush2.msra.mxu0 0.0
  %274 = vmatprep.subr.mxu0 0.0
  %275 = vmatpush2.msra.mxu0 0.0
  %276 = vmatprep.subr.mxu0 0.0
  %277 = vmatpush2.msra.mxu0 0.0
  %278 = vmatprep.subr.mxu0 0.0
  %279 = vmatpush2.msra.mxu0 0.0
  %280 = vmatprep.mubr.f32.mxu0 0.0
  %281 = vmatmul.mubr.f32.gmra.mxu0 %v191
  %v282 = vpop.f32.mrf.mxu0
  %v283 = vadd.f32 %v214, %v282
  %v284 = vpop.f32.mrf.mxu0
  %285 = vmatprep.mubr.f32.mxu0 0.0
  %286 = vmatmul.mubr.f32.gmra.mxu0 %v192
  %v287 = vpop.f32.mrf.mxu0
  %v288 = vadd.f32 %v214, %v287
  %v289 = vpop.f32.mrf.mxu0
  %290 = vdwg.mxu0
  %v291 = vld [vmem:[%s7] sm:$0x7f]
  %v292 = vld [vmem:[%s73] sm:$0xff]
  %v293 = vld [vmem:[%s73 + $0x8] sm:$0xff]
  %v294 = vld [vmem:[%s73 + $0x10] sm:$0xff]
  %v295 = vld [vmem:[%s73 + $0x18] sm:$0xff]
  %v296 = vld [vmem:[%s73 + $0x20] sm:$0xff]
  %v297 = vld [vmem:[%s73 + $0x28] sm:$0xff]
  %v298 = vld [vmem:[%s73 + $0x30] sm:$0xff]
  %v299 = vld [vmem:[%s73 + $0x38] sm:$0xff]
  %v300 = vld [vmem:[%s73 + $0x40] sm:$0xff]
  %v301 = vld [vmem:[%s73 + $0x48] sm:$0xff]
  %v302 = vld [vmem:[%s73 + $0x50] sm:$0xff]
  %v303 = vld [vmem:[%s73 + $0x58] sm:$0xff]
  %v304 = vld [vmem:[%s73 + $0x60] sm:$0x3]
  %v305 = vld [vmem:[%s75] sm:$0xff]
  %v306 = vld [vmem:[%s75 + $0x8] sm:$0xff]
  %v307 = vld [vmem:[%s75 + $0x10] sm:$0xff]
  %v308 = vld [vmem:[%s75 + $0x18] sm:$0xff]
  %v309 = vld [vmem:[%s75 + $0x20] sm:$0xff]
  %v310 = vld [vmem:[%s75 + $0x28] sm:$0xff]
  %v311 = vld [vmem:[%s75 + $0x30] sm:$0xff]
  %v312 = vld [vmem:[%s75 + $0x38] sm:$0xff]
  %v313 = vld [vmem:[%s75 + $0x40] sm:$0xff]
  %v314 = vld [vmem:[%s75 + $0x48] sm:$0xff]
  %v315 = vld [vmem:[%s75 + $0x50] sm:$0xff]
  %v316 = vld [vmem:[%s75 + $0x58] sm:$0xff]
  %v317 = vld [vmem:[%s75 + $0x60] sm:$0x3]
  %v318 = vld [vmem:[%s77] sm:$0xff]
  %v319 = vld [vmem:[%s77 + $0x8] sm:$0xff]
  %v320 = vld [vmem:[%s77 + $0x10] sm:$0xff]
  %v321 = vld [vmem:[%s77 + $0x18] sm:$0xff]
  %v322 = vld [vmem:[%s77 + $0x20] sm:$0xff]
  %v323 = vld [vmem:[%s77 + $0x28] sm:$0xff]
  %v324 = vld [vmem:[%s77 + $0x30] sm:$0xff]
  %v325 = vld [vmem:[%s77 + $0x38] sm:$0xff]
  %v326 = vld [vmem:[%s77 + $0x40] sm:$0xff]
  %v327 = vld [vmem:[%s77 + $0x48] sm:$0xff]
  %v328 = vld [vmem:[%s77 + $0x50] sm:$0xff]
  %v329 = vld [vmem:[%s77 + $0x58] sm:$0xff]
  %v330 = vld [vmem:[%s77 + $0x60] sm:$0x3]
  %v331 = vld [vmem:[%s79] sm:$0xff]
  %v332 = vld [vmem:[%s79 + $0x8] sm:$0x3f]
  %v333 = vld [vmem:[%s81] sm:$0xff]
  %v334 = vld [vmem:[%s81 + $0x8] sm:$0xff]
  %v335 = vld [vmem:[%s81 + $0x10] sm:$0xff]
  %v336 = vld [vmem:[%s81 + $0x18] sm:$0xff]
  %v337 = vld [vmem:[%s81 + $0x20] sm:$0xff]
  %v338 = vld [vmem:[%s81 + $0x28] sm:$0xff]
  %v339 = vld [vmem:[%s81 + $0x30] sm:$0xff]
  %v340 = vld [vmem:[%s81 + $0x38] sm:$0xff]
  %v341 = vld [vmem:[%s81 + $0x40] sm:$0xff]
  %v342 = vld [vmem:[%s81 + $0x48] sm:$0xff]
  %v343 = vld [vmem:[%s81 + $0x50] sm:$0xff]
  %v344 = vld [vmem:[%s81 + $0x58] sm:$0xff]
  %v345 = vld [vmem:[%s81 + $0x60] sm:$0x3]
  %v346 = vld [vmem:[%s83] sm:$0xff]
  %v347 = vld [vmem:[%s83 + $0x8] sm:$0xff]
  %v348 = vld [vmem:[%s83 + $0x10] sm:$0xff]
  %v349 = vld [vmem:[%s83 + $0x18] sm:$0xff]
  %v350 = vld [vmem:[%s85] sm:$0xf]
  %v351 = vld [vmem:[%s9] sm:$0x1]
  %v352 = vld [vmem:[%s11] sm:$0x1]
  %v353 = vld [vmem:[%s13] sm:$0xff]
  %v354 = vld [vmem:[%s13 + $0x8] sm:$0xff]
  %v355 = vld [vmem:[%s13 + $0x10] sm:$0xff]
  %v356 = vld [vmem:[%s13 + $0x18] sm:$0xff]
  %v357 = vld [vmem:[%s15] sm:$0x1]
  %v358 = vld [vmem:[%s17] sm:$0xff]
  %v359 = vld [vmem:[%s17 + $0x8] sm:$0xff]
  %v360 = vld [vmem:[%s17 + $0x10] sm:$0xff]
  %v361 = vld [vmem:[%s17 + $0x18] sm:$0xff]
  %v362 = vld [vmem:[%s17 + $0x20] sm:$0xff]
  %v363 = vld [vmem:[%s17 + $0x28] sm:$0xff]
  %v364 = vld [vmem:[%s17 + $0x30] sm:$0xff]
  %v365 = vld [vmem:[%s17 + $0x38] sm:$0xff]
  %v366 = vld [vmem:[%s17 + $0x40] sm:$0xff]
  %v367 = vld [vmem:[%s17 + $0x48] sm:$0xff]
  %v368 = vld [vmem:[%s17 + $0x50] sm:$0xff]
  %v369 = vld [vmem:[%s17 + $0x58] sm:$0xff]
  %v370 = vld [vmem:[%s17 + $0x60] sm:$0xff]
  %v371 = vld [vmem:[%s17 + $0x68] sm:$0xff]
  %v372 = vld [vmem:[%s17 + $0x70] sm:$0xff]
  %v373 = vld [vmem:[%s17 + $0x78] sm:$0xff]
  %v374 = vld [vmem:[%s19] sm:$0x1]
  %vm375 = vcmask 261120
  %v376 = vsel %vm375, %v283, 0.0
  %377 = vadd.xlane.f32.xlu0 %v376
  %v378 = vpop.xlane.xlu0 %377
  %vm379 = vcmask 259072
  %v380 = vsel %vm379, %v288, 0.0
  %381 = vadd.xlane.f32.xlu0 %v380
  %v382 = vpop.xlane.xlu0 %381
  %v383 = vrcp.pop 32.0
  %v384 = vmul.f32 %v378, %v383
  %v385 = vmul.f32 %v382, %v383
  %v386 = vsub.f32 %v283, %v384
  %v387 = vsub.f32 %v288, %v385
  %v388 = vmul.f32 %v386, %v386
  %v389 = vmul.f32 %v387, %v387
  %v390 = vsel %vm375, %v388, 0.0
  %391 = vadd.xlane.f32.xlu0 %v390
  %v392 = vpop.xlane.xlu0 %391
  %v393 = vsel %vm379, %v389, 0.0
  %394 = vadd.xlane.f32.xlu0 %v393
  %v395 = vpop.xlane.xlu0 %394
  %v396 = vmul.f32 %v392, %v383
  %v397 = vmul.f32 %v395, %v383
  %v398 = vadd.f32 %v396, 1e-05
  %v399 = vadd.f32 %v397, 1e-05
  %v400 = vrsqrt.pop %v398
  %v401 = vrsqrt.pop %v399
  %v402 = vmul.f32 %v386, %v400
  %v403 = vmul.f32 %v387, %v401
  %v405 = vlaneseq
  %v406 = vshrl.u32 %v405, 7
  %v407 = vsub.s32 0, %v406
  %v408 = vrot.slane %v351, %v407
  %v410 = vmul.f32 %v402, %v408
  %v411 = vmul.f32 %v403, %v408
  %v413 = vlaneseq
  %v414 = vshrl.u32 %v413, 7
  %v415 = vsub.s32 0, %v414
  %v416 = vrot.slane %v352, %v415
  %v418 = vadd.f32 %v410, %v416
  %v419 = vadd.f32 %v411, %v416
  %v421 = vlaneseq
  %v422 = vshrl.u32 %v421, 7
  %v423 = vsub.s32 0, %v422
  %v424 = vrot.slane %v357, %v423
  %v427 = vsel %vm375, %v418, 0
  %v430 = vsel %vm375, %v419, 0
  %432 = vmatprep.subr.mxu0 0.0
  %433 = vmatpush1.msra.mxu0 0.0
  %434 = vmatprep.subr.mxu0 0.0
  %435 = vmatpush1.msra.mxu0 0.0
  %436 = vmatprep.subr.mxu0 0.0
  %437 = vmatpush1.msra.mxu0 0.0
  %438 = vmatprep.subr.mxu0 0.0
  %439 = vmatpush1.msra.mxu0 0.0
  %440 = vmatprep.subr.mxu0 0.0
  %441 = vmatpush1.msra.mxu0 0.0
  %442 = vmatprep.subr.mxu0 0.0
  %443 = vmatpush1.msra.mxu0 0.0
  %444 = vmatprep.subr.mxu0 0.0
  %445 = vmatpush1.msra.mxu0 0.0
  %446 = vmatprep.subr.mxu0 0.0
  %447 = vmatpush1.msra.mxu0 0.0
  %448 = vmatprep.subr.mxu0 0.0
  %449 = vmatpush1.msra.mxu0 0.0
  %450 = vmatprep.subr.mxu0 0.0
  %451 = vmatpush1.msra.mxu0 0.0
  %452 = vmatprep.subr.mxu0 0.0
  %453 = vmatpush1.msra.mxu0 0.0
  %454 = vmatprep.subr.mxu0 0.0
  %455 = vmatpush1.msra.mxu0 0.0
  %456 = vmatprep.subr.mxu0 0.0
  %457 = vmatpush1.msra.mxu0 %v356
  %458 = vmatprep.subr.mxu0 0.0
  %459 = vmatpush1.msra.mxu0 %v355
  %460 = vmatprep.subr.mxu0 0.0
  %461 = vmatpush1.msra.mxu0 %v354
  %462 = vmatprep.subr.mxu0 0.0
  %463 = vmatpush1.msra.mxu0 %v353
  %464 = vmatprep.subr.mxu0 0.0
  %465 = vmatpush2.msra.mxu0 0.0
  %466 = vmatprep.subr.mxu0 0.0
  %467 = vmatpush2.msra.mxu0 0.0
  %468 = vmatprep.subr.mxu0 0.0
  %469 = vmatpush2.msra.mxu0 0.0
  %470 = vmatprep.subr.mxu0 0.0
  %471 = vmatpush2.msra.mxu0 0.0
  %472 = vmatprep.subr.mxu0 0.0
  %473 = vmatpush2.msra.mxu0 0.0
  %474 = vmatprep.subr.mxu0 0.0
  %475 = vmatpush2.msra.mxu0 0.0
  %476 = vmatprep.subr.mxu0 0.0
  %477 = vmatpush2.msra.mxu0 0.0
  %478 = vmatprep.subr.mxu0 0.0
  %479 = vmatpush2.msra.mxu0 0.0
  %480 = vmatprep.subr.mxu0 0.0
  %481 = vmatpush2.msra.mxu0 0.0
  %482 = vmatprep.subr.mxu0 0.0
  %483 = vmatpush2.msra.mxu0 0.0
  %484 = vmatprep.subr.mxu0 0.0
  %485 = vmatpush2.msra.mxu0 0.0
  %486 = vmatprep.subr.mxu0 0.0
  %487 = vmatpush2.msra.mxu0 0.0
  %488 = vmatprep.subr.mxu0 0.0
  %489 = vmatpush2.msra.mxu0 0.0
  %490 = vmatprep.subr.mxu0 0.0
  %491 = vmatpush2.msra.mxu0 0.0
  %492 = vmatprep.subr.mxu0 0.0
  %493 = vmatpush2.msra.mxu0 0.0
  %494 = vmatprep.subr.mxu0 0.0
  %495 = vmatpush2.msra.mxu0 0.0
  %496 = vmatprep.mubr.f32.mxu0 0.0
  %497 = vmatmul.mubr.f32.gmra.mxu0 %v427
  %v498 = vpop.f32.mrf.mxu0
  %v499 = vadd.f32 %v424, %v498
  %v500 = vpop.f32.mrf.mxu0
  %501 = vmatprep.mubr.f32.mxu0 0.0
  %502 = vmatmul.mubr.f32.gmra.mxu0 %v430
  %v503 = vpop.f32.mrf.mxu0
  %v504 = vadd.f32 %v424, %v503
  %v505 = vpop.f32.mrf.mxu0
  %506 = vdwg.mxu0
  %v507 = vsub.f32 0.0, %v499
  %v508 = vsub.f32 0.0, %v504
  %v509 = vmul.f32 %v507, 1.442695
  %v510 = vpow.pop %v509
  %v511 = vmul.f32 %v508, 1.442695
  %v512 = vpow.pop %v511
  %v513 = vadd.f32 %v510, 1.0
  %v514 = vadd.f32 %v512, 1.0
  %v515 = vrcp.pop %v513
  %v516 = vmul.f32 1.0, %v515
  %v517 = vrcp.pop %v514
  %v518 = vmul.f32 1.0, %v517
  %v519 = vmul.f32 %v499, %v516
  %v520 = vmul.f32 %v504, %v518
  %v522 = vlaneseq
  %v523 = vshrl.u32 %v522, 7
  %v524 = vsub.s32 0, %v523
  %v525 = vrot.slane %v374, %v524
  %527 = vmatprep.subr.mxu0 0.0
  %528 = vmatpush1.msra.mxu0 %v373
  %529 = vmatprep.subr.mxu0 0.0
  %530 = vmatpush1.msra.mxu0 %v372
  %531 = vmatprep.subr.mxu0 0.0
  %532 = vmatpush1.msra.mxu0 %v371
  %533 = vmatprep.subr.mxu0 0.0
  %534 = vmatpush1.msra.mxu0 %v370
  %535 = vmatprep.subr.mxu0 0.0
  %536 = vmatpush1.msra.mxu0 %v369
  %537 = vmatprep.subr.mxu0 0.0
  %538 = vmatpush1.msra.mxu0 %v368
  %539 = vmatprep.subr.mxu0 0.0
  %540 = vmatpush1.msra.mxu0 %v367
  %541 = vmatprep.subr.mxu0 0.0
  %542 = vmatpush1.msra.mxu0 %v366
  %543 = vmatprep.subr.mxu0 0.0
  %544 = vmatpush1.msra.mxu0 %v365
  %545 = vmatprep.subr.mxu0 0.0
  %546 = vmatpush1.msra.mxu0 %v364
  %547 = vmatprep.subr.mxu0 0.0
  %548 = vmatpush1.msra.mxu0 %v363
  %549 = vmatprep.subr.mxu0 0.0
  %550 = vmatpush1.msra.mxu0 %v362
  %551 = vmatprep.subr.mxu0 0.0
  %552 = vmatpush1.msra.mxu0 %v361
  %553 = vmatprep.subr.mxu0 0.0
  %554 = vmatpush1.msra.mxu0 %v360
  %555 = vmatprep.subr.mxu0 0.0
  %556 = vmatpush1.msra.mxu0 %v359
  %557 = vmatprep.subr.mxu0 0.0
  %558 = vmatpush1.msra.mxu0 %v358
  %559 = vmatprep.subr.mxu0 0.0
  %560 = vmatpush2.msra.mxu0 0.0
  %561 = vmatprep.subr.mxu0 0.0
  %562 = vmatpush2.msra.mxu0 0.0
  %563 = vmatprep.subr.mxu0 0.0
  %564 = vmatpush2.msra.mxu0 0.0
  %565 = vmatprep.subr.mxu0 0.0
  %566 = vmatpush2.msra.mxu0 0.0
  %567 = vmatprep.subr.mxu0 0.0
  %568 = vmatpush2.msra.mxu0 0.0
  %569 = vmatprep.subr.mxu0 0.0
  %570 = vmatpush2.msra.mxu0 0.0
  %571 = vmatprep.subr.mxu0 0.0
  %572 = vmatpush2.msra.mxu0 0.0
  %573 = vmatprep.subr.mxu0 0.0
  %574 = vmatpush2.msra.mxu0 0.0
  %575 = vmatprep.subr.mxu0 0.0
  %576 = vmatpush2.msra.mxu0 0.0
  %577 = vmatprep.subr.mxu0 0.0
  %578 = vmatpush2.msra.mxu0 0.0
  %579 = vmatprep.subr.mxu0 0.0
  %580 = vmatpush2.msra.mxu0 0.0
  %581 = vmatprep.subr.mxu0 0.0
  %582 = vmatpush2.msra.mxu0 0.0
  %583 = vmatprep.subr.mxu0 0.0
  %584 = vmatpush2.msra.mxu0 0.0
  %585 = vmatprep.subr.mxu0 0.0
  %586 = vmatpush2.msra.mxu0 0.0
  %587 = vmatprep.subr.mxu0 0.0
  %588 = vmatpush2.msra.mxu0 0.0
  %589 = vmatprep.subr.mxu0 0.0
  %590 = vmatpush2.msra.mxu0 0.0
  %591 = vmatprep.mubr.f32.mxu0 0.0
  %592 = vmatmul.mubr.f32.gmra.mxu0 %v519
  %v593 = vpop.f32.mrf.mxu0
  %v594 = vadd.f32 %v525, %v593
  %v595 = vpop.f32.mrf.mxu0
  %596 = vmatprep.mubr.f32.mxu0 0.0
  %597 = vmatmul.mubr.f32.gmra.mxu0 %v520
  %v598 = vpop.f32.mrf.mxu0
  %v599 = vadd.f32 %v525, %v598
  %v600 = vpop.f32.mrf.mxu0
  %601 = vdwg.mxu0
  %v602 = vmul.f32 %v594, 0.5
  %v603 = vmul.f32 %v599, 0.5
  %v604 = vadd.f32 %v283, %v602
  %v605 = vadd.f32 %v288, %v603
  %v606 = vld [vmem:[%s21] sm:$0x1]
  %v607 = vld [vmem:[%s23] sm:$0x1]
  %v608 = vsel %vm375, %v604, 0.0
  %609 = vadd.xlane.f32.xlu0 %v608
  %v610 = vpop.xlane.xlu0 %609
  %v611 = vsel %vm379, %v605, 0.0
  %612 = vadd.xlane.f32.xlu0 %v611
  %v613 = vpop.xlane.xlu0 %612
  %v614 = vmul.f32 %v610, %v383
  %v615 = vmul.f32 %v613, %v383
  %v616 = vsub.f32 %v604, %v614
  %v617 = vsub.f32 %v605, %v615
  %v618 = vmul.f32 %v616, %v616
  %v619 = vmul.f32 %v617, %v617
  %v620 = vsel %vm375, %v618, 0.0
  %621 = vadd.xlane.f32.xlu0 %v620
  %v622 = vpop.xlane.xlu0 %621
  %v623 = vsel %vm379, %v619, 0.0
  %624 = vadd.xlane.f32.xlu0 %v623
  %v625 = vpop.xlane.xlu0 %624
  %v626 = vmul.f32 %v622, %v383
  %v627 = vmul.f32 %v625, %v383
  %v628 = vadd.f32 %v626, 1e-05
  %v629 = vadd.f32 %v627, 1e-05
  %v630 = vrsqrt.pop %v628
  %v631 = vrsqrt.pop %v629
  %v632 = vmul.f32 %v616, %v630
  %v633 = vmul.f32 %v617, %v631
  %v635 = vlaneseq
  %v636 = vshrl.u32 %v635, 7
  %v637 = vsub.s32 0, %v636
  %v638 = vrot.slane %v606, %v637
  %v640 = vmul.f32 %v632, %v638
  %v641 = vmul.f32 %v633, %v638
  %v643 = vlaneseq
  %v644 = vshrl.u32 %v643, 7
  %v645 = vsub.s32 0, %v644
  %v646 = vrot.slane %v607, %v645
  %v648 = vadd.f32 %v640, %v646
  %v649 = vadd.f32 %v641, %v646
  %v650 = vld [vmem:[%s25] sm:$0xff]
  %v651 = vld [vmem:[%s25 + $0x8] sm:$0xff]
  %v652 = vld [vmem:[%s25 + $0x10] sm:$0xff]
  %v653 = vld [vmem:[%s25 + $0x18] sm:$0xff]
  %v654 = vld [vmem:[%s27] sm:$0x1]
  %v656 = vlaneseq
  %v657 = vshrl.u32 %v656, 7
  %v658 = vsub.s32 0, %v657
  %v659 = vrot.slane %v654, %v658
  %v662 = vsel %vm375, %v648, 0
  %v665 = vsel %vm375, %v649, 0
  %667 = vmatprep.subr.mxu0 0.0
  %668 = vmatpush1.msra.mxu0 0.0
  %669 = vmatprep.subr.mxu0 0.0
  %670 = vmatpush1.msra.mxu0 0.0
  %671 = vmatprep.subr.mxu0 0.0
  %672 = vmatpush1.msra.mxu0 0.0
  %673 = vmatprep.subr.mxu0 0.0
  %674 = vmatpush1.msra.mxu0 0.0
  %675 = vmatprep.subr.mxu0 0.0
  %676 = vmatpush1.msra.mxu0 0.0
  %677 = vmatprep.subr.mxu0 0.0
  %678 = vmatpush1.msra.mxu0 0.0
  %679 = vmatprep.subr.mxu0 0.0
  %680 = vmatpush1.msra.mxu0 0.0
  %681 = vmatprep.subr.mxu0 0.0
  %682 = vmatpush1.msra.mxu0 0.0
  %683 = vmatprep.subr.mxu0 0.0
  %684 = vmatpush1.msra.mxu0 0.0
  %685 = vmatprep.subr.mxu0 0.0
  %686 = vmatpush1.msra.mxu0 0.0
  %687 = vmatprep.subr.mxu0 0.0
  %688 = vmatpush1.msra.mxu0 0.0
  %689 = vmatprep.subr.mxu0 0.0
  %690 = vmatpush1.msra.mxu0 0.0
  %691 = vmatprep.subr.mxu0 0.0
  %692 = vmatpush1.msra.mxu0 %v653
  %693 = vmatprep.subr.mxu0 0.0
  %694 = vmatpush1.msra.mxu0 %v652
  %695 = vmatprep.subr.mxu0 0.0
  %696 = vmatpush1.msra.mxu0 %v651
  %697 = vmatprep.subr.mxu0 0.0
  %698 = vmatpush1.msra.mxu0 %v650
  %699 = vmatprep.subr.mxu0 0.0
  %700 = vmatpush2.msra.mxu0 0.0
  %701 = vmatprep.subr.mxu0 0.0
  %702 = vmatpush2.msra.mxu0 0.0
  %703 = vmatprep.subr.mxu0 0.0
  %704 = vmatpush2.msra.mxu0 0.0
  %705 = vmatprep.subr.mxu0 0.0
  %706 = vmatpush2.msra.mxu0 0.0
  %707 = vmatprep.subr.mxu0 0.0
  %708 = vmatpush2.msra.mxu0 0.0
  %709 = vmatprep.subr.mxu0 0.0
  %710 = vmatpush2.msra.mxu0 0.0
  %711 = vmatprep.subr.mxu0 0.0
  %712 = vmatpush2.msra.mxu0 0.0
  %713 = vmatprep.subr.mxu0 0.0
  %714 = vmatpush2.msra.mxu0 0.0
  %715 = vmatprep.subr.mxu0 0.0
  %716 = vmatpush2.msra.mxu0 0.0
  %717 = vmatprep.subr.mxu0 0.0
  %718 = vmatpush2.msra.mxu0 0.0
  %719 = vmatprep.subr.mxu0 0.0
  %720 = vmatpush2.msra.mxu0 0.0
  %721 = vmatprep.subr.mxu0 0.0
  %722 = vmatpush2.msra.mxu0 0.0
  %723 = vmatprep.subr.mxu0 0.0
  %724 = vmatpush2.msra.mxu0 0.0
  %725 = vmatprep.subr.mxu0 0.0
  %726 = vmatpush2.msra.mxu0 0.0
  %727 = vmatprep.subr.mxu0 0.0
  %728 = vmatpush2.msra.mxu0 0.0
  %729 = vmatprep.subr.mxu0 0.0
  %730 = vmatpush2.msra.mxu0 0.0
  %731 = vmatprep.mubr.f32.mxu0 0.0
  %732 = vmatmul.mubr.f32.gmra.mxu0 %v662
  %v733 = vpop.f32.mrf.mxu0
  %v734 = vadd.f32 %v659, %v733
  %v735 = vpop.f32.mrf.mxu0
  %736 = vmatprep.mubr.f32.mxu0 0.0
  %737 = vmatmul.mubr.f32.gmra.mxu0 %v665
  %v738 = vpop.f32.mrf.mxu0
  %v739 = vadd.f32 %v659, %v738
  %v740 = vpop.f32.mrf.mxu0
  %741 = vdwg.mxu0
  %v742 = vld [vmem:[%s29] sm:$0xff]
  %v743 = vld [vmem:[%s29 + $0x8] sm:$0xff]
  %v744 = vld [vmem:[%s29 + $0x10] sm:$0xff]
  %v745 = vld [vmem:[%s29 + $0x18] sm:$0xff]
  %v747 = vsel %vm375, %v291, 0
  %749 = vmatprep.subr.mxu0 0.0
  %750 = vmatpush1.msra.mxu0 0.0
  %751 = vmatprep.subr.mxu0 0.0
  %752 = vmatpush1.msra.mxu0 0.0
  %753 = vmatprep.subr.mxu0 0.0
  %754 = vmatpush1.msra.mxu0 0.0
  %755 = vmatprep.subr.mxu0 0.0
  %756 = vmatpush1.msra.mxu0 0.0
  %757 = vmatprep.subr.mxu0 0.0
  %758 = vmatpush1.msra.mxu0 0.0
  %759 = vmatprep.subr.mxu0 0.0
  %760 = vmatpush1.msra.mxu0 0.0
  %761 = vmatprep.subr.mxu0 0.0
  %762 = vmatpush1.msra.mxu0 0.0
  %763 = vmatprep.subr.mxu0 0.0
  %764 = vmatpush1.msra.mxu0 0.0
  %765 = vmatprep.subr.mxu0 0.0
  %766 = vmatpush1.msra.mxu0 0.0
  %767 = vmatprep.subr.mxu0 0.0
  %768 = vmatpush1.msra.mxu0 0.0
  %769 = vmatprep.subr.mxu0 0.0
  %770 = vmatpush1.msra.mxu0 0.0
  %771 = vmatprep.subr.mxu0 0.0
  %772 = vmatpush1.msra.mxu0 0.0
  %773 = vmatprep.subr.mxu0 0.0
  %774 = vmatpush1.msra.mxu0 %v745
  %775 = vmatprep.subr.mxu0 0.0
  %776 = vmatpush1.msra.mxu0 %v744
  %777 = vmatprep.subr.mxu0 0.0
  %778 = vmatpush1.msra.mxu0 %v743
  %779 = vmatprep.subr.mxu0 0.0
  %780 = vmatpush1.msra.mxu0 %v742
  %781 = vmatprep.subr.mxu0 0.0
  %782 = vmatpush2.msra.mxu0 0.0
  %783 = vmatprep.subr.mxu0 0.0
  %784 = vmatpush2.msra.mxu0 0.0
  %785 = vmatprep.subr.mxu0 0.0
  %786 = vmatpush2.msra.mxu0 0.0
  %787 = vmatprep.subr.mxu0 0.0
  %788 = vmatpush2.msra.mxu0 0.0
  %789 = vmatprep.subr.mxu0 0.0
  %790 = vmatpush2.msra.mxu0 0.0
  %791 = vmatprep.subr.mxu0 0.0
  %792 = vmatpush2.msra.mxu0 0.0
  %793 = vmatprep.subr.mxu0 0.0
  %794 = vmatpush2.msra.mxu0 0.0
  %795 = vmatprep.subr.mxu0 0.0
  %796 = vmatpush2.msra.mxu0 0.0
  %797 = vmatprep.subr.mxu0 0.0
  %798 = vmatpush2.msra.mxu0 0.0
  %799 = vmatprep.subr.mxu0 0.0
  %800 = vmatpush2.msra.mxu0 0.0
  %801 = vmatprep.subr.mxu0 0.0
  %802 = vmatpush2.msra.mxu0 0.0
  %803 = vmatprep.subr.mxu0 0.0
  %804 = vmatpush2.msra.mxu0 0.0
  %805 = vmatprep.subr.mxu0 0.0
  %806 = vmatpush2.msra.mxu0 0.0
  %807 = vmatprep.subr.mxu0 0.0
  %808 = vmatpush2.msra.mxu0 0.0
  %809 = vmatprep.subr.mxu0 0.0
  %810 = vmatpush2.msra.mxu0 0.0
  %811 = vmatprep.subr.mxu0 0.0
  %812 = vmatpush2.msra.mxu0 0.0
  %813 = vmatprep.mubr.f32.mxu0 0.0
  %814 = vmatmul.mubr.f32.gmra.mxu0 %v747
  %v815 = vpop.f32.mrf.mxu0
  %v816 = vadd.f32 0.0, %v815
  %v817 = vpop.f32.mrf.mxu0
  %818 = vdwg.mxu0
  %v819 = vld [vmem:[%s31] sm:$0x1]
  %v821 = vlaneseq
  %v822 = vshrl.u32 %v821, 7
  %v823 = vsub.s32 0, %v822
  %v824 = vrot.slane %v819, %v823
  %v826 = vadd.f32 %v734, %v824
  %v827 = vadd.f32 %v739, %v824
  %vm828 = vcmask 113664
  %v830 = vsel %vm828, %v292, 0
  %v833 = vsel %vm828, %v293, 0
  %v836 = vsel %vm828, %v294, 0
  %v839 = vsel %vm828, %v295, 0
  %v842 = vsel %vm828, %v296, 0
  %v845 = vsel %vm828, %v297, 0
  %v848 = vsel %vm828, %v298, 0
  %v851 = vsel %vm828, %v299, 0
  %v854 = vsel %vm828, %v300, 0
  %v857 = vsel %vm828, %v301, 0
  %v860 = vsel %vm828, %v302, 0
  %v863 = vsel %vm828, %v303, 0
  %v866 = vsel %vm828, %v304, 0
  %vm868 = vcmask 1045504
  %v870 = vsel %vm868, %v827, 0
  %872 = vmatprep.subr.mxu0 0.0
  %873 = vmatpush1.msra.mxu0 0.0
  %874 = vmatprep.subr.mxu0 0.0
  %875 = vmatpush1.msra.mxu0 0.0
  %876 = vmatprep.subr.mxu0 0.0
  %877 = vmatpush1.msra.mxu0 0.0
  %878 = vmatprep.subr.mxu0 0.0
  %879 = vmatpush1.msra.mxu0 0.0
  %880 = vmatprep.subr.mxu0 0.0
  %881 = vmatpush1.msra.mxu0 0.0
  %882 = vmatprep.subr.mxu0 0.0
  %883 = vmatpush1.msra.mxu0 0.0
  %884 = vmatprep.subr.mxu0 0.0
  %885 = vmatpush1.msra.mxu0 0.0
  %886 = vmatprep.subr.mxu0 0.0
  %887 = vmatpush1.msra.mxu0 0.0
  %888 = vmatprep.subr.mxu0 0.0
  %889 = vmatpush1.msra.mxu0 0.0
  %890 = vmatprep.subr.mxu0 0.0
  %891 = vmatpush1.msra.mxu0 0.0
  %892 = vmatprep.subr.mxu0 0.0
  %893 = vmatpush1.msra.mxu0 0.0
  %894 = vmatprep.subr.mxu0 0.0
  %895 = vmatpush1.msra.mxu0 0.0
  %896 = vmatprep.subr.mxu0 0.0
  %897 = vmatpush1.msra.mxu0 0.0
  %898 = vmatprep.subr.mxu0 0.0
  %899 = vmatpush1.msra.mxu0 0.0
  %900 = vmatprep.subr.mxu0 0.0
  %901 = vmatpush1.msra.mxu0 %v870
  %902 = vmatprep.subr.mxu0 0.0
  %903 = vmatpush1.msra.mxu0 %v826
  %904 = vmatprep.subr.mxu0 0.0
  %905 = vmatpush2.msra.mxu0 0.0
  %906 = vmatprep.subr.mxu0 0.0
  %907 = vmatpush2.msra.mxu0 0.0
  %908 = vmatprep.subr.mxu0 0.0
  %909 = vmatpush2.msra.mxu0 0.0
  %910 = vmatprep.subr.mxu0 0.0
  %911 = vmatpush2.msra.mxu0 0.0
  %912 = vmatprep.subr.mxu0 0.0
  %913 = vmatpush2.msra.mxu0 0.0
  %914 = vmatprep.subr.mxu0 0.0
  %915 = vmatpush2.msra.mxu0 0.0
  %916 = vmatprep.subr.mxu0 0.0
  %917 = vmatpush2.msra.mxu0 0.0
  %918 = vmatprep.subr.mxu0 0.0
  %919 = vmatpush2.msra.mxu0 0.0
  %920 = vmatprep.subr.mxu0 0.0
  %921 = vmatpush2.msra.mxu0 0.0
  %922 = vmatprep.subr.mxu0 0.0
  %923 = vmatpush2.msra.mxu0 0.0
  %924 = vmatprep.subr.mxu0 0.0
  %925 = vmatpush2.msra.mxu0 0.0
  %926 = vmatprep.subr.mxu0 0.0
  %927 = vmatpush2.msra.mxu0 0.0
  %928 = vmatprep.subr.mxu0 0.0
  %929 = vmatpush2.msra.mxu0 0.0
  %930 = vmatprep.subr.mxu0 0.0
  %931 = vmatpush2.msra.mxu0 0.0
  %932 = vmatprep.subr.mxu0 0.0
  %933 = vmatpush2.msra.mxu0 0.0
  %934 = vmatprep.subr.mxu0 0.0
  %935 = vmatpush2.msra.mxu0 0.0
  %936 = vmatprep.mubr.f32.mxu0 0.0
  %937 = vmatmul.mubr.f32.gmra.mxu0 %v830
  %v938 = vpop.f32.mrf.mxu0
  %v939 = vadd.f32 0.0, %v938
  %v940 = vpop.f32.mrf.mxu0
  %941 = vmatprep.mubr.f32.mxu0 0.0
  %942 = vmatmul.mubr.f32.gmra.mxu0 %v833
  %v943 = vpop.f32.mrf.mxu0
  %v944 = vadd.f32 0.0, %v943
  %v945 = vpop.f32.mrf.mxu0
  %946 = vmatprep.mubr.f32.mxu0 0.0
  %947 = vmatmul.mubr.f32.gmra.mxu0 %v836
  %v948 = vpop.f32.mrf.mxu0
  %v949 = vadd.f32 0.0, %v948
  %v950 = vpop.f32.mrf.mxu0
  %951 = vmatprep.mubr.f32.mxu0 0.0
  %952 = vmatmul.mubr.f32.gmra.mxu0 %v839
  %v953 = vpop.f32.mrf.mxu0
  %v954 = vadd.f32 0.0, %v953
  %v955 = vpop.f32.mrf.mxu0
  %956 = vmatprep.mubr.f32.mxu0 0.0
  %957 = vmatmul.mubr.f32.gmra.mxu0 %v842
  %v958 = vpop.f32.mrf.mxu0
  %v959 = vadd.f32 0.0, %v958
  %v960 = vpop.f32.mrf.mxu0
  %961 = vmatprep.mubr.f32.mxu0 0.0
  %962 = vmatmul.mubr.f32.gmra.mxu0 %v845
  %v963 = vpop.f32.mrf.mxu0
  %v964 = vadd.f32 0.0, %v963
  %v965 = vpop.f32.mrf.mxu0
  %966 = vmatprep.mubr.f32.mxu0 0.0
  %967 = vmatmul.mubr.f32.gmra.mxu0 %v848
  %v968 = vpop.f32.mrf.mxu0
  %v969 = vadd.f32 0.0, %v968
  %v970 = vpop.f32.mrf.mxu0
  %971 = vmatprep.mubr.f32.mxu0 0.0
  %972 = vmatmul.mubr.f32.gmra.mxu0 %v851
  %v973 = vpop.f32.mrf.mxu0
  %v974 = vadd.f32 0.0, %v973
  %v975 = vpop.f32.mrf.mxu0
  %976 = vmatprep.mubr.f32.mxu0 0.0
  %977 = vmatmul.mubr.f32.gmra.mxu0 %v854
  %v978 = vpop.f32.mrf.mxu0
  %v979 = vadd.f32 0.0, %v978
  %v980 = vpop.f32.mrf.mxu0
  %981 = vmatprep.mubr.f32.mxu0 0.0
  %982 = vmatmul.mubr.f32.gmra.mxu0 %v857
  %v983 = vpop.f32.mrf.mxu0
  %v984 = vadd.f32 0.0, %v983
  %v985 = vpop.f32.mrf.mxu0
  %986 = vmatprep.mubr.f32.mxu0 0.0
  %987 = vmatmul.mubr.f32.gmra.mxu0 %v860
  %v988 = vpop.f32.mrf.mxu0
  %v989 = vadd.f32 0.0, %v988
  %v990 = vpop.f32.mrf.mxu0
  %991 = vmatprep.mubr.f32.mxu0 0.0
  %992 = vmatmul.mubr.f32.gmra.mxu0 %v863
  %v993 = vpop.f32.mrf.mxu0
  %v994 = vadd.f32 0.0, %v993
  %v995 = vpop.f32.mrf.mxu0
  %996 = vmatprep.mubr.f32.mxu0 0.0
  %997 = vmatmul.mubr.f32.gmra.mxu0 %v866
  %v998 = vpop.f32.mrf.mxu0
  %v999 = vadd.f32 0.0, %v998
  %v1000 = vpop.f32.mrf.mxu0
  %1001 = vdwg.mxu0
  %v1002 = vld [vmem:[%s33] sm:$0x1]
  %v1004 = vlaneseq
  %v1005 = vshrl.u32 %v1004, 7
  %v1006 = vsub.s32 0, %v1005
  %v1007 = vrot.slane %v1002, %v1006
  %v1009 = vadd.f32 %v734, %v1007
  %v1010 = vadd.f32 %v739, %v1007
  %v1012 = vsel %vm868, %v1010, 0
  %1014 = vmatprep.subr.mxu0 0.0
  %1015 = vmatpush1.msra.mxu0 0.0
  %1016 = vmatprep.subr.mxu0 0.0
  %1017 = vmatpush1.msra.mxu0 0.0
  %1018 = vmatprep.subr.mxu0 0.0
  %1019 = vmatpush1.msra.mxu0 0.0
  %1020 = vmatprep.subr.mxu0 0.0
  %1021 = vmatpush1.msra.mxu0 0.0
  %1022 = vmatprep.subr.mxu0 0.0
  %1023 = vmatpush1.msra.mxu0 0.0
  %1024 = vmatprep.subr.mxu0 0.0
  %1025 = vmatpush1.msra.mxu0 0.0
  %1026 = vmatprep.subr.mxu0 0.0
  %1027 = vmatpush1.msra.mxu0 0.0
  %1028 = vmatprep.subr.mxu0 0.0
  %1029 = vmatpush1.msra.mxu0 0.0
  %1030 = vmatprep.subr.mxu0 0.0
  %1031 = vmatpush1.msra.mxu0 0.0
  %1032 = vmatprep.subr.mxu0 0.0
  %1033 = vmatpush1.msra.mxu0 0.0
  %1034 = vmatprep.subr.mxu0 0.0
  %1035 = vmatpush1.msra.mxu0 0.0
  %1036 = vmatprep.subr.mxu0 0.0
  %1037 = vmatpush1.msra.mxu0 0.0
  %1038 = vmatprep.subr.mxu0 0.0
  %1039 = vmatpush1.msra.mxu0 0.0
  %1040 = vmatprep.subr.mxu0 0.0
  %1041 = vmatpush1.msra.mxu0 0.0
  %1042 = vmatprep.subr.mxu0 0.0
  %1043 = vmatpush1.msra.mxu0 %v1012
  %1044 = vmatprep.subr.mxu0 0.0
  %1045 = vmatpush1.msra.mxu0 %v1009
  %1046 = vmatprep.subr.mxu0 0.0
  %1047 = vmatpush2.msra.mxu0 0.0
  %1048 = vmatprep.subr.mxu0 0.0
  %1049 = vmatpush2.msra.mxu0 0.0
  %1050 = vmatprep.subr.mxu0 0.0
  %1051 = vmatpush2.msra.mxu0 0.0
  %1052 = vmatprep.subr.mxu0 0.0
  %1053 = vmatpush2.msra.mxu0 0.0
  %1054 = vmatprep.subr.mxu0 0.0
  %1055 = vmatpush2.msra.mxu0 0.0
  %1056 = vmatprep.subr.mxu0 0.0
  %1057 = vmatpush2.msra.mxu0 0.0
  %1058 = vmatprep.subr.mxu0 0.0
  %1059 = vmatpush2.msra.mxu0 0.0
  %1060 = vmatprep.subr.mxu0 0.0
  %1061 = vmatpush2.msra.mxu0 0.0
  %1062 = vmatprep.subr.mxu0 0.0
  %1063 = vmatpush2.msra.mxu0 0.0
  %1064 = vmatprep.subr.mxu0 0.0
  %1065 = vmatpush2.msra.mxu0 0.0
  %1066 = vmatprep.subr.mxu0 0.0
  %1067 = vmatpush2.msra.mxu0 0.0
  %1068 = vmatprep.subr.mxu0 0.0
  %1069 = vmatpush2.msra.mxu0 0.0
  %1070 = vmatprep.subr.mxu0 0.0
  %1071 = vmatpush2.msra.mxu0 0.0
  %1072 = vmatprep.subr.mxu0 0.0
  %1073 = vmatpush2.msra.mxu0 0.0
  %1074 = vmatprep.subr.mxu0 0.0
  %1075 = vmatpush2.msra.mxu0 0.0
  %1076 = vmatprep.subr.mxu0 0.0
  %1077 = vmatpush2.msra.mxu0 0.0
  %1078 = vmatprep.mubr.f32.mxu0 0.0
  %1079 = vmatmul.mubr.f32.gmra.mxu0 %v830
  %v1080 = vpop.f32.mrf.mxu0
  %v1081 = vadd.f32 0.0, %v1080
  %v1082 = vpop.f32.mrf.mxu0
  %1083 = vmatprep.mubr.f32.mxu0 0.0
  %1084 = vmatmul.mubr.f32.gmra.mxu0 %v833
  %v1085 = vpop.f32.mrf.mxu0
  %v1086 = vadd.f32 0.0, %v1085
  %v1087 = vpop.f32.mrf.mxu0
  %1088 = vmatprep.mubr.f32.mxu0 0.0
  %1089 = vmatmul.mubr.f32.gmra.mxu0 %v836
  %v1090 = vpop.f32.mrf.mxu0
  %v1091 = vadd.f32 0.0, %v1090
  %v1092 = vpop.f32.mrf.mxu0
  %1093 = vmatprep.mubr.f32.mxu0 0.0
  %1094 = vmatmul.mubr.f32.gmra.mxu0 %v839
  %v1095 = vpop.f32.mrf.mxu0
  %v1096 = vadd.f32 0.0, %v1095
  %v1097 = vpop.f32.mrf.mxu0
  %1098 = vmatprep.mubr.f32.mxu0 0.0
  %1099 = vmatmul.mubr.f32.gmra.mxu0 %v842
  %v1100 = vpop.f32.mrf.mxu0
  %v1101 = vadd.f32 0.0, %v1100
  %v1102 = vpop.f32.mrf.mxu0
  %1103 = vmatprep.mubr.f32.mxu0 0.0
  %1104 = vmatmul.mubr.f32.gmra.mxu0 %v845
  %v1105 = vpop.f32.mrf.mxu0
  %v1106 = vadd.f32 0.0, %v1105
  %v1107 = vpop.f32.mrf.mxu0
  %1108 = vmatprep.mubr.f32.mxu0 0.0
  %1109 = vmatmul.mubr.f32.gmra.mxu0 %v848
  %v1110 = vpop.f32.mrf.mxu0
  %v1111 = vadd.f32 0.0, %v1110
  %v1112 = vpop.f32.mrf.mxu0
  %1113 = vmatprep.mubr.f32.mxu0 0.0
  %1114 = vmatmul.mubr.f32.gmra.mxu0 %v851
  %v1115 = vpop.f32.mrf.mxu0
  %v1116 = vadd.f32 0.0, %v1115
  %v1117 = vpop.f32.mrf.mxu0
  %1118 = vmatprep.mubr.f32.mxu0 0.0
  %1119 = vmatmul.mubr.f32.gmra.mxu0 %v854
  %v1120 = vpop.f32.mrf.mxu0
  %v1121 = vadd.f32 0.0, %v1120
  %v1122 = vpop.f32.mrf.mxu0
  %1123 = vmatprep.mubr.f32.mxu0 0.0
  %1124 = vmatmul.mubr.f32.gmra.mxu0 %v857
  %v1125 = vpop.f32.mrf.mxu0
  %v1126 = vadd.f32 0.0, %v1125
  %v1127 = vpop.f32.mrf.mxu0
  %1128 = vmatprep.mubr.f32.mxu0 0.0
  %1129 = vmatmul.mubr.f32.gmra.mxu0 %v860
  %v1130 = vpop.f32.mrf.mxu0
  %v1131 = vadd.f32 0.0, %v1130
  %v1132 = vpop.f32.mrf.mxu0
  %1133 = vmatprep.mubr.f32.mxu0 0.0
  %1134 = vmatmul.mubr.f32.gmra.mxu0 %v863
  %v1135 = vpop.f32.mrf.mxu0
  %v1136 = vadd.f32 0.0, %v1135
  %v1137 = vpop.f32.mrf.mxu0
  %1138 = vmatprep.mubr.f32.mxu0 0.0
  %1139 = vmatmul.mubr.f32.gmra.mxu0 %v866
  %v1140 = vpop.f32.mrf.mxu0
  %v1141 = vadd.f32 0.0, %v1140
  %v1142 = vpop.f32.mrf.mxu0
  %1143 = vdwg.mxu0
  %1146 = vrot.lane.b32.xlu0 %v734, 96
  %v1147 = vpop.permute.xlu0 %1146
  %1148 = vrot.lane.b32.xlu0 %v739, 96
  %v1149 = vpop.permute.xlu0 %1148
  %v1152 = vsel %vm828, %v305, 0
  %v1155 = vsel %vm828, %v306, 0
  %v1158 = vsel %vm828, %v307, 0
  %v1161 = vsel %vm828, %v308, 0
  %v1164 = vsel %vm828, %v309, 0
  %v1167 = vsel %vm828, %v310, 0
  %v1170 = vsel %vm828, %v311, 0
  %v1173 = vsel %vm828, %v312, 0
  %v1176 = vsel %vm828, %v313, 0
  %v1179 = vsel %vm828, %v314, 0
  %v1182 = vsel %vm828, %v315, 0
  %v1185 = vsel %vm828, %v316, 0
  %v1188 = vsel %vm828, %v317, 0
  %v1190 = vsel %vm868, %v1149, 0
  %1192 = vmatprep.subr.mxu0 0.0
  %1193 = vmatpush1.msra.mxu0 0.0
  %1194 = vmatprep.subr.mxu0 0.0
  %1195 = vmatpush1.msra.mxu0 0.0
  %1196 = vmatprep.subr.mxu0 0.0
  %1197 = vmatpush1.msra.mxu0 0.0
  %1198 = vmatprep.subr.mxu0 0.0
  %1199 = vmatpush1.msra.mxu0 0.0
  %1200 = vmatprep.subr.mxu0 0.0
  %1201 = vmatpush1.msra.mxu0 0.0
  %1202 = vmatprep.subr.mxu0 0.0
  %1203 = vmatpush1.msra.mxu0 0.0
  %1204 = vmatprep.subr.mxu0 0.0
  %1205 = vmatpush1.msra.mxu0 0.0
  %1206 = vmatprep.subr.mxu0 0.0
  %1207 = vmatpush1.msra.mxu0 0.0
  %1208 = vmatprep.subr.mxu0 0.0
  %1209 = vmatpush1.msra.mxu0 0.0
  %1210 = vmatprep.subr.mxu0 0.0
  %1211 = vmatpush1.msra.mxu0 0.0
  %1212 = vmatprep.subr.mxu0 0.0
  %1213 = vmatpush1.msra.mxu0 0.0
  %1214 = vmatprep.subr.mxu0 0.0
  %1215 = vmatpush1.msra.mxu0 0.0
  %1216 = vmatprep.subr.mxu0 0.0
  %1217 = vmatpush1.msra.mxu0 0.0
  %1218 = vmatprep.subr.mxu0 0.0
  %1219 = vmatpush1.msra.mxu0 0.0
  %1220 = vmatprep.subr.mxu0 0.0
  %1221 = vmatpush1.msra.mxu0 %v1190
  %1222 = vmatprep.subr.mxu0 0.0
  %1223 = vmatpush1.msra.mxu0 %v1147
  %1224 = vmatprep.subr.mxu0 0.0
  %1225 = vmatpush2.msra.mxu0 0.0
  %1226 = vmatprep.subr.mxu0 0.0
  %1227 = vmatpush2.msra.mxu0 0.0
  %1228 = vmatprep.subr.mxu0 0.0
  %1229 = vmatpush2.msra.mxu0 0.0
  %1230 = vmatprep.subr.mxu0 0.0
  %1231 = vmatpush2.msra.mxu0 0.0
  %1232 = vmatprep.subr.mxu0 0.0
  %1233 = vmatpush2.msra.mxu0 0.0
  %1234 = vmatprep.subr.mxu0 0.0
  %1235 = vmatpush2.msra.mxu0 0.0
  %1236 = vmatprep.subr.mxu0 0.0
  %1237 = vmatpush2.msra.mxu0 0.0
  %1238 = vmatprep.subr.mxu0 0.0
  %1239 = vmatpush2.msra.mxu0 0.0
  %1240 = vmatprep.subr.mxu0 0.0
  %1241 = vmatpush2.msra.mxu0 0.0
  %1242 = vmatprep.subr.mxu0 0.0
  %1243 = vmatpush2.msra.mxu0 0.0
  %1244 = vmatprep.subr.mxu0 0.0
  %1245 = vmatpush2.msra.mxu0 0.0
  %1246 = vmatprep.subr.mxu0 0.0
  %1247 = vmatpush2.msra.mxu0 0.0
  %1248 = vmatprep.subr.mxu0 0.0
  %1249 = vmatpush2.msra.mxu0 0.0
  %1250 = vmatprep.subr.mxu0 0.0
  %1251 = vmatpush2.msra.mxu0 0.0
  %1252 = vmatprep.subr.mxu0 0.0
  %1253 = vmatpush2.msra.mxu0 0.0
  %1254 = vmatprep.subr.mxu0 0.0
  %1255 = vmatpush2.msra.mxu0 0.0
  %1256 = vmatprep.mubr.f32.mxu0 0.0
  %1257 = vmatmul.mubr.f32.gmra.mxu0 %v1152
  %v1258 = vpop.f32.mrf.mxu0
  %v1259 = vadd.f32 0.0, %v1258
  %v1260 = vpop.f32.mrf.mxu0
  %1261 = vmatprep.mubr.f32.mxu0 0.0
  %1262 = vmatmul.mubr.f32.gmra.mxu0 %v1155
  %v1263 = vpop.f32.mrf.mxu0
  %v1264 = vadd.f32 0.0, %v1263
  %v1265 = vpop.f32.mrf.mxu0
  %1266 = vmatprep.mubr.f32.mxu0 0.0
  %1267 = vmatmul.mubr.f32.gmra.mxu0 %v1158
  %v1268 = vpop.f32.mrf.mxu0
  %v1269 = vadd.f32 0.0, %v1268
  %v1270 = vpop.f32.mrf.mxu0
  %1271 = vmatprep.mubr.f32.mxu0 0.0
  %1272 = vmatmul.mubr.f32.gmra.mxu0 %v1161
  %v1273 = vpop.f32.mrf.mxu0
  %v1274 = vadd.f32 0.0, %v1273
  %v1275 = vpop.f32.mrf.mxu0
  %1276 = vmatprep.mubr.f32.mxu0 0.0
  %1277 = vmatmul.mubr.f32.gmra.mxu0 %v1164
  %v1278 = vpop.f32.mrf.mxu0
  %v1279 = vadd.f32 0.0, %v1278
  %v1280 = vpop.f32.mrf.mxu0
  %1281 = vmatprep.mubr.f32.mxu0 0.0
  %1282 = vmatmul.mubr.f32.gmra.mxu0 %v1167
  %v1283 = vpop.f32.mrf.mxu0
  %v1284 = vadd.f32 0.0, %v1283
  %v1285 = vpop.f32.mrf.mxu0
  %1286 = vmatprep.mubr.f32.mxu0 0.0
  %1287 = vmatmul.mubr.f32.gmra.mxu0 %v1170
  %v1288 = vpop.f32.mrf.mxu0
  %v1289 = vadd.f32 0.0, %v1288
  %v1290 = vpop.f32.mrf.mxu0
  %1291 = vmatprep.mubr.f32.mxu0 0.0
  %1292 = vmatmul.mubr.f32.gmra.mxu0 %v1173
  %v1293 = vpop.f32.mrf.mxu0
  %v1294 = vadd.f32 0.0, %v1293
  %v1295 = vpop.f32.mrf.mxu0
  %1296 = vmatprep.mubr.f32.mxu0 0.0
  %1297 = vmatmul.mubr.f32.gmra.mxu0 %v1176
  %v1298 = vpop.f32.mrf.mxu0
  %v1299 = vadd.f32 0.0, %v1298
  %v1300 = vpop.f32.mrf.mxu0
  %1301 = vmatprep.mubr.f32.mxu0 0.0
  %1302 = vmatmul.mubr.f32.gmra.mxu0 %v1179
  %v1303 = vpop.f32.mrf.mxu0
  %v1304 = vadd.f32 0.0, %v1303
  %v1305 = vpop.f32.mrf.mxu0
  %1306 = vmatprep.mubr.f32.mxu0 0.0
  %1307 = vmatmul.mubr.f32.gmra.mxu0 %v1182
  %v1308 = vpop.f32.mrf.mxu0
  %v1309 = vadd.f32 0.0, %v1308
  %v1310 = vpop.f32.mrf.mxu0
  %1311 = vmatprep.mubr.f32.mxu0 0.0
  %1312 = vmatmul.mubr.f32.gmra.mxu0 %v1185
  %v1313 = vpop.f32.mrf.mxu0
  %v1314 = vadd.f32 0.0, %v1313
  %v1315 = vpop.f32.mrf.mxu0
  %1316 = vmatprep.mubr.f32.mxu0 0.0
  %1317 = vmatmul.mubr.f32.gmra.mxu0 %v1188
  %v1318 = vpop.f32.mrf.mxu0
  %v1319 = vadd.f32 0.0, %v1318
  %v1320 = vpop.f32.mrf.mxu0
  %1321 = vdwg.mxu0
  %1322 = vrot.lane.b32.xlu0 %v734, 64
  %v1323 = vpop.permute.xlu0 %1322
  %1324 = vrot.lane.b32.xlu0 %v739, 64
  %v1325 = vpop.permute.xlu0 %1324
  %v1327 = vsel %vm868, %v1325, 0
  %1329 = vmatprep.subr.mxu0 0.0
  %1330 = vmatpush1.msra.mxu0 0.0
  %1331 = vmatprep.subr.mxu0 0.0
  %1332 = vmatpush1.msra.mxu0 0.0
  %1333 = vmatprep.subr.mxu0 0.0
  %1334 = vmatpush1.msra.mxu0 0.0
  %1335 = vmatprep.subr.mxu0 0.0
  %1336 = vmatpush1.msra.mxu0 0.0
  %1337 = vmatprep.subr.mxu0 0.0
  %1338 = vmatpush1.msra.mxu0 0.0
  %1339 = vmatprep.subr.mxu0 0.0
  %1340 = vmatpush1.msra.mxu0 0.0
  %1341 = vmatprep.subr.mxu0 0.0
  %1342 = vmatpush1.msra.mxu0 0.0
  %1343 = vmatprep.subr.mxu0 0.0
  %1344 = vmatpush1.msra.mxu0 0.0
  %1345 = vmatprep.subr.mxu0 0.0
  %1346 = vmatpush1.msra.mxu0 0.0
  %1347 = vmatprep.subr.mxu0 0.0
  %1348 = vmatpush1.msra.mxu0 0.0
  %1349 = vmatprep.subr.mxu0 0.0
  %1350 = vmatpush1.msra.mxu0 0.0
  %1351 = vmatprep.subr.mxu0 0.0
  %1352 = vmatpush1.msra.mxu0 0.0
  %1353 = vmatprep.subr.mxu0 0.0
  %1354 = vmatpush1.msra.mxu0 0.0
  %1355 = vmatprep.subr.mxu0 0.0
  %1356 = vmatpush1.msra.mxu0 0.0
  %1357 = vmatprep.subr.mxu0 0.0
  %1358 = vmatpush1.msra.mxu0 %v1327
  %1359 = vmatprep.subr.mxu0 0.0
  %1360 = vmatpush1.msra.mxu0 %v1323
  %1361 = vmatprep.subr.mxu0 0.0
  %1362 = vmatpush2.msra.mxu0 0.0
  %1363 = vmatprep.subr.mxu0 0.0
  %1364 = vmatpush2.msra.mxu0 0.0
  %1365 = vmatprep.subr.mxu0 0.0
  %1366 = vmatpush2.msra.mxu0 0.0
  %1367 = vmatprep.subr.mxu0 0.0
  %1368 = vmatpush2.msra.mxu0 0.0
  %1369 = vmatprep.subr.mxu0 0.0
  %1370 = vmatpush2.msra.mxu0 0.0
  %1371 = vmatprep.subr.mxu0 0.0
  %1372 = vmatpush2.msra.mxu0 0.0
  %1373 = vmatprep.subr.mxu0 0.0
  %1374 = vmatpush2.msra.mxu0 0.0
  %1375 = vmatprep.subr.mxu0 0.0
  %1376 = vmatpush2.msra.mxu0 0.0
  %1377 = vmatprep.subr.mxu0 0.0
  %1378 = vmatpush2.msra.mxu0 0.0
  %1379 = vmatprep.subr.mxu0 0.0
  %1380 = vmatpush2.msra.mxu0 0.0
  %1381 = vmatprep.subr.mxu0 0.0
  %1382 = vmatpush2.msra.mxu0 0.0
  %1383 = vmatprep.subr.mxu0 0.0
  %1384 = vmatpush2.msra.mxu0 0.0
  %1385 = vmatprep.subr.mxu0 0.0
  %1386 = vmatpush2.msra.mxu0 0.0
  %1387 = vmatprep.subr.mxu0 0.0
  %1388 = vmatpush2.msra.mxu0 0.0
  %1389 = vmatprep.subr.mxu0 0.0
  %1390 = vmatpush2.msra.mxu0 0.0
  %1391 = vmatprep.subr.mxu0 0.0
  %1392 = vmatpush2.msra.mxu0 0.0
  %1393 = vmatprep.mubr.f32.mxu0 0.0
  %1394 = vmatmul.mubr.f32.gmra.mxu0 %v1152
  %v1395 = vpop.f32.mrf.mxu0
  %v1396 = vadd.f32 0.0, %v1395
  %v1397 = vpop.f32.mrf.mxu0
  %1398 = vmatprep.mubr.f32.mxu0 0.0
  %1399 = vmatmul.mubr.f32.gmra.mxu0 %v1155
  %v1400 = vpop.f32.mrf.mxu0
  %v1401 = vadd.f32 0.0, %v1400
  %v1402 = vpop.f32.mrf.mxu0
  %1403 = vmatprep.mubr.f32.mxu0 0.0
  %1404 = vmatmul.mubr.f32.gmra.mxu0 %v1158
  %v1405 = vpop.f32.mrf.mxu0
  %v1406 = vadd.f32 0.0, %v1405
  %v1407 = vpop.f32.mrf.mxu0
  %1408 = vmatprep.mubr.f32.mxu0 0.0
  %1409 = vmatmul.mubr.f32.gmra.mxu0 %v1161
  %v1410 = vpop.f32.mrf.mxu0
  %v1411 = vadd.f32 0.0, %v1410
  %v1412 = vpop.f32.mrf.mxu0
  %1413 = vmatprep.mubr.f32.mxu0 0.0
  %1414 = vmatmul.mubr.f32.gmra.mxu0 %v1164
  %v1415 = vpop.f32.mrf.mxu0
  %v1416 = vadd.f32 0.0, %v1415
  %v1417 = vpop.f32.mrf.mxu0
  %1418 = vmatprep.mubr.f32.mxu0 0.0
  %1419 = vmatmul.mubr.f32.gmra.mxu0 %v1167
  %v1420 = vpop.f32.mrf.mxu0
  %v1421 = vadd.f32 0.0, %v1420
  %v1422 = vpop.f32.mrf.mxu0
  %1423 = vmatprep.mubr.f32.mxu0 0.0
  %1424 = vmatmul.mubr.f32.gmra.mxu0 %v1170
  %v1425 = vpop.f32.mrf.mxu0
  %v1426 = vadd.f32 0.0, %v1425
  %v1427 = vpop.f32.mrf.mxu0
  %1428 = vmatprep.mubr.f32.mxu0 0.0
  %1429 = vmatmul.mubr.f32.gmra.mxu0 %v1173
  %v1430 = vpop.f32.mrf.mxu0
  %v1431 = vadd.f32 0.0, %v1430
  %v1432 = vpop.f32.mrf.mxu0
  %1433 = vmatprep.mubr.f32.mxu0 0.0
  %1434 = vmatmul.mubr.f32.gmra.mxu0 %v1176
  %v1435 = vpop.f32.mrf.mxu0
  %v1436 = vadd.f32 0.0, %v1435
  %v1437 = vpop.f32.mrf.mxu0
  %1438 = vmatprep.mubr.f32.mxu0 0.0
  %1439 = vmatmul.mubr.f32.gmra.mxu0 %v1179
  %v1440 = vpop.f32.mrf.mxu0
  %v1441 = vadd.f32 0.0, %v1440
  %v1442 = vpop.f32.mrf.mxu0
  %1443 = vmatprep.mubr.f32.mxu0 0.0
  %1444 = vmatmul.mubr.f32.gmra.mxu0 %v1182
  %v1445 = vpop.f32.mrf.mxu0
  %v1446 = vadd.f32 0.0, %v1445
  %v1447 = vpop.f32.mrf.mxu0
  %1448 = vmatprep.mubr.f32.mxu0 0.0
  %1449 = vmatmul.mubr.f32.gmra.mxu0 %v1185
  %v1450 = vpop.f32.mrf.mxu0
  %v1451 = vadd.f32 0.0, %v1450
  %v1452 = vpop.f32.mrf.mxu0
  %1453 = vmatprep.mubr.f32.mxu0 0.0
  %1454 = vmatmul.mubr.f32.gmra.mxu0 %v1188
  %v1455 = vpop.f32.mrf.mxu0
  %v1456 = vadd.f32 0.0, %v1455
  %v1457 = vpop.f32.mrf.mxu0
  %1458 = vdwg.mxu0
  %vm1459 = vcmask 56320
  %v1461 = vsel %vm1459, %v318, 0
  %v1464 = vsel %vm1459, %v319, 0
  %v1467 = vsel %vm1459, %v320, 0
  %v1470 = vsel %vm1459, %v321, 0
  %v1473 = vsel %vm1459, %v322, 0
  %v1476 = vsel %vm1459, %v323, 0
  %v1479 = vsel %vm1459, %v324, 0
  %v1482 = vsel %vm1459, %v325, 0
  %v1485 = vsel %vm1459, %v326, 0
  %v1488 = vsel %vm1459, %v327, 0
  %v1491 = vsel %vm1459, %v328, 0
  %v1494 = vsel %vm1459, %v329, 0
  %v1497 = vsel %vm1459, %v330, 0
  %vm1499 = vcmask 1046528
  %v1501 = vsel %vm1499, %v816, 0
  %1503 = vmatprep.subr.mxu0 0.0
  %1504 = vmatpush1.msra.mxu0 0.0
  %1505 = vmatprep.subr.mxu0 0.0
  %1506 = vmatpush1.msra.mxu0 0.0
  %1507 = vmatprep.subr.mxu0 0.0
  %1508 = vmatpush1.msra.mxu0 0.0
  %1509 = vmatprep.subr.mxu0 0.0
  %1510 = vmatpush1.msra.mxu0 0.0
  %1511 = vmatprep.subr.mxu0 0.0
  %1512 = vmatpush1.msra.mxu0 0.0
  %1513 = vmatprep.subr.mxu0 0.0
  %1514 = vmatpush1.msra.mxu0 0.0
  %1515 = vmatprep.subr.mxu0 0.0
  %1516 = vmatpush1.msra.mxu0 0.0
  %1517 = vmatprep.subr.mxu0 0.0
  %1518 = vmatpush1.msra.mxu0 0.0
  %1519 = vmatprep.subr.mxu0 0.0
  %1520 = vmatpush1.msra.mxu0 0.0
  %1521 = vmatprep.subr.mxu0 0.0
  %1522 = vmatpush1.msra.mxu0 0.0
  %1523 = vmatprep.subr.mxu0 0.0
  %1524 = vmatpush1.msra.mxu0 0.0
  %1525 = vmatprep.subr.mxu0 0.0
  %1526 = vmatpush1.msra.mxu0 0.0
  %1527 = vmatprep.subr.mxu0 0.0
  %1528 = vmatpush1.msra.mxu0 0.0
  %1529 = vmatprep.subr.mxu0 0.0
  %1530 = vmatpush1.msra.mxu0 0.0
  %1531 = vmatprep.subr.mxu0 0.0
  %1532 = vmatpush1.msra.mxu0 0.0
  %1533 = vmatprep.subr.mxu0 0.0
  %1534 = vmatpush1.msra.mxu0 %v1501
  %1535 = vmatprep.subr.mxu0 0.0
  %1536 = vmatpush2.msra.mxu0 0.0
  %1537 = vmatprep.subr.mxu0 0.0
  %1538 = vmatpush2.msra.mxu0 0.0
  %1539 = vmatprep.subr.mxu0 0.0
  %1540 = vmatpush2.msra.mxu0 0.0
  %1541 = vmatprep.subr.mxu0 0.0
  %1542 = vmatpush2.msra.mxu0 0.0
  %1543 = vmatprep.subr.mxu0 0.0
  %1544 = vmatpush2.msra.mxu0 0.0
  %1545 = vmatprep.subr.mxu0 0.0
  %1546 = vmatpush2.msra.mxu0 0.0
  %1547 = vmatprep.subr.mxu0 0.0
  %1548 = vmatpush2.msra.mxu0 0.0
  %1549 = vmatprep.subr.mxu0 0.0
  %1550 = vmatpush2.msra.mxu0 0.0
  %1551 = vmatprep.subr.mxu0 0.0
  %1552 = vmatpush2.msra.mxu0 0.0
  %1553 = vmatprep.subr.mxu0 0.0
  %1554 = vmatpush2.msra.mxu0 0.0
  %1555 = vmatprep.subr.mxu0 0.0
  %1556 = vmatpush2.msra.mxu0 0.0
  %1557 = vmatprep.subr.mxu0 0.0
  %1558 = vmatpush2.msra.mxu0 0.0
  %1559 = vmatprep.subr.mxu0 0.0
  %1560 = vmatpush2.msra.mxu0 0.0
  %1561 = vmatprep.subr.mxu0 0.0
  %1562 = vmatpush2.msra.mxu0 0.0
  %1563 = vmatprep.subr.mxu0 0.0
  %1564 = vmatpush2.msra.mxu0 0.0
  %1565 = vmatprep.subr.mxu0 0.0
  %1566 = vmatpush2.msra.mxu0 0.0
  %1567 = vmatprep.mubr.f32.mxu0 0.0
  %1568 = vmatmul.mubr.f32.gmra.mxu0 %v1461
  %v1569 = vpop.f32.mrf.mxu0
  %v1570 = vadd.f32 0.0, %v1569
  %v1571 = vpop.f32.mrf.mxu0
  %1572 = vmatprep.mubr.f32.mxu0 0.0
  %1573 = vmatmul.mubr.f32.gmra.mxu0 %v1464
  %v1574 = vpop.f32.mrf.mxu0
  %v1575 = vadd.f32 0.0, %v1574
  %v1576 = vpop.f32.mrf.mxu0
  %1577 = vmatprep.mubr.f32.mxu0 0.0
  %1578 = vmatmul.mubr.f32.gmra.mxu0 %v1467
  %v1579 = vpop.f32.mrf.mxu0
  %v1580 = vadd.f32 0.0, %v1579
  %v1581 = vpop.f32.mrf.mxu0
  %1582 = vmatprep.mubr.f32.mxu0 0.0
  %1583 = vmatmul.mubr.f32.gmra.mxu0 %v1470
  %v1584 = vpop.f32.mrf.mxu0
  %v1585 = vadd.f32 0.0, %v1584
  %v1586 = vpop.f32.mrf.mxu0
  %1587 = vmatprep.mubr.f32.mxu0 0.0
  %1588 = vmatmul.mubr.f32.gmra.mxu0 %v1473
  %v1589 = vpop.f32.mrf.mxu0
  %v1590 = vadd.f32 0.0, %v1589
  %v1591 = vpop.f32.mrf.mxu0
  %1592 = vmatprep.mubr.f32.mxu0 0.0
  %1593 = vmatmul.mubr.f32.gmra.mxu0 %v1476
  %v1594 = vpop.f32.mrf.mxu0
  %v1595 = vadd.f32 0.0, %v1594
  %v1596 = vpop.f32.mrf.mxu0
  %1597 = vmatprep.mubr.f32.mxu0 0.0
  %1598 = vmatmul.mubr.f32.gmra.mxu0 %v1479
  %v1599 = vpop.f32.mrf.mxu0
  %v1600 = vadd.f32 0.0, %v1599
  %v1601 = vpop.f32.mrf.mxu0
  %1602 = vmatprep.mubr.f32.mxu0 0.0
  %1603 = vmatmul.mubr.f32.gmra.mxu0 %v1482
  %v1604 = vpop.f32.mrf.mxu0
  %v1605 = vadd.f32 0.0, %v1604
  %v1606 = vpop.f32.mrf.mxu0
  %1607 = vmatprep.mubr.f32.mxu0 0.0
  %1608 = vmatmul.mubr.f32.gmra.mxu0 %v1485
  %v1609 = vpop.f32.mrf.mxu0
  %v1610 = vadd.f32 0.0, %v1609
  %v1611 = vpop.f32.mrf.mxu0
  %1612 = vmatprep.mubr.f32.mxu0 0.0
  %1613 = vmatmul.mubr.f32.gmra.mxu0 %v1488
  %v1614 = vpop.f32.mrf.mxu0
  %v1615 = vadd.f32 0.0, %v1614
  %v1616 = vpop.f32.mrf.mxu0
  %1617 = vmatprep.mubr.f32.mxu0 0.0
  %1618 = vmatmul.mubr.f32.gmra.mxu0 %v1491
  %v1619 = vpop.f32.mrf.mxu0
  %v1620 = vadd.f32 0.0, %v1619
  %v1621 = vpop.f32.mrf.mxu0
  %1622 = vmatprep.mubr.f32.mxu0 0.0
  %1623 = vmatmul.mubr.f32.gmra.mxu0 %v1494
  %v1624 = vpop.f32.mrf.mxu0
  %v1625 = vadd.f32 0.0, %v1624
  %v1626 = vpop.f32.mrf.mxu0
  %1627 = vmatprep.mubr.f32.mxu0 0.0
  %1628 = vmatmul.mubr.f32.gmra.mxu0 %v1497
  %v1629 = vpop.f32.mrf.mxu0
  %v1630 = vadd.f32 0.0, %v1629
  %v1631 = vpop.f32.mrf.mxu0
  %1632 = vdwg.mxu0
  %v1633 = vmul.f32 %v939, %v1259
  %v1634 = vmul.f32 %v944, %v1264
  %v1635 = vmul.f32 %v949, %v1269
  %v1636 = vmul.f32 %v954, %v1274
  %v1637 = vmul.f32 %v959, %v1279
  %v1638 = vmul.f32 %v964, %v1284
  %v1639 = vmul.f32 %v969, %v1289
  %v1640 = vmul.f32 %v974, %v1294
  %v1641 = vmul.f32 %v979, %v1299
  %v1642 = vmul.f32 %v984, %v1304
  %v1643 = vmul.f32 %v989, %v1309
  %v1644 = vmul.f32 %v994, %v1314
  %v1645 = vmul.f32 %v999, %v1319
  %v1646 = vmul.f32 %v1081, %v1570
  %v1647 = vmul.f32 %v1086, %v1575
  %v1648 = vmul.f32 %v1091, %v1580
  %v1649 = vmul.f32 %v1096, %v1585
  %v1650 = vmul.f32 %v1101, %v1590
  %v1651 = vmul.f32 %v1106, %v1595
  %v1652 = vmul.f32 %v1111, %v1600
  %v1653 = vmul.f32 %v1116, %v1605
  %v1654 = vmul.f32 %v1121, %v1610
  %v1655 = vmul.f32 %v1126, %v1615
  %v1656 = vmul.f32 %v1131, %v1620
  %v1657 = vmul.f32 %v1136, %v1625
  %v1658 = vmul.f32 %v1141, %v1630
  %v1660 = vsel %vm375, %v1646, 0
  %v1663 = vsel %vm375, %v1647, 0
  %v1666 = vsel %vm375, %v1648, 0
  %v1669 = vsel %vm375, %v1649, 0
  %v1672 = vsel %vm375, %v1650, 0
  %v1675 = vsel %vm375, %v1651, 0
  %v1678 = vsel %vm375, %v1652, 0
  %v1681 = vsel %vm375, %v1653, 0
  %v1684 = vsel %vm375, %v1654, 0
  %v1687 = vsel %vm375, %v1655, 0
  %v1690 = vsel %vm375, %v1656, 0
  %v1693 = vsel %vm375, %v1657, 0
  %v1696 = vsel %vm375, %v1658, 0
  %1698 = vmatprep.subr.mxu0 0.0
  %1699 = vmatpush1.msra.mxu0 0.0
  %1700 = vmatprep.subr.mxu0 0.0
  %1701 = vmatpush1.msra.mxu0 0.0
  %1702 = vmatprep.subr.mxu0 0.0
  %1703 = vmatpush1.msra.mxu0 0.0
  %1704 = vmatprep.subr.mxu0 0.0
  %1705 = vmatpush1.msra.mxu0 0.0
  %1706 = vmatprep.subr.mxu0 0.0
  %1707 = vmatpush1.msra.mxu0 0.0
  %1708 = vmatprep.subr.mxu0 0.0
  %1709 = vmatpush1.msra.mxu0 0.0
  %1710 = vmatprep.subr.mxu0 0.0
  %1711 = vmatpush1.msra.mxu0 0.0
  %1712 = vmatprep.subr.mxu0 0.0
  %1713 = vmatpush1.msra.mxu0 0.0
  %1714 = vmatprep.subr.mxu0 0.0
  %1715 = vmatpush1.msra.mxu0 0.0
  %1716 = vmatprep.subr.mxu0 0.0
  %1717 = vmatpush1.msra.mxu0 0.0
  %1718 = vmatprep.subr.mxu0 0.0
  %1719 = vmatpush1.msra.mxu0 0.0
  %1720 = vmatprep.subr.mxu0 0.0
  %1721 = vmatpush1.msra.mxu0 0.0
  %1722 = vmatprep.subr.mxu0 0.0
  %1723 = vmatpush1.msra.mxu0 %v349
  %1724 = vmatprep.subr.mxu0 0.0
  %1725 = vmatpush1.msra.mxu0 %v348
  %1726 = vmatprep.subr.mxu0 0.0
  %1727 = vmatpush1.msra.mxu0 %v347
  %1728 = vmatprep.subr.mxu0 0.0
  %1729 = vmatpush1.msra.mxu0 %v346
  %1730 = vmatprep.subr.mxu0 0.0
  %1731 = vmatpush2.msra.mxu0 0.0
  %1732 = vmatprep.subr.mxu0 0.0
  %1733 = vmatpush2.msra.mxu0 0.0
  %1734 = vmatprep.subr.mxu0 0.0
  %1735 = vmatpush2.msra.mxu0 0.0
  %1736 = vmatprep.subr.mxu0 0.0
  %1737 = vmatpush2.msra.mxu0 0.0
  %1738 = vmatprep.subr.mxu0 0.0
  %1739 = vmatpush2.msra.mxu0 0.0
  %1740 = vmatprep.subr.mxu0 0.0
  %1741 = vmatpush2.msra.mxu0 0.0
  %1742 = vmatprep.subr.mxu0 0.0
  %1743 = vmatpush2.msra.mxu0 0.0
  %1744 = vmatprep.subr.mxu0 0.0
  %1745 = vmatpush2.msra.mxu0 0.0
  %1746 = vmatprep.subr.mxu0 0.0
  %1747 = vmatpush2.msra.mxu0 0.0
  %1748 = vmatprep.subr.mxu0 0.0
  %1749 = vmatpush2.msra.mxu0 0.0
  %1750 = vmatprep.subr.mxu0 0.0
  %1751 = vmatpush2.msra.mxu0 0.0
  %1752 = vmatprep.subr.mxu0 0.0
  %1753 = vmatpush2.msra.mxu0 0.0
  %1754 = vmatprep.subr.mxu0 0.0
  %1755 = vmatpush2.msra.mxu0 0.0
  %1756 = vmatprep.subr.mxu0 0.0
  %1757 = vmatpush2.msra.mxu0 0.0
  %1758 = vmatprep.subr.mxu0 0.0
  %1759 = vmatpush2.msra.mxu0 0.0
  %1760 = vmatprep.subr.mxu0 0.0
  %1761 = vmatpush2.msra.mxu0 0.0
  %1762 = vmatprep.mubr.f32.mxu0 0.0
  %1763 = vmatmul.mubr.f32.gmra.mxu0 %v1660
  %v1764 = vpop.f32.mrf.mxu0
  %v1765 = vadd.f32 0.0, %v1764
  %v1766 = vpop.f32.mrf.mxu0
  %1767 = vmatprep.mubr.f32.mxu0 0.0
  %1768 = vmatmul.mubr.f32.gmra.mxu0 %v1663
  %v1769 = vpop.f32.mrf.mxu0
  %v1770 = vadd.f32 0.0, %v1769
  %v1771 = vpop.f32.mrf.mxu0
  %1772 = vmatprep.mubr.f32.mxu0 0.0
  %1773 = vmatmul.mubr.f32.gmra.mxu0 %v1666
  %v1774 = vpop.f32.mrf.mxu0
  %v1775 = vadd.f32 0.0, %v1774
  %v1776 = vpop.f32.mrf.mxu0
  %1777 = vmatprep.mubr.f32.mxu0 0.0
  %1778 = vmatmul.mubr.f32.gmra.mxu0 %v1669
  %v1779 = vpop.f32.mrf.mxu0
  %v1780 = vadd.f32 0.0, %v1779
  %v1781 = vpop.f32.mrf.mxu0
  %1782 = vmatprep.mubr.f32.mxu0 0.0
  %1783 = vmatmul.mubr.f32.gmra.mxu0 %v1672
  %v1784 = vpop.f32.mrf.mxu0
  %v1785 = vadd.f32 0.0, %v1784
  %v1786 = vpop.f32.mrf.mxu0
  %1787 = vmatprep.mubr.f32.mxu0 0.0
  %1788 = vmatmul.mubr.f32.gmra.mxu0 %v1675
  %v1789 = vpop.f32.mrf.mxu0
  %v1790 = vadd.f32 0.0, %v1789
  %v1791 = vpop.f32.mrf.mxu0
  %1792 = vmatprep.mubr.f32.mxu0 0.0
  %1793 = vmatmul.mubr.f32.gmra.mxu0 %v1678
  %v1794 = vpop.f32.mrf.mxu0
  %v1795 = vadd.f32 0.0, %v1794
  %v1796 = vpop.f32.mrf.mxu0
  %1797 = vmatprep.mubr.f32.mxu0 0.0
  %1798 = vmatmul.mubr.f32.gmra.mxu0 %v1681
  %v1799 = vpop.f32.mrf.mxu0
  %v1800 = vadd.f32 0.0, %v1799
  %v1801 = vpop.f32.mrf.mxu0
  %1802 = vmatprep.mubr.f32.mxu0 0.0
  %1803 = vmatmul.mubr.f32.gmra.mxu0 %v1684
  %v1804 = vpop.f32.mrf.mxu0
  %v1805 = vadd.f32 0.0, %v1804
  %v1806 = vpop.f32.mrf.mxu0
  %1807 = vmatprep.mubr.f32.mxu0 0.0
  %1808 = vmatmul.mubr.f32.gmra.mxu0 %v1687
  %v1809 = vpop.f32.mrf.mxu0
  %v1810 = vadd.f32 0.0, %v1809
  %v1811 = vpop.f32.mrf.mxu0
  %1812 = vmatprep.mubr.f32.mxu0 0.0
  %1813 = vmatmul.mubr.f32.gmra.mxu0 %v1690
  %v1814 = vpop.f32.mrf.mxu0
  %v1815 = vadd.f32 0.0, %v1814
  %v1816 = vpop.f32.mrf.mxu0
  %1817 = vmatprep.mubr.f32.mxu0 0.0
  %1818 = vmatmul.mubr.f32.gmra.mxu0 %v1693
  %v1819 = vpop.f32.mrf.mxu0
  %v1820 = vadd.f32 0.0, %v1819
  %v1821 = vpop.f32.mrf.mxu0
  %1822 = vmatprep.mubr.f32.mxu0 0.0
  %1823 = vmatmul.mubr.f32.gmra.mxu0 %v1696
  %v1824 = vpop.f32.mrf.mxu0
  %v1825 = vadd.f32 0.0, %v1824
  %v1826 = vpop.f32.mrf.mxu0
  %1827 = vdwg.mxu0
  %vm1828 = vcmask 801792
  %v1830 = vsel %vm1828, %v333, 0
  %v1833 = vsel %vm1828, %v334, 0
  %v1836 = vsel %vm1828, %v335, 0
  %v1839 = vsel %vm1828, %v336, 0
  %v1842 = vsel %vm1828, %v337, 0
  %v1845 = vsel %vm1828, %v338, 0
  %v1848 = vsel %vm1828, %v339, 0
  %v1851 = vsel %vm1828, %v340, 0
  %v1854 = vsel %vm1828, %v341, 0
  %v1857 = vsel %vm1828, %v342, 0
  %v1860 = vsel %vm1828, %v343, 0
  %v1863 = vsel %vm1828, %v344, 0
  %v1866 = vsel %vm1828, %v345, 0
  %vm1868 = vcmask 1041408
  %v1870 = vsel %vm1868, %v1825, 0
  %1872 = vmatprep.subr.mxu0 0.0
  %1873 = vmatpush1.msra.mxu0 0.0
  %1874 = vmatprep.subr.mxu0 0.0
  %1875 = vmatpush1.msra.mxu0 0.0
  %1876 = vmatprep.subr.mxu0 0.0
  %1877 = vmatpush1.msra.mxu0 0.0
  %1878 = vmatprep.subr.mxu0 0.0
  %1879 = vmatpush1.msra.mxu0 %v1870
  %1880 = vmatprep.subr.mxu0 0.0
  %1881 = vmatpush1.msra.mxu0 %v1820
  %1882 = vmatprep.subr.mxu0 0.0
  %1883 = vmatpush1.msra.mxu0 %v1815
  %1884 = vmatprep.subr.mxu0 0.0
  %1885 = vmatpush1.msra.mxu0 %v1810
  %1886 = vmatprep.subr.mxu0 0.0
  %1887 = vmatpush1.msra.mxu0 %v1805
  %1888 = vmatprep.subr.mxu0 0.0
  %1889 = vmatpush1.msra.mxu0 %v1800
  %1890 = vmatprep.subr.mxu0 0.0
  %1891 = vmatpush1.msra.mxu0 %v1795
  %1892 = vmatprep.subr.mxu0 0.0
  %1893 = vmatpush1.msra.mxu0 %v1790
  %1894 = vmatprep.subr.mxu0 0.0
  %1895 = vmatpush1.msra.mxu0 %v1785
  %1896 = vmatprep.subr.mxu0 0.0
  %1897 = vmatpush1.msra.mxu0 %v1780
  %1898 = vmatprep.subr.mxu0 0.0
  %1899 = vmatpush1.msra.mxu0 %v1775
  %1900 = vmatprep.subr.mxu0 0.0
  %1901 = vmatpush1.msra.mxu0 %v1770
  %1902 = vmatprep.subr.mxu0 0.0
  %1903 = vmatpush1.msra.mxu0 %v1765
  %1904 = vmatprep.subr.mxu0 0.0
  %1905 = vmatpush2.msra.mxu0 0.0
  %1906 = vmatprep.subr.mxu0 0.0
  %1907 = vmatpush2.msra.mxu0 0.0
  %1908 = vmatprep.subr.mxu0 0.0
  %1909 = vmatpush2.msra.mxu0 0.0
  %1910 = vmatprep.subr.mxu0 0.0
  %1911 = vmatpush2.msra.mxu0 0.0
  %1912 = vmatprep.subr.mxu0 0.0
  %1913 = vmatpush2.msra.mxu0 0.0
  %1914 = vmatprep.subr.mxu0 0.0
  %1915 = vmatpush2.msra.mxu0 0.0
  %1916 = vmatprep.subr.mxu0 0.0
  %1917 = vmatpush2.msra.mxu0 0.0
  %1918 = vmatprep.subr.mxu0 0.0
  %1919 = vmatpush2.msra.mxu0 0.0
  %1920 = vmatprep.subr.mxu0 0.0
  %1921 = vmatpush2.msra.mxu0 0.0
  %1922 = vmatprep.subr.mxu0 0.0
  %1923 = vmatpush2.msra.mxu0 0.0
  %1924 = vmatprep.subr.mxu0 0.0
  %1925 = vmatpush2.msra.mxu0 0.0
  %1926 = vmatprep.subr.mxu0 0.0
  %1927 = vmatpush2.msra.mxu0 0.0
  %1928 = vmatprep.subr.mxu0 0.0
  %1929 = vmatpush2.msra.mxu0 0.0
  %1930 = vmatprep.subr.mxu0 0.0
  %1931 = vmatpush2.msra.mxu0 0.0
  %1932 = vmatprep.subr.mxu0 0.0
  %1933 = vmatpush2.msra.mxu0 0.0
  %1934 = vmatprep.subr.mxu0 0.0
  %1935 = vmatpush2.msra.mxu0 0.0
  %1936 = vmatprep.mubr.f32.mxu0 0.0
  %1937 = vmatmul.mubr.f32.gmra.mxu0 %v1830
  %v1938 = vpop.f32.mrf.mxu0
  %v1939 = vadd.f32 0.0, %v1938
  %v1940 = vpop.f32.mrf.mxu0
  %1941 = vmatprep.mubr.f32.mxu0 0.0
  %1942 = vmatmul.mubr.f32.gmra.mxu0 %v1833
  %v1943 = vpop.f32.mrf.mxu0
  %v1944 = vadd.f32 0.0, %v1943
  %v1945 = vpop.f32.mrf.mxu0
  %1946 = vmatprep.mubr.f32.mxu0 0.0
  %1947 = vmatmul.mubr.f32.gmra.mxu0 %v1836
  %v1948 = vpop.f32.mrf.mxu0
  %v1949 = vadd.f32 0.0, %v1948
  %v1950 = vpop.f32.mrf.mxu0
  %1951 = vmatprep.mubr.f32.mxu0 0.0
  %1952 = vmatmul.mubr.f32.gmra.mxu0 %v1839
  %v1953 = vpop.f32.mrf.mxu0
  %v1954 = vadd.f32 0.0, %v1953
  %v1955 = vpop.f32.mrf.mxu0
  %1956 = vmatprep.mubr.f32.mxu0 0.0
  %1957 = vmatmul.mubr.f32.gmra.mxu0 %v1842
  %v1958 = vpop.f32.mrf.mxu0
  %v1959 = vadd.f32 0.0, %v1958
  %v1960 = vpop.f32.mrf.mxu0
  %1961 = vmatprep.mubr.f32.mxu0 0.0
  %1962 = vmatmul.mubr.f32.gmra.mxu0 %v1845
  %v1963 = vpop.f32.mrf.mxu0
  %v1964 = vadd.f32 0.0, %v1963
  %v1965 = vpop.f32.mrf.mxu0
  %1966 = vmatprep.mubr.f32.mxu0 0.0
  %1967 = vmatmul.mubr.f32.gmra.mxu0 %v1848
  %v1968 = vpop.f32.mrf.mxu0
  %v1969 = vadd.f32 0.0, %v1968
  %v1970 = vpop.f32.mrf.mxu0
  %1971 = vmatprep.mubr.f32.mxu0 0.0
  %1972 = vmatmul.mubr.f32.gmra.mxu0 %v1851
  %v1973 = vpop.f32.mrf.mxu0
  %v1974 = vadd.f32 0.0, %v1973
  %v1975 = vpop.f32.mrf.mxu0
  %1976 = vmatprep.mubr.f32.mxu0 0.0
  %1977 = vmatmul.mubr.f32.gmra.mxu0 %v1854
  %v1978 = vpop.f32.mrf.mxu0
  %v1979 = vadd.f32 0.0, %v1978
  %v1980 = vpop.f32.mrf.mxu0
  %1981 = vmatprep.mubr.f32.mxu0 0.0
  %1982 = vmatmul.mubr.f32.gmra.mxu0 %v1857
  %v1983 = vpop.f32.mrf.mxu0
  %v1984 = vadd.f32 0.0, %v1983
  %v1985 = vpop.f32.mrf.mxu0
  %1986 = vmatprep.mubr.f32.mxu0 0.0
  %1987 = vmatmul.mubr.f32.gmra.mxu0 %v1860
  %v1988 = vpop.f32.mrf.mxu0
  %v1989 = vadd.f32 0.0, %v1988
  %v1990 = vpop.f32.mrf.mxu0
  %1991 = vmatprep.mubr.f32.mxu0 0.0
  %1992 = vmatmul.mubr.f32.gmra.mxu0 %v1863
  %v1993 = vpop.f32.mrf.mxu0
  %v1994 = vadd.f32 0.0, %v1993
  %v1995 = vpop.f32.mrf.mxu0
  %1996 = vmatprep.mubr.f32.mxu0 0.0
  %1997 = vmatmul.mubr.f32.gmra.mxu0 %v1866
  %v1998 = vpop.f32.mrf.mxu0
  %v1999 = vadd.f32 0.0, %v1998
  %v2000 = vpop.f32.mrf.mxu0
  %2001 = vdwg.mxu0
  %v2003 = vsel %vm375, %v1633, 0
  %v2006 = vsel %vm375, %v1634, 0
  %v2009 = vsel %vm375, %v1635, 0
  %v2012 = vsel %vm375, %v1636, 0
  %v2015 = vsel %vm375, %v1637, 0
  %v2018 = vsel %vm375, %v1638, 0
  %v2021 = vsel %vm375, %v1639, 0
  %v2024 = vsel %vm375, %v1640, 0
  %v2027 = vsel %vm375, %v1641, 0
  %v2030 = vsel %vm375, %v1642, 0
  %v2033 = vsel %vm375, %v1643, 0
  %v2036 = vsel %vm375, %v1644, 0
  %v2039 = vsel %vm375, %v1645, 0
  %2041 = vmatprep.subr.mxu0 0.0
  %2042 = vmatpush1.msra.mxu0 0.0
  %2043 = vmatprep.subr.mxu0 0.0
  %2044 = vmatpush1.msra.mxu0 0.0
  %2045 = vmatprep.subr.mxu0 0.0
  %2046 = vmatpush1.msra.mxu0 0.0
  %2047 = vmatprep.subr.mxu0 0.0
  %2048 = vmatpush1.msra.mxu0 0.0
  %2049 = vmatprep.subr.mxu0 0.0
  %2050 = vmatpush1.msra.mxu0 0.0
  %2051 = vmatprep.subr.mxu0 0.0
  %2052 = vmatpush1.msra.mxu0 0.0
  %2053 = vmatprep.subr.mxu0 0.0
  %2054 = vmatpush1.msra.mxu0 0.0
  %2055 = vmatprep.subr.mxu0 0.0
  %2056 = vmatpush1.msra.mxu0 0.0
  %2057 = vmatprep.subr.mxu0 0.0
  %2058 = vmatpush1.msra.mxu0 0.0
  %2059 = vmatprep.subr.mxu0 0.0
  %2060 = vmatpush1.msra.mxu0 0.0
  %2061 = vmatprep.subr.mxu0 0.0
  %2062 = vmatpush1.msra.mxu0 0.0
  %2063 = vmatprep.subr.mxu0 0.0
  %2064 = vmatpush1.msra.mxu0 0.0
  %2065 = vmatprep.subr.mxu0 0.0
  %2066 = vmatpush1.msra.mxu0 %v349
  %2067 = vmatprep.subr.mxu0 0.0
  %2068 = vmatpush1.msra.mxu0 %v348
  %2069 = vmatprep.subr.mxu0 0.0
  %2070 = vmatpush1.msra.mxu0 %v347
  %2071 = vmatprep.subr.mxu0 0.0
  %2072 = vmatpush1.msra.mxu0 %v346
  %2073 = vmatprep.subr.mxu0 0.0
  %2074 = vmatpush2.msra.mxu0 0.0
  %2075 = vmatprep.subr.mxu0 0.0
  %2076 = vmatpush2.msra.mxu0 0.0
  %2077 = vmatprep.subr.mxu0 0.0
  %2078 = vmatpush2.msra.mxu0 0.0
  %2079 = vmatprep.subr.mxu0 0.0
  %2080 = vmatpush2.msra.mxu0 0.0
  %2081 = vmatprep.subr.mxu0 0.0
  %2082 = vmatpush2.msra.mxu0 0.0
  %2083 = vmatprep.subr.mxu0 0.0
  %2084 = vmatpush2.msra.mxu0 0.0
  %2085 = vmatprep.subr.mxu0 0.0
  %2086 = vmatpush2.msra.mxu0 0.0
  %2087 = vmatprep.subr.mxu0 0.0
  %2088 = vmatpush2.msra.mxu0 0.0
  %2089 = vmatprep.subr.mxu0 0.0
  %2090 = vmatpush2.msra.mxu0 0.0
  %2091 = vmatprep.subr.mxu0 0.0
  %2092 = vmatpush2.msra.mxu0 0.0
  %2093 = vmatprep.subr.mxu0 0.0
  %2094 = vmatpush2.msra.mxu0 0.0
  %2095 = vmatprep.subr.mxu0 0.0
  %2096 = vmatpush2.msra.mxu0 0.0
  %2097 = vmatprep.subr.mxu0 0.0
  %2098 = vmatpush2.msra.mxu0 0.0
  %2099 = vmatprep.subr.mxu0 0.0
  %2100 = vmatpush2.msra.mxu0 0.0
  %2101 = vmatprep.subr.mxu0 0.0
  %2102 = vmatpush2.msra.mxu0 0.0
  %2103 = vmatprep.subr.mxu0 0.0
  %2104 = vmatpush2.msra.mxu0 0.0
  %2105 = vmatprep.mubr.f32.mxu0 0.0
  %2106 = vmatmul.mubr.f32.gmra.mxu0 %v2003
  %v2107 = vpop.f32.mrf.mxu0
  %v2108 = vadd.f32 %v1939, %v2107
  %v2109 = vpop.f32.mrf.mxu0
  %2110 = vmatprep.mubr.f32.mxu0 0.0
  %2111 = vmatmul.mubr.f32.gmra.mxu0 %v2006
  %v2112 = vpop.f32.mrf.mxu0
  %v2113 = vadd.f32 %v1944, %v2112
  %v2114 = vpop.f32.mrf.mxu0
  %2115 = vmatprep.mubr.f32.mxu0 0.0
  %2116 = vmatmul.mubr.f32.gmra.mxu0 %v2009
  %v2117 = vpop.f32.mrf.mxu0
  %v2118 = vadd.f32 %v1949, %v2117
  %v2119 = vpop.f32.mrf.mxu0
  %2120 = vmatprep.mubr.f32.mxu0 0.0
  %2121 = vmatmul.mubr.f32.gmra.mxu0 %v2012
  %v2122 = vpop.f32.mrf.mxu0
  %v2123 = vadd.f32 %v1954, %v2122
  %v2124 = vpop.f32.mrf.mxu0
  %2125 = vmatprep.mubr.f32.mxu0 0.0
  %2126 = vmatmul.mubr.f32.gmra.mxu0 %v2015
  %v2127 = vpop.f32.mrf.mxu0
  %v2128 = vadd.f32 %v1959, %v2127
  %v2129 = vpop.f32.mrf.mxu0
  %2130 = vmatprep.mubr.f32.mxu0 0.0
  %2131 = vmatmul.mubr.f32.gmra.mxu0 %v2018
  %v2132 = vpop.f32.mrf.mxu0
  %v2133 = vadd.f32 %v1964, %v2132
  %v2134 = vpop.f32.mrf.mxu0
  %2135 = vmatprep.mubr.f32.mxu0 0.0
  %2136 = vmatmul.mubr.f32.gmra.mxu0 %v2021
  %v2137 = vpop.f32.mrf.mxu0
  %v2138 = vadd.f32 %v1969, %v2137
  %v2139 = vpop.f32.mrf.mxu0
  %2140 = vmatprep.mubr.f32.mxu0 0.0
  %2141 = vmatmul.mubr.f32.gmra.mxu0 %v2024
  %v2142 = vpop.f32.mrf.mxu0
  %v2143 = vadd.f32 %v1974, %v2142
  %v2144 = vpop.f32.mrf.mxu0
  %2145 = vmatprep.mubr.f32.mxu0 0.0
  %2146 = vmatmul.mubr.f32.gmra.mxu0 %v2027
  %v2147 = vpop.f32.mrf.mxu0
  %v2148 = vadd.f32 %v1979, %v2147
  %v2149 = vpop.f32.mrf.mxu0
  %2150 = vmatprep.mubr.f32.mxu0 0.0
  %2151 = vmatmul.mubr.f32.gmra.mxu0 %v2030
  %v2152 = vpop.f32.mrf.mxu0
  %v2153 = vadd.f32 %v1984, %v2152
  %v2154 = vpop.f32.mrf.mxu0
  %2155 = vmatprep.mubr.f32.mxu0 0.0
  %2156 = vmatmul.mubr.f32.gmra.mxu0 %v2033
  %v2157 = vpop.f32.mrf.mxu0
  %v2158 = vadd.f32 %v1989, %v2157
  %v2159 = vpop.f32.mrf.mxu0
  %2160 = vmatprep.mubr.f32.mxu0 0.0
  %2161 = vmatmul.mubr.f32.gmra.mxu0 %v2036
  %v2162 = vpop.f32.mrf.mxu0
  %v2163 = vadd.f32 %v1994, %v2162
  %v2164 = vpop.f32.mrf.mxu0
  %2165 = vmatprep.mubr.f32.mxu0 0.0
  %2166 = vmatmul.mubr.f32.gmra.mxu0 %v2039
  %v2167 = vpop.f32.mrf.mxu0
  %v2168 = vadd.f32 %v1999, %v2167
  %v2169 = vpop.f32.mrf.mxu0
  %2170 = vdwg.mxu0
  %v2171 = vmul.f32 %v2108, 0.17677669
  %v2172 = vmul.f32 %v2113, 0.17677669
  %v2173 = vmul.f32 %v2118, 0.17677669
  %v2174 = vmul.f32 %v2123, 0.17677669
  %v2175 = vmul.f32 %v2128, 0.17677669
  %v2176 = vmul.f32 %v2133, 0.17677669
  %v2177 = vmul.f32 %v2138, 0.17677669
  %v2178 = vmul.f32 %v2143, 0.17677669
  %v2179 = vmul.f32 %v2148, 0.17677669
  %v2180 = vmul.f32 %v2153, 0.17677669
  %v2181 = vmul.f32 %v2158, 0.17677669
  %v2182 = vmul.f32 %v2163, 0.17677669
  %v2183 = vmul.f32 %v2168, 0.17677669
  %vm2184 = vcmask 31744
  %v2185 = vsel %vm2184, %v2171, -inf
  %2186 = vmax.xlane.f32.xlu0 %v2185
  %v2187 = vpop.xlane.xlu0 %2186
  %v2188 = vsel %vm2184, %v2172, -inf
  %2189 = vmax.xlane.f32.xlu0 %v2188
  %v2190 = vpop.xlane.xlu0 %2189
  %v2191 = vsel %vm2184, %v2173, -inf
  %2192 = vmax.xlane.f32.xlu0 %v2191
  %v2193 = vpop.xlane.xlu0 %2192
  %v2194 = vsel %vm2184, %v2174, -inf
  %2195 = vmax.xlane.f32.xlu0 %v2194
  %v2196 = vpop.xlane.xlu0 %2195
  %v2197 = vsel %vm2184, %v2175, -inf
  %2198 = vmax.xlane.f32.xlu0 %v2197
  %v2199 = vpop.xlane.xlu0 %2198
  %v2200 = vsel %vm2184, %v2176, -inf
  %2201 = vmax.xlane.f32.xlu0 %v2200
  %v2202 = vpop.xlane.xlu0 %2201
  %v2203 = vsel %vm2184, %v2177, -inf
  %2204 = vmax.xlane.f32.xlu0 %v2203
  %v2205 = vpop.xlane.xlu0 %2204
  %v2206 = vsel %vm2184, %v2178, -inf
  %2207 = vmax.xlane.f32.xlu0 %v2206
  %v2208 = vpop.xlane.xlu0 %2207
  %v2209 = vsel %vm2184, %v2179, -inf
  %2210 = vmax.xlane.f32.xlu0 %v2209
  %v2211 = vpop.xlane.xlu0 %2210
  %v2212 = vsel %vm2184, %v2180, -inf
  %2213 = vmax.xlane.f32.xlu0 %v2212
  %v2214 = vpop.xlane.xlu0 %2213
  %v2215 = vsel %vm2184, %v2181, -inf
  %2216 = vmax.xlane.f32.xlu0 %v2215
  %v2217 = vpop.xlane.xlu0 %2216
  %v2218 = vsel %vm2184, %v2182, -inf
  %2219 = vmax.xlane.f32.xlu0 %v2218
  %v2220 = vpop.xlane.xlu0 %2219
  %vm2221 = vcmask 25600
  %v2222 = vsel %vm2221, %v2183, -inf
  %2223 = vmax.xlane.f32.xlu0 %v2222
  %v2224 = vpop.xlane.xlu0 %2223
  %v2225 = vmax.f32 %v2187, %v2199
  %v2226 = vmax.f32 %v2190, %v2202
  %v2227 = vmax.f32 %v2193, %v2205
  %v2228 = vmax.f32 %v2196, %v2208
  %v2229 = vmax.f32 %v2225, %v2211
  %v2230 = vmax.f32 %v2226, %v2214
  %v2231 = vmax.f32 %v2227, %v2217
  %v2232 = vmax.f32 %v2228, %v2220
  %v2233 = vsel %vm1868, %v2224, -inf
  %v2234 = vmax.f32 %v2229, %v2233
  %v2235 = vmax.f32 %v2234, %v2230
  %v2236 = vmax.f32 %v2231, %v2232
  %v2237 = vmax.f32 %v2235, %v2236
  %v2238 = vrot.slane %v2237, 4
  %v2239 = vmax.f32 %v2237, %v2238
  %v2240 = vrot.slane %v2239, 2
  %v2241 = vmax.f32 %v2239, %v2240
  %v2242 = vrot.slane %v2241, 1
  %v2243 = vmax.f32 %v2241, %v2242
  %v2244 = vsub.f32 %v2171, %v2243
  %v2245 = vsub.f32 %v2172, %v2243
  %v2246 = vsub.f32 %v2173, %v2243
  %v2247 = vsub.f32 %v2174, %v2243
  %v2248 = vsub.f32 %v2175, %v2243
  %v2249 = vsub.f32 %v2176, %v2243
  %v2250 = vsub.f32 %v2177, %v2243
  %v2251 = vsub.f32 %v2178, %v2243
  %v2252 = vsub.f32 %v2179, %v2243
  %v2253 = vsub.f32 %v2180, %v2243
  %v2254 = vsub.f32 %v2181, %v2243
  %v2255 = vsub.f32 %v2182, %v2243
  %v2256 = vsub.f32 %v2183, %v2243
  %v2257 = vmul.f32 %v2244, 1.442695
  %v2258 = vpow.pop %v2257
  %v2259 = vmul.f32 %v2245, 1.442695
  %v2260 = vpow.pop %v2259
  %v2261 = vmul.f32 %v2246, 1.442695
  %v2262 = vpow.pop %v2261
  %v2263 = vmul.f32 %v2247, 1.442695
  %v2264 = vpow.pop %v2263
  %v2265 = vmul.f32 %v2248, 1.442695
  %v2266 = vpow.pop %v2265
  %v2267 = vmul.f32 %v2249, 1.442695
  %v2268 = vpow.pop %v2267
  %v2269 = vmul.f32 %v2250, 1.442695
  %v2270 = vpow.pop %v2269
  %v2271 = vmul.f32 %v2251, 1.442695
  %v2272 = vpow.pop %v2271
  %v2273 = vmul.f32 %v2252, 1.442695
  %v2274 = vpow.pop %v2273
  %v2275 = vmul.f32 %v2253, 1.442695
  %v2276 = vpow.pop %v2275
  %v2277 = vmul.f32 %v2254, 1.442695
  %v2278 = vpow.pop %v2277
  %v2279 = vmul.f32 %v2255, 1.442695
  %v2280 = vpow.pop %v2279
  %v2281 = vmul.f32 %v2256, 1.442695
  %v2282 = vpow.pop %v2281
  %v2284 = vsel %vm1828, %v331, 0
  %v2287 = vsel %vm1828, %v332, 0
  %v2290 = vsel %vm1868, %v2282, 0
  %2292 = vmatprep.subr.mxu0 0.0
  %2293 = vmatpush1.msra.mxu0 0.0
  %2294 = vmatprep.subr.mxu0 0.0
  %2295 = vmatpush1.msra.mxu0 0.0
  %2296 = vmatprep.subr.mxu0 0.0
  %2297 = vmatpush1.msra.mxu0 0.0
  %2298 = vmatprep.subr.mxu0 0.0
  %2299 = vmatpush1.msra.mxu0 %v2290
  %2300 = vmatprep.subr.mxu0 0.0
  %2301 = vmatpush1.msra.mxu0 %v2280
  %2302 = vmatprep.subr.mxu0 0.0
  %2303 = vmatpush1.msra.mxu0 %v2278
  %2304 = vmatprep.subr.mxu0 0.0
  %2305 = vmatpush1.msra.mxu0 %v2276
  %2306 = vmatprep.subr.mxu0 0.0
  %2307 = vmatpush1.msra.mxu0 %v2274
  %2308 = vmatprep.subr.mxu0 0.0
  %2309 = vmatpush1.msra.mxu0 %v2272
  %2310 = vmatprep.subr.mxu0 0.0
  %2311 = vmatpush1.msra.mxu0 %v2270
  %2312 = vmatprep.subr.mxu0 0.0
  %2313 = vmatpush1.msra.mxu0 %v2268
  %2314 = vmatprep.subr.mxu0 0.0
  %2315 = vmatpush1.msra.mxu0 %v2266
  %2316 = vmatprep.subr.mxu0 0.0
  %2317 = vmatpush1.msra.mxu0 %v2264
  %2318 = vmatprep.subr.mxu0 0.0
  %2319 = vmatpush1.msra.mxu0 %v2262
  %2320 = vmatprep.subr.mxu0 0.0
  %2321 = vmatpush1.msra.mxu0 %v2260
  %2322 = vmatprep.subr.mxu0 0.0
  %2323 = vmatpush1.msra.mxu0 %v2258
  %2324 = vmatprep.subr.mxu0 0.0
  %2325 = vmatpush2.msra.mxu0 0.0
  %2326 = vmatprep.subr.mxu0 0.0
  %2327 = vmatpush2.msra.mxu0 0.0
  %2328 = vmatprep.subr.mxu0 0.0
  %2329 = vmatpush2.msra.mxu0 0.0
  %2330 = vmatprep.subr.mxu0 0.0
  %2331 = vmatpush2.msra.mxu0 0.0
  %2332 = vmatprep.subr.mxu0 0.0
  %2333 = vmatpush2.msra.mxu0 0.0
  %2334 = vmatprep.subr.mxu0 0.0
  %2335 = vmatpush2.msra.mxu0 0.0
  %2336 = vmatprep.subr.mxu0 0.0
  %2337 = vmatpush2.msra.mxu0 0.0
  %2338 = vmatprep.subr.mxu0 0.0
  %2339 = vmatpush2.msra.mxu0 0.0
  %2340 = vmatprep.subr.mxu0 0.0
  %2341 = vmatpush2.msra.mxu0 0.0
  %2342 = vmatprep.subr.mxu0 0.0
  %2343 = vmatpush2.msra.mxu0 0.0
  %2344 = vmatprep.subr.mxu0 0.0
  %2345 = vmatpush2.msra.mxu0 0.0
  %2346 = vmatprep.subr.mxu0 0.0
  %2347 = vmatpush2.msra.mxu0 0.0
  %2348 = vmatprep.subr.mxu0 0.0
  %2349 = vmatpush2.msra.mxu0 0.0
  %2350 = vmatprep.subr.mxu0 0.0
  %2351 = vmatpush2.msra.mxu0 0.0
  %2352 = vmatprep.subr.mxu0 0.0
  %2353 = vmatpush2.msra.mxu0 0.0
  %2354 = vmatprep.subr.mxu0 0.0
  %2355 = vmatpush2.msra.mxu0 0.0
  %2356 = vmatprep.mubr.f32.mxu0 0.0
  %2357 = vmatmul.mubr.f32.gmra.mxu0 %v2284
  %v2358 = vpop.f32.mrf.mxu0
  %v2359 = vadd.f32 0.0, %v2358
  %v2360 = vpop.f32.mrf.mxu0
  %2361 = vmatprep.mubr.f32.mxu0 0.0
  %2362 = vmatmul.mubr.f32.gmra.mxu0 %v2287
  %v2363 = vpop.f32.mrf.mxu0
  %v2364 = vadd.f32 0.0, %v2363
  %v2365 = vpop.f32.mrf.mxu0
  %2366 = vdwg.mxu0
  %v2368 = vsel %vm868, %v2364, 0
  %2370 = vmatprep.subr.mxu0 0.0
  %2371 = vmatpush1.msra.mxu0 0.0
  %2372 = vmatprep.subr.mxu0 0.0
  %2373 = vmatpush1.msra.mxu0 0.0
  %2374 = vmatprep.subr.mxu0 0.0
  %2375 = vmatpush1.msra.mxu0 0.0
  %2376 = vmatprep.subr.mxu0 0.0
  %2377 = vmatpush1.msra.mxu0 0.0
  %2378 = vmatprep.subr.mxu0 0.0
  %2379 = vmatpush1.msra.mxu0 0.0
  %2380 = vmatprep.subr.mxu0 0.0
  %2381 = vmatpush1.msra.mxu0 0.0
  %2382 = vmatprep.subr.mxu0 0.0
  %2383 = vmatpush1.msra.mxu0 0.0
  %2384 = vmatprep.subr.mxu0 0.0
  %2385 = vmatpush1.msra.mxu0 0.0
  %2386 = vmatprep.subr.mxu0 0.0
  %2387 = vmatpush1.msra.mxu0 0.0
  %2388 = vmatprep.subr.mxu0 0.0
  %2389 = vmatpush1.msra.mxu0 0.0
  %2390 = vmatprep.subr.mxu0 0.0
  %2391 = vmatpush1.msra.mxu0 0.0
  %2392 = vmatprep.subr.mxu0 0.0
  %2393 = vmatpush1.msra.mxu0 0.0
  %2394 = vmatprep.subr.mxu0 0.0
  %2395 = vmatpush1.msra.mxu0 0.0
  %2396 = vmatprep.subr.mxu0 0.0
  %2397 = vmatpush1.msra.mxu0 0.0
  %2398 = vmatprep.subr.mxu0 0.0
  %2399 = vmatpush1.msra.mxu0 %v2368
  %2400 = vmatprep.subr.mxu0 0.0
  %2401 = vmatpush1.msra.mxu0 %v2359
  %2402 = vmatprep.subr.mxu0 0.0
  %2403 = vmatpush2.msra.mxu0 0.0
  %2404 = vmatprep.subr.mxu0 0.0
  %2405 = vmatpush2.msra.mxu0 0.0
  %2406 = vmatprep.subr.mxu0 0.0
  %2407 = vmatpush2.msra.mxu0 0.0
  %2408 = vmatprep.subr.mxu0 0.0
  %2409 = vmatpush2.msra.mxu0 0.0
  %2410 = vmatprep.subr.mxu0 0.0
  %2411 = vmatpush2.msra.mxu0 0.0
  %2412 = vmatprep.subr.mxu0 0.0
  %2413 = vmatpush2.msra.mxu0 0.0
  %2414 = vmatprep.subr.mxu0 0.0
  %2415 = vmatpush2.msra.mxu0 0.0
  %2416 = vmatprep.subr.mxu0 0.0
  %2417 = vmatpush2.msra.mxu0 0.0
  %2418 = vmatprep.subr.mxu0 0.0
  %2419 = vmatpush2.msra.mxu0 0.0
  %2420 = vmatprep.subr.mxu0 0.0
  %2421 = vmatpush2.msra.mxu0 0.0
  %2422 = vmatprep.subr.mxu0 0.0
  %2423 = vmatpush2.msra.mxu0 0.0
  %2424 = vmatprep.subr.mxu0 0.0
  %2425 = vmatpush2.msra.mxu0 0.0
  %2426 = vmatprep.subr.mxu0 0.0
  %2427 = vmatpush2.msra.mxu0 0.0
  %2428 = vmatprep.subr.mxu0 0.0
  %2429 = vmatpush2.msra.mxu0 0.0
  %2430 = vmatprep.subr.mxu0 0.0
  %2431 = vmatpush2.msra.mxu0 0.0
  %2432 = vmatprep.subr.mxu0 0.0
  %2433 = vmatpush2.msra.mxu0 0.0
  %2434 = vmatprep.mubr.f32.mxu0 0.0
  %2435 = vmatmul.mubr.f32.gmra.mxu0 %v830
  %v2436 = vpop.f32.mrf.mxu0
  %v2437 = vadd.f32 0.0, %v2436
  %v2438 = vpop.f32.mrf.mxu0
  %2439 = vmatprep.mubr.f32.mxu0 0.0
  %2440 = vmatmul.mubr.f32.gmra.mxu0 %v833
  %v2441 = vpop.f32.mrf.mxu0
  %v2442 = vadd.f32 0.0, %v2441
  %v2443 = vpop.f32.mrf.mxu0
  %2444 = vmatprep.mubr.f32.mxu0 0.0
  %2445 = vmatmul.mubr.f32.gmra.mxu0 %v836
  %v2446 = vpop.f32.mrf.mxu0
  %v2447 = vadd.f32 0.0, %v2446
  %v2448 = vpop.f32.mrf.mxu0
  %2449 = vmatprep.mubr.f32.mxu0 0.0
  %2450 = vmatmul.mubr.f32.gmra.mxu0 %v839
  %v2451 = vpop.f32.mrf.mxu0
  %v2452 = vadd.f32 0.0, %v2451
  %v2453 = vpop.f32.mrf.mxu0
  %2454 = vmatprep.mubr.f32.mxu0 0.0
  %2455 = vmatmul.mubr.f32.gmra.mxu0 %v842
  %v2456 = vpop.f32.mrf.mxu0
  %v2457 = vadd.f32 0.0, %v2456
  %v2458 = vpop.f32.mrf.mxu0
  %2459 = vmatprep.mubr.f32.mxu0 0.0
  %2460 = vmatmul.mubr.f32.gmra.mxu0 %v845
  %v2461 = vpop.f32.mrf.mxu0
  %v2462 = vadd.f32 0.0, %v2461
  %v2463 = vpop.f32.mrf.mxu0
  %2464 = vmatprep.mubr.f32.mxu0 0.0
  %2465 = vmatmul.mubr.f32.gmra.mxu0 %v848
  %v2466 = vpop.f32.mrf.mxu0
  %v2467 = vadd.f32 0.0, %v2466
  %v2468 = vpop.f32.mrf.mxu0
  %2469 = vmatprep.mubr.f32.mxu0 0.0
  %2470 = vmatmul.mubr.f32.gmra.mxu0 %v851
  %v2471 = vpop.f32.mrf.mxu0
  %v2472 = vadd.f32 0.0, %v2471
  %v2473 = vpop.f32.mrf.mxu0
  %2474 = vmatprep.mubr.f32.mxu0 0.0
  %2475 = vmatmul.mubr.f32.gmra.mxu0 %v854
  %v2476 = vpop.f32.mrf.mxu0
  %v2477 = vadd.f32 0.0, %v2476
  %v2478 = vpop.f32.mrf.mxu0
  %2479 = vmatprep.mubr.f32.mxu0 0.0
  %2480 = vmatmul.mubr.f32.gmra.mxu0 %v857
  %v2481 = vpop.f32.mrf.mxu0
  %v2482 = vadd.f32 0.0, %v2481
  %v2483 = vpop.f32.mrf.mxu0
  %2484 = vmatprep.mubr.f32.mxu0 0.0
  %2485 = vmatmul.mubr.f32.gmra.mxu0 %v860
  %v2486 = vpop.f32.mrf.mxu0
  %v2487 = vadd.f32 0.0, %v2486
  %v2488 = vpop.f32.mrf.mxu0
  %2489 = vmatprep.mubr.f32.mxu0 0.0
  %2490 = vmatmul.mubr.f32.gmra.mxu0 %v863
  %v2491 = vpop.f32.mrf.mxu0
  %v2492 = vadd.f32 0.0, %v2491
  %v2493 = vpop.f32.mrf.mxu0
  %2494 = vmatprep.mubr.f32.mxu0 0.0
  %2495 = vmatmul.mubr.f32.gmra.mxu0 %v866
  %v2496 = vpop.f32.mrf.mxu0
  %v2497 = vadd.f32 0.0, %v2496
  %v2498 = vpop.f32.mrf.mxu0
  %2499 = vdwg.mxu0
  %v2500 = vrcp.pop %v2437
  %v2501 = vrcp.pop %v2442
  %v2502 = vrcp.pop %v2447
  %v2503 = vrcp.pop %v2452
  %v2504 = vrcp.pop %v2457
  %v2505 = vrcp.pop %v2462
  %v2506 = vrcp.pop %v2467
  %v2507 = vrcp.pop %v2472
  %v2508 = vrcp.pop %v2477
  %v2509 = vrcp.pop %v2482
  %v2510 = vrcp.pop %v2487
  %v2511 = vrcp.pop %v2492
  %v2512 = vrcp.pop %v2497
  %v2513 = vmul.f32 %v2258, %v2500
  %v2514 = vmul.f32 %v2260, %v2501
  %v2515 = vmul.f32 %v2262, %v2502
  %v2516 = vmul.f32 %v2264, %v2503
  %v2517 = vmul.f32 %v2266, %v2504
  %v2518 = vmul.f32 %v2268, %v2505
  %v2519 = vmul.f32 %v2270, %v2506
  %v2520 = vmul.f32 %v2272, %v2507
  %v2521 = vmul.f32 %v2274, %v2508
  %v2522 = vmul.f32 %v2276, %v2509
  %v2523 = vmul.f32 %v2278, %v2510
  %v2524 = vmul.f32 %v2280, %v2511
  %v2525 = vmul.f32 %v2282, %v2512
  %v2527 = vsel %vm2184, %v2513, 0
  %v2530 = vsel %vm2184, %v2514, 0
  %v2533 = vsel %vm2184, %v2515, 0
  %v2536 = vsel %vm2184, %v2516, 0
  %v2539 = vsel %vm2184, %v2517, 0
  %v2542 = vsel %vm2184, %v2518, 0
  %v2545 = vsel %vm2184, %v2519, 0
  %v2548 = vsel %vm2184, %v2520, 0
  %v2551 = vsel %vm2184, %v2521, 0
  %v2554 = vsel %vm2184, %v2522, 0
  %v2557 = vsel %vm2184, %v2523, 0
  %v2560 = vsel %vm2184, %v2524, 0
  %v2563 = vsel %vm2184, %v2525, 0
  %vm2565 = vcmask 1043456
  %v2567 = vsel %vm2565, %v350, 0
  %2569 = vmatprep.subr.mxu0 0.0
  %2570 = vmatpush1.msra.mxu0 0.0
  %2571 = vmatprep.subr.mxu0 0.0
  %2572 = vmatpush1.msra.mxu0 0.0
  %2573 = vmatprep.subr.mxu0 0.0
  %2574 = vmatpush1.msra.mxu0 0.0
  %2575 = vmatprep.subr.mxu0 0.0
  %2576 = vmatpush1.msra.mxu0 0.0
  %2577 = vmatprep.subr.mxu0 0.0
  %2578 = vmatpush1.msra.mxu0 0.0
  %2579 = vmatprep.subr.mxu0 0.0
  %2580 = vmatpush1.msra.mxu0 0.0
  %2581 = vmatprep.subr.mxu0 0.0
  %2582 = vmatpush1.msra.mxu0 0.0
  %2583 = vmatprep.subr.mxu0 0.0
  %2584 = vmatpush1.msra.mxu0 0.0
  %2585 = vmatprep.subr.mxu0 0.0
  %2586 = vmatpush1.msra.mxu0 0.0
  %2587 = vmatprep.subr.mxu0 0.0
  %2588 = vmatpush1.msra.mxu0 0.0
  %2589 = vmatprep.subr.mxu0 0.0
  %2590 = vmatpush1.msra.mxu0 0.0
  %2591 = vmatprep.subr.mxu0 0.0
  %2592 = vmatpush1.msra.mxu0 0.0
  %2593 = vmatprep.subr.mxu0 0.0
  %2594 = vmatpush1.msra.mxu0 0.0
  %2595 = vmatprep.subr.mxu0 0.0
  %2596 = vmatpush1.msra.mxu0 0.0
  %2597 = vmatprep.subr.mxu0 0.0
  %2598 = vmatpush1.msra.mxu0 0.0
  %2599 = vmatprep.subr.mxu0 0.0
  %2600 = vmatpush1.msra.mxu0 %v2567
  %2601 = vmatprep.subr.mxu0 0.0
  %2602 = vmatpush2.msra.mxu0 0.0
  %2603 = vmatprep.subr.mxu0 0.0
  %2604 = vmatpush2.msra.mxu0 0.0
  %2605 = vmatprep.subr.mxu0 0.0
  %2606 = vmatpush2.msra.mxu0 0.0
  %2607 = vmatprep.subr.mxu0 0.0
  %2608 = vmatpush2.msra.mxu0 0.0
  %2609 = vmatprep.subr.mxu0 0.0
  %2610 = vmatpush2.msra.mxu0 0.0
  %2611 = vmatprep.subr.mxu0 0.0
  %2612 = vmatpush2.msra.mxu0 0.0
  %2613 = vmatprep.subr.mxu0 0.0
  %2614 = vmatpush2.msra.mxu0 0.0
  %2615 = vmatprep.subr.mxu0 0.0
  %2616 = vmatpush2.msra.mxu0 0.0
  %2617 = vmatprep.subr.mxu0 0.0
  %2618 = vmatpush2.msra.mxu0 0.0
  %2619 = vmatprep.subr.mxu0 0.0
  %2620 = vmatpush2.msra.mxu0 0.0
  %2621 = vmatprep.subr.mxu0 0.0
  %2622 = vmatpush2.msra.mxu0 0.0
  %2623 = vmatprep.subr.mxu0 0.0
  %2624 = vmatpush2.msra.mxu0 0.0
  %2625 = vmatprep.subr.mxu0 0.0
  %2626 = vmatpush2.msra.mxu0 0.0
  %2627 = vmatprep.subr.mxu0 0.0
  %2628 = vmatpush2.msra.mxu0 0.0
  %2629 = vmatprep.subr.mxu0 0.0
  %2630 = vmatpush2.msra.mxu0 0.0
  %2631 = vmatprep.subr.mxu0 0.0
  %2632 = vmatpush2.msra.mxu0 0.0
  %2633 = vmatprep.mubr.f32.mxu0 0.0
  %2634 = vmatmul.mubr.f32.gmra.mxu0 %v2527
  %v2635 = vpop.f32.mrf.mxu0
  %v2636 = vadd.f32 0.0, %v2635
  %v2637 = vpop.f32.mrf.mxu0
  %2638 = vmatprep.mubr.f32.mxu0 0.0
  %2639 = vmatmul.mubr.f32.gmra.mxu0 %v2530
  %v2640 = vpop.f32.mrf.mxu0
  %v2641 = vadd.f32 0.0, %v2640
  %v2642 = vpop.f32.mrf.mxu0
  %2643 = vmatprep.mubr.f32.mxu0 0.0
  %2644 = vmatmul.mubr.f32.gmra.mxu0 %v2533
  %v2645 = vpop.f32.mrf.mxu0
  %v2646 = vadd.f32 0.0, %v2645
  %v2647 = vpop.f32.mrf.mxu0
  %2648 = vmatprep.mubr.f32.mxu0 0.0
  %2649 = vmatmul.mubr.f32.gmra.mxu0 %v2536
  %v2650 = vpop.f32.mrf.mxu0
  %v2651 = vadd.f32 0.0, %v2650
  %v2652 = vpop.f32.mrf.mxu0
  %2653 = vmatprep.mubr.f32.mxu0 0.0
  %2654 = vmatmul.mubr.f32.gmra.mxu0 %v2539
  %v2655 = vpop.f32.mrf.mxu0
  %v2656 = vadd.f32 0.0, %v2655
  %v2657 = vpop.f32.mrf.mxu0
  %2658 = vmatprep.mubr.f32.mxu0 0.0
  %2659 = vmatmul.mubr.f32.gmra.mxu0 %v2542
  %v2660 = vpop.f32.mrf.mxu0
  %v2661 = vadd.f32 0.0, %v2660
  %v2662 = vpop.f32.mrf.mxu0
  %2663 = vmatprep.mubr.f32.mxu0 0.0
  %2664 = vmatmul.mubr.f32.gmra.mxu0 %v2545
  %v2665 = vpop.f32.mrf.mxu0
  %v2666 = vadd.f32 0.0, %v2665
  %v2667 = vpop.f32.mrf.mxu0
  %2668 = vmatprep.mubr.f32.mxu0 0.0
  %2669 = vmatmul.mubr.f32.gmra.mxu0 %v2548
  %v2670 = vpop.f32.mrf.mxu0
  %v2671 = vadd.f32 0.0, %v2670
  %v2672 = vpop.f32.mrf.mxu0
  %2673 = vmatprep.mubr.f32.mxu0 0.0
  %2674 = vmatmul.mubr.f32.gmra.mxu0 %v2551
  %v2675 = vpop.f32.mrf.mxu0
  %v2676 = vadd.f32 0.0, %v2675
  %v2677 = vpop.f32.mrf.mxu0
  %2678 = vmatprep.mubr.f32.mxu0 0.0
  %2679 = vmatmul.mubr.f32.gmra.mxu0 %v2554
  %v2680 = vpop.f32.mrf.mxu0
  %v2681 = vadd.f32 0.0, %v2680
  %v2682 = vpop.f32.mrf.mxu0
  %2683 = vmatprep.mubr.f32.mxu0 0.0
  %2684 = vmatmul.mubr.f32.gmra.mxu0 %v2557
  %v2685 = vpop.f32.mrf.mxu0
  %v2686 = vadd.f32 0.0, %v2685
  %v2687 = vpop.f32.mrf.mxu0
  %2688 = vmatprep.mubr.f32.mxu0 0.0
  %2689 = vmatmul.mubr.f32.gmra.mxu0 %v2560
  %v2690 = vpop.f32.mrf.mxu0
  %v2691 = vadd.f32 0.0, %v2690
  %v2692 = vpop.f32.mrf.mxu0
  %2693 = vmatprep.mubr.f32.mxu0 0.0
  %2694 = vmatmul.mubr.f32.gmra.mxu0 %v2563
  %v2695 = vpop.f32.mrf.mxu0
  %v2696 = vadd.f32 0.0, %v2695
  %v2697 = vpop.f32.mrf.mxu0
  %2698 = vdwg.mxu0
  %v2699 = vmul.f32 %v2636, %v1396
  %v2700 = vmul.f32 %v2641, %v1401
  %v2701 = vmul.f32 %v2646, %v1406
  %v2702 = vmul.f32 %v2651, %v1411
  %v2703 = vmul.f32 %v2656, %v1416
  %v2704 = vmul.f32 %v2661, %v1421
  %v2705 = vmul.f32 %v2666, %v1426
  %v2706 = vmul.f32 %v2671, %v1431
  %v2707 = vmul.f32 %v2676, %v1436
  %v2708 = vmul.f32 %v2681, %v1441
  %v2709 = vmul.f32 %v2686, %v1446
  %v2710 = vmul.f32 %v2691, %v1451
  %v2711 = vmul.f32 %v2696, %v1456
  %v2713 = vsel %vm1868, %v2711, 0
  %2715 = vmatprep.subr.mxu0 0.0
  %2716 = vmatpush1.msra.mxu0 0.0
  %2717 = vmatprep.subr.mxu0 0.0
  %2718 = vmatpush1.msra.mxu0 0.0
  %2719 = vmatprep.subr.mxu0 0.0
  %2720 = vmatpush1.msra.mxu0 0.0
  %2721 = vmatprep.subr.mxu0 0.0
  %2722 = vmatpush1.msra.mxu0 %v2713
  %2723 = vmatprep.subr.mxu0 0.0
  %2724 = vmatpush1.msra.mxu0 %v2710
  %2725 = vmatprep.subr.mxu0 0.0
  %2726 = vmatpush1.msra.mxu0 %v2709
  %2727 = vmatprep.subr.mxu0 0.0
  %2728 = vmatpush1.msra.mxu0 %v2708
  %2729 = vmatprep.subr.mxu0 0.0
  %2730 = vmatpush1.msra.mxu0 %v2707
  %2731 = vmatprep.subr.mxu0 0.0
  %2732 = vmatpush1.msra.mxu0 %v2706
  %2733 = vmatprep.subr.mxu0 0.0
  %2734 = vmatpush1.msra.mxu0 %v2705
  %2735 = vmatprep.subr.mxu0 0.0
  %2736 = vmatpush1.msra.mxu0 %v2704
  %2737 = vmatprep.subr.mxu0 0.0
  %2738 = vmatpush1.msra.mxu0 %v2703
  %2739 = vmatprep.subr.mxu0 0.0
  %2740 = vmatpush1.msra.mxu0 %v2702
  %2741 = vmatprep.subr.mxu0 0.0
  %2742 = vmatpush1.msra.mxu0 %v2701
  %2743 = vmatprep.subr.mxu0 0.0
  %2744 = vmatpush1.msra.mxu0 %v2700
  %2745 = vmatprep.subr.mxu0 0.0
  %2746 = vmatpush1.msra.mxu0 %v2699
  %2747 = vmatprep.subr.mxu0 0.0
  %2748 = vmatpush2.msra.mxu0 0.0
  %2749 = vmatprep.subr.mxu0 0.0
  %2750 = vmatpush2.msra.mxu0 0.0
  %2751 = vmatprep.subr.mxu0 0.0
  %2752 = vmatpush2.msra.mxu0 0.0
  %2753 = vmatprep.subr.mxu0 0.0
  %2754 = vmatpush2.msra.mxu0 0.0
  %2755 = vmatprep.subr.mxu0 0.0
  %2756 = vmatpush2.msra.mxu0 0.0
  %2757 = vmatprep.subr.mxu0 0.0
  %2758 = vmatpush2.msra.mxu0 0.0
  %2759 = vmatprep.subr.mxu0 0.0
  %2760 = vmatpush2.msra.mxu0 0.0
  %2761 = vmatprep.subr.mxu0 0.0
  %2762 = vmatpush2.msra.mxu0 0.0
  %2763 = vmatprep.subr.mxu0 0.0
  %2764 = vmatpush2.msra.mxu0 0.0
  %2765 = vmatprep.subr.mxu0 0.0
  %2766 = vmatpush2.msra.mxu0 0.0
  %2767 = vmatprep.subr.mxu0 0.0
  %2768 = vmatpush2.msra.mxu0 0.0
  %2769 = vmatprep.subr.mxu0 0.0
  %2770 = vmatpush2.msra.mxu0 0.0
  %2771 = vmatprep.subr.mxu0 0.0
  %2772 = vmatpush2.msra.mxu0 0.0
  %2773 = vmatprep.subr.mxu0 0.0
  %2774 = vmatpush2.msra.mxu0 0.0
  %2775 = vmatprep.subr.mxu0 0.0
  %2776 = vmatpush2.msra.mxu0 0.0
  %2777 = vmatprep.subr.mxu0 0.0
  %2778 = vmatpush2.msra.mxu0 0.0
  %2779 = vmatprep.mubr.f32.mxu0 0.0
  %2780 = vmatmul.mubr.f32.gmra.mxu0 %v2284
  %v2781 = vpop.f32.mrf.mxu0
  %v2782 = vadd.f32 0.0, %v2781
  %v2783 = vpop.f32.mrf.mxu0
  %2784 = vmatprep.mubr.f32.mxu0 0.0
  %2785 = vmatmul.mubr.f32.gmra.mxu0 %v2287
  %v2786 = vpop.f32.mrf.mxu0
  %v2787 = vadd.f32 0.0, %v2786
  %v2788 = vpop.f32.mrf.mxu0
  %2789 = vdwg.mxu0
  %v2790 = vld [vmem:[%s35] sm:$0xff]
  %v2791 = vld [vmem:[%s35 + $0x8] sm:$0xff]
  %v2792 = vld [vmem:[%s35 + $0x10] sm:$0xff]
  %v2793 = vld [vmem:[%s35 + $0x18] sm:$0xff]
  %v2795 = vsel %vm375, %v2782, 0
  %v2798 = vsel %vm375, %v2787, 0
  %2800 = vmatprep.subr.mxu0 0.0
  %2801 = vmatpush1.msra.mxu0 0.0
  %2802 = vmatprep.subr.mxu0 0.0
  %2803 = vmatpush1.msra.mxu0 0.0
  %2804 = vmatprep.subr.mxu0 0.0
  %2805 = vmatpush1.msra.mxu0 0.0
  %2806 = vmatprep.subr.mxu0 0.0
  %2807 = vmatpush1.msra.mxu0 0.0
  %2808 = vmatprep.subr.mxu0 0.0
  %2809 = vmatpush1.msra.mxu0 0.0
  %2810 = vmatprep.subr.mxu0 0.0
  %2811 = vmatpush1.msra.mxu0 0.0
  %2812 = vmatprep.subr.mxu0 0.0
  %2813 = vmatpush1.msra.mxu0 0.0
  %2814 = vmatprep.subr.mxu0 0.0
  %2815 = vmatpush1.msra.mxu0 0.0
  %2816 = vmatprep.subr.mxu0 0.0
  %2817 = vmatpush1.msra.mxu0 0.0
  %2818 = vmatprep.subr.mxu0 0.0
  %2819 = vmatpush1.msra.mxu0 0.0
  %2820 = vmatprep.subr.mxu0 0.0
  %2821 = vmatpush1.msra.mxu0 0.0
  %2822 = vmatprep.subr.mxu0 0.0
  %2823 = vmatpush1.msra.mxu0 0.0
  %2824 = vmatprep.subr.mxu0 0.0
  %2825 = vmatpush1.msra.mxu0 %v2793
  %2826 = vmatprep.subr.mxu0 0.0
  %2827 = vmatpush1.msra.mxu0 %v2792
  %2828 = vmatprep.subr.mxu0 0.0
  %2829 = vmatpush1.msra.mxu0 %v2791
  %2830 = vmatprep.subr.mxu0 0.0
  %2831 = vmatpush1.msra.mxu0 %v2790
  %2832 = vmatprep.subr.mxu0 0.0
  %2833 = vmatpush2.msra.mxu0 0.0
  %2834 = vmatprep.subr.mxu0 0.0
  %2835 = vmatpush2.msra.mxu0 0.0
  %2836 = vmatprep.subr.mxu0 0.0
  %2837 = vmatpush2.msra.mxu0 0.0
  %2838 = vmatprep.subr.mxu0 0.0
  %2839 = vmatpush2.msra.mxu0 0.0
  %2840 = vmatprep.subr.mxu0 0.0
  %2841 = vmatpush2.msra.mxu0 0.0
  %2842 = vmatprep.subr.mxu0 0.0
  %2843 = vmatpush2.msra.mxu0 0.0
  %2844 = vmatprep.subr.mxu0 0.0
  %2845 = vmatpush2.msra.mxu0 0.0
  %2846 = vmatprep.subr.mxu0 0.0
  %2847 = vmatpush2.msra.mxu0 0.0
  %2848 = vmatprep.subr.mxu0 0.0
  %2849 = vmatpush2.msra.mxu0 0.0
  %2850 = vmatprep.subr.mxu0 0.0
  %2851 = vmatpush2.msra.mxu0 0.0
  %2852 = vmatprep.subr.mxu0 0.0
  %2853 = vmatpush2.msra.mxu0 0.0
  %2854 = vmatprep.subr.mxu0 0.0
  %2855 = vmatpush2.msra.mxu0 0.0
  %2856 = vmatprep.subr.mxu0 0.0
  %2857 = vmatpush2.msra.mxu0 0.0
  %2858 = vmatprep.subr.mxu0 0.0
  %2859 = vmatpush2.msra.mxu0 0.0
  %2860 = vmatprep.subr.mxu0 0.0
  %2861 = vmatpush2.msra.mxu0 0.0
  %2862 = vmatprep.subr.mxu0 0.0
  %2863 = vmatpush2.msra.mxu0 0.0
  %2864 = vmatprep.mubr.f32.mxu0 0.0
  %2865 = vmatmul.mubr.f32.gmra.mxu0 %v2795
  %v2866 = vpop.f32.mrf.mxu0
  %v2867 = vadd.f32 0.0, %v2866
  %v2868 = vpop.f32.mrf.mxu0
  %2869 = vmatprep.mubr.f32.mxu0 0.0
  %2870 = vmatmul.mubr.f32.gmra.mxu0 %v2798
  %v2871 = vpop.f32.mrf.mxu0
  %v2872 = vadd.f32 0.0, %v2871
  %v2873 = vpop.f32.mrf.mxu0
  %2874 = vdwg.mxu0
  %v2875 = vadd.f32 %v604, %v2867
  %v2876 = vadd.f32 %v605, %v2872
  %v2877 = vld [vmem:[%s37] sm:$0x1]
  %v2879 = vlaneseq
  %v2880 = vshrl.u32 %v2879, 7
  %v2881 = vsub.s32 0, %v2880
  %v2882 = vrot.slane %v2877, %v2881
  %v2884 = vadd.f32 %v2875, %v2882
  %v2885 = vadd.f32 %v2876, %v2882
  %v2886 = vld [vmem:[%s39] sm:$0x1]
  %v2887 = vld [vmem:[%s41] sm:$0x1]
  %v2888 = vsel %vm375, %v2884, 0.0
  %2889 = vadd.xlane.f32.xlu0 %v2888
  %v2890 = vpop.xlane.xlu0 %2889
  %v2891 = vsel %vm379, %v2885, 0.0
  %2892 = vadd.xlane.f32.xlu0 %v2891
  %v2893 = vpop.xlane.xlu0 %2892
  %v2894 = vmul.f32 %v2890, %v383
  %v2895 = vmul.f32 %v2893, %v383
  %v2896 = vsub.f32 %v2884, %v2894
  %v2897 = vsub.f32 %v2885, %v2895
  %v2898 = vmul.f32 %v2896, %v2896
  %v2899 = vmul.f32 %v2897, %v2897
  %v2900 = vsel %vm375, %v2898, 0.0
  %2901 = vadd.xlane.f32.xlu0 %v2900
  %v2902 = vpop.xlane.xlu0 %2901
  %v2903 = vsel %vm379, %v2899, 0.0
  %2904 = vadd.xlane.f32.xlu0 %v2903
  %v2905 = vpop.xlane.xlu0 %2904
  %v2906 = vmul.f32 %v2902, %v383
  %v2907 = vmul.f32 %v2905, %v383
  %v2908 = vadd.f32 %v2906, 1e-05
  %v2909 = vadd.f32 %v2907, 1e-05
  %v2910 = vrsqrt.pop %v2908
  %v2911 = vrsqrt.pop %v2909
  %v2912 = vmul.f32 %v2896, %v2910
  %v2913 = vmul.f32 %v2897, %v2911
  %v2915 = vlaneseq
  %v2916 = vshrl.u32 %v2915, 7
  %v2917 = vsub.s32 0, %v2916
  %v2918 = vrot.slane %v2886, %v2917
  %v2920 = vmul.f32 %v2912, %v2918
  %v2921 = vmul.f32 %v2913, %v2918
  %v2923 = vlaneseq
  %v2924 = vshrl.u32 %v2923, 7
  %v2925 = vsub.s32 0, %v2924
  %v2926 = vrot.slane %v2887, %v2925
  %v2928 = vadd.f32 %v2920, %v2926
  %v2929 = vadd.f32 %v2921, %v2926
  %v2930 = vld [vmem:[%s43] sm:$0xff]
  %v2931 = vld [vmem:[%s43 + $0x8] sm:$0xff]
  %v2932 = vld [vmem:[%s43 + $0x10] sm:$0xff]
  %v2933 = vld [vmem:[%s43 + $0x18] sm:$0xff]
  %v2934 = vld [vmem:[%s45] sm:$0x1]
  %v2936 = vlaneseq
  %v2937 = vshrl.u32 %v2936, 7
  %v2938 = vsub.s32 0, %v2937
  %v2939 = vrot.slane %v2934, %v2938
  %v2942 = vsel %vm375, %v2928, 0
  %v2945 = vsel %vm375, %v2929, 0
  %2947 = vmatprep.subr.mxu0 0.0
  %2948 = vmatpush1.msra.mxu0 0.0
  %2949 = vmatprep.subr.mxu0 0.0
  %2950 = vmatpush1.msra.mxu0 0.0
  %2951 = vmatprep.subr.mxu0 0.0
  %2952 = vmatpush1.msra.mxu0 0.0
  %2953 = vmatprep.subr.mxu0 0.0
  %2954 = vmatpush1.msra.mxu0 0.0
  %2955 = vmatprep.subr.mxu0 0.0
  %2956 = vmatpush1.msra.mxu0 0.0
  %2957 = vmatprep.subr.mxu0 0.0
  %2958 = vmatpush1.msra.mxu0 0.0
  %2959 = vmatprep.subr.mxu0 0.0
  %2960 = vmatpush1.msra.mxu0 0.0
  %2961 = vmatprep.subr.mxu0 0.0
  %2962 = vmatpush1.msra.mxu0 0.0
  %2963 = vmatprep.subr.mxu0 0.0
  %2964 = vmatpush1.msra.mxu0 0.0
  %2965 = vmatprep.subr.mxu0 0.0
  %2966 = vmatpush1.msra.mxu0 0.0
  %2967 = vmatprep.subr.mxu0 0.0
  %2968 = vmatpush1.msra.mxu0 0.0
  %2969 = vmatprep.subr.mxu0 0.0
  %2970 = vmatpush1.msra.mxu0 0.0
  %2971 = vmatprep.subr.mxu0 0.0
  %2972 = vmatpush1.msra.mxu0 %v2933
  %2973 = vmatprep.subr.mxu0 0.0
  %2974 = vmatpush1.msra.mxu0 %v2932
  %2975 = vmatprep.subr.mxu0 0.0
  %2976 = vmatpush1.msra.mxu0 %v2931
  %2977 = vmatprep.subr.mxu0 0.0
  %2978 = vmatpush1.msra.mxu0 %v2930
  %2979 = vmatprep.subr.mxu0 0.0
  %2980 = vmatpush2.msra.mxu0 0.0
  %2981 = vmatprep.subr.mxu0 0.0
  %2982 = vmatpush2.msra.mxu0 0.0
  %2983 = vmatprep.subr.mxu0 0.0
  %2984 = vmatpush2.msra.mxu0 0.0
  %2985 = vmatprep.subr.mxu0 0.0
  %2986 = vmatpush2.msra.mxu0 0.0
  %2987 = vmatprep.subr.mxu0 0.0
  %2988 = vmatpush2.msra.mxu0 0.0
  %2989 = vmatprep.subr.mxu0 0.0
  %2990 = vmatpush2.msra.mxu0 0.0
  %2991 = vmatprep.subr.mxu0 0.0
  %2992 = vmatpush2.msra.mxu0 0.0
  %2993 = vmatprep.subr.mxu0 0.0
  %2994 = vmatpush2.msra.mxu0 0.0
  %2995 = vmatprep.subr.mxu0 0.0
  %2996 = vmatpush2.msra.mxu0 0.0
  %2997 = vmatprep.subr.mxu0 0.0
  %2998 = vmatpush2.msra.mxu0 0.0
  %2999 = vmatprep.subr.mxu0 0.0
  %3000 = vmatpush2.msra.mxu0 0.0
  %3001 = vmatprep.subr.mxu0 0.0
  %3002 = vmatpush2.msra.mxu0 0.0
  %3003 = vmatprep.subr.mxu0 0.0
  %3004 = vmatpush2.msra.mxu0 0.0
  %3005 = vmatprep.subr.mxu0 0.0
  %3006 = vmatpush2.msra.mxu0 0.0
  %3007 = vmatprep.subr.mxu0 0.0
  %3008 = vmatpush2.msra.mxu0 0.0
  %3009 = vmatprep.subr.mxu0 0.0
  %3010 = vmatpush2.msra.mxu0 0.0
  %3011 = vmatprep.mubr.f32.mxu0 0.0
  %3012 = vmatmul.mubr.f32.gmra.mxu0 %v2942
  %v3013 = vpop.f32.mrf.mxu0
  %v3014 = vadd.f32 %v2939, %v3013
  %v3015 = vpop.f32.mrf.mxu0
  %3016 = vmatprep.mubr.f32.mxu0 0.0
  %3017 = vmatmul.mubr.f32.gmra.mxu0 %v2945
  %v3018 = vpop.f32.mrf.mxu0
  %v3019 = vadd.f32 %v2939, %v3018
  %v3020 = vpop.f32.mrf.mxu0
  %3021 = vdwg.mxu0
  %v3022 = vsub.f32 0.0, %v3014
  %v3023 = vsub.f32 0.0, %v3019
  %v3024 = vmul.f32 %v3022, 1.442695
  %v3025 = vpow.pop %v3024
  %v3026 = vmul.f32 %v3023, 1.442695
  %v3027 = vpow.pop %v3026
  %v3028 = vadd.f32 %v3025, 1.0
  %v3029 = vadd.f32 %v3027, 1.0
  %v3030 = vrcp.pop %v3028
  %v3031 = vmul.f32 1.0, %v3030
  %v3032 = vrcp.pop %v3029
  %v3033 = vmul.f32 1.0, %v3032
  %3036 = vrot.lane.b32.xlu0 %v3031, 96
  %v3037 = vpop.permute.xlu0 %3036
  %3038 = vrot.lane.b32.xlu0 %v3033, 96
  %v3039 = vpop.permute.xlu0 %3038
  %v3042 = vmul.f32 %v3014, %v3037
  %v3043 = vmul.f32 %v3019, %v3039
  %v3044 = vld [vmem:[%s47] sm:$0x7f]
  %v3045 = vld [vmem:[%s87] sm:$0xff]
  %v3046 = vld [vmem:[%s87 + $0x8] sm:$0x3f]
  %v3048 = vsel %vm828, %v3045, 0
  %v3051 = vsel %vm828, %v3046, 0
  %v3054 = vsel %vm868, %v3043, 0
  %3056 = vmatprep.subr.mxu0 0.0
  %3057 = vmatpush1.msra.mxu0 0.0
  %3058 = vmatprep.subr.mxu0 0.0
  %3059 = vmatpush1.msra.mxu0 0.0
  %3060 = vmatprep.subr.mxu0 0.0
  %3061 = vmatpush1.msra.mxu0 0.0
  %3062 = vmatprep.subr.mxu0 0.0
  %3063 = vmatpush1.msra.mxu0 0.0
  %3064 = vmatprep.subr.mxu0 0.0
  %3065 = vmatpush1.msra.mxu0 0.0
  %3066 = vmatprep.subr.mxu0 0.0
  %3067 = vmatpush1.msra.mxu0 0.0
  %3068 = vmatprep.subr.mxu0 0.0
  %3069 = vmatpush1.msra.mxu0 0.0
  %3070 = vmatprep.subr.mxu0 0.0
  %3071 = vmatpush1.msra.mxu0 0.0
  %3072 = vmatprep.subr.mxu0 0.0
  %3073 = vmatpush1.msra.mxu0 0.0
  %3074 = vmatprep.subr.mxu0 0.0
  %3075 = vmatpush1.msra.mxu0 0.0
  %3076 = vmatprep.subr.mxu0 0.0
  %3077 = vmatpush1.msra.mxu0 0.0
  %3078 = vmatprep.subr.mxu0 0.0
  %3079 = vmatpush1.msra.mxu0 0.0
  %3080 = vmatprep.subr.mxu0 0.0
  %3081 = vmatpush1.msra.mxu0 0.0
  %3082 = vmatprep.subr.mxu0 0.0
  %3083 = vmatpush1.msra.mxu0 0.0
  %3084 = vmatprep.subr.mxu0 0.0
  %3085 = vmatpush1.msra.mxu0 %v3054
  %3086 = vmatprep.subr.mxu0 0.0
  %3087 = vmatpush1.msra.mxu0 %v3042
  %3088 = vmatprep.subr.mxu0 0.0
  %3089 = vmatpush2.msra.mxu0 0.0
  %3090 = vmatprep.subr.mxu0 0.0
  %3091 = vmatpush2.msra.mxu0 0.0
  %3092 = vmatprep.subr.mxu0 0.0
  %3093 = vmatpush2.msra.mxu0 0.0
  %3094 = vmatprep.subr.mxu0 0.0
  %3095 = vmatpush2.msra.mxu0 0.0
  %3096 = vmatprep.subr.mxu0 0.0
  %3097 = vmatpush2.msra.mxu0 0.0
  %3098 = vmatprep.subr.mxu0 0.0
  %3099 = vmatpush2.msra.mxu0 0.0
  %3100 = vmatprep.subr.mxu0 0.0
  %3101 = vmatpush2.msra.mxu0 0.0
  %3102 = vmatprep.subr.mxu0 0.0
  %3103 = vmatpush2.msra.mxu0 0.0
  %3104 = vmatprep.subr.mxu0 0.0
  %3105 = vmatpush2.msra.mxu0 0.0
  %3106 = vmatprep.subr.mxu0 0.0
  %3107 = vmatpush2.msra.mxu0 0.0
  %3108 = vmatprep.subr.mxu0 0.0
  %3109 = vmatpush2.msra.mxu0 0.0
  %3110 = vmatprep.subr.mxu0 0.0
  %3111 = vmatpush2.msra.mxu0 0.0
  %3112 = vmatprep.subr.mxu0 0.0
  %3113 = vmatpush2.msra.mxu0 0.0
  %3114 = vmatprep.subr.mxu0 0.0
  %3115 = vmatpush2.msra.mxu0 0.0
  %3116 = vmatprep.subr.mxu0 0.0
  %3117 = vmatpush2.msra.mxu0 0.0
  %3118 = vmatprep.subr.mxu0 0.0
  %3119 = vmatpush2.msra.mxu0 0.0
  %3120 = vmatprep.mubr.f32.mxu0 0.0
  %3121 = vmatmul.mubr.f32.gmra.mxu0 %v3048
  %v3122 = vpop.f32.mrf.mxu0
  %v3123 = vadd.f32 0.0, %v3122
  %v3124 = vpop.f32.mrf.mxu0
  %3125 = vmatprep.mubr.f32.mxu0 0.0
  %3126 = vmatmul.mubr.f32.gmra.mxu0 %v3051
  %v3127 = vpop.f32.mrf.mxu0
  %v3128 = vadd.f32 0.0, %v3127
  %v3129 = vpop.f32.mrf.mxu0
  %3130 = vdwg.mxu0
  %v3131 = vlaneseq
  %v3132 = vshrl.u32 %v3131, 7
  %v3133 = vsub.s32 0, %v3132
  %v3134 = vrot.slane %v3044, %v3133
  %v3135 = vmul.f32 %v3123, %v3134
  %v3136 = vmul.f32 %v3128, %v3134
  %v3137 = vadd.f32 %v3135, 0.0
  %v3138 = vadd.f32 %v3136, 0.0
  %s3139 = scalar_lea.vmem %s87, 16
  %v3140 = vld [vmem:[%s3139] sm:$0xff]
  %v3141 = vld [vmem:[%s3139 + $0x8] sm:$0x3f]
  %v3143 = vsel %vm828, %v3140, 0
  %v3146 = vsel %vm828, %v3141, 0
  %3148 = vmatprep.subr.mxu0 0.0
  %3149 = vmatpush1.msra.mxu0 0.0
  %3150 = vmatprep.subr.mxu0 0.0
  %3151 = vmatpush1.msra.mxu0 0.0
  %3152 = vmatprep.subr.mxu0 0.0
  %3153 = vmatpush1.msra.mxu0 0.0
  %3154 = vmatprep.subr.mxu0 0.0
  %3155 = vmatpush1.msra.mxu0 0.0
  %3156 = vmatprep.subr.mxu0 0.0
  %3157 = vmatpush1.msra.mxu0 0.0
  %3158 = vmatprep.subr.mxu0 0.0
  %3159 = vmatpush1.msra.mxu0 0.0
  %3160 = vmatprep.subr.mxu0 0.0
  %3161 = vmatpush1.msra.mxu0 0.0
  %3162 = vmatprep.subr.mxu0 0.0
  %3163 = vmatpush1.msra.mxu0 0.0
  %3164 = vmatprep.subr.mxu0 0.0
  %3165 = vmatpush1.msra.mxu0 0.0
  %3166 = vmatprep.subr.mxu0 0.0
  %3167 = vmatpush1.msra.mxu0 0.0
  %3168 = vmatprep.subr.mxu0 0.0
  %3169 = vmatpush1.msra.mxu0 0.0
  %3170 = vmatprep.subr.mxu0 0.0
  %3171 = vmatpush1.msra.mxu0 0.0
  %3172 = vmatprep.subr.mxu0 0.0
  %3173 = vmatpush1.msra.mxu0 0.0
  %3174 = vmatprep.subr.mxu0 0.0
  %3175 = vmatpush1.msra.mxu0 0.0
  %3176 = vmatprep.subr.mxu0 0.0
  %3177 = vmatpush1.msra.mxu0 %v3054
  %3178 = vmatprep.subr.mxu0 0.0
  %3179 = vmatpush1.msra.mxu0 %v3042
  %3180 = vmatprep.subr.mxu0 0.0
  %3181 = vmatpush2.msra.mxu0 0.0
  %3182 = vmatprep.subr.mxu0 0.0
  %3183 = vmatpush2.msra.mxu0 0.0
  %3184 = vmatprep.subr.mxu0 0.0
  %3185 = vmatpush2.msra.mxu0 0.0
  %3186 = vmatprep.subr.mxu0 0.0
  %3187 = vmatpush2.msra.mxu0 0.0
  %3188 = vmatprep.subr.mxu0 0.0
  %3189 = vmatpush2.msra.mxu0 0.0
  %3190 = vmatprep.subr.mxu0 0.0
  %3191 = vmatpush2.msra.mxu0 0.0
  %3192 = vmatprep.subr.mxu0 0.0
  %3193 = vmatpush2.msra.mxu0 0.0
  %3194 = vmatprep.subr.mxu0 0.0
  %3195 = vmatpush2.msra.mxu0 0.0
  %3196 = vmatprep.subr.mxu0 0.0
  %3197 = vmatpush2.msra.mxu0 0.0
  %3198 = vmatprep.subr.mxu0 0.0
  %3199 = vmatpush2.msra.mxu0 0.0
  %3200 = vmatprep.subr.mxu0 0.0
  %3201 = vmatpush2.msra.mxu0 0.0
  %3202 = vmatprep.subr.mxu0 0.0
  %3203 = vmatpush2.msra.mxu0 0.0
  %3204 = vmatprep.subr.mxu0 0.0
  %3205 = vmatpush2.msra.mxu0 0.0
  %3206 = vmatprep.subr.mxu0 0.0
  %3207 = vmatpush2.msra.mxu0 0.0
  %3208 = vmatprep.subr.mxu0 0.0
  %3209 = vmatpush2.msra.mxu0 0.0
  %3210 = vmatprep.subr.mxu0 0.0
  %3211 = vmatpush2.msra.mxu0 0.0
  %3212 = vmatprep.mubr.f32.mxu0 0.0
  %3213 = vmatmul.mubr.f32.gmra.mxu0 %v3143
  %v3214 = vpop.f32.mrf.mxu0
  %v3215 = vadd.f32 0.0, %v3214
  %v3216 = vpop.f32.mrf.mxu0
  %3217 = vmatprep.mubr.f32.mxu0 0.0
  %3218 = vmatmul.mubr.f32.gmra.mxu0 %v3146
  %v3219 = vpop.f32.mrf.mxu0
  %v3220 = vadd.f32 0.0, %v3219
  %v3221 = vpop.f32.mrf.mxu0
  %3222 = vdwg.mxu0
  %v3223 = vlaneseq
  %v3224 = vshrl.u32 %v3223, 7
  %v3225 = vsub.s32 1, %v3224
  %v3226 = vrot.slane %v3044, %v3225
  %v3227 = vmul.f32 %v3215, %v3226
  %v3228 = vmul.f32 %v3220, %v3226
  %v3229 = vadd.f32 %v3137, %v3227
  %v3230 = vadd.f32 %v3138, %v3228
  %s3231 = scalar_lea.vmem %s87, 32
  %v3232 = vld [vmem:[%s3231] sm:$0xff]
  %v3233 = vld [vmem:[%s3231 + $0x8] sm:$0x3f]
  %v3235 = vsel %vm828, %v3232, 0
  %v3238 = vsel %vm828, %v3233, 0
  %3240 = vmatprep.subr.mxu0 0.0
  %3241 = vmatpush1.msra.mxu0 0.0
  %3242 = vmatprep.subr.mxu0 0.0
  %3243 = vmatpush1.msra.mxu0 0.0
  %3244 = vmatprep.subr.mxu0 0.0
  %3245 = vmatpush1.msra.mxu0 0.0
  %3246 = vmatprep.subr.mxu0 0.0
  %3247 = vmatpush1.msra.mxu0 0.0
  %3248 = vmatprep.subr.mxu0 0.0
  %3249 = vmatpush1.msra.mxu0 0.0
  %3250 = vmatprep.subr.mxu0 0.0
  %3251 = vmatpush1.msra.mxu0 0.0
  %3252 = vmatprep.subr.mxu0 0.0
  %3253 = vmatpush1.msra.mxu0 0.0
  %3254 = vmatprep.subr.mxu0 0.0
  %3255 = vmatpush1.msra.mxu0 0.0
  %3256 = vmatprep.subr.mxu0 0.0
  %3257 = vmatpush1.msra.mxu0 0.0
  %3258 = vmatprep.subr.mxu0 0.0
  %3259 = vmatpush1.msra.mxu0 0.0
  %3260 = vmatprep.subr.mxu0 0.0
  %3261 = vmatpush1.msra.mxu0 0.0
  %3262 = vmatprep.subr.mxu0 0.0
  %3263 = vmatpush1.msra.mxu0 0.0
  %3264 = vmatprep.subr.mxu0 0.0
  %3265 = vmatpush1.msra.mxu0 0.0
  %3266 = vmatprep.subr.mxu0 0.0
  %3267 = vmatpush1.msra.mxu0 0.0
  %3268 = vmatprep.subr.mxu0 0.0
  %3269 = vmatpush1.msra.mxu0 %v3054
  %3270 = vmatprep.subr.mxu0 0.0
  %3271 = vmatpush1.msra.mxu0 %v3042
  %3272 = vmatprep.subr.mxu0 0.0
  %3273 = vmatpush2.msra.mxu0 0.0
  %3274 = vmatprep.subr.mxu0 0.0
  %3275 = vmatpush2.msra.mxu0 0.0
  %3276 = vmatprep.subr.mxu0 0.0
  %3277 = vmatpush2.msra.mxu0 0.0
  %3278 = vmatprep.subr.mxu0 0.0
  %3279 = vmatpush2.msra.mxu0 0.0
  %3280 = vmatprep.subr.mxu0 0.0
  %3281 = vmatpush2.msra.mxu0 0.0
  %3282 = vmatprep.subr.mxu0 0.0
  %3283 = vmatpush2.msra.mxu0 0.0
  %3284 = vmatprep.subr.mxu0 0.0
  %3285 = vmatpush2.msra.mxu0 0.0
  %3286 = vmatprep.subr.mxu0 0.0
  %3287 = vmatpush2.msra.mxu0 0.0
  %3288 = vmatprep.subr.mxu0 0.0
  %3289 = vmatpush2.msra.mxu0 0.0
  %3290 = vmatprep.subr.mxu0 0.0
  %3291 = vmatpush2.msra.mxu0 0.0
  %3292 = vmatprep.subr.mxu0 0.0
  %3293 = vmatpush2.msra.mxu0 0.0
  %3294 = vmatprep.subr.mxu0 0.0
  %3295 = vmatpush2.msra.mxu0 0.0
  %3296 = vmatprep.subr.mxu0 0.0
  %3297 = vmatpush2.msra.mxu0 0.0
  %3298 = vmatprep.subr.mxu0 0.0
  %3299 = vmatpush2.msra.mxu0 0.0
  %3300 = vmatprep.subr.mxu0 0.0
  %3301 = vmatpush2.msra.mxu0 0.0
  %3302 = vmatprep.subr.mxu0 0.0
  %3303 = vmatpush2.msra.mxu0 0.0
  %3304 = vmatprep.mubr.f32.mxu0 0.0
  %3305 = vmatmul.mubr.f32.gmra.mxu0 %v3235
  %v3306 = vpop.f32.mrf.mxu0
  %v3307 = vadd.f32 0.0, %v3306
  %v3308 = vpop.f32.mrf.mxu0
  %3309 = vmatprep.mubr.f32.mxu0 0.0
  %3310 = vmatmul.mubr.f32.gmra.mxu0 %v3238
  %v3311 = vpop.f32.mrf.mxu0
  %v3312 = vadd.f32 0.0, %v3311
  %v3313 = vpop.f32.mrf.mxu0
  %3314 = vdwg.mxu0
  %v3315 = vlaneseq
  %v3316 = vshrl.u32 %v3315, 7
  %v3317 = vsub.s32 2, %v3316
  %v3318 = vrot.slane %v3044, %v3317
  %v3319 = vmul.f32 %v3307, %v3318
  %v3320 = vmul.f32 %v3312, %v3318
  %v3321 = vadd.f32 %v3229, %v3319
  %v3322 = vadd.f32 %v3230, %v3320
  %s3323 = scalar_lea.vmem %s87, 48
  %v3324 = vld [vmem:[%s3323] sm:$0xff]
  %v3325 = vld [vmem:[%s3323 + $0x8] sm:$0x3f]
  %v3327 = vsel %vm828, %v3324, 0
  %v3330 = vsel %vm828, %v3325, 0
  %3332 = vmatprep.subr.mxu0 0.0
  %3333 = vmatpush1.msra.mxu0 0.0
  %3334 = vmatprep.subr.mxu0 0.0
  %3335 = vmatpush1.msra.mxu0 0.0
  %3336 = vmatprep.subr.mxu0 0.0
  %3337 = vmatpush1.msra.mxu0 0.0
  %3338 = vmatprep.subr.mxu0 0.0
  %3339 = vmatpush1.msra.mxu0 0.0
  %3340 = vmatprep.subr.mxu0 0.0
  %3341 = vmatpush1.msra.mxu0 0.0
  %3342 = vmatprep.subr.mxu0 0.0
  %3343 = vmatpush1.msra.mxu0 0.0
  %3344 = vmatprep.subr.mxu0 0.0
  %3345 = vmatpush1.msra.mxu0 0.0
  %3346 = vmatprep.subr.mxu0 0.0
  %3347 = vmatpush1.msra.mxu0 0.0
  %3348 = vmatprep.subr.mxu0 0.0
  %3349 = vmatpush1.msra.mxu0 0.0
  %3350 = vmatprep.subr.mxu0 0.0
  %3351 = vmatpush1.msra.mxu0 0.0
  %3352 = vmatprep.subr.mxu0 0.0
  %3353 = vmatpush1.msra.mxu0 0.0
  %3354 = vmatprep.subr.mxu0 0.0
  %3355 = vmatpush1.msra.mxu0 0.0
  %3356 = vmatprep.subr.mxu0 0.0
  %3357 = vmatpush1.msra.mxu0 0.0
  %3358 = vmatprep.subr.mxu0 0.0
  %3359 = vmatpush1.msra.mxu0 0.0
  %3360 = vmatprep.subr.mxu0 0.0
  %3361 = vmatpush1.msra.mxu0 %v3054
  %3362 = vmatprep.subr.mxu0 0.0
  %3363 = vmatpush1.msra.mxu0 %v3042
  %3364 = vmatprep.subr.mxu0 0.0
  %3365 = vmatpush2.msra.mxu0 0.0
  %3366 = vmatprep.subr.mxu0 0.0
  %3367 = vmatpush2.msra.mxu0 0.0
  %3368 = vmatprep.subr.mxu0 0.0
  %3369 = vmatpush2.msra.mxu0 0.0
  %3370 = vmatprep.subr.mxu0 0.0
  %3371 = vmatpush2.msra.mxu0 0.0
  %3372 = vmatprep.subr.mxu0 0.0
  %3373 = vmatpush2.msra.mxu0 0.0
  %3374 = vmatprep.subr.mxu0 0.0
  %3375 = vmatpush2.msra.mxu0 0.0
  %3376 = vmatprep.subr.mxu0 0.0
  %3377 = vmatpush2.msra.mxu0 0.0
  %3378 = vmatprep.subr.mxu0 0.0
  %3379 = vmatpush2.msra.mxu0 0.0
  %3380 = vmatprep.subr.mxu0 0.0
  %3381 = vmatpush2.msra.mxu0 0.0
  %3382 = vmatprep.subr.mxu0 0.0
  %3383 = vmatpush2.msra.mxu0 0.0
  %3384 = vmatprep.subr.mxu0 0.0
  %3385 = vmatpush2.msra.mxu0 0.0
  %3386 = vmatprep.subr.mxu0 0.0
  %3387 = vmatpush2.msra.mxu0 0.0
  %3388 = vmatprep.subr.mxu0 0.0
  %3389 = vmatpush2.msra.mxu0 0.0
  %3390 = vmatprep.subr.mxu0 0.0
  %3391 = vmatpush2.msra.mxu0 0.0
  %3392 = vmatprep.subr.mxu0 0.0
  %3393 = vmatpush2.msra.mxu0 0.0
  %3394 = vmatprep.subr.mxu0 0.0
  %3395 = vmatpush2.msra.mxu0 0.0
  %3396 = vmatprep.mubr.f32.mxu0 0.0
  %3397 = vmatmul.mubr.f32.gmra.mxu0 %v3327
  %v3398 = vpop.f32.mrf.mxu0
  %v3399 = vadd.f32 0.0, %v3398
  %v3400 = vpop.f32.mrf.mxu0
  %3401 = vmatprep.mubr.f32.mxu0 0.0
  %3402 = vmatmul.mubr.f32.gmra.mxu0 %v3330
  %v3403 = vpop.f32.mrf.mxu0
  %v3404 = vadd.f32 0.0, %v3403
  %v3405 = vpop.f32.mrf.mxu0
  %3406 = vdwg.mxu0
  %v3407 = vlaneseq
  %v3408 = vshrl.u32 %v3407, 7
  %v3409 = vsub.s32 3, %v3408
  %v3410 = vrot.slane %v3044, %v3409
  %v3411 = vmul.f32 %v3399, %v3410
  %v3412 = vmul.f32 %v3404, %v3410
  %v3413 = vadd.f32 %v3321, %v3411
  %v3414 = vadd.f32 %v3322, %v3412
  %s3415 = scalar_lea.vmem %s87, 64
  %v3416 = vld [vmem:[%s3415] sm:$0xff]
  %v3417 = vld [vmem:[%s3415 + $0x8] sm:$0x3f]
  %v3419 = vsel %vm828, %v3416, 0
  %v3422 = vsel %vm828, %v3417, 0
  %3424 = vmatprep.subr.mxu0 0.0
  %3425 = vmatpush1.msra.mxu0 0.0
  %3426 = vmatprep.subr.mxu0 0.0
  %3427 = vmatpush1.msra.mxu0 0.0
  %3428 = vmatprep.subr.mxu0 0.0
  %3429 = vmatpush1.msra.mxu0 0.0
  %3430 = vmatprep.subr.mxu0 0.0
  %3431 = vmatpush1.msra.mxu0 0.0
  %3432 = vmatprep.subr.mxu0 0.0
  %3433 = vmatpush1.msra.mxu0 0.0
  %3434 = vmatprep.subr.mxu0 0.0
  %3435 = vmatpush1.msra.mxu0 0.0
  %3436 = vmatprep.subr.mxu0 0.0
  %3437 = vmatpush1.msra.mxu0 0.0
  %3438 = vmatprep.subr.mxu0 0.0
  %3439 = vmatpush1.msra.mxu0 0.0
  %3440 = vmatprep.subr.mxu0 0.0
  %3441 = vmatpush1.msra.mxu0 0.0
  %3442 = vmatprep.subr.mxu0 0.0
  %3443 = vmatpush1.msra.mxu0 0.0
  %3444 = vmatprep.subr.mxu0 0.0
  %3445 = vmatpush1.msra.mxu0 0.0
  %3446 = vmatprep.subr.mxu0 0.0
  %3447 = vmatpush1.msra.mxu0 0.0
  %3448 = vmatprep.subr.mxu0 0.0
  %3449 = vmatpush1.msra.mxu0 0.0
  %3450 = vmatprep.subr.mxu0 0.0
  %3451 = vmatpush1.msra.mxu0 0.0
  %3452 = vmatprep.subr.mxu0 0.0
  %3453 = vmatpush1.msra.mxu0 %v3054
  %3454 = vmatprep.subr.mxu0 0.0
  %3455 = vmatpush1.msra.mxu0 %v3042
  %3456 = vmatprep.subr.mxu0 0.0
  %3457 = vmatpush2.msra.mxu0 0.0
  %3458 = vmatprep.subr.mxu0 0.0
  %3459 = vmatpush2.msra.mxu0 0.0
  %3460 = vmatprep.subr.mxu0 0.0
  %3461 = vmatpush2.msra.mxu0 0.0
  %3462 = vmatprep.subr.mxu0 0.0
  %3463 = vmatpush2.msra.mxu0 0.0
  %3464 = vmatprep.subr.mxu0 0.0
  %3465 = vmatpush2.msra.mxu0 0.0
  %3466 = vmatprep.subr.mxu0 0.0
  %3467 = vmatpush2.msra.mxu0 0.0
  %3468 = vmatprep.subr.mxu0 0.0
  %3469 = vmatpush2.msra.mxu0 0.0
  %3470 = vmatprep.subr.mxu0 0.0
  %3471 = vmatpush2.msra.mxu0 0.0
  %3472 = vmatprep.subr.mxu0 0.0
  %3473 = vmatpush2.msra.mxu0 0.0
  %3474 = vmatprep.subr.mxu0 0.0
  %3475 = vmatpush2.msra.mxu0 0.0
  %3476 = vmatprep.subr.mxu0 0.0
  %3477 = vmatpush2.msra.mxu0 0.0
  %3478 = vmatprep.subr.mxu0 0.0
  %3479 = vmatpush2.msra.mxu0 0.0
  %3480 = vmatprep.subr.mxu0 0.0
  %3481 = vmatpush2.msra.mxu0 0.0
  %3482 = vmatprep.subr.mxu0 0.0
  %3483 = vmatpush2.msra.mxu0 0.0
  %3484 = vmatprep.subr.mxu0 0.0
  %3485 = vmatpush2.msra.mxu0 0.0
  %3486 = vmatprep.subr.mxu0 0.0
  %3487 = vmatpush2.msra.mxu0 0.0
  %3488 = vmatprep.mubr.f32.mxu0 0.0
  %3489 = vmatmul.mubr.f32.gmra.mxu0 %v3419
  %v3490 = vpop.f32.mrf.mxu0
  %v3491 = vadd.f32 0.0, %v3490
  %v3492 = vpop.f32.mrf.mxu0
  %3493 = vmatprep.mubr.f32.mxu0 0.0
  %3494 = vmatmul.mubr.f32.gmra.mxu0 %v3422
  %v3495 = vpop.f32.mrf.mxu0
  %v3496 = vadd.f32 0.0, %v3495
  %v3497 = vpop.f32.mrf.mxu0
  %3498 = vdwg.mxu0
  %v3499 = vlaneseq
  %v3500 = vshrl.u32 %v3499, 7
  %v3501 = vsub.s32 4, %v3500
  %v3502 = vrot.slane %v3044, %v3501
  %v3503 = vmul.f32 %v3491, %v3502
  %v3504 = vmul.f32 %v3496, %v3502
  %v3505 = vadd.f32 %v3413, %v3503
  %v3506 = vadd.f32 %v3414, %v3504
  %s3507 = scalar_lea.vmem %s87, 80
  %v3508 = vld [vmem:[%s3507] sm:$0xff]
  %v3509 = vld [vmem:[%s3507 + $0x8] sm:$0x3f]
  %v3511 = vsel %vm828, %v3508, 0
  %v3514 = vsel %vm828, %v3509, 0
  %3516 = vmatprep.subr.mxu0 0.0
  %3517 = vmatpush1.msra.mxu0 0.0
  %3518 = vmatprep.subr.mxu0 0.0
  %3519 = vmatpush1.msra.mxu0 0.0
  %3520 = vmatprep.subr.mxu0 0.0
  %3521 = vmatpush1.msra.mxu0 0.0
  %3522 = vmatprep.subr.mxu0 0.0
  %3523 = vmatpush1.msra.mxu0 0.0
  %3524 = vmatprep.subr.mxu0 0.0
  %3525 = vmatpush1.msra.mxu0 0.0
  %3526 = vmatprep.subr.mxu0 0.0
  %3527 = vmatpush1.msra.mxu0 0.0
  %3528 = vmatprep.subr.mxu0 0.0
  %3529 = vmatpush1.msra.mxu0 0.0
  %3530 = vmatprep.subr.mxu0 0.0
  %3531 = vmatpush1.msra.mxu0 0.0
  %3532 = vmatprep.subr.mxu0 0.0
  %3533 = vmatpush1.msra.mxu0 0.0
  %3534 = vmatprep.subr.mxu0 0.0
  %3535 = vmatpush1.msra.mxu0 0.0
  %3536 = vmatprep.subr.mxu0 0.0
  %3537 = vmatpush1.msra.mxu0 0.0
  %3538 = vmatprep.subr.mxu0 0.0
  %3539 = vmatpush1.msra.mxu0 0.0
  %3540 = vmatprep.subr.mxu0 0.0
  %3541 = vmatpush1.msra.mxu0 0.0
  %3542 = vmatprep.subr.mxu0 0.0
  %3543 = vmatpush1.msra.mxu0 0.0
  %3544 = vmatprep.subr.mxu0 0.0
  %3545 = vmatpush1.msra.mxu0 %v3054
  %3546 = vmatprep.subr.mxu0 0.0
  %3547 = vmatpush1.msra.mxu0 %v3042
  %3548 = vmatprep.subr.mxu0 0.0
  %3549 = vmatpush2.msra.mxu0 0.0
  %3550 = vmatprep.subr.mxu0 0.0
  %3551 = vmatpush2.msra.mxu0 0.0
  %3552 = vmatprep.subr.mxu0 0.0
  %3553 = vmatpush2.msra.mxu0 0.0
  %3554 = vmatprep.subr.mxu0 0.0
  %3555 = vmatpush2.msra.mxu0 0.0
  %3556 = vmatprep.subr.mxu0 0.0
  %3557 = vmatpush2.msra.mxu0 0.0
  %3558 = vmatprep.subr.mxu0 0.0
  %3559 = vmatpush2.msra.mxu0 0.0
  %3560 = vmatprep.subr.mxu0 0.0
  %3561 = vmatpush2.msra.mxu0 0.0
  %3562 = vmatprep.subr.mxu0 0.0
  %3563 = vmatpush2.msra.mxu0 0.0
  %3564 = vmatprep.subr.mxu0 0.0
  %3565 = vmatpush2.msra.mxu0 0.0
  %3566 = vmatprep.subr.mxu0 0.0
  %3567 = vmatpush2.msra.mxu0 0.0
  %3568 = vmatprep.subr.mxu0 0.0
  %3569 = vmatpush2.msra.mxu0 0.0
  %3570 = vmatprep.subr.mxu0 0.0
  %3571 = vmatpush2.msra.mxu0 0.0
  %3572 = vmatprep.subr.mxu0 0.0
  %3573 = vmatpush2.msra.mxu0 0.0
  %3574 = vmatprep.subr.mxu0 0.0
  %3575 = vmatpush2.msra.mxu0 0.0
  %3576 = vmatprep.subr.mxu0 0.0
  %3577 = vmatpush2.msra.mxu0 0.0
  %3578 = vmatprep.subr.mxu0 0.0
  %3579 = vmatpush2.msra.mxu0 0.0
  %3580 = vmatprep.mubr.f32.mxu0 0.0
  %3581 = vmatmul.mubr.f32.gmra.mxu0 %v3511
  %v3582 = vpop.f32.mrf.mxu0
  %v3583 = vadd.f32 0.0, %v3582
  %v3584 = vpop.f32.mrf.mxu0
  %3585 = vmatprep.mubr.f32.mxu0 0.0
  %3586 = vmatmul.mubr.f32.gmra.mxu0 %v3514
  %v3587 = vpop.f32.mrf.mxu0
  %v3588 = vadd.f32 0.0, %v3587
  %v3589 = vpop.f32.mrf.mxu0
  %3590 = vdwg.mxu0
  %v3591 = vlaneseq
  %v3592 = vshrl.u32 %v3591, 7
  %v3593 = vsub.s32 5, %v3592
  %v3594 = vrot.slane %v3044, %v3593
  %v3595 = vmul.f32 %v3583, %v3594
  %v3596 = vmul.f32 %v3588, %v3594
  %v3597 = vadd.f32 %v3505, %v3595
  %v3598 = vadd.f32 %v3506, %v3596
  %s3599 = scalar_lea.vmem %s87, 96
  %v3600 = vld [vmem:[%s3599] sm:$0xff]
  %v3601 = vld [vmem:[%s3599 + $0x8] sm:$0x3f]
  %v3603 = vsel %vm828, %v3600, 0
  %v3606 = vsel %vm828, %v3601, 0
  %3608 = vmatprep.subr.mxu0 0.0
  %3609 = vmatpush1.msra.mxu0 0.0
  %3610 = vmatprep.subr.mxu0 0.0
  %3611 = vmatpush1.msra.mxu0 0.0
  %3612 = vmatprep.subr.mxu0 0.0
  %3613 = vmatpush1.msra.mxu0 0.0
  %3614 = vmatprep.subr.mxu0 0.0
  %3615 = vmatpush1.msra.mxu0 0.0
  %3616 = vmatprep.subr.mxu0 0.0
  %3617 = vmatpush1.msra.mxu0 0.0
  %3618 = vmatprep.subr.mxu0 0.0
  %3619 = vmatpush1.msra.mxu0 0.0
  %3620 = vmatprep.subr.mxu0 0.0
  %3621 = vmatpush1.msra.mxu0 0.0
  %3622 = vmatprep.subr.mxu0 0.0
  %3623 = vmatpush1.msra.mxu0 0.0
  %3624 = vmatprep.subr.mxu0 0.0
  %3625 = vmatpush1.msra.mxu0 0.0
  %3626 = vmatprep.subr.mxu0 0.0
  %3627 = vmatpush1.msra.mxu0 0.0
  %3628 = vmatprep.subr.mxu0 0.0
  %3629 = vmatpush1.msra.mxu0 0.0
  %3630 = vmatprep.subr.mxu0 0.0
  %3631 = vmatpush1.msra.mxu0 0.0
  %3632 = vmatprep.subr.mxu0 0.0
  %3633 = vmatpush1.msra.mxu0 0.0
  %3634 = vmatprep.subr.mxu0 0.0
  %3635 = vmatpush1.msra.mxu0 0.0
  %3636 = vmatprep.subr.mxu0 0.0
  %3637 = vmatpush1.msra.mxu0 %v3054
  %3638 = vmatprep.subr.mxu0 0.0
  %3639 = vmatpush1.msra.mxu0 %v3042
  %3640 = vmatprep.subr.mxu0 0.0
  %3641 = vmatpush2.msra.mxu0 0.0
  %3642 = vmatprep.subr.mxu0 0.0
  %3643 = vmatpush2.msra.mxu0 0.0
  %3644 = vmatprep.subr.mxu0 0.0
  %3645 = vmatpush2.msra.mxu0 0.0
  %3646 = vmatprep.subr.mxu0 0.0
  %3647 = vmatpush2.msra.mxu0 0.0
  %3648 = vmatprep.subr.mxu0 0.0
  %3649 = vmatpush2.msra.mxu0 0.0
  %3650 = vmatprep.subr.mxu0 0.0
  %3651 = vmatpush2.msra.mxu0 0.0
  %3652 = vmatprep.subr.mxu0 0.0
  %3653 = vmatpush2.msra.mxu0 0.0
  %3654 = vmatprep.subr.mxu0 0.0
  %3655 = vmatpush2.msra.mxu0 0.0
  %3656 = vmatprep.subr.mxu0 0.0
  %3657 = vmatpush2.msra.mxu0 0.0
  %3658 = vmatprep.subr.mxu0 0.0
  %3659 = vmatpush2.msra.mxu0 0.0
  %3660 = vmatprep.subr.mxu0 0.0
  %3661 = vmatpush2.msra.mxu0 0.0
  %3662 = vmatprep.subr.mxu0 0.0
  %3663 = vmatpush2.msra.mxu0 0.0
  %3664 = vmatprep.subr.mxu0 0.0
  %3665 = vmatpush2.msra.mxu0 0.0
  %3666 = vmatprep.subr.mxu0 0.0
  %3667 = vmatpush2.msra.mxu0 0.0
  %3668 = vmatprep.subr.mxu0 0.0
  %3669 = vmatpush2.msra.mxu0 0.0
  %3670 = vmatprep.subr.mxu0 0.0
  %3671 = vmatpush2.msra.mxu0 0.0
  %3672 = vmatprep.mubr.f32.mxu0 0.0
  %3673 = vmatmul.mubr.f32.gmra.mxu0 %v3603
  %v3674 = vpop.f32.mrf.mxu0
  %v3675 = vadd.f32 0.0, %v3674
  %v3676 = vpop.f32.mrf.mxu0
  %3677 = vmatprep.mubr.f32.mxu0 0.0
  %3678 = vmatmul.mubr.f32.gmra.mxu0 %v3606
  %v3679 = vpop.f32.mrf.mxu0
  %v3680 = vadd.f32 0.0, %v3679
  %v3681 = vpop.f32.mrf.mxu0
  %3682 = vdwg.mxu0
  %v3683 = vlaneseq
  %v3684 = vshrl.u32 %v3683, 7
  %v3685 = vsub.s32 6, %v3684
  %v3686 = vrot.slane %v3044, %v3685
  %v3687 = vmul.f32 %v3675, %v3686
  %v3688 = vmul.f32 %v3680, %v3686
  %v3689 = vadd.f32 %v3597, %v3687
  %v3690 = vadd.f32 %v3598, %v3688
  %v3691 = vsel %vm375, %v3689, 0.0
  %v3692 = vsel %vm379, %v3690, 0.0
  %v3693 = vadd.f32 %v3691, %v3692
  %v3694 = vrot.slane %v3693, 4
  %v3695 = vadd.f32 %v3693, %v3694
  %v3696 = vrot.slane %v3695, 2
  %v3697 = vadd.f32 %v3695, %v3696
  %v3698 = vrot.slane %v3697, 1
  %v3699 = vadd.f32 %v3697, %v3698
  %v3700 = vrcp.pop 14.0
  %v3701 = vmul.f32 %v3699, %v3700
  %v3702 = vsub.f32 %v3689, %v3701
  %v3703 = vsub.f32 %v3690, %v3701
  %v3704 = vmul.f32 %v3702, %v3702
  %v3705 = vmul.f32 %v3703, %v3703
  %v3706 = vsel %vm375, %v3704, 0.0
  %v3707 = vsel %vm379, %v3705, 0.0
  %v3708 = vadd.f32 %v3706, %v3707
  %v3709 = vrot.slane %v3708, 4
  %v3710 = vadd.f32 %v3708, %v3709
  %v3711 = vrot.slane %v3710, 2
  %v3712 = vadd.f32 %v3710, %v3711
  %v3713 = vrot.slane %v3712, 1
  %v3714 = vadd.f32 %v3712, %v3713
  %v3715 = vmul.f32 %v3714, %v3700
  %v3716 = vadd.f32 %v3715, 1e-05
  %v3717 = vrsqrt.pop %v3716
  %v3718 = vmul.f32 %v3702, %v3717
  %v3719 = vmul.f32 %v3703, %v3717
  %v3720 = vld [vmem:[%s49] sm:$0x1]
  %v3722 = vlaneseq
  %v3723 = vshrl.u32 %v3722, 7
  %v3724 = vsub.s32 0, %v3723
  %v3725 = vrot.slane %v3720, %v3724
  %v3727 = vmul.f32 %v3718, %v3725
  %v3728 = vmul.f32 %v3719, %v3725
  %v3729 = vld [vmem:[%s51] sm:$0x1]
  %v3731 = vlaneseq
  %v3732 = vshrl.u32 %v3731, 7
  %v3733 = vsub.s32 0, %v3732
  %v3734 = vrot.slane %v3729, %v3733
  %v3736 = vadd.f32 %v3727, %v3734
  %v3737 = vadd.f32 %v3728, %v3734
  %v3738 = vsub.f32 0.0, %v3736
  %v3739 = vsub.f32 0.0, %v3737
  %v3740 = vmul.f32 %v3738, 1.442695
  %v3741 = vpow.pop %v3740
  %v3742 = vmul.f32 %v3739, 1.442695
  %v3743 = vpow.pop %v3742
  %v3744 = vadd.f32 %v3741, 1.0
  %v3745 = vadd.f32 %v3743, 1.0
  %v3746 = vrcp.pop %v3744
  %v3747 = vmul.f32 1.0, %v3746
  %v3748 = vrcp.pop %v3745
  %v3749 = vmul.f32 1.0, %v3748
  %v3750 = vmul.f32 %v3736, %v3747
  %v3751 = vmul.f32 %v3737, %v3749
  %v3752 = vld [vmem:[%s53] sm:$0xff]
  %v3753 = vld [vmem:[%s53 + $0x8] sm:$0xff]
  %v3754 = vld [vmem:[%s53 + $0x10] sm:$0xff]
  %v3755 = vld [vmem:[%s53 + $0x18] sm:$0xff]
  %v3756 = vld [vmem:[%s55] sm:$0x1]
  %v3758 = vlaneseq
  %v3759 = vshrl.u32 %v3758, 7
  %v3760 = vsub.s32 0, %v3759
  %v3761 = vrot.slane %v3756, %v3760
  %v3764 = vsel %vm375, %v3750, 0
  %v3767 = vsel %vm375, %v3751, 0
  %3769 = vmatprep.subr.mxu0 0.0
  %3770 = vmatpush1.msra.mxu0 0.0
  %3771 = vmatprep.subr.mxu0 0.0
  %3772 = vmatpush1.msra.mxu0 0.0
  %3773 = vmatprep.subr.mxu0 0.0
  %3774 = vmatpush1.msra.mxu0 0.0
  %3775 = vmatprep.subr.mxu0 0.0
  %3776 = vmatpush1.msra.mxu0 0.0
  %3777 = vmatprep.subr.mxu0 0.0
  %3778 = vmatpush1.msra.mxu0 0.0
  %3779 = vmatprep.subr.mxu0 0.0
  %3780 = vmatpush1.msra.mxu0 0.0
  %3781 = vmatprep.subr.mxu0 0.0
  %3782 = vmatpush1.msra.mxu0 0.0
  %3783 = vmatprep.subr.mxu0 0.0
  %3784 = vmatpush1.msra.mxu0 0.0
  %3785 = vmatprep.subr.mxu0 0.0
  %3786 = vmatpush1.msra.mxu0 0.0
  %3787 = vmatprep.subr.mxu0 0.0
  %3788 = vmatpush1.msra.mxu0 0.0
  %3789 = vmatprep.subr.mxu0 0.0
  %3790 = vmatpush1.msra.mxu0 0.0
  %3791 = vmatprep.subr.mxu0 0.0
  %3792 = vmatpush1.msra.mxu0 0.0
  %3793 = vmatprep.subr.mxu0 0.0
  %3794 = vmatpush1.msra.mxu0 %v3755
  %3795 = vmatprep.subr.mxu0 0.0
  %3796 = vmatpush1.msra.mxu0 %v3754
  %3797 = vmatprep.subr.mxu0 0.0
  %3798 = vmatpush1.msra.mxu0 %v3753
  %3799 = vmatprep.subr.mxu0 0.0
  %3800 = vmatpush1.msra.mxu0 %v3752
  %3801 = vmatprep.subr.mxu0 0.0
  %3802 = vmatpush2.msra.mxu0 0.0
  %3803 = vmatprep.subr.mxu0 0.0
  %3804 = vmatpush2.msra.mxu0 0.0
  %3805 = vmatprep.subr.mxu0 0.0
  %3806 = vmatpush2.msra.mxu0 0.0
  %3807 = vmatprep.subr.mxu0 0.0
  %3808 = vmatpush2.msra.mxu0 0.0
  %3809 = vmatprep.subr.mxu0 0.0
  %3810 = vmatpush2.msra.mxu0 0.0
  %3811 = vmatprep.subr.mxu0 0.0
  %3812 = vmatpush2.msra.mxu0 0.0
  %3813 = vmatprep.subr.mxu0 0.0
  %3814 = vmatpush2.msra.mxu0 0.0
  %3815 = vmatprep.subr.mxu0 0.0
  %3816 = vmatpush2.msra.mxu0 0.0
  %3817 = vmatprep.subr.mxu0 0.0
  %3818 = vmatpush2.msra.mxu0 0.0
  %3819 = vmatprep.subr.mxu0 0.0
  %3820 = vmatpush2.msra.mxu0 0.0
  %3821 = vmatprep.subr.mxu0 0.0
  %3822 = vmatpush2.msra.mxu0 0.0
  %3823 = vmatprep.subr.mxu0 0.0
  %3824 = vmatpush2.msra.mxu0 0.0
  %3825 = vmatprep.subr.mxu0 0.0
  %3826 = vmatpush2.msra.mxu0 0.0
  %3827 = vmatprep.subr.mxu0 0.0
  %3828 = vmatpush2.msra.mxu0 0.0
  %3829 = vmatprep.subr.mxu0 0.0
  %3830 = vmatpush2.msra.mxu0 0.0
  %3831 = vmatprep.subr.mxu0 0.0
  %3832 = vmatpush2.msra.mxu0 0.0
  %3833 = vmatprep.mubr.f32.mxu0 0.0
  %3834 = vmatmul.mubr.f32.gmra.mxu0 %v3764
  %v3835 = vpop.f32.mrf.mxu0
  %v3836 = vadd.f32 %v3761, %v3835
  %v3837 = vpop.f32.mrf.mxu0
  %3838 = vmatprep.mubr.f32.mxu0 0.0
  %3839 = vmatmul.mubr.f32.gmra.mxu0 %v3767
  %v3840 = vpop.f32.mrf.mxu0
  %v3841 = vadd.f32 %v3761, %v3840
  %v3842 = vpop.f32.mrf.mxu0
  %3843 = vdwg.mxu0
  %v3844 = vadd.f32 %v2884, %v3836
  %v3845 = vadd.f32 %v2885, %v3841
  %v3846 = vld [vmem:[%s57] sm:$0x1]
  %v3847 = vld [vmem:[%s59] sm:$0x1]
  %v3848 = vld [vmem:[%s61] sm:$0xff]
  %v3849 = vld [vmem:[%s61 + $0x8] sm:$0xff]
  %v3850 = vld [vmem:[%s61 + $0x10] sm:$0xff]
  %v3851 = vld [vmem:[%s61 + $0x18] sm:$0xff]
  %v3852 = vld [vmem:[%s63] sm:$0x1]
  %v3853 = vld [vmem:[%s65] sm:$0xff]
  %v3854 = vld [vmem:[%s65 + $0x8] sm:$0xff]
  %v3855 = vld [vmem:[%s65 + $0x10] sm:$0xff]
  %v3856 = vld [vmem:[%s65 + $0x18] sm:$0xff]
  %v3857 = vld [vmem:[%s65 + $0x20] sm:$0xff]
  %v3858 = vld [vmem:[%s65 + $0x28] sm:$0xff]
  %v3859 = vld [vmem:[%s65 + $0x30] sm:$0xff]
  %v3860 = vld [vmem:[%s65 + $0x38] sm:$0xff]
  %v3861 = vld [vmem:[%s65 + $0x40] sm:$0xff]
  %v3862 = vld [vmem:[%s65 + $0x48] sm:$0xff]
  %v3863 = vld [vmem:[%s65 + $0x50] sm:$0xff]
  %v3864 = vld [vmem:[%s65 + $0x58] sm:$0xff]
  %v3865 = vld [vmem:[%s65 + $0x60] sm:$0xff]
  %v3866 = vld [vmem:[%s65 + $0x68] sm:$0xff]
  %v3867 = vld [vmem:[%s65 + $0x70] sm:$0xff]
  %v3868 = vld [vmem:[%s65 + $0x78] sm:$0xff]
  %v3869 = vld [vmem:[%s67] sm:$0x1]
  %v3870 = vsel %vm375, %v3844, 0.0
  %3871 = vadd.xlane.f32.xlu0 %v3870
  %v3872 = vpop.xlane.xlu0 %3871
  %v3873 = vsel %vm379, %v3845, 0.0
  %3874 = vadd.xlane.f32.xlu0 %v3873
  %v3875 = vpop.xlane.xlu0 %3874
  %v3876 = vmul.f32 %v3872, %v383
  %v3877 = vmul.f32 %v3875, %v383
  %v3878 = vsub.f32 %v3844, %v3876
  %v3879 = vsub.f32 %v3845, %v3877
  %v3880 = vmul.f32 %v3878, %v3878
  %v3881 = vmul.f32 %v3879, %v3879
  %v3882 = vsel %vm375, %v3880, 0.0
  %3883 = vadd.xlane.f32.xlu0 %v3882
  %v3884 = vpop.xlane.xlu0 %3883
  %v3885 = vsel %vm379, %v3881, 0.0
  %3886 = vadd.xlane.f32.xlu0 %v3885
  %v3887 = vpop.xlane.xlu0 %3886
  %v3888 = vmul.f32 %v3884, %v383
  %v3889 = vmul.f32 %v3887, %v383
  %v3890 = vadd.f32 %v3888, 1e-05
  %v3891 = vadd.f32 %v3889, 1e-05
  %v3892 = vrsqrt.pop %v3890
  %v3893 = vrsqrt.pop %v3891
  %v3894 = vmul.f32 %v3878, %v3892
  %v3895 = vmul.f32 %v3879, %v3893
  %v3897 = vlaneseq
  %v3898 = vshrl.u32 %v3897, 7
  %v3899 = vsub.s32 0, %v3898
  %v3900 = vrot.slane %v3846, %v3899
  %v3902 = vmul.f32 %v3894, %v3900
  %v3903 = vmul.f32 %v3895, %v3900
  %v3905 = vlaneseq
  %v3906 = vshrl.u32 %v3905, 7
  %v3907 = vsub.s32 0, %v3906
  %v3908 = vrot.slane %v3847, %v3907
  %v3910 = vadd.f32 %v3902, %v3908
  %v3911 = vadd.f32 %v3903, %v3908
  %v3913 = vlaneseq
  %v3914 = vshrl.u32 %v3913, 7
  %v3915 = vsub.s32 0, %v3914
  %v3916 = vrot.slane %v3852, %v3915
  %v3919 = vsel %vm375, %v3910, 0
  %v3922 = vsel %vm375, %v3911, 0
  %3924 = vmatprep.subr.mxu0 0.0
  %3925 = vmatpush1.msra.mxu0 0.0
  %3926 = vmatprep.subr.mxu0 0.0
  %3927 = vmatpush1.msra.mxu0 0.0
  %3928 = vmatprep.subr.mxu0 0.0
  %3929 = vmatpush1.msra.mxu0 0.0
  %3930 = vmatprep.subr.mxu0 0.0
  %3931 = vmatpush1.msra.mxu0 0.0
  %3932 = vmatprep.subr.mxu0 0.0
  %3933 = vmatpush1.msra.mxu0 0.0
  %3934 = vmatprep.subr.mxu0 0.0
  %3935 = vmatpush1.msra.mxu0 0.0
  %3936 = vmatprep.subr.mxu0 0.0
  %3937 = vmatpush1.msra.mxu0 0.0
  %3938 = vmatprep.subr.mxu0 0.0
  %3939 = vmatpush1.msra.mxu0 0.0
  %3940 = vmatprep.subr.mxu0 0.0
  %3941 = vmatpush1.msra.mxu0 0.0
  %3942 = vmatprep.subr.mxu0 0.0
  %3943 = vmatpush1.msra.mxu0 0.0
  %3944 = vmatprep.subr.mxu0 0.0
  %3945 = vmatpush1.msra.mxu0 0.0
  %3946 = vmatprep.subr.mxu0 0.0
  %3947 = vmatpush1.msra.mxu0 0.0
  %3948 = vmatprep.subr.mxu0 0.0
  %3949 = vmatpush1.msra.mxu0 %v3851
  %3950 = vmatprep.subr.mxu0 0.0
  %3951 = vmatpush1.msra.mxu0 %v3850
  %3952 = vmatprep.subr.mxu0 0.0
  %3953 = vmatpush1.msra.mxu0 %v3849
  %3954 = vmatprep.subr.mxu0 0.0
  %3955 = vmatpush1.msra.mxu0 %v3848
  %3956 = vmatprep.subr.mxu0 0.0
  %3957 = vmatpush2.msra.mxu0 0.0
  %3958 = vmatprep.subr.mxu0 0.0
  %3959 = vmatpush2.msra.mxu0 0.0
  %3960 = vmatprep.subr.mxu0 0.0
  %3961 = vmatpush2.msra.mxu0 0.0
  %3962 = vmatprep.subr.mxu0 0.0
  %3963 = vmatpush2.msra.mxu0 0.0
  %3964 = vmatprep.subr.mxu0 0.0
  %3965 = vmatpush2.msra.mxu0 0.0
  %3966 = vmatprep.subr.mxu0 0.0
  %3967 = vmatpush2.msra.mxu0 0.0
  %3968 = vmatprep.subr.mxu0 0.0
  %3969 = vmatpush2.msra.mxu0 0.0
  %3970 = vmatprep.subr.mxu0 0.0
  %3971 = vmatpush2.msra.mxu0 0.0
  %3972 = vmatprep.subr.mxu0 0.0
  %3973 = vmatpush2.msra.mxu0 0.0
  %3974 = vmatprep.subr.mxu0 0.0
  %3975 = vmatpush2.msra.mxu0 0.0
  %3976 = vmatprep.subr.mxu0 0.0
  %3977 = vmatpush2.msra.mxu0 0.0
  %3978 = vmatprep.subr.mxu0 0.0
  %3979 = vmatpush2.msra.mxu0 0.0
  %3980 = vmatprep.subr.mxu0 0.0
  %3981 = vmatpush2.msra.mxu0 0.0
  %3982 = vmatprep.subr.mxu0 0.0
  %3983 = vmatpush2.msra.mxu0 0.0
  %3984 = vmatprep.subr.mxu0 0.0
  %3985 = vmatpush2.msra.mxu0 0.0
  %3986 = vmatprep.subr.mxu0 0.0
  %3987 = vmatpush2.msra.mxu0 0.0
  %3988 = vmatprep.mubr.f32.mxu0 0.0
  %3989 = vmatmul.mubr.f32.gmra.mxu0 %v3919
  %v3990 = vpop.f32.mrf.mxu0
  %v3991 = vadd.f32 %v3916, %v3990
  %v3992 = vpop.f32.mrf.mxu0
  %3993 = vmatprep.mubr.f32.mxu0 0.0
  %3994 = vmatmul.mubr.f32.gmra.mxu0 %v3922
  %v3995 = vpop.f32.mrf.mxu0
  %v3996 = vadd.f32 %v3916, %v3995
  %v3997 = vpop.f32.mrf.mxu0
  %3998 = vdwg.mxu0
  %v3999 = vsub.f32 0.0, %v3991
  %v4000 = vsub.f32 0.0, %v3996
  %v4001 = vmul.f32 %v3999, 1.442695
  %v4002 = vpow.pop %v4001
  %v4003 = vmul.f32 %v4000, 1.442695
  %v4004 = vpow.pop %v4003
  %v4005 = vadd.f32 %v4002, 1.0
  %v4006 = vadd.f32 %v4004, 1.0
  %v4007 = vrcp.pop %v4005
  %v4008 = vmul.f32 1.0, %v4007
  %v4009 = vrcp.pop %v4006
  %v4010 = vmul.f32 1.0, %v4009
  %v4011 = vmul.f32 %v3991, %v4008
  %v4012 = vmul.f32 %v3996, %v4010
  %v4014 = vlaneseq
  %v4015 = vshrl.u32 %v4014, 7
  %v4016 = vsub.s32 0, %v4015
  %v4017 = vrot.slane %v3869, %v4016
  %4019 = vmatprep.subr.mxu0 0.0
  %4020 = vmatpush1.msra.mxu0 %v3868
  %4021 = vmatprep.subr.mxu0 0.0
  %4022 = vmatpush1.msra.mxu0 %v3867
  %4023 = vmatprep.subr.mxu0 0.0
  %4024 = vmatpush1.msra.mxu0 %v3866
  %4025 = vmatprep.subr.mxu0 0.0
  %4026 = vmatpush1.msra.mxu0 %v3865
  %4027 = vmatprep.subr.mxu0 0.0
  %4028 = vmatpush1.msra.mxu0 %v3864
  %4029 = vmatprep.subr.mxu0 0.0
  %4030 = vmatpush1.msra.mxu0 %v3863
  %4031 = vmatprep.subr.mxu0 0.0
  %4032 = vmatpush1.msra.mxu0 %v3862
  %4033 = vmatprep.subr.mxu0 0.0
  %4034 = vmatpush1.msra.mxu0 %v3861
  %4035 = vmatprep.subr.mxu0 0.0
  %4036 = vmatpush1.msra.mxu0 %v3860
  %4037 = vmatprep.subr.mxu0 0.0
  %4038 = vmatpush1.msra.mxu0 %v3859
  %4039 = vmatprep.subr.mxu0 0.0
  %4040 = vmatpush1.msra.mxu0 %v3858
  %4041 = vmatprep.subr.mxu0 0.0
  %4042 = vmatpush1.msra.mxu0 %v3857
  %4043 = vmatprep.subr.mxu0 0.0
  %4044 = vmatpush1.msra.mxu0 %v3856
  %4045 = vmatprep.subr.mxu0 0.0
  %4046 = vmatpush1.msra.mxu0 %v3855
  %4047 = vmatprep.subr.mxu0 0.0
  %4048 = vmatpush1.msra.mxu0 %v3854
  %4049 = vmatprep.subr.mxu0 0.0
  %4050 = vmatpush1.msra.mxu0 %v3853
  %4051 = vmatprep.subr.mxu0 0.0
  %4052 = vmatpush2.msra.mxu0 0.0
  %4053 = vmatprep.subr.mxu0 0.0
  %4054 = vmatpush2.msra.mxu0 0.0
  %4055 = vmatprep.subr.mxu0 0.0
  %4056 = vmatpush2.msra.mxu0 0.0
  %4057 = vmatprep.subr.mxu0 0.0
  %4058 = vmatpush2.msra.mxu0 0.0
  %4059 = vmatprep.subr.mxu0 0.0
  %4060 = vmatpush2.msra.mxu0 0.0
  %4061 = vmatprep.subr.mxu0 0.0
  %4062 = vmatpush2.msra.mxu0 0.0
  %4063 = vmatprep.subr.mxu0 0.0
  %4064 = vmatpush2.msra.mxu0 0.0
  %4065 = vmatprep.subr.mxu0 0.0
  %4066 = vmatpush2.msra.mxu0 0.0
  %4067 = vmatprep.subr.mxu0 0.0
  %4068 = vmatpush2.msra.mxu0 0.0
  %4069 = vmatprep.subr.mxu0 0.0
  %4070 = vmatpush2.msra.mxu0 0.0
  %4071 = vmatprep.subr.mxu0 0.0
  %4072 = vmatpush2.msra.mxu0 0.0
  %4073 = vmatprep.subr.mxu0 0.0
  %4074 = vmatpush2.msra.mxu0 0.0
  %4075 = vmatprep.subr.mxu0 0.0
  %4076 = vmatpush2.msra.mxu0 0.0
  %4077 = vmatprep.subr.mxu0 0.0
  %4078 = vmatpush2.msra.mxu0 0.0
  %4079 = vmatprep.subr.mxu0 0.0
  %4080 = vmatpush2.msra.mxu0 0.0
  %4081 = vmatprep.subr.mxu0 0.0
  %4082 = vmatpush2.msra.mxu0 0.0
  %4083 = vmatprep.mubr.f32.mxu0 0.0
  %4084 = vmatmul.mubr.f32.gmra.mxu0 %v4011
  %v4085 = vpop.f32.mrf.mxu0
  %v4086 = vadd.f32 %v4017, %v4085
  %v4087 = vpop.f32.mrf.mxu0
  %4088 = vmatprep.mubr.f32.mxu0 0.0
  %4089 = vmatmul.mubr.f32.gmra.mxu0 %v4012
  %v4090 = vpop.f32.mrf.mxu0
  %v4091 = vadd.f32 %v4017, %v4090
  %v4092 = vpop.f32.mrf.mxu0
  %4093 = vdwg.mxu0
  %v4094 = vmul.f32 %v4086, 0.5
  %v4095 = vmul.f32 %v4091, 0.5
  %v4096 = vadd.f32 %v3844, %v4094
  %v4097 = vadd.f32 %v3845, %v4095
  %v4098 = vld [vmem:[%s69] sm:$0x1]
  %v4099 = vld [vmem:[%s71] sm:$0x1]
  %v4100 = vsel %vm375, %v4096, 0.0
  %4101 = vadd.xlane.f32.xlu0 %v4100
  %v4102 = vpop.xlane.xlu0 %4101
  %v4103 = vsel %vm379, %v4097, 0.0
  %4104 = vadd.xlane.f32.xlu0 %v4103
  %v4105 = vpop.xlane.xlu0 %4104
  %v4106 = vmul.f32 %v4102, %v383
  %v4107 = vmul.f32 %v4105, %v383
  %v4108 = vsub.f32 %v4096, %v4106
  %v4109 = vsub.f32 %v4097, %v4107
  %v4110 = vmul.f32 %v4108, %v4108
  %v4111 = vmul.f32 %v4109, %v4109
  %v4112 = vsel %vm375, %v4110, 0.0
  %4113 = vadd.xlane.f32.xlu0 %v4112
  %v4114 = vpop.xlane.xlu0 %4113
  %v4115 = vsel %vm379, %v4111, 0.0
  %4116 = vadd.xlane.f32.xlu0 %v4115
  %v4117 = vpop.xlane.xlu0 %4116
  %v4118 = vmul.f32 %v4114, %v383
  %v4119 = vmul.f32 %v4117, %v383
  %v4120 = vadd.f32 %v4118, 1e-05
  %v4121 = vadd.f32 %v4119, 1e-05
  %v4122 = vrsqrt.pop %v4120
  %v4123 = vrsqrt.pop %v4121
  %v4124 = vmul.f32 %v4108, %v4122
  %v4125 = vmul.f32 %v4109, %v4123
  %v4127 = vlaneseq
  %v4128 = vshrl.u32 %v4127, 7
  %v4129 = vsub.s32 0, %v4128
  %v4130 = vrot.slane %v4098, %v4129
  %v4132 = vmul.f32 %v4124, %v4130
  %v4133 = vmul.f32 %v4125, %v4130
  %v4135 = vlaneseq
  %v4136 = vshrl.u32 %v4135, 7
  %v4137 = vsub.s32 0, %v4136
  %v4138 = vrot.slane %v4099, %v4137
  %v4140 = vadd.f32 %v4132, %v4138
  %v4141 = vadd.f32 %v4133, %v4138
  %s4142 = scalar_lea.vmem %s9, 1
  %v4143 = vld [vmem:[%s4142] sm:$0x1]
  %s4144 = scalar_lea.vmem %s11, 1
  %v4145 = vld [vmem:[%s4144] sm:$0x1]
  %s4146 = scalar_lea.vmem %s13, 32
  %v4147 = vld [vmem:[%s4146] sm:$0xff]
  %v4148 = vld [vmem:[%s4146 + $0x8] sm:$0xff]
  %v4149 = vld [vmem:[%s4146 + $0x10] sm:$0xff]
  %v4150 = vld [vmem:[%s4146 + $0x18] sm:$0xff]
  %s4151 = scalar_lea.vmem %s15, 1
  %v4152 = vld [vmem:[%s4151] sm:$0x1]
  %s4153 = scalar_lea.vmem %s17, 128
  %v4154 = vld [vmem:[%s4153] sm:$0xff]
  %v4155 = vld [vmem:[%s4153 + $0x8] sm:$0xff]
  %v4156 = vld [vmem:[%s4153 + $0x10] sm:$0xff]
  %v4157 = vld [vmem:[%s4153 + $0x18] sm:$0xff]
  %v4158 = vld [vmem:[%s4153 + $0x20] sm:$0xff]
  %v4159 = vld [vmem:[%s4153 + $0x28] sm:$0xff]
  %v4160 = vld [vmem:[%s4153 + $0x30] sm:$0xff]
  %v4161 = vld [vmem:[%s4153 + $0x38] sm:$0xff]
  %v4162 = vld [vmem:[%s4153 + $0x40] sm:$0xff]
  %v4163 = vld [vmem:[%s4153 + $0x48] sm:$0xff]
  %v4164 = vld [vmem:[%s4153 + $0x50] sm:$0xff]
  %v4165 = vld [vmem:[%s4153 + $0x58] sm:$0xff]
  %v4166 = vld [vmem:[%s4153 + $0x60] sm:$0xff]
  %v4167 = vld [vmem:[%s4153 + $0x68] sm:$0xff]
  %v4168 = vld [vmem:[%s4153 + $0x70] sm:$0xff]
  %v4169 = vld [vmem:[%s4153 + $0x78] sm:$0xff]
  %s4170 = scalar_lea.vmem %s19, 1
  %v4171 = vld [vmem:[%s4170] sm:$0x1]
  %v4172 = vsel %vm375, %v4140, 0.0
  %4173 = vadd.xlane.f32.xlu0 %v4172
  %v4174 = vpop.xlane.xlu0 %4173
  %v4175 = vsel %vm379, %v4141, 0.0
  %4176 = vadd.xlane.f32.xlu0 %v4175
  %v4177 = vpop.xlane.xlu0 %4176
  %v4178 = vmul.f32 %v4174, %v383
  %v4179 = vmul.f32 %v4177, %v383
  %v4180 = vsub.f32 %v4140, %v4178
  %v4181 = vsub.f32 %v4141, %v4179
  %v4182 = vmul.f32 %v4180, %v4180
  %v4183 = vmul.f32 %v4181, %v4181
  %v4184 = vsel %vm375, %v4182, 0.0
  %4185 = vadd.xlane.f32.xlu0 %v4184
  %v4186 = vpop.xlane.xlu0 %4185
  %v4187 = vsel %vm379, %v4183, 0.0
  %4188 = vadd.xlane.f32.xlu0 %v4187
  %v4189 = vpop.xlane.xlu0 %4188
  %v4190 = vmul.f32 %v4186, %v383
  %v4191 = vmul.f32 %v4189, %v383
  %v4192 = vadd.f32 %v4190, 1e-05
  %v4193 = vadd.f32 %v4191, 1e-05
  %v4194 = vrsqrt.pop %v4192
  %v4195 = vrsqrt.pop %v4193
  %v4196 = vmul.f32 %v4180, %v4194
  %v4197 = vmul.f32 %v4181, %v4195
  %v4199 = vlaneseq
  %v4200 = vshrl.u32 %v4199, 7
  %v4201 = vsub.s32 0, %v4200
  %v4202 = vrot.slane %v4143, %v4201
  %v4204 = vmul.f32 %v4196, %v4202
  %v4205 = vmul.f32 %v4197, %v4202
  %v4207 = vlaneseq
  %v4208 = vshrl.u32 %v4207, 7
  %v4209 = vsub.s32 0, %v4208
  %v4210 = vrot.slane %v4145, %v4209
  %v4212 = vadd.f32 %v4204, %v4210
  %v4213 = vadd.f32 %v4205, %v4210
  %v4215 = vlaneseq
  %v4216 = vshrl.u32 %v4215, 7
  %v4217 = vsub.s32 0, %v4216
  %v4218 = vrot.slane %v4152, %v4217
  %v4221 = vsel %vm375, %v4212, 0
  %v4224 = vsel %vm375, %v4213, 0
  %4226 = vmatprep.subr.mxu0 0.0
  %4227 = vmatpush1.msra.mxu0 0.0
  %4228 = vmatprep.subr.mxu0 0.0
  %4229 = vmatpush1.msra.mxu0 0.0
  %4230 = vmatprep.subr.mxu0 0.0
  %4231 = vmatpush1.msra.mxu0 0.0
  %4232 = vmatprep.subr.mxu0 0.0
  %4233 = vmatpush1.msra.mxu0 0.0
  %4234 = vmatprep.subr.mxu0 0.0
  %4235 = vmatpush1.msra.mxu0 0.0
  %4236 = vmatprep.subr.mxu0 0.0
  %4237 = vmatpush1.msra.mxu0 0.0
  %4238 = vmatprep.subr.mxu0 0.0
  %4239 = vmatpush1.msra.mxu0 0.0
  %4240 = vmatprep.subr.mxu0 0.0
  %4241 = vmatpush1.msra.mxu0 0.0
  %4242 = vmatprep.subr.mxu0 0.0
  %4243 = vmatpush1.msra.mxu0 0.0
  %4244 = vmatprep.subr.mxu0 0.0
  %4245 = vmatpush1.msra.mxu0 0.0
  %4246 = vmatprep.subr.mxu0 0.0
  %4247 = vmatpush1.msra.mxu0 0.0
  %4248 = vmatprep.subr.mxu0 0.0
  %4249 = vmatpush1.msra.mxu0 0.0
  %4250 = vmatprep.subr.mxu0 0.0
  %4251 = vmatpush1.msra.mxu0 %v4150
  %4252 = vmatprep.subr.mxu0 0.0
  %4253 = vmatpush1.msra.mxu0 %v4149
  %4254 = vmatprep.subr.mxu0 0.0
  %4255 = vmatpush1.msra.mxu0 %v4148
  %4256 = vmatprep.subr.mxu0 0.0
  %4257 = vmatpush1.msra.mxu0 %v4147
  %4258 = vmatprep.subr.mxu0 0.0
  %4259 = vmatpush2.msra.mxu0 0.0
  %4260 = vmatprep.subr.mxu0 0.0
  %4261 = vmatpush2.msra.mxu0 0.0
  %4262 = vmatprep.subr.mxu0 0.0
  %4263 = vmatpush2.msra.mxu0 0.0
  %4264 = vmatprep.subr.mxu0 0.0
  %4265 = vmatpush2.msra.mxu0 0.0
  %4266 = vmatprep.subr.mxu0 0.0
  %4267 = vmatpush2.msra.mxu0 0.0
  %4268 = vmatprep.subr.mxu0 0.0
  %4269 = vmatpush2.msra.mxu0 0.0
  %4270 = vmatprep.subr.mxu0 0.0
  %4271 = vmatpush2.msra.mxu0 0.0
  %4272 = vmatprep.subr.mxu0 0.0
  %4273 = vmatpush2.msra.mxu0 0.0
  %4274 = vmatprep.subr.mxu0 0.0
  %4275 = vmatpush2.msra.mxu0 0.0
  %4276 = vmatprep.subr.mxu0 0.0
  %4277 = vmatpush2.msra.mxu0 0.0
  %4278 = vmatprep.subr.mxu0 0.0
  %4279 = vmatpush2.msra.mxu0 0.0
  %4280 = vmatprep.subr.mxu0 0.0
  %4281 = vmatpush2.msra.mxu0 0.0
  %4282 = vmatprep.subr.mxu0 0.0
  %4283 = vmatpush2.msra.mxu0 0.0
  %4284 = vmatprep.subr.mxu0 0.0
  %4285 = vmatpush2.msra.mxu0 0.0
  %4286 = vmatprep.subr.mxu0 0.0
  %4287 = vmatpush2.msra.mxu0 0.0
  %4288 = vmatprep.subr.mxu0 0.0
  %4289 = vmatpush2.msra.mxu0 0.0
  %4290 = vmatprep.mubr.f32.mxu0 0.0
  %4291 = vmatmul.mubr.f32.gmra.mxu0 %v4221
  %v4292 = vpop.f32.mrf.mxu0
  %v4293 = vadd.f32 %v4218, %v4292
  %v4294 = vpop.f32.mrf.mxu0
  %4295 = vmatprep.mubr.f32.mxu0 0.0
  %4296 = vmatmul.mubr.f32.gmra.mxu0 %v4224
  %v4297 = vpop.f32.mrf.mxu0
  %v4298 = vadd.f32 %v4218, %v4297
  %v4299 = vpop.f32.mrf.mxu0
  %4300 = vdwg.mxu0
  %v4301 = vsub.f32 0.0, %v4293
  %v4302 = vsub.f32 0.0, %v4298
  %v4303 = vmul.f32 %v4301, 1.442695
  %v4304 = vpow.pop %v4303
  %v4305 = vmul.f32 %v4302, 1.442695
  %v4306 = vpow.pop %v4305
  %v4307 = vadd.f32 %v4304, 1.0
  %v4308 = vadd.f32 %v4306, 1.0
  %v4309 = vrcp.pop %v4307
  %v4310 = vmul.f32 1.0, %v4309
  %v4311 = vrcp.pop %v4308
  %v4312 = vmul.f32 1.0, %v4311
  %v4313 = vmul.f32 %v4293, %v4310
  %v4314 = vmul.f32 %v4298, %v4312
  %v4316 = vlaneseq
  %v4317 = vshrl.u32 %v4316, 7
  %v4318 = vsub.s32 0, %v4317
  %v4319 = vrot.slane %v4171, %v4318
  %4321 = vmatprep.subr.mxu0 0.0
  %4322 = vmatpush1.msra.mxu0 %v4169
  %4323 = vmatprep.subr.mxu0 0.0
  %4324 = vmatpush1.msra.mxu0 %v4168
  %4325 = vmatprep.subr.mxu0 0.0
  %4326 = vmatpush1.msra.mxu0 %v4167
  %4327 = vmatprep.subr.mxu0 0.0
  %4328 = vmatpush1.msra.mxu0 %v4166
  %4329 = vmatprep.subr.mxu0 0.0
  %4330 = vmatpush1.msra.mxu0 %v4165
  %4331 = vmatprep.subr.mxu0 0.0
  %4332 = vmatpush1.msra.mxu0 %v4164
  %4333 = vmatprep.subr.mxu0 0.0
  %4334 = vmatpush1.msra.mxu0 %v4163
  %4335 = vmatprep.subr.mxu0 0.0
  %4336 = vmatpush1.msra.mxu0 %v4162
  %4337 = vmatprep.subr.mxu0 0.0
  %4338 = vmatpush1.msra.mxu0 %v4161
  %4339 = vmatprep.subr.mxu0 0.0
  %4340 = vmatpush1.msra.mxu0 %v4160
  %4341 = vmatprep.subr.mxu0 0.0
  %4342 = vmatpush1.msra.mxu0 %v4159
  %4343 = vmatprep.subr.mxu0 0.0
  %4344 = vmatpush1.msra.mxu0 %v4158
  %4345 = vmatprep.subr.mxu0 0.0
  %4346 = vmatpush1.msra.mxu0 %v4157
  %4347 = vmatprep.subr.mxu0 0.0
  %4348 = vmatpush1.msra.mxu0 %v4156
  %4349 = vmatprep.subr.mxu0 0.0
  %4350 = vmatpush1.msra.mxu0 %v4155
  %4351 = vmatprep.subr.mxu0 0.0
  %4352 = vmatpush1.msra.mxu0 %v4154
  %4353 = vmatprep.subr.mxu0 0.0
  %4354 = vmatpush2.msra.mxu0 0.0
  %4355 = vmatprep.subr.mxu0 0.0
  %4356 = vmatpush2.msra.mxu0 0.0
  %4357 = vmatprep.subr.mxu0 0.0
  %4358 = vmatpush2.msra.mxu0 0.0
  %4359 = vmatprep.subr.mxu0 0.0
  %4360 = vmatpush2.msra.mxu0 0.0
  %4361 = vmatprep.subr.mxu0 0.0
  %4362 = vmatpush2.msra.mxu0 0.0
  %4363 = vmatprep.subr.mxu0 0.0
  %4364 = vmatpush2.msra.mxu0 0.0
  %4365 = vmatprep.subr.mxu0 0.0
  %4366 = vmatpush2.msra.mxu0 0.0
  %4367 = vmatprep.subr.mxu0 0.0
  %4368 = vmatpush2.msra.mxu0 0.0
  %4369 = vmatprep.subr.mxu0 0.0
  %4370 = vmatpush2.msra.mxu0 0.0
  %4371 = vmatprep.subr.mxu0 0.0
  %4372 = vmatpush2.msra.mxu0 0.0
  %4373 = vmatprep.subr.mxu0 0.0
  %4374 = vmatpush2.msra.mxu0 0.0
  %4375 = vmatprep.subr.mxu0 0.0
  %4376 = vmatpush2.msra.mxu0 0.0
  %4377 = vmatprep.subr.mxu0 0.0
  %4378 = vmatpush2.msra.mxu0 0.0
  %4379 = vmatprep.subr.mxu0 0.0
  %4380 = vmatpush2.msra.mxu0 0.0
  %4381 = vmatprep.subr.mxu0 0.0
  %4382 = vmatpush2.msra.mxu0 0.0
  %4383 = vmatprep.subr.mxu0 0.0
  %4384 = vmatpush2.msra.mxu0 0.0
  %4385 = vmatprep.mubr.f32.mxu0 0.0
  %4386 = vmatmul.mubr.f32.gmra.mxu0 %v4313
  %v4387 = vpop.f32.mrf.mxu0
  %v4388 = vadd.f32 %v4319, %v4387
  %v4389 = vpop.f32.mrf.mxu0
  %4390 = vmatprep.mubr.f32.mxu0 0.0
  %4391 = vmatmul.mubr.f32.gmra.mxu0 %v4314
  %v4392 = vpop.f32.mrf.mxu0
  %v4393 = vadd.f32 %v4319, %v4392
  %v4394 = vpop.f32.mrf.mxu0
  %4395 = vdwg.mxu0
  %v4396 = vmul.f32 %v4388, 0.5
  %v4397 = vmul.f32 %v4393, 0.5
  %v4398 = vadd.f32 %v4140, %v4396
  %v4399 = vadd.f32 %v4141, %v4397
  %s4400 = scalar_lea.vmem %s21, 1
  %v4401 = vld [vmem:[%s4400] sm:$0x1]
  %s4402 = scalar_lea.vmem %s23, 1
  %v4403 = vld [vmem:[%s4402] sm:$0x1]
  %v4404 = vsel %vm375, %v4398, 0.0
  %4405 = vadd.xlane.f32.xlu0 %v4404
  %v4406 = vpop.xlane.xlu0 %4405
  %v4407 = vsel %vm379, %v4399, 0.0
  %4408 = vadd.xlane.f32.xlu0 %v4407
  %v4409 = vpop.xlane.xlu0 %4408
  %v4410 = vmul.f32 %v4406, %v383
  %v4411 = vmul.f32 %v4409, %v383
  %v4412 = vsub.f32 %v4398, %v4410
  %v4413 = vsub.f32 %v4399, %v4411
  %v4414 = vmul.f32 %v4412, %v4412
  %v4415 = vmul.f32 %v4413, %v4413
  %v4416 = vsel %vm375, %v4414, 0.0
  %4417 = vadd.xlane.f32.xlu0 %v4416
  %v4418 = vpop.xlane.xlu0 %4417
  %v4419 = vsel %vm379, %v4415, 0.0
  %4420 = vadd.xlane.f32.xlu0 %v4419
  %v4421 = vpop.xlane.xlu0 %4420
  %v4422 = vmul.f32 %v4418, %v383
  %v4423 = vmul.f32 %v4421, %v383
  %v4424 = vadd.f32 %v4422, 1e-05
  %v4425 = vadd.f32 %v4423, 1e-05
  %v4426 = vrsqrt.pop %v4424
  %v4427 = vrsqrt.pop %v4425
  %v4428 = vmul.f32 %v4412, %v4426
  %v4429 = vmul.f32 %v4413, %v4427
  %v4431 = vlaneseq
  %v4432 = vshrl.u32 %v4431, 7
  %v4433 = vsub.s32 0, %v4432
  %v4434 = vrot.slane %v4401, %v4433
  %v4436 = vmul.f32 %v4428, %v4434
  %v4437 = vmul.f32 %v4429, %v4434
  %v4439 = vlaneseq
  %v4440 = vshrl.u32 %v4439, 7
  %v4441 = vsub.s32 0, %v4440
  %v4442 = vrot.slane %v4403, %v4441
  %v4444 = vadd.f32 %v4436, %v4442
  %v4445 = vadd.f32 %v4437, %v4442
  %s4446 = scalar_lea.vmem %s25, 32
  %v4447 = vld [vmem:[%s4446] sm:$0xff]
  %v4448 = vld [vmem:[%s4446 + $0x8] sm:$0xff]
  %v4449 = vld [vmem:[%s4446 + $0x10] sm:$0xff]
  %v4450 = vld [vmem:[%s4446 + $0x18] sm:$0xff]
  %s4451 = scalar_lea.vmem %s27, 1
  %v4452 = vld [vmem:[%s4451] sm:$0x1]
  %v4454 = vlaneseq
  %v4455 = vshrl.u32 %v4454, 7
  %v4456 = vsub.s32 0, %v4455
  %v4457 = vrot.slane %v4452, %v4456
  %v4460 = vsel %vm375, %v4444, 0
  %v4463 = vsel %vm375, %v4445, 0
  %4465 = vmatprep.subr.mxu0 0.0
  %4466 = vmatpush1.msra.mxu0 0.0
  %4467 = vmatprep.subr.mxu0 0.0
  %4468 = vmatpush1.msra.mxu0 0.0
  %4469 = vmatprep.subr.mxu0 0.0
  %4470 = vmatpush1.msra.mxu0 0.0
  %4471 = vmatprep.subr.mxu0 0.0
  %4472 = vmatpush1.msra.mxu0 0.0
  %4473 = vmatprep.subr.mxu0 0.0
  %4474 = vmatpush1.msra.mxu0 0.0
  %4475 = vmatprep.subr.mxu0 0.0
  %4476 = vmatpush1.msra.mxu0 0.0
  %4477 = vmatprep.subr.mxu0 0.0
  %4478 = vmatpush1.msra.mxu0 0.0
  %4479 = vmatprep.subr.mxu0 0.0
  %4480 = vmatpush1.msra.mxu0 0.0
  %4481 = vmatprep.subr.mxu0 0.0
  %4482 = vmatpush1.msra.mxu0 0.0
  %4483 = vmatprep.subr.mxu0 0.0
  %4484 = vmatpush1.msra.mxu0 0.0
  %4485 = vmatprep.subr.mxu0 0.0
  %4486 = vmatpush1.msra.mxu0 0.0
  %4487 = vmatprep.subr.mxu0 0.0
  %4488 = vmatpush1.msra.mxu0 0.0
  %4489 = vmatprep.subr.mxu0 0.0
  %4490 = vmatpush1.msra.mxu0 %v4450
  %4491 = vmatprep.subr.mxu0 0.0
  %4492 = vmatpush1.msra.mxu0 %v4449
  %4493 = vmatprep.subr.mxu0 0.0
  %4494 = vmatpush1.msra.mxu0 %v4448
  %4495 = vmatprep.subr.mxu0 0.0
  %4496 = vmatpush1.msra.mxu0 %v4447
  %4497 = vmatprep.subr.mxu0 0.0
  %4498 = vmatpush2.msra.mxu0 0.0
  %4499 = vmatprep.subr.mxu0 0.0
  %4500 = vmatpush2.msra.mxu0 0.0
  %4501 = vmatprep.subr.mxu0 0.0
  %4502 = vmatpush2.msra.mxu0 0.0
  %4503 = vmatprep.subr.mxu0 0.0
  %4504 = vmatpush2.msra.mxu0 0.0
  %4505 = vmatprep.subr.mxu0 0.0
  %4506 = vmatpush2.msra.mxu0 0.0
  %4507 = vmatprep.subr.mxu0 0.0
  %4508 = vmatpush2.msra.mxu0 0.0
  %4509 = vmatprep.subr.mxu0 0.0
  %4510 = vmatpush2.msra.mxu0 0.0
  %4511 = vmatprep.subr.mxu0 0.0
  %4512 = vmatpush2.msra.mxu0 0.0
  %4513 = vmatprep.subr.mxu0 0.0
  %4514 = vmatpush2.msra.mxu0 0.0
  %4515 = vmatprep.subr.mxu0 0.0
  %4516 = vmatpush2.msra.mxu0 0.0
  %4517 = vmatprep.subr.mxu0 0.0
  %4518 = vmatpush2.msra.mxu0 0.0
  %4519 = vmatprep.subr.mxu0 0.0
  %4520 = vmatpush2.msra.mxu0 0.0
  %4521 = vmatprep.subr.mxu0 0.0
  %4522 = vmatpush2.msra.mxu0 0.0
  %4523 = vmatprep.subr.mxu0 0.0
  %4524 = vmatpush2.msra.mxu0 0.0
  %4525 = vmatprep.subr.mxu0 0.0
  %4526 = vmatpush2.msra.mxu0 0.0
  %4527 = vmatprep.subr.mxu0 0.0
  %4528 = vmatpush2.msra.mxu0 0.0
  %4529 = vmatprep.mubr.f32.mxu0 0.0
  %4530 = vmatmul.mubr.f32.gmra.mxu0 %v4460
  %v4531 = vpop.f32.mrf.mxu0
  %v4532 = vadd.f32 %v4457, %v4531
  %v4533 = vpop.f32.mrf.mxu0
  %4534 = vmatprep.mubr.f32.mxu0 0.0
  %4535 = vmatmul.mubr.f32.gmra.mxu0 %v4463
  %v4536 = vpop.f32.mrf.mxu0
  %v4537 = vadd.f32 %v4457, %v4536
  %v4538 = vpop.f32.mrf.mxu0
  %4539 = vdwg.mxu0
  %s4540 = scalar_lea.vmem %s29, 32
  %v4541 = vld [vmem:[%s4540] sm:$0xff]
  %v4542 = vld [vmem:[%s4540 + $0x8] sm:$0xff]
  %v4543 = vld [vmem:[%s4540 + $0x10] sm:$0xff]
  %v4544 = vld [vmem:[%s4540 + $0x18] sm:$0xff]
  %4545 = vmatprep.subr.mxu0 0.0
  %4546 = vmatpush1.msra.mxu0 0.0
  %4547 = vmatprep.subr.mxu0 0.0
  %4548 = vmatpush1.msra.mxu0 0.0
  %4549 = vmatprep.subr.mxu0 0.0
  %4550 = vmatpush1.msra.mxu0 0.0
  %4551 = vmatprep.subr.mxu0 0.0
  %4552 = vmatpush1.msra.mxu0 0.0
  %4553 = vmatprep.subr.mxu0 0.0
  %4554 = vmatpush1.msra.mxu0 0.0
  %4555 = vmatprep.subr.mxu0 0.0
  %4556 = vmatpush1.msra.mxu0 0.0
  %4557 = vmatprep.subr.mxu0 0.0
  %4558 = vmatpush1.msra.mxu0 0.0
  %4559 = vmatprep.subr.mxu0 0.0
  %4560 = vmatpush1.msra.mxu0 0.0
  %4561 = vmatprep.subr.mxu0 0.0
  %4562 = vmatpush1.msra.mxu0 0.0
  %4563 = vmatprep.subr.mxu0 0.0
  %4564 = vmatpush1.msra.mxu0 0.0
  %4565 = vmatprep.subr.mxu0 0.0
  %4566 = vmatpush1.msra.mxu0 0.0
  %4567 = vmatprep.subr.mxu0 0.0
  %4568 = vmatpush1.msra.mxu0 0.0
  %4569 = vmatprep.subr.mxu0 0.0
  %4570 = vmatpush1.msra.mxu0 %v4544
  %4571 = vmatprep.subr.mxu0 0.0
  %4572 = vmatpush1.msra.mxu0 %v4543
  %4573 = vmatprep.subr.mxu0 0.0
  %4574 = vmatpush1.msra.mxu0 %v4542
  %4575 = vmatprep.subr.mxu0 0.0
  %4576 = vmatpush1.msra.mxu0 %v4541
  %4577 = vmatprep.subr.mxu0 0.0
  %4578 = vmatpush2.msra.mxu0 0.0
  %4579 = vmatprep.subr.mxu0 0.0
  %4580 = vmatpush2.msra.mxu0 0.0
  %4581 = vmatprep.subr.mxu0 0.0
  %4582 = vmatpush2.msra.mxu0 0.0
  %4583 = vmatprep.subr.mxu0 0.0
  %4584 = vmatpush2.msra.mxu0 0.0
  %4585 = vmatprep.subr.mxu0 0.0
  %4586 = vmatpush2.msra.mxu0 0.0
  %4587 = vmatprep.subr.mxu0 0.0
  %4588 = vmatpush2.msra.mxu0 0.0
  %4589 = vmatprep.subr.mxu0 0.0
  %4590 = vmatpush2.msra.mxu0 0.0
  %4591 = vmatprep.subr.mxu0 0.0
  %4592 = vmatpush2.msra.mxu0 0.0
  %4593 = vmatprep.subr.mxu0 0.0
  %4594 = vmatpush2.msra.mxu0 0.0
  %4595 = vmatprep.subr.mxu0 0.0
  %4596 = vmatpush2.msra.mxu0 0.0
  %4597 = vmatprep.subr.mxu0 0.0
  %4598 = vmatpush2.msra.mxu0 0.0
  %4599 = vmatprep.subr.mxu0 0.0
  %4600 = vmatpush2.msra.mxu0 0.0
  %4601 = vmatprep.subr.mxu0 0.0
  %4602 = vmatpush2.msra.mxu0 0.0
  %4603 = vmatprep.subr.mxu0 0.0
  %4604 = vmatpush2.msra.mxu0 0.0
  %4605 = vmatprep.subr.mxu0 0.0
  %4606 = vmatpush2.msra.mxu0 0.0
  %4607 = vmatprep.subr.mxu0 0.0
  %4608 = vmatpush2.msra.mxu0 0.0
  %4609 = vmatprep.mubr.f32.mxu0 0.0
  %4610 = vmatmul.mubr.f32.gmra.mxu0 %v747
  %v4611 = vpop.f32.mrf.mxu0
  %v4612 = vadd.f32 0.0, %v4611
  %v4613 = vpop.f32.mrf.mxu0
  %4614 = vdwg.mxu0
  %s4615 = scalar_lea.vmem %s31, 1
  %v4616 = vld [vmem:[%s4615] sm:$0x1]
  %v4618 = vlaneseq
  %v4619 = vshrl.u32 %v4618, 7
  %v4620 = vsub.s32 0, %v4619
  %v4621 = vrot.slane %v4616, %v4620
  %v4623 = vadd.f32 %v4532, %v4621
  %v4624 = vadd.f32 %v4537, %v4621
  %v4626 = vsel %vm868, %v4624, 0
  %4628 = vmatprep.subr.mxu0 0.0
  %4629 = vmatpush1.msra.mxu0 0.0
  %4630 = vmatprep.subr.mxu0 0.0
  %4631 = vmatpush1.msra.mxu0 0.0
  %4632 = vmatprep.subr.mxu0 0.0
  %4633 = vmatpush1.msra.mxu0 0.0
  %4634 = vmatprep.subr.mxu0 0.0
  %4635 = vmatpush1.msra.mxu0 0.0
  %4636 = vmatprep.subr.mxu0 0.0
  %4637 = vmatpush1.msra.mxu0 0.0
  %4638 = vmatprep.subr.mxu0 0.0
  %4639 = vmatpush1.msra.mxu0 0.0
  %4640 = vmatprep.subr.mxu0 0.0
  %4641 = vmatpush1.msra.mxu0 0.0
  %4642 = vmatprep.subr.mxu0 0.0
  %4643 = vmatpush1.msra.mxu0 0.0
  %4644 = vmatprep.subr.mxu0 0.0
  %4645 = vmatpush1.msra.mxu0 0.0
  %4646 = vmatprep.subr.mxu0 0.0
  %4647 = vmatpush1.msra.mxu0 0.0
  %4648 = vmatprep.subr.mxu0 0.0
  %4649 = vmatpush1.msra.mxu0 0.0
  %4650 = vmatprep.subr.mxu0 0.0
  %4651 = vmatpush1.msra.mxu0 0.0
  %4652 = vmatprep.subr.mxu0 0.0
  %4653 = vmatpush1.msra.mxu0 0.0
  %4654 = vmatprep.subr.mxu0 0.0
  %4655 = vmatpush1.msra.mxu0 0.0
  %4656 = vmatprep.subr.mxu0 0.0
  %4657 = vmatpush1.msra.mxu0 %v4626
  %4658 = vmatprep.subr.mxu0 0.0
  %4659 = vmatpush1.msra.mxu0 %v4623
  %4660 = vmatprep.subr.mxu0 0.0
  %4661 = vmatpush2.msra.mxu0 0.0
  %4662 = vmatprep.subr.mxu0 0.0
  %4663 = vmatpush2.msra.mxu0 0.0
  %4664 = vmatprep.subr.mxu0 0.0
  %4665 = vmatpush2.msra.mxu0 0.0
  %4666 = vmatprep.subr.mxu0 0.0
  %4667 = vmatpush2.msra.mxu0 0.0
  %4668 = vmatprep.subr.mxu0 0.0
  %4669 = vmatpush2.msra.mxu0 0.0
  %4670 = vmatprep.subr.mxu0 0.0
  %4671 = vmatpush2.msra.mxu0 0.0
  %4672 = vmatprep.subr.mxu0 0.0
  %4673 = vmatpush2.msra.mxu0 0.0
  %4674 = vmatprep.subr.mxu0 0.0
  %4675 = vmatpush2.msra.mxu0 0.0
  %4676 = vmatprep.subr.mxu0 0.0
  %4677 = vmatpush2.msra.mxu0 0.0
  %4678 = vmatprep.subr.mxu0 0.0
  %4679 = vmatpush2.msra.mxu0 0.0
  %4680 = vmatprep.subr.mxu0 0.0
  %4681 = vmatpush2.msra.mxu0 0.0
  %4682 = vmatprep.subr.mxu0 0.0
  %4683 = vmatpush2.msra.mxu0 0.0
  %4684 = vmatprep.subr.mxu0 0.0
  %4685 = vmatpush2.msra.mxu0 0.0
  %4686 = vmatprep.subr.mxu0 0.0
  %4687 = vmatpush2.msra.mxu0 0.0
  %4688 = vmatprep.subr.mxu0 0.0
  %4689 = vmatpush2.msra.mxu0 0.0
  %4690 = vmatprep.subr.mxu0 0.0
  %4691 = vmatpush2.msra.mxu0 0.0
  %4692 = vmatprep.mubr.f32.mxu0 0.0
  %4693 = vmatmul.mubr.f32.gmra.mxu0 %v830
  %v4694 = vpop.f32.mrf.mxu0
  %v4695 = vadd.f32 0.0, %v4694
  %v4696 = vpop.f32.mrf.mxu0
  %4697 = vmatprep.mubr.f32.mxu0 0.0
  %4698 = vmatmul.mubr.f32.gmra.mxu0 %v833
  %v4699 = vpop.f32.mrf.mxu0
  %v4700 = vadd.f32 0.0, %v4699
  %v4701 = vpop.f32.mrf.mxu0
  %4702 = vmatprep.mubr.f32.mxu0 0.0
  %4703 = vmatmul.mubr.f32.gmra.mxu0 %v836
  %v4704 = vpop.f32.mrf.mxu0
  %v4705 = vadd.f32 0.0, %v4704
  %v4706 = vpop.f32.mrf.mxu0
  %4707 = vmatprep.mubr.f32.mxu0 0.0
  %4708 = vmatmul.mubr.f32.gmra.mxu0 %v839
  %v4709 = vpop.f32.mrf.mxu0
  %v4710 = vadd.f32 0.0, %v4709
  %v4711 = vpop.f32.mrf.mxu0
  %4712 = vmatprep.mubr.f32.mxu0 0.0
  %4713 = vmatmul.mubr.f32.gmra.mxu0 %v842
  %v4714 = vpop.f32.mrf.mxu0
  %v4715 = vadd.f32 0.0, %v4714
  %v4716 = vpop.f32.mrf.mxu0
  %4717 = vmatprep.mubr.f32.mxu0 0.0
  %4718 = vmatmul.mubr.f32.gmra.mxu0 %v845
  %v4719 = vpop.f32.mrf.mxu0
  %v4720 = vadd.f32 0.0, %v4719
  %v4721 = vpop.f32.mrf.mxu0
  %4722 = vmatprep.mubr.f32.mxu0 0.0
  %4723 = vmatmul.mubr.f32.gmra.mxu0 %v848
  %v4724 = vpop.f32.mrf.mxu0
  %v4725 = vadd.f32 0.0, %v4724
  %v4726 = vpop.f32.mrf.mxu0
  %4727 = vmatprep.mubr.f32.mxu0 0.0
  %4728 = vmatmul.mubr.f32.gmra.mxu0 %v851
  %v4729 = vpop.f32.mrf.mxu0
  %v4730 = vadd.f32 0.0, %v4729
  %v4731 = vpop.f32.mrf.mxu0
  %4732 = vmatprep.mubr.f32.mxu0 0.0
  %4733 = vmatmul.mubr.f32.gmra.mxu0 %v854
  %v4734 = vpop.f32.mrf.mxu0
  %v4735 = vadd.f32 0.0, %v4734
  %v4736 = vpop.f32.mrf.mxu0
  %4737 = vmatprep.mubr.f32.mxu0 0.0
  %4738 = vmatmul.mubr.f32.gmra.mxu0 %v857
  %v4739 = vpop.f32.mrf.mxu0
  %v4740 = vadd.f32 0.0, %v4739
  %v4741 = vpop.f32.mrf.mxu0
  %4742 = vmatprep.mubr.f32.mxu0 0.0
  %4743 = vmatmul.mubr.f32.gmra.mxu0 %v860
  %v4744 = vpop.f32.mrf.mxu0
  %v4745 = vadd.f32 0.0, %v4744
  %v4746 = vpop.f32.mrf.mxu0
  %4747 = vmatprep.mubr.f32.mxu0 0.0
  %4748 = vmatmul.mubr.f32.gmra.mxu0 %v863
  %v4749 = vpop.f32.mrf.mxu0
  %v4750 = vadd.f32 0.0, %v4749
  %v4751 = vpop.f32.mrf.mxu0
  %4752 = vmatprep.mubr.f32.mxu0 0.0
  %4753 = vmatmul.mubr.f32.gmra.mxu0 %v866
  %v4754 = vpop.f32.mrf.mxu0
  %v4755 = vadd.f32 0.0, %v4754
  %v4756 = vpop.f32.mrf.mxu0
  %4757 = vdwg.mxu0
  %s4758 = scalar_lea.vmem %s33, 1
  %v4759 = vld [vmem:[%s4758] sm:$0x1]
  %v4761 = vlaneseq
  %v4762 = vshrl.u32 %v4761, 7
  %v4763 = vsub.s32 0, %v4762
  %v4764 = vrot.slane %v4759, %v4763
  %v4766 = vadd.f32 %v4532, %v4764
  %v4767 = vadd.f32 %v4537, %v4764
  %v4769 = vsel %vm868, %v4767, 0
  %4771 = vmatprep.subr.mxu0 0.0
  %4772 = vmatpush1.msra.mxu0 0.0
  %4773 = vmatprep.subr.mxu0 0.0
  %4774 = vmatpush1.msra.mxu0 0.0
  %4775 = vmatprep.subr.mxu0 0.0
  %4776 = vmatpush1.msra.mxu0 0.0
  %4777 = vmatprep.subr.mxu0 0.0
  %4778 = vmatpush1.msra.mxu0 0.0
  %4779 = vmatprep.subr.mxu0 0.0
  %4780 = vmatpush1.msra.mxu0 0.0
  %4781 = vmatprep.subr.mxu0 0.0
  %4782 = vmatpush1.msra.mxu0 0.0
  %4783 = vmatprep.subr.mxu0 0.0
  %4784 = vmatpush1.msra.mxu0 0.0
  %4785 = vmatprep.subr.mxu0 0.0
  %4786 = vmatpush1.msra.mxu0 0.0
  %4787 = vmatprep.subr.mxu0 0.0
  %4788 = vmatpush1.msra.mxu0 0.0
  %4789 = vmatprep.subr.mxu0 0.0
  %4790 = vmatpush1.msra.mxu0 0.0
  %4791 = vmatprep.subr.mxu0 0.0
  %4792 = vmatpush1.msra.mxu0 0.0
  %4793 = vmatprep.subr.mxu0 0.0
  %4794 = vmatpush1.msra.mxu0 0.0
  %4795 = vmatprep.subr.mxu0 0.0
  %4796 = vmatpush1.msra.mxu0 0.0
  %4797 = vmatprep.subr.mxu0 0.0
  %4798 = vmatpush1.msra.mxu0 0.0
  %4799 = vmatprep.subr.mxu0 0.0
  %4800 = vmatpush1.msra.mxu0 %v4769
  %4801 = vmatprep.subr.mxu0 0.0
  %4802 = vmatpush1.msra.mxu0 %v4766
  %4803 = vmatprep.subr.mxu0 0.0
  %4804 = vmatpush2.msra.mxu0 0.0
  %4805 = vmatprep.subr.mxu0 0.0
  %4806 = vmatpush2.msra.mxu0 0.0
  %4807 = vmatprep.subr.mxu0 0.0
  %4808 = vmatpush2.msra.mxu0 0.0
  %4809 = vmatprep.subr.mxu0 0.0
  %4810 = vmatpush2.msra.mxu0 0.0
  %4811 = vmatprep.subr.mxu0 0.0
  %4812 = vmatpush2.msra.mxu0 0.0
  %4813 = vmatprep.subr.mxu0 0.0
  %4814 = vmatpush2.msra.mxu0 0.0
  %4815 = vmatprep.subr.mxu0 0.0
  %4816 = vmatpush2.msra.mxu0 0.0
  %4817 = vmatprep.subr.mxu0 0.0
  %4818 = vmatpush2.msra.mxu0 0.0
  %4819 = vmatprep.subr.mxu0 0.0
  %4820 = vmatpush2.msra.mxu0 0.0
  %4821 = vmatprep.subr.mxu0 0.0
  %4822 = vmatpush2.msra.mxu0 0.0
  %4823 = vmatprep.subr.mxu0 0.0
  %4824 = vmatpush2.msra.mxu0 0.0
  %4825 = vmatprep.subr.mxu0 0.0
  %4826 = vmatpush2.msra.mxu0 0.0
  %4827 = vmatprep.subr.mxu0 0.0
  %4828 = vmatpush2.msra.mxu0 0.0
  %4829 = vmatprep.subr.mxu0 0.0
  %4830 = vmatpush2.msra.mxu0 0.0
  %4831 = vmatprep.subr.mxu0 0.0
  %4832 = vmatpush2.msra.mxu0 0.0
  %4833 = vmatprep.subr.mxu0 0.0
  %4834 = vmatpush2.msra.mxu0 0.0
  %4835 = vmatprep.mubr.f32.mxu0 0.0
  %4836 = vmatmul.mubr.f32.gmra.mxu0 %v830
  %v4837 = vpop.f32.mrf.mxu0
  %v4838 = vadd.f32 0.0, %v4837
  %v4839 = vpop.f32.mrf.mxu0
  %4840 = vmatprep.mubr.f32.mxu0 0.0
  %4841 = vmatmul.mubr.f32.gmra.mxu0 %v833
  %v4842 = vpop.f32.mrf.mxu0
  %v4843 = vadd.f32 0.0, %v4842
  %v4844 = vpop.f32.mrf.mxu0
  %4845 = vmatprep.mubr.f32.mxu0 0.0
  %4846 = vmatmul.mubr.f32.gmra.mxu0 %v836
  %v4847 = vpop.f32.mrf.mxu0
  %v4848 = vadd.f32 0.0, %v4847
  %v4849 = vpop.f32.mrf.mxu0
  %4850 = vmatprep.mubr.f32.mxu0 0.0
  %4851 = vmatmul.mubr.f32.gmra.mxu0 %v839
  %v4852 = vpop.f32.mrf.mxu0
  %v4853 = vadd.f32 0.0, %v4852
  %v4854 = vpop.f32.mrf.mxu0
  %4855 = vmatprep.mubr.f32.mxu0 0.0
  %4856 = vmatmul.mubr.f32.gmra.mxu0 %v842
  %v4857 = vpop.f32.mrf.mxu0
  %v4858 = vadd.f32 0.0, %v4857
  %v4859 = vpop.f32.mrf.mxu0
  %4860 = vmatprep.mubr.f32.mxu0 0.0
  %4861 = vmatmul.mubr.f32.gmra.mxu0 %v845
  %v4862 = vpop.f32.mrf.mxu0
  %v4863 = vadd.f32 0.0, %v4862
  %v4864 = vpop.f32.mrf.mxu0
  %4865 = vmatprep.mubr.f32.mxu0 0.0
  %4866 = vmatmul.mubr.f32.gmra.mxu0 %v848
  %v4867 = vpop.f32.mrf.mxu0
  %v4868 = vadd.f32 0.0, %v4867
  %v4869 = vpop.f32.mrf.mxu0
  %4870 = vmatprep.mubr.f32.mxu0 0.0
  %4871 = vmatmul.mubr.f32.gmra.mxu0 %v851
  %v4872 = vpop.f32.mrf.mxu0
  %v4873 = vadd.f32 0.0, %v4872
  %v4874 = vpop.f32.mrf.mxu0
  %4875 = vmatprep.mubr.f32.mxu0 0.0
  %4876 = vmatmul.mubr.f32.gmra.mxu0 %v854
  %v4877 = vpop.f32.mrf.mxu0
  %v4878 = vadd.f32 0.0, %v4877
  %v4879 = vpop.f32.mrf.mxu0
  %4880 = vmatprep.mubr.f32.mxu0 0.0
  %4881 = vmatmul.mubr.f32.gmra.mxu0 %v857
  %v4882 = vpop.f32.mrf.mxu0
  %v4883 = vadd.f32 0.0, %v4882
  %v4884 = vpop.f32.mrf.mxu0
  %4885 = vmatprep.mubr.f32.mxu0 0.0
  %4886 = vmatmul.mubr.f32.gmra.mxu0 %v860
  %v4887 = vpop.f32.mrf.mxu0
  %v4888 = vadd.f32 0.0, %v4887
  %v4889 = vpop.f32.mrf.mxu0
  %4890 = vmatprep.mubr.f32.mxu0 0.0
  %4891 = vmatmul.mubr.f32.gmra.mxu0 %v863
  %v4892 = vpop.f32.mrf.mxu0
  %v4893 = vadd.f32 0.0, %v4892
  %v4894 = vpop.f32.mrf.mxu0
  %4895 = vmatprep.mubr.f32.mxu0 0.0
  %4896 = vmatmul.mubr.f32.gmra.mxu0 %v866
  %v4897 = vpop.f32.mrf.mxu0
  %v4898 = vadd.f32 0.0, %v4897
  %v4899 = vpop.f32.mrf.mxu0
  %4900 = vdwg.mxu0
  %4903 = vrot.lane.b32.xlu0 %v4532, 96
  %v4904 = vpop.permute.xlu0 %4903
  %4905 = vrot.lane.b32.xlu0 %v4537, 96
  %v4906 = vpop.permute.xlu0 %4905
  %v4908 = vsel %vm868, %v4906, 0
  %4910 = vmatprep.subr.mxu0 0.0
  %4911 = vmatpush1.msra.mxu0 0.0
  %4912 = vmatprep.subr.mxu0 0.0
  %4913 = vmatpush1.msra.mxu0 0.0
  %4914 = vmatprep.subr.mxu0 0.0
  %4915 = vmatpush1.msra.mxu0 0.0
  %4916 = vmatprep.subr.mxu0 0.0
  %4917 = vmatpush1.msra.mxu0 0.0
  %4918 = vmatprep.subr.mxu0 0.0
  %4919 = vmatpush1.msra.mxu0 0.0
  %4920 = vmatprep.subr.mxu0 0.0
  %4921 = vmatpush1.msra.mxu0 0.0
  %4922 = vmatprep.subr.mxu0 0.0
  %4923 = vmatpush1.msra.mxu0 0.0
  %4924 = vmatprep.subr.mxu0 0.0
  %4925 = vmatpush1.msra.mxu0 0.0
  %4926 = vmatprep.subr.mxu0 0.0
  %4927 = vmatpush1.msra.mxu0 0.0
  %4928 = vmatprep.subr.mxu0 0.0
  %4929 = vmatpush1.msra.mxu0 0.0
  %4930 = vmatprep.subr.mxu0 0.0
  %4931 = vmatpush1.msra.mxu0 0.0
  %4932 = vmatprep.subr.mxu0 0.0
  %4933 = vmatpush1.msra.mxu0 0.0
  %4934 = vmatprep.subr.mxu0 0.0
  %4935 = vmatpush1.msra.mxu0 0.0
  %4936 = vmatprep.subr.mxu0 0.0
  %4937 = vmatpush1.msra.mxu0 0.0
  %4938 = vmatprep.subr.mxu0 0.0
  %4939 = vmatpush1.msra.mxu0 %v4908
  %4940 = vmatprep.subr.mxu0 0.0
  %4941 = vmatpush1.msra.mxu0 %v4904
  %4942 = vmatprep.subr.mxu0 0.0
  %4943 = vmatpush2.msra.mxu0 0.0
  %4944 = vmatprep.subr.mxu0 0.0
  %4945 = vmatpush2.msra.mxu0 0.0
  %4946 = vmatprep.subr.mxu0 0.0
  %4947 = vmatpush2.msra.mxu0 0.0
  %4948 = vmatprep.subr.mxu0 0.0
  %4949 = vmatpush2.msra.mxu0 0.0
  %4950 = vmatprep.subr.mxu0 0.0
  %4951 = vmatpush2.msra.mxu0 0.0
  %4952 = vmatprep.subr.mxu0 0.0
  %4953 = vmatpush2.msra.mxu0 0.0
  %4954 = vmatprep.subr.mxu0 0.0
  %4955 = vmatpush2.msra.mxu0 0.0
  %4956 = vmatprep.subr.mxu0 0.0
  %4957 = vmatpush2.msra.mxu0 0.0
  %4958 = vmatprep.subr.mxu0 0.0
  %4959 = vmatpush2.msra.mxu0 0.0
  %4960 = vmatprep.subr.mxu0 0.0
  %4961 = vmatpush2.msra.mxu0 0.0
  %4962 = vmatprep.subr.mxu0 0.0
  %4963 = vmatpush2.msra.mxu0 0.0
  %4964 = vmatprep.subr.mxu0 0.0
  %4965 = vmatpush2.msra.mxu0 0.0
  %4966 = vmatprep.subr.mxu0 0.0
  %4967 = vmatpush2.msra.mxu0 0.0
  %4968 = vmatprep.subr.mxu0 0.0
  %4969 = vmatpush2.msra.mxu0 0.0
  %4970 = vmatprep.subr.mxu0 0.0
  %4971 = vmatpush2.msra.mxu0 0.0
  %4972 = vmatprep.subr.mxu0 0.0
  %4973 = vmatpush2.msra.mxu0 0.0
  %4974 = vmatprep.mubr.f32.mxu0 0.0
  %4975 = vmatmul.mubr.f32.gmra.mxu0 %v1152
  %v4976 = vpop.f32.mrf.mxu0
  %v4977 = vadd.f32 0.0, %v4976
  %v4978 = vpop.f32.mrf.mxu0
  %4979 = vmatprep.mubr.f32.mxu0 0.0
  %4980 = vmatmul.mubr.f32.gmra.mxu0 %v1155
  %v4981 = vpop.f32.mrf.mxu0
  %v4982 = vadd.f32 0.0, %v4981
  %v4983 = vpop.f32.mrf.mxu0
  %4984 = vmatprep.mubr.f32.mxu0 0.0
  %4985 = vmatmul.mubr.f32.gmra.mxu0 %v1158
  %v4986 = vpop.f32.mrf.mxu0
  %v4987 = vadd.f32 0.0, %v4986
  %v4988 = vpop.f32.mrf.mxu0
  %4989 = vmatprep.mubr.f32.mxu0 0.0
  %4990 = vmatmul.mubr.f32.gmra.mxu0 %v1161
  %v4991 = vpop.f32.mrf.mxu0
  %v4992 = vadd.f32 0.0, %v4991
  %v4993 = vpop.f32.mrf.mxu0
  %4994 = vmatprep.mubr.f32.mxu0 0.0
  %4995 = vmatmul.mubr.f32.gmra.mxu0 %v1164
  %v4996 = vpop.f32.mrf.mxu0
  %v4997 = vadd.f32 0.0, %v4996
  %v4998 = vpop.f32.mrf.mxu0
  %4999 = vmatprep.mubr.f32.mxu0 0.0
  %5000 = vmatmul.mubr.f32.gmra.mxu0 %v1167
  %v5001 = vpop.f32.mrf.mxu0
  %v5002 = vadd.f32 0.0, %v5001
  %v5003 = vpop.f32.mrf.mxu0
  %5004 = vmatprep.mubr.f32.mxu0 0.0
  %5005 = vmatmul.mubr.f32.gmra.mxu0 %v1170
  %v5006 = vpop.f32.mrf.mxu0
  %v5007 = vadd.f32 0.0, %v5006
  %v5008 = vpop.f32.mrf.mxu0
  %5009 = vmatprep.mubr.f32.mxu0 0.0
  %5010 = vmatmul.mubr.f32.gmra.mxu0 %v1173
  %v5011 = vpop.f32.mrf.mxu0
  %v5012 = vadd.f32 0.0, %v5011
  %v5013 = vpop.f32.mrf.mxu0
  %5014 = vmatprep.mubr.f32.mxu0 0.0
  %5015 = vmatmul.mubr.f32.gmra.mxu0 %v1176
  %v5016 = vpop.f32.mrf.mxu0
  %v5017 = vadd.f32 0.0, %v5016
  %v5018 = vpop.f32.mrf.mxu0
  %5019 = vmatprep.mubr.f32.mxu0 0.0
  %5020 = vmatmul.mubr.f32.gmra.mxu0 %v1179
  %v5021 = vpop.f32.mrf.mxu0
  %v5022 = vadd.f32 0.0, %v5021
  %v5023 = vpop.f32.mrf.mxu0
  %5024 = vmatprep.mubr.f32.mxu0 0.0
  %5025 = vmatmul.mubr.f32.gmra.mxu0 %v1182
  %v5026 = vpop.f32.mrf.mxu0
  %v5027 = vadd.f32 0.0, %v5026
  %v5028 = vpop.f32.mrf.mxu0
  %5029 = vmatprep.mubr.f32.mxu0 0.0
  %5030 = vmatmul.mubr.f32.gmra.mxu0 %v1185
  %v5031 = vpop.f32.mrf.mxu0
  %v5032 = vadd.f32 0.0, %v5031
  %v5033 = vpop.f32.mrf.mxu0
  %5034 = vmatprep.mubr.f32.mxu0 0.0
  %5035 = vmatmul.mubr.f32.gmra.mxu0 %v1188
  %v5036 = vpop.f32.mrf.mxu0
  %v5037 = vadd.f32 0.0, %v5036
  %v5038 = vpop.f32.mrf.mxu0
  %5039 = vdwg.mxu0
  %5040 = vrot.lane.b32.xlu0 %v4532, 64
  %v5041 = vpop.permute.xlu0 %5040
  %5042 = vrot.lane.b32.xlu0 %v4537, 64
  %v5043 = vpop.permute.xlu0 %5042
  %v5045 = vsel %vm868, %v5043, 0
  %5047 = vmatprep.subr.mxu0 0.0
  %5048 = vmatpush1.msra.mxu0 0.0
  %5049 = vmatprep.subr.mxu0 0.0
  %5050 = vmatpush1.msra.mxu0 0.0
  %5051 = vmatprep.subr.mxu0 0.0
  %5052 = vmatpush1.msra.mxu0 0.0
  %5053 = vmatprep.subr.mxu0 0.0
  %5054 = vmatpush1.msra.mxu0 0.0
  %5055 = vmatprep.subr.mxu0 0.0
  %5056 = vmatpush1.msra.mxu0 0.0
  %5057 = vmatprep.subr.mxu0 0.0
  %5058 = vmatpush1.msra.mxu0 0.0
  %5059 = vmatprep.subr.mxu0 0.0
  %5060 = vmatpush1.msra.mxu0 0.0
  %5061 = vmatprep.subr.mxu0 0.0
  %5062 = vmatpush1.msra.mxu0 0.0
  %5063 = vmatprep.subr.mxu0 0.0
  %5064 = vmatpush1.msra.mxu0 0.0
  %5065 = vmatprep.subr.mxu0 0.0
  %5066 = vmatpush1.msra.mxu0 0.0
  %5067 = vmatprep.subr.mxu0 0.0
  %5068 = vmatpush1.msra.mxu0 0.0
  %5069 = vmatprep.subr.mxu0 0.0
  %5070 = vmatpush1.msra.mxu0 0.0
  %5071 = vmatprep.subr.mxu0 0.0
  %5072 = vmatpush1.msra.mxu0 0.0
  %5073 = vmatprep.subr.mxu0 0.0
  %5074 = vmatpush1.msra.mxu0 0.0
  %5075 = vmatprep.subr.mxu0 0.0
  %5076 = vmatpush1.msra.mxu0 %v5045
  %5077 = vmatprep.subr.mxu0 0.0
  %5078 = vmatpush1.msra.mxu0 %v5041
  %5079 = vmatprep.subr.mxu0 0.0
  %5080 = vmatpush2.msra.mxu0 0.0
  %5081 = vmatprep.subr.mxu0 0.0
  %5082 = vmatpush2.msra.mxu0 0.0
  %5083 = vmatprep.subr.mxu0 0.0
  %5084 = vmatpush2.msra.mxu0 0.0
  %5085 = vmatprep.subr.mxu0 0.0
  %5086 = vmatpush2.msra.mxu0 0.0
  %5087 = vmatprep.subr.mxu0 0.0
  %5088 = vmatpush2.msra.mxu0 0.0
  %5089 = vmatprep.subr.mxu0 0.0
  %5090 = vmatpush2.msra.mxu0 0.0
  %5091 = vmatprep.subr.mxu0 0.0
  %5092 = vmatpush2.msra.mxu0 0.0
  %5093 = vmatprep.subr.mxu0 0.0
  %5094 = vmatpush2.msra.mxu0 0.0
  %5095 = vmatprep.subr.mxu0 0.0
  %5096 = vmatpush2.msra.mxu0 0.0
  %5097 = vmatprep.subr.mxu0 0.0
  %5098 = vmatpush2.msra.mxu0 0.0
  %5099 = vmatprep.subr.mxu0 0.0
  %5100 = vmatpush2.msra.mxu0 0.0
  %5101 = vmatprep.subr.mxu0 0.0
  %5102 = vmatpush2.msra.mxu0 0.0
  %5103 = vmatprep.subr.mxu0 0.0
  %5104 = vmatpush2.msra.mxu0 0.0
  %5105 = vmatprep.subr.mxu0 0.0
  %5106 = vmatpush2.msra.mxu0 0.0
  %5107 = vmatprep.subr.mxu0 0.0
  %5108 = vmatpush2.msra.mxu0 0.0
  %5109 = vmatprep.subr.mxu0 0.0
  %5110 = vmatpush2.msra.mxu0 0.0
  %5111 = vmatprep.mubr.f32.mxu0 0.0
  %5112 = vmatmul.mubr.f32.gmra.mxu0 %v1152
  %v5113 = vpop.f32.mrf.mxu0
  %v5114 = vadd.f32 0.0, %v5113
  %v5115 = vpop.f32.mrf.mxu0
  %5116 = vmatprep.mubr.f32.mxu0 0.0
  %5117 = vmatmul.mubr.f32.gmra.mxu0 %v1155
  %v5118 = vpop.f32.mrf.mxu0
  %v5119 = vadd.f32 0.0, %v5118
  %v5120 = vpop.f32.mrf.mxu0
  %5121 = vmatprep.mubr.f32.mxu0 0.0
  %5122 = vmatmul.mubr.f32.gmra.mxu0 %v1158
  %v5123 = vpop.f32.mrf.mxu0
  %v5124 = vadd.f32 0.0, %v5123
  %v5125 = vpop.f32.mrf.mxu0
  %5126 = vmatprep.mubr.f32.mxu0 0.0
  %5127 = vmatmul.mubr.f32.gmra.mxu0 %v1161
  %v5128 = vpop.f32.mrf.mxu0
  %v5129 = vadd.f32 0.0, %v5128
  %v5130 = vpop.f32.mrf.mxu0
  %5131 = vmatprep.mubr.f32.mxu0 0.0
  %5132 = vmatmul.mubr.f32.gmra.mxu0 %v1164
  %v5133 = vpop.f32.mrf.mxu0
  %v5134 = vadd.f32 0.0, %v5133
  %v5135 = vpop.f32.mrf.mxu0
  %5136 = vmatprep.mubr.f32.mxu0 0.0
  %5137 = vmatmul.mubr.f32.gmra.mxu0 %v1167
  %v5138 = vpop.f32.mrf.mxu0
  %v5139 = vadd.f32 0.0, %v5138
  %v5140 = vpop.f32.mrf.mxu0
  %5141 = vmatprep.mubr.f32.mxu0 0.0
  %5142 = vmatmul.mubr.f32.gmra.mxu0 %v1170
  %v5143 = vpop.f32.mrf.mxu0
  %v5144 = vadd.f32 0.0, %v5143
  %v5145 = vpop.f32.mrf.mxu0
  %5146 = vmatprep.mubr.f32.mxu0 0.0
  %5147 = vmatmul.mubr.f32.gmra.mxu0 %v1173
  %v5148 = vpop.f32.mrf.mxu0
  %v5149 = vadd.f32 0.0, %v5148
  %v5150 = vpop.f32.mrf.mxu0
  %5151 = vmatprep.mubr.f32.mxu0 0.0
  %5152 = vmatmul.mubr.f32.gmra.mxu0 %v1176
  %v5153 = vpop.f32.mrf.mxu0
  %v5154 = vadd.f32 0.0, %v5153
  %v5155 = vpop.f32.mrf.mxu0
  %5156 = vmatprep.mubr.f32.mxu0 0.0
  %5157 = vmatmul.mubr.f32.gmra.mxu0 %v1179
  %v5158 = vpop.f32.mrf.mxu0
  %v5159 = vadd.f32 0.0, %v5158
  %v5160 = vpop.f32.mrf.mxu0
  %5161 = vmatprep.mubr.f32.mxu0 0.0
  %5162 = vmatmul.mubr.f32.gmra.mxu0 %v1182
  %v5163 = vpop.f32.mrf.mxu0
  %v5164 = vadd.f32 0.0, %v5163
  %v5165 = vpop.f32.mrf.mxu0
  %5166 = vmatprep.mubr.f32.mxu0 0.0
  %5167 = vmatmul.mubr.f32.gmra.mxu0 %v1185
  %v5168 = vpop.f32.mrf.mxu0
  %v5169 = vadd.f32 0.0, %v5168
  %v5170 = vpop.f32.mrf.mxu0
  %5171 = vmatprep.mubr.f32.mxu0 0.0
  %5172 = vmatmul.mubr.f32.gmra.mxu0 %v1188
  %v5173 = vpop.f32.mrf.mxu0
  %v5174 = vadd.f32 0.0, %v5173
  %v5175 = vpop.f32.mrf.mxu0
  %5176 = vdwg.mxu0
  %v5178 = vsel %vm1499, %v4612, 0
  %5180 = vmatprep.subr.mxu0 0.0
  %5181 = vmatpush1.msra.mxu0 0.0
  %5182 = vmatprep.subr.mxu0 0.0
  %5183 = vmatpush1.msra.mxu0 0.0
  %5184 = vmatprep.subr.mxu0 0.0
  %5185 = vmatpush1.msra.mxu0 0.0
  %5186 = vmatprep.subr.mxu0 0.0
  %5187 = vmatpush1.msra.mxu0 0.0
  %5188 = vmatprep.subr.mxu0 0.0
  %5189 = vmatpush1.msra.mxu0 0.0
  %5190 = vmatprep.subr.mxu0 0.0
  %5191 = vmatpush1.msra.mxu0 0.0
  %5192 = vmatprep.subr.mxu0 0.0
  %5193 = vmatpush1.msra.mxu0 0.0
  %5194 = vmatprep.subr.mxu0 0.0
  %5195 = vmatpush1.msra.mxu0 0.0
  %5196 = vmatprep.subr.mxu0 0.0
  %5197 = vmatpush1.msra.mxu0 0.0
  %5198 = vmatprep.subr.mxu0 0.0
  %5199 = vmatpush1.msra.mxu0 0.0
  %5200 = vmatprep.subr.mxu0 0.0
  %5201 = vmatpush1.msra.mxu0 0.0
  %5202 = vmatprep.subr.mxu0 0.0
  %5203 = vmatpush1.msra.mxu0 0.0
  %5204 = vmatprep.subr.mxu0 0.0
  %5205 = vmatpush1.msra.mxu0 0.0
  %5206 = vmatprep.subr.mxu0 0.0
  %5207 = vmatpush1.msra.mxu0 0.0
  %5208 = vmatprep.subr.mxu0 0.0
  %5209 = vmatpush1.msra.mxu0 0.0
  %5210 = vmatprep.subr.mxu0 0.0
  %5211 = vmatpush1.msra.mxu0 %v5178
  %5212 = vmatprep.subr.mxu0 0.0
  %5213 = vmatpush2.msra.mxu0 0.0
  %5214 = vmatprep.subr.mxu0 0.0
  %5215 = vmatpush2.msra.mxu0 0.0
  %5216 = vmatprep.subr.mxu0 0.0
  %5217 = vmatpush2.msra.mxu0 0.0
  %5218 = vmatprep.subr.mxu0 0.0
  %5219 = vmatpush2.msra.mxu0 0.0
  %5220 = vmatprep.subr.mxu0 0.0
  %5221 = vmatpush2.msra.mxu0 0.0
  %5222 = vmatprep.subr.mxu0 0.0
  %5223 = vmatpush2.msra.mxu0 0.0
  %5224 = vmatprep.subr.mxu0 0.0
  %5225 = vmatpush2.msra.mxu0 0.0
  %5226 = vmatprep.subr.mxu0 0.0
  %5227 = vmatpush2.msra.mxu0 0.0
  %5228 = vmatprep.subr.mxu0 0.0
  %5229 = vmatpush2.msra.mxu0 0.0
  %5230 = vmatprep.subr.mxu0 0.0
  %5231 = vmatpush2.msra.mxu0 0.0
  %5232 = vmatprep.subr.mxu0 0.0
  %5233 = vmatpush2.msra.mxu0 0.0
  %5234 = vmatprep.subr.mxu0 0.0
  %5235 = vmatpush2.msra.mxu0 0.0
  %5236 = vmatprep.subr.mxu0 0.0
  %5237 = vmatpush2.msra.mxu0 0.0
  %5238 = vmatprep.subr.mxu0 0.0
  %5239 = vmatpush2.msra.mxu0 0.0
  %5240 = vmatprep.subr.mxu0 0.0
  %5241 = vmatpush2.msra.mxu0 0.0
  %5242 = vmatprep.subr.mxu0 0.0
  %5243 = vmatpush2.msra.mxu0 0.0
  %5244 = vmatprep.mubr.f32.mxu0 0.0
  %5245 = vmatmul.mubr.f32.gmra.mxu0 %v1461
  %v5246 = vpop.f32.mrf.mxu0
  %v5247 = vadd.f32 0.0, %v5246
  %v5248 = vpop.f32.mrf.mxu0
  %5249 = vmatprep.mubr.f32.mxu0 0.0
  %5250 = vmatmul.mubr.f32.gmra.mxu0 %v1464
  %v5251 = vpop.f32.mrf.mxu0
  %v5252 = vadd.f32 0.0, %v5251
  %v5253 = vpop.f32.mrf.mxu0
  %5254 = vmatprep.mubr.f32.mxu0 0.0
  %5255 = vmatmul.mubr.f32.gmra.mxu0 %v1467
  %v5256 = vpop.f32.mrf.mxu0
  %v5257 = vadd.f32 0.0, %v5256
  %v5258 = vpop.f32.mrf.mxu0
  %5259 = vmatprep.mubr.f32.mxu0 0.0
  %5260 = vmatmul.mubr.f32.gmra.mxu0 %v1470
  %v5261 = vpop.f32.mrf.mxu0
  %v5262 = vadd.f32 0.0, %v5261
  %v5263 = vpop.f32.mrf.mxu0
  %5264 = vmatprep.mubr.f32.mxu0 0.0
  %5265 = vmatmul.mubr.f32.gmra.mxu0 %v1473
  %v5266 = vpop.f32.mrf.mxu0
  %v5267 = vadd.f32 0.0, %v5266
  %v5268 = vpop.f32.mrf.mxu0
  %5269 = vmatprep.mubr.f32.mxu0 0.0
  %5270 = vmatmul.mubr.f32.gmra.mxu0 %v1476
  %v5271 = vpop.f32.mrf.mxu0
  %v5272 = vadd.f32 0.0, %v5271
  %v5273 = vpop.f32.mrf.mxu0
  %5274 = vmatprep.mubr.f32.mxu0 0.0
  %5275 = vmatmul.mubr.f32.gmra.mxu0 %v1479
  %v5276 = vpop.f32.mrf.mxu0
  %v5277 = vadd.f32 0.0, %v5276
  %v5278 = vpop.f32.mrf.mxu0
  %5279 = vmatprep.mubr.f32.mxu0 0.0
  %5280 = vmatmul.mubr.f32.gmra.mxu0 %v1482
  %v5281 = vpop.f32.mrf.mxu0
  %v5282 = vadd.f32 0.0, %v5281
  %v5283 = vpop.f32.mrf.mxu0
  %5284 = vmatprep.mubr.f32.mxu0 0.0
  %5285 = vmatmul.mubr.f32.gmra.mxu0 %v1485
  %v5286 = vpop.f32.mrf.mxu0
  %v5287 = vadd.f32 0.0, %v5286
  %v5288 = vpop.f32.mrf.mxu0
  %5289 = vmatprep.mubr.f32.mxu0 0.0
  %5290 = vmatmul.mubr.f32.gmra.mxu0 %v1488
  %v5291 = vpop.f32.mrf.mxu0
  %v5292 = vadd.f32 0.0, %v5291
  %v5293 = vpop.f32.mrf.mxu0
  %5294 = vmatprep.mubr.f32.mxu0 0.0
  %5295 = vmatmul.mubr.f32.gmra.mxu0 %v1491
  %v5296 = vpop.f32.mrf.mxu0
  %v5297 = vadd.f32 0.0, %v5296
  %v5298 = vpop.f32.mrf.mxu0
  %5299 = vmatprep.mubr.f32.mxu0 0.0
  %5300 = vmatmul.mubr.f32.gmra.mxu0 %v1494
  %v5301 = vpop.f32.mrf.mxu0
  %v5302 = vadd.f32 0.0, %v5301
  %v5303 = vpop.f32.mrf.mxu0
  %5304 = vmatprep.mubr.f32.mxu0 0.0
  %5305 = vmatmul.mubr.f32.gmra.mxu0 %v1497
  %v5306 = vpop.f32.mrf.mxu0
  %v5307 = vadd.f32 0.0, %v5306
  %v5308 = vpop.f32.mrf.mxu0
  %5309 = vdwg.mxu0
  %v5310 = vmul.f32 %v4695, %v4977
  %v5311 = vmul.f32 %v4700, %v4982
  %v5312 = vmul.f32 %v4705, %v4987
  %v5313 = vmul.f32 %v4710, %v4992
  %v5314 = vmul.f32 %v4715, %v4997
  %v5315 = vmul.f32 %v4720, %v5002
  %v5316 = vmul.f32 %v4725, %v5007
  %v5317 = vmul.f32 %v4730, %v5012
  %v5318 = vmul.f32 %v4735, %v5017
  %v5319 = vmul.f32 %v4740, %v5022
  %v5320 = vmul.f32 %v4745, %v5027
  %v5321 = vmul.f32 %v4750, %v5032
  %v5322 = vmul.f32 %v4755, %v5037
  %v5323 = vmul.f32 %v4838, %v5247
  %v5324 = vmul.f32 %v4843, %v5252
  %v5325 = vmul.f32 %v4848, %v5257
  %v5326 = vmul.f32 %v4853, %v5262
  %v5327 = vmul.f32 %v4858, %v5267
  %v5328 = vmul.f32 %v4863, %v5272
  %v5329 = vmul.f32 %v4868, %v5277
  %v5330 = vmul.f32 %v4873, %v5282
  %v5331 = vmul.f32 %v4878, %v5287
  %v5332 = vmul.f32 %v4883, %v5292
  %v5333 = vmul.f32 %v4888, %v5297
  %v5334 = vmul.f32 %v4893, %v5302
  %v5335 = vmul.f32 %v4898, %v5307
  %v5337 = vsel %vm375, %v5323, 0
  %v5340 = vsel %vm375, %v5324, 0
  %v5343 = vsel %vm375, %v5325, 0
  %v5346 = vsel %vm375, %v5326, 0
  %v5349 = vsel %vm375, %v5327, 0
  %v5352 = vsel %vm375, %v5328, 0
  %v5355 = vsel %vm375, %v5329, 0
  %v5358 = vsel %vm375, %v5330, 0
  %v5361 = vsel %vm375, %v5331, 0
  %v5364 = vsel %vm375, %v5332, 0
  %v5367 = vsel %vm375, %v5333, 0
  %v5370 = vsel %vm375, %v5334, 0
  %v5373 = vsel %vm375, %v5335, 0
  %5375 = vmatprep.subr.mxu0 0.0
  %5376 = vmatpush1.msra.mxu0 0.0
  %5377 = vmatprep.subr.mxu0 0.0
  %5378 = vmatpush1.msra.mxu0 0.0
  %5379 = vmatprep.subr.mxu0 0.0
  %5380 = vmatpush1.msra.mxu0 0.0
  %5381 = vmatprep.subr.mxu0 0.0
  %5382 = vmatpush1.msra.mxu0 0.0
  %5383 = vmatprep.subr.mxu0 0.0
  %5384 = vmatpush1.msra.mxu0 0.0
  %5385 = vmatprep.subr.mxu0 0.0
  %5386 = vmatpush1.msra.mxu0 0.0
  %5387 = vmatprep.subr.mxu0 0.0
  %5388 = vmatpush1.msra.mxu0 0.0
  %5389 = vmatprep.subr.mxu0 0.0
  %5390 = vmatpush1.msra.mxu0 0.0
  %5391 = vmatprep.subr.mxu0 0.0
  %5392 = vmatpush1.msra.mxu0 0.0
  %5393 = vmatprep.subr.mxu0 0.0
  %5394 = vmatpush1.msra.mxu0 0.0
  %5395 = vmatprep.subr.mxu0 0.0
  %5396 = vmatpush1.msra.mxu0 0.0
  %5397 = vmatprep.subr.mxu0 0.0
  %5398 = vmatpush1.msra.mxu0 0.0
  %5399 = vmatprep.subr.mxu0 0.0
  %5400 = vmatpush1.msra.mxu0 %v349
  %5401 = vmatprep.subr.mxu0 0.0
  %5402 = vmatpush1.msra.mxu0 %v348
  %5403 = vmatprep.subr.mxu0 0.0
  %5404 = vmatpush1.msra.mxu0 %v347
  %5405 = vmatprep.subr.mxu0 0.0
  %5406 = vmatpush1.msra.mxu0 %v346
  %5407 = vmatprep.subr.mxu0 0.0
  %5408 = vmatpush2.msra.mxu0 0.0
  %5409 = vmatprep.subr.mxu0 0.0
  %5410 = vmatpush2.msra.mxu0 0.0
  %5411 = vmatprep.subr.mxu0 0.0
  %5412 = vmatpush2.msra.mxu0 0.0
  %5413 = vmatprep.subr.mxu0 0.0
  %5414 = vmatpush2.msra.mxu0 0.0
  %5415 = vmatprep.subr.mxu0 0.0
  %5416 = vmatpush2.msra.mxu0 0.0
  %5417 = vmatprep.subr.mxu0 0.0
  %5418 = vmatpush2.msra.mxu0 0.0
  %5419 = vmatprep.subr.mxu0 0.0
  %5420 = vmatpush2.msra.mxu0 0.0
  %5421 = vmatprep.subr.mxu0 0.0
  %5422 = vmatpush2.msra.mxu0 0.0
  %5423 = vmatprep.subr.mxu0 0.0
  %5424 = vmatpush2.msra.mxu0 0.0
  %5425 = vmatprep.subr.mxu0 0.0
  %5426 = vmatpush2.msra.mxu0 0.0
  %5427 = vmatprep.subr.mxu0 0.0
  %5428 = vmatpush2.msra.mxu0 0.0
  %5429 = vmatprep.subr.mxu0 0.0
  %5430 = vmatpush2.msra.mxu0 0.0
  %5431 = vmatprep.subr.mxu0 0.0
  %5432 = vmatpush2.msra.mxu0 0.0
  %5433 = vmatprep.subr.mxu0 0.0
  %5434 = vmatpush2.msra.mxu0 0.0
  %5435 = vmatprep.subr.mxu0 0.0
  %5436 = vmatpush2.msra.mxu0 0.0
  %5437 = vmatprep.subr.mxu0 0.0
  %5438 = vmatpush2.msra.mxu0 0.0
  %5439 = vmatprep.mubr.f32.mxu0 0.0
  %5440 = vmatmul.mubr.f32.gmra.mxu0 %v5337
  %v5441 = vpop.f32.mrf.mxu0
  %v5442 = vadd.f32 0.0, %v5441
  %v5443 = vpop.f32.mrf.mxu0
  %5444 = vmatprep.mubr.f32.mxu0 0.0
  %5445 = vmatmul.mubr.f32.gmra.mxu0 %v5340
  %v5446 = vpop.f32.mrf.mxu0
  %v5447 = vadd.f32 0.0, %v5446
  %v5448 = vpop.f32.mrf.mxu0
  %5449 = vmatprep.mubr.f32.mxu0 0.0
  %5450 = vmatmul.mubr.f32.gmra.mxu0 %v5343
  %v5451 = vpop.f32.mrf.mxu0
  %v5452 = vadd.f32 0.0, %v5451
  %v5453 = vpop.f32.mrf.mxu0
  %5454 = vmatprep.mubr.f32.mxu0 0.0
  %5455 = vmatmul.mubr.f32.gmra.mxu0 %v5346
  %v5456 = vpop.f32.mrf.mxu0
  %v5457 = vadd.f32 0.0, %v5456
  %v5458 = vpop.f32.mrf.mxu0
  %5459 = vmatprep.mubr.f32.mxu0 0.0
  %5460 = vmatmul.mubr.f32.gmra.mxu0 %v5349
  %v5461 = vpop.f32.mrf.mxu0
  %v5462 = vadd.f32 0.0, %v5461
  %v5463 = vpop.f32.mrf.mxu0
  %5464 = vmatprep.mubr.f32.mxu0 0.0
  %5465 = vmatmul.mubr.f32.gmra.mxu0 %v5352
  %v5466 = vpop.f32.mrf.mxu0
  %v5467 = vadd.f32 0.0, %v5466
  %v5468 = vpop.f32.mrf.mxu0
  %5469 = vmatprep.mubr.f32.mxu0 0.0
  %5470 = vmatmul.mubr.f32.gmra.mxu0 %v5355
  %v5471 = vpop.f32.mrf.mxu0
  %v5472 = vadd.f32 0.0, %v5471
  %v5473 = vpop.f32.mrf.mxu0
  %5474 = vmatprep.mubr.f32.mxu0 0.0
  %5475 = vmatmul.mubr.f32.gmra.mxu0 %v5358
  %v5476 = vpop.f32.mrf.mxu0
  %v5477 = vadd.f32 0.0, %v5476
  %v5478 = vpop.f32.mrf.mxu0
  %5479 = vmatprep.mubr.f32.mxu0 0.0
  %5480 = vmatmul.mubr.f32.gmra.mxu0 %v5361
  %v5481 = vpop.f32.mrf.mxu0
  %v5482 = vadd.f32 0.0, %v5481
  %v5483 = vpop.f32.mrf.mxu0
  %5484 = vmatprep.mubr.f32.mxu0 0.0
  %5485 = vmatmul.mubr.f32.gmra.mxu0 %v5364
  %v5486 = vpop.f32.mrf.mxu0
  %v5487 = vadd.f32 0.0, %v5486
  %v5488 = vpop.f32.mrf.mxu0
  %5489 = vmatprep.mubr.f32.mxu0 0.0
  %5490 = vmatmul.mubr.f32.gmra.mxu0 %v5367
  %v5491 = vpop.f32.mrf.mxu0
  %v5492 = vadd.f32 0.0, %v5491
  %v5493 = vpop.f32.mrf.mxu0
  %5494 = vmatprep.mubr.f32.mxu0 0.0
  %5495 = vmatmul.mubr.f32.gmra.mxu0 %v5370
  %v5496 = vpop.f32.mrf.mxu0
  %v5497 = vadd.f32 0.0, %v5496
  %v5498 = vpop.f32.mrf.mxu0
  %5499 = vmatprep.mubr.f32.mxu0 0.0
  %5500 = vmatmul.mubr.f32.gmra.mxu0 %v5373
  %v5501 = vpop.f32.mrf.mxu0
  %v5502 = vadd.f32 0.0, %v5501
  %v5503 = vpop.f32.mrf.mxu0
  %5504 = vdwg.mxu0
  %v5506 = vsel %vm1868, %v5502, 0
  %5508 = vmatprep.subr.mxu0 0.0
  %5509 = vmatpush1.msra.mxu0 0.0
  %5510 = vmatprep.subr.mxu0 0.0
  %5511 = vmatpush1.msra.mxu0 0.0
  %5512 = vmatprep.subr.mxu0 0.0
  %5513 = vmatpush1.msra.mxu0 0.0
  %5514 = vmatprep.subr.mxu0 0.0
  %5515 = vmatpush1.msra.mxu0 %v5506
  %5516 = vmatprep.subr.mxu0 0.0
  %5517 = vmatpush1.msra.mxu0 %v5497
  %5518 = vmatprep.subr.mxu0 0.0
  %5519 = vmatpush1.msra.mxu0 %v5492
  %5520 = vmatprep.subr.mxu0 0.0
  %5521 = vmatpush1.msra.mxu0 %v5487
  %5522 = vmatprep.subr.mxu0 0.0
  %5523 = vmatpush1.msra.mxu0 %v5482
  %5524 = vmatprep.subr.mxu0 0.0
  %5525 = vmatpush1.msra.mxu0 %v5477
  %5526 = vmatprep.subr.mxu0 0.0
  %5527 = vmatpush1.msra.mxu0 %v5472
  %5528 = vmatprep.subr.mxu0 0.0
  %5529 = vmatpush1.msra.mxu0 %v5467
  %5530 = vmatprep.subr.mxu0 0.0
  %5531 = vmatpush1.msra.mxu0 %v5462
  %5532 = vmatprep.subr.mxu0 0.0
  %5533 = vmatpush1.msra.mxu0 %v5457
  %5534 = vmatprep.subr.mxu0 0.0
  %5535 = vmatpush1.msra.mxu0 %v5452
  %5536 = vmatprep.subr.mxu0 0.0
  %5537 = vmatpush1.msra.mxu0 %v5447
  %5538 = vmatprep.subr.mxu0 0.0
  %5539 = vmatpush1.msra.mxu0 %v5442
  %5540 = vmatprep.subr.mxu0 0.0
  %5541 = vmatpush2.msra.mxu0 0.0
  %5542 = vmatprep.subr.mxu0 0.0
  %5543 = vmatpush2.msra.mxu0 0.0
  %5544 = vmatprep.subr.mxu0 0.0
  %5545 = vmatpush2.msra.mxu0 0.0
  %5546 = vmatprep.subr.mxu0 0.0
  %5547 = vmatpush2.msra.mxu0 0.0
  %5548 = vmatprep.subr.mxu0 0.0
  %5549 = vmatpush2.msra.mxu0 0.0
  %5550 = vmatprep.subr.mxu0 0.0
  %5551 = vmatpush2.msra.mxu0 0.0
  %5552 = vmatprep.subr.mxu0 0.0
  %5553 = vmatpush2.msra.mxu0 0.0
  %5554 = vmatprep.subr.mxu0 0.0
  %5555 = vmatpush2.msra.mxu0 0.0
  %5556 = vmatprep.subr.mxu0 0.0
  %5557 = vmatpush2.msra.mxu0 0.0
  %5558 = vmatprep.subr.mxu0 0.0
  %5559 = vmatpush2.msra.mxu0 0.0
  %5560 = vmatprep.subr.mxu0 0.0
  %5561 = vmatpush2.msra.mxu0 0.0
  %5562 = vmatprep.subr.mxu0 0.0
  %5563 = vmatpush2.msra.mxu0 0.0
  %5564 = vmatprep.subr.mxu0 0.0
  %5565 = vmatpush2.msra.mxu0 0.0
  %5566 = vmatprep.subr.mxu0 0.0
  %5567 = vmatpush2.msra.mxu0 0.0
  %5568 = vmatprep.subr.mxu0 0.0
  %5569 = vmatpush2.msra.mxu0 0.0
  %5570 = vmatprep.subr.mxu0 0.0
  %5571 = vmatpush2.msra.mxu0 0.0
  %5572 = vmatprep.mubr.f32.mxu0 0.0
  %5573 = vmatmul.mubr.f32.gmra.mxu0 %v1830
  %v5574 = vpop.f32.mrf.mxu0
  %v5575 = vadd.f32 0.0, %v5574
  %v5576 = vpop.f32.mrf.mxu0
  %5577 = vmatprep.mubr.f32.mxu0 0.0
  %5578 = vmatmul.mubr.f32.gmra.mxu0 %v1833
  %v5579 = vpop.f32.mrf.mxu0
  %v5580 = vadd.f32 0.0, %v5579
  %v5581 = vpop.f32.mrf.mxu0
  %5582 = vmatprep.mubr.f32.mxu0 0.0
  %5583 = vmatmul.mubr.f32.gmra.mxu0 %v1836
  %v5584 = vpop.f32.mrf.mxu0
  %v5585 = vadd.f32 0.0, %v5584
  %v5586 = vpop.f32.mrf.mxu0
  %5587 = vmatprep.mubr.f32.mxu0 0.0
  %5588 = vmatmul.mubr.f32.gmra.mxu0 %v1839
  %v5589 = vpop.f32.mrf.mxu0
  %v5590 = vadd.f32 0.0, %v5589
  %v5591 = vpop.f32.mrf.mxu0
  %5592 = vmatprep.mubr.f32.mxu0 0.0
  %5593 = vmatmul.mubr.f32.gmra.mxu0 %v1842
  %v5594 = vpop.f32.mrf.mxu0
  %v5595 = vadd.f32 0.0, %v5594
  %v5596 = vpop.f32.mrf.mxu0
  %5597 = vmatprep.mubr.f32.mxu0 0.0
  %5598 = vmatmul.mubr.f32.gmra.mxu0 %v1845
  %v5599 = vpop.f32.mrf.mxu0
  %v5600 = vadd.f32 0.0, %v5599
  %v5601 = vpop.f32.mrf.mxu0
  %5602 = vmatprep.mubr.f32.mxu0 0.0
  %5603 = vmatmul.mubr.f32.gmra.mxu0 %v1848
  %v5604 = vpop.f32.mrf.mxu0
  %v5605 = vadd.f32 0.0, %v5604
  %v5606 = vpop.f32.mrf.mxu0
  %5607 = vmatprep.mubr.f32.mxu0 0.0
  %5608 = vmatmul.mubr.f32.gmra.mxu0 %v1851
  %v5609 = vpop.f32.mrf.mxu0
  %v5610 = vadd.f32 0.0, %v5609
  %v5611 = vpop.f32.mrf.mxu0
  %5612 = vmatprep.mubr.f32.mxu0 0.0
  %5613 = vmatmul.mubr.f32.gmra.mxu0 %v1854
  %v5614 = vpop.f32.mrf.mxu0
  %v5615 = vadd.f32 0.0, %v5614
  %v5616 = vpop.f32.mrf.mxu0
  %5617 = vmatprep.mubr.f32.mxu0 0.0
  %5618 = vmatmul.mubr.f32.gmra.mxu0 %v1857
  %v5619 = vpop.f32.mrf.mxu0
  %v5620 = vadd.f32 0.0, %v5619
  %v5621 = vpop.f32.mrf.mxu0
  %5622 = vmatprep.mubr.f32.mxu0 0.0
  %5623 = vmatmul.mubr.f32.gmra.mxu0 %v1860
  %v5624 = vpop.f32.mrf.mxu0
  %v5625 = vadd.f32 0.0, %v5624
  %v5626 = vpop.f32.mrf.mxu0
  %5627 = vmatprep.mubr.f32.mxu0 0.0
  %5628 = vmatmul.mubr.f32.gmra.mxu0 %v1863
  %v5629 = vpop.f32.mrf.mxu0
  %v5630 = vadd.f32 0.0, %v5629
  %v5631 = vpop.f32.mrf.mxu0
  %5632 = vmatprep.mubr.f32.mxu0 0.0
  %5633 = vmatmul.mubr.f32.gmra.mxu0 %v1866
  %v5634 = vpop.f32.mrf.mxu0
  %v5635 = vadd.f32 0.0, %v5634
  %v5636 = vpop.f32.mrf.mxu0
  %5637 = vdwg.mxu0
  %v5639 = vsel %vm375, %v5310, 0
  %v5642 = vsel %vm375, %v5311, 0
  %v5645 = vsel %vm375, %v5312, 0
  %v5648 = vsel %vm375, %v5313, 0
  %v5651 = vsel %vm375, %v5314, 0
  %v5654 = vsel %vm375, %v5315, 0
  %v5657 = vsel %vm375, %v5316, 0
  %v5660 = vsel %vm375, %v5317, 0
  %v5663 = vsel %vm375, %v5318, 0
  %v5666 = vsel %vm375, %v5319, 0
  %v5669 = vsel %vm375, %v5320, 0
  %v5672 = vsel %vm375, %v5321, 0
  %v5675 = vsel %vm375, %v5322, 0
  %5677 = vmatprep.subr.mxu0 0.0
  %5678 = vmatpush1.msra.mxu0 0.0
  %5679 = vmatprep.subr.mxu0 0.0
  %5680 = vmatpush1.msra.mxu0 0.0
  %5681 = vmatprep.subr.mxu0 0.0
  %5682 = vmatpush1.msra.mxu0 0.0
  %5683 = vmatprep.subr.mxu0 0.0
  %5684 = vmatpush1.msra.mxu0 0.0
  %5685 = vmatprep.subr.mxu0 0.0
  %5686 = vmatpush1.msra.mxu0 0.0
  %5687 = vmatprep.subr.mxu0 0.0
  %5688 = vmatpush1.msra.mxu0 0.0
  %5689 = vmatprep.subr.mxu0 0.0
  %5690 = vmatpush1.msra.mxu0 0.0
  %5691 = vmatprep.subr.mxu0 0.0
  %5692 = vmatpush1.msra.mxu0 0.0
  %5693 = vmatprep.subr.mxu0 0.0
  %5694 = vmatpush1.msra.mxu0 0.0
  %5695 = vmatprep.subr.mxu0 0.0
  %5696 = vmatpush1.msra.mxu0 0.0
  %5697 = vmatprep.subr.mxu0 0.0
  %5698 = vmatpush1.msra.mxu0 0.0
  %5699 = vmatprep.subr.mxu0 0.0
  %5700 = vmatpush1.msra.mxu0 0.0
  %5701 = vmatprep.subr.mxu0 0.0
  %5702 = vmatpush1.msra.mxu0 %v349
  %5703 = vmatprep.subr.mxu0 0.0
  %5704 = vmatpush1.msra.mxu0 %v348
  %5705 = vmatprep.subr.mxu0 0.0
  %5706 = vmatpush1.msra.mxu0 %v347
  %5707 = vmatprep.subr.mxu0 0.0
  %5708 = vmatpush1.msra.mxu0 %v346
  %5709 = vmatprep.subr.mxu0 0.0
  %5710 = vmatpush2.msra.mxu0 0.0
  %5711 = vmatprep.subr.mxu0 0.0
  %5712 = vmatpush2.msra.mxu0 0.0
  %5713 = vmatprep.subr.mxu0 0.0
  %5714 = vmatpush2.msra.mxu0 0.0
  %5715 = vmatprep.subr.mxu0 0.0
  %5716 = vmatpush2.msra.mxu0 0.0
  %5717 = vmatprep.subr.mxu0 0.0
  %5718 = vmatpush2.msra.mxu0 0.0
  %5719 = vmatprep.subr.mxu0 0.0
  %5720 = vmatpush2.msra.mxu0 0.0
  %5721 = vmatprep.subr.mxu0 0.0
  %5722 = vmatpush2.msra.mxu0 0.0
  %5723 = vmatprep.subr.mxu0 0.0
  %5724 = vmatpush2.msra.mxu0 0.0
  %5725 = vmatprep.subr.mxu0 0.0
  %5726 = vmatpush2.msra.mxu0 0.0
  %5727 = vmatprep.subr.mxu0 0.0
  %5728 = vmatpush2.msra.mxu0 0.0
  %5729 = vmatprep.subr.mxu0 0.0
  %5730 = vmatpush2.msra.mxu0 0.0
  %5731 = vmatprep.subr.mxu0 0.0
  %5732 = vmatpush2.msra.mxu0 0.0
  %5733 = vmatprep.subr.mxu0 0.0
  %5734 = vmatpush2.msra.mxu0 0.0
  %5735 = vmatprep.subr.mxu0 0.0
  %5736 = vmatpush2.msra.mxu0 0.0
  %5737 = vmatprep.subr.mxu0 0.0
  %5738 = vmatpush2.msra.mxu0 0.0
  %5739 = vmatprep.subr.mxu0 0.0
  %5740 = vmatpush2.msra.mxu0 0.0
  %5741 = vmatprep.mubr.f32.mxu0 0.0
  %5742 = vmatmul.mubr.f32.gmra.mxu0 %v5639
  %v5743 = vpop.f32.mrf.mxu0
  %v5744 = vadd.f32 %v5575, %v5743
  %v5745 = vpop.f32.mrf.mxu0
  %5746 = vmatprep.mubr.f32.mxu0 0.0
  %5747 = vmatmul.mubr.f32.gmra.mxu0 %v5642
  %v5748 = vpop.f32.mrf.mxu0
  %v5749 = vadd.f32 %v5580, %v5748
  %v5750 = vpop.f32.mrf.mxu0
  %5751 = vmatprep.mubr.f32.mxu0 0.0
  %5752 = vmatmul.mubr.f32.gmra.mxu0 %v5645
  %v5753 = vpop.f32.mrf.mxu0
  %v5754 = vadd.f32 %v5585, %v5753
  %v5755 = vpop.f32.mrf.mxu0
  %5756 = vmatprep.mubr.f32.mxu0 0.0
  %5757 = vmatmul.mubr.f32.gmra.mxu0 %v5648
  %v5758 = vpop.f32.mrf.mxu0
  %v5759 = vadd.f32 %v5590, %v5758
  %v5760 = vpop.f32.mrf.mxu0
  %5761 = vmatprep.mubr.f32.mxu0 0.0
  %5762 = vmatmul.mubr.f32.gmra.mxu0 %v5651
  %v5763 = vpop.f32.mrf.mxu0
  %v5764 = vadd.f32 %v5595, %v5763
  %v5765 = vpop.f32.mrf.mxu0
  %5766 = vmatprep.mubr.f32.mxu0 0.0
  %5767 = vmatmul.mubr.f32.gmra.mxu0 %v5654
  %v5768 = vpop.f32.mrf.mxu0
  %v5769 = vadd.f32 %v5600, %v5768
  %v5770 = vpop.f32.mrf.mxu0
  %5771 = vmatprep.mubr.f32.mxu0 0.0
  %5772 = vmatmul.mubr.f32.gmra.mxu0 %v5657
  %v5773 = vpop.f32.mrf.mxu0
  %v5774 = vadd.f32 %v5605, %v5773
  %v5775 = vpop.f32.mrf.mxu0
  %5776 = vmatprep.mubr.f32.mxu0 0.0
  %5777 = vmatmul.mubr.f32.gmra.mxu0 %v5660
  %v5778 = vpop.f32.mrf.mxu0
  %v5779 = vadd.f32 %v5610, %v5778
  %v5780 = vpop.f32.mrf.mxu0
  %5781 = vmatprep.mubr.f32.mxu0 0.0
  %5782 = vmatmul.mubr.f32.gmra.mxu0 %v5663
  %v5783 = vpop.f32.mrf.mxu0
  %v5784 = vadd.f32 %v5615, %v5783
  %v5785 = vpop.f32.mrf.mxu0
  %5786 = vmatprep.mubr.f32.mxu0 0.0
  %5787 = vmatmul.mubr.f32.gmra.mxu0 %v5666
  %v5788 = vpop.f32.mrf.mxu0
  %v5789 = vadd.f32 %v5620, %v5788
  %v5790 = vpop.f32.mrf.mxu0
  %5791 = vmatprep.mubr.f32.mxu0 0.0
  %5792 = vmatmul.mubr.f32.gmra.mxu0 %v5669
  %v5793 = vpop.f32.mrf.mxu0
  %v5794 = vadd.f32 %v5625, %v5793
  %v5795 = vpop.f32.mrf.mxu0
  %5796 = vmatprep.mubr.f32.mxu0 0.0
  %5797 = vmatmul.mubr.f32.gmra.mxu0 %v5672
  %v5798 = vpop.f32.mrf.mxu0
  %v5799 = vadd.f32 %v5630, %v5798
  %v5800 = vpop.f32.mrf.mxu0
  %5801 = vmatprep.mubr.f32.mxu0 0.0
  %5802 = vmatmul.mubr.f32.gmra.mxu0 %v5675
  %v5803 = vpop.f32.mrf.mxu0
  %v5804 = vadd.f32 %v5635, %v5803
  %v5805 = vpop.f32.mrf.mxu0
  %5806 = vdwg.mxu0
  %v5807 = vmul.f32 %v5744, 0.17677669
  %v5808 = vmul.f32 %v5749, 0.17677669
  %v5809 = vmul.f32 %v5754, 0.17677669
  %v5810 = vmul.f32 %v5759, 0.17677669
  %v5811 = vmul.f32 %v5764, 0.17677669
  %v5812 = vmul.f32 %v5769, 0.17677669
  %v5813 = vmul.f32 %v5774, 0.17677669
  %v5814 = vmul.f32 %v5779, 0.17677669
  %v5815 = vmul.f32 %v5784, 0.17677669
  %v5816 = vmul.f32 %v5789, 0.17677669
  %v5817 = vmul.f32 %v5794, 0.17677669
  %v5818 = vmul.f32 %v5799, 0.17677669
  %v5819 = vmul.f32 %v5804, 0.17677669
  %v5820 = vsel %vm2184, %v5807, -inf
  %5821 = vmax.xlane.f32.xlu0 %v5820
  %v5822 = vpop.xlane.xlu0 %5821
  %v5823 = vsel %vm2184, %v5808, -inf
  %5824 = vmax.xlane.f32.xlu0 %v5823
  %v5825 = vpop.xlane.xlu0 %5824
  %v5826 = vsel %vm2184, %v5809, -inf
  %5827 = vmax.xlane.f32.xlu0 %v5826
  %v5828 = vpop.xlane.xlu0 %5827
  %v5829 = vsel %vm2184, %v5810, -inf
  %5830 = vmax.xlane.f32.xlu0 %v5829
  %v5831 = vpop.xlane.xlu0 %5830
  %v5832 = vsel %vm2184, %v5811, -inf
  %5833 = vmax.xlane.f32.xlu0 %v5832
  %v5834 = vpop.xlane.xlu0 %5833
  %v5835 = vsel %vm2184, %v5812, -inf
  %5836 = vmax.xlane.f32.xlu0 %v5835
  %v5837 = vpop.xlane.xlu0 %5836
  %v5838 = vsel %vm2184, %v5813, -inf
  %5839 = vmax.xlane.f32.xlu0 %v5838
  %v5840 = vpop.xlane.xlu0 %5839
  %v5841 = vsel %vm2184, %v5814, -inf
  %5842 = vmax.xlane.f32.xlu0 %v5841
  %v5843 = vpop.xlane.xlu0 %5842
  %v5844 = vsel %vm2184, %v5815, -inf
  %5845 = vmax.xlane.f32.xlu0 %v5844
  %v5846 = vpop.xlane.xlu0 %5845
  %v5847 = vsel %vm2184, %v5816, -inf
  %5848 = vmax.xlane.f32.xlu0 %v5847
  %v5849 = vpop.xlane.xlu0 %5848
  %v5850 = vsel %vm2184, %v5817, -inf
  %5851 = vmax.xlane.f32.xlu0 %v5850
  %v5852 = vpop.xlane.xlu0 %5851
  %v5853 = vsel %vm2184, %v5818, -inf
  %5854 = vmax.xlane.f32.xlu0 %v5853
  %v5855 = vpop.xlane.xlu0 %5854
  %v5856 = vsel %vm2221, %v5819, -inf
  %5857 = vmax.xlane.f32.xlu0 %v5856
  %v5858 = vpop.xlane.xlu0 %5857
  %v5859 = vmax.f32 %v5822, %v5834
  %v5860 = vmax.f32 %v5825, %v5837
  %v5861 = vmax.f32 %v5828, %v5840
  %v5862 = vmax.f32 %v5831, %v5843
  %v5863 = vmax.f32 %v5859, %v5846
  %v5864 = vmax.f32 %v5860, %v5849
  %v5865 = vmax.f32 %v5861, %v5852
  %v5866 = vmax.f32 %v5862, %v5855
  %v5867 = vsel %vm1868, %v5858, -inf
  %v5868 = vmax.f32 %v5863, %v5867
  %v5869 = vmax.f32 %v5868, %v5864
  %v5870 = vmax.f32 %v5865, %v5866
  %v5871 = vmax.f32 %v5869, %v5870
  %v5872 = vrot.slane %v5871, 4
  %v5873 = vmax.f32 %v5871, %v5872
  %v5874 = vrot.slane %v5873, 2
  %v5875 = vmax.f32 %v5873, %v5874
  %v5876 = vrot.slane %v5875, 1
  %v5877 = vmax.f32 %v5875, %v5876
  %v5878 = vsub.f32 %v5807, %v5877
  %v5879 = vsub.f32 %v5808, %v5877
  %v5880 = vsub.f32 %v5809, %v5877
  %v5881 = vsub.f32 %v5810, %v5877
  %v5882 = vsub.f32 %v5811, %v5877
  %v5883 = vsub.f32 %v5812, %v5877
  %v5884 = vsub.f32 %v5813, %v5877
  %v5885 = vsub.f32 %v5814, %v5877
  %v5886 = vsub.f32 %v5815, %v5877
  %v5887 = vsub.f32 %v5816, %v5877
  %v5888 = vsub.f32 %v5817, %v5877
  %v5889 = vsub.f32 %v5818, %v5877
  %v5890 = vsub.f32 %v5819, %v5877
  %v5891 = vmul.f32 %v5878, 1.442695
  %v5892 = vpow.pop %v5891
  %v5893 = vmul.f32 %v5879, 1.442695
  %v5894 = vpow.pop %v5893
  %v5895 = vmul.f32 %v5880, 1.442695
  %v5896 = vpow.pop %v5895
  %v5897 = vmul.f32 %v5881, 1.442695
  %v5898 = vpow.pop %v5897
  %v5899 = vmul.f32 %v5882, 1.442695
  %v5900 = vpow.pop %v5899
  %v5901 = vmul.f32 %v5883, 1.442695
  %v5902 = vpow.pop %v5901
  %v5903 = vmul.f32 %v5884, 1.442695
  %v5904 = vpow.pop %v5903
  %v5905 = vmul.f32 %v5885, 1.442695
  %v5906 = vpow.pop %v5905
  %v5907 = vmul.f32 %v5886, 1.442695
  %v5908 = vpow.pop %v5907
  %v5909 = vmul.f32 %v5887, 1.442695
  %v5910 = vpow.pop %v5909
  %v5911 = vmul.f32 %v5888, 1.442695
  %v5912 = vpow.pop %v5911
  %v5913 = vmul.f32 %v5889, 1.442695
  %v5914 = vpow.pop %v5913
  %v5915 = vmul.f32 %v5890, 1.442695
  %v5916 = vpow.pop %v5915
  %v5918 = vsel %vm1868, %v5916, 0
  %5920 = vmatprep.subr.mxu0 0.0
  %5921 = vmatpush1.msra.mxu0 0.0
  %5922 = vmatprep.subr.mxu0 0.0
  %5923 = vmatpush1.msra.mxu0 0.0
  %5924 = vmatprep.subr.mxu0 0.0
  %5925 = vmatpush1.msra.mxu0 0.0
  %5926 = vmatprep.subr.mxu0 0.0
  %5927 = vmatpush1.msra.mxu0 %v5918
  %5928 = vmatprep.subr.mxu0 0.0
  %5929 = vmatpush1.msra.mxu0 %v5914
  %5930 = vmatprep.subr.mxu0 0.0
  %5931 = vmatpush1.msra.mxu0 %v5912
  %5932 = vmatprep.subr.mxu0 0.0
  %5933 = vmatpush1.msra.mxu0 %v5910
  %5934 = vmatprep.subr.mxu0 0.0
  %5935 = vmatpush1.msra.mxu0 %v5908
  %5936 = vmatprep.subr.mxu0 0.0
  %5937 = vmatpush1.msra.mxu0 %v5906
  %5938 = vmatprep.subr.mxu0 0.0
  %5939 = vmatpush1.msra.mxu0 %v5904
  %5940 = vmatprep.subr.mxu0 0.0
  %5941 = vmatpush1.msra.mxu0 %v5902
  %5942 = vmatprep.subr.mxu0 0.0
  %5943 = vmatpush1.msra.mxu0 %v5900
  %5944 = vmatprep.subr.mxu0 0.0
  %5945 = vmatpush1.msra.mxu0 %v5898
  %5946 = vmatprep.subr.mxu0 0.0
  %5947 = vmatpush1.msra.mxu0 %v5896
  %5948 = vmatprep.subr.mxu0 0.0
  %5949 = vmatpush1.msra.mxu0 %v5894
  %5950 = vmatprep.subr.mxu0 0.0
  %5951 = vmatpush1.msra.mxu0 %v5892
  %5952 = vmatprep.subr.mxu0 0.0
  %5953 = vmatpush2.msra.mxu0 0.0
  %5954 = vmatprep.subr.mxu0 0.0
  %5955 = vmatpush2.msra.mxu0 0.0
  %5956 = vmatprep.subr.mxu0 0.0
  %5957 = vmatpush2.msra.mxu0 0.0
  %5958 = vmatprep.subr.mxu0 0.0
  %5959 = vmatpush2.msra.mxu0 0.0
  %5960 = vmatprep.subr.mxu0 0.0
  %5961 = vmatpush2.msra.mxu0 0.0
  %5962 = vmatprep.subr.mxu0 0.0
  %5963 = vmatpush2.msra.mxu0 0.0
  %5964 = vmatprep.subr.mxu0 0.0
  %5965 = vmatpush2.msra.mxu0 0.0
  %5966 = vmatprep.subr.mxu0 0.0
  %5967 = vmatpush2.msra.mxu0 0.0
  %5968 = vmatprep.subr.mxu0 0.0
  %5969 = vmatpush2.msra.mxu0 0.0
  %5970 = vmatprep.subr.mxu0 0.0
  %5971 = vmatpush2.msra.mxu0 0.0
  %5972 = vmatprep.subr.mxu0 0.0
  %5973 = vmatpush2.msra.mxu0 0.0
  %5974 = vmatprep.subr.mxu0 0.0
  %5975 = vmatpush2.msra.mxu0 0.0
  %5976 = vmatprep.subr.mxu0 0.0
  %5977 = vmatpush2.msra.mxu0 0.0
  %5978 = vmatprep.subr.mxu0 0.0
  %5979 = vmatpush2.msra.mxu0 0.0
  %5980 = vmatprep.subr.mxu0 0.0
  %5981 = vmatpush2.msra.mxu0 0.0
  %5982 = vmatprep.subr.mxu0 0.0
  %5983 = vmatpush2.msra.mxu0 0.0
  %5984 = vmatprep.mubr.f32.mxu0 0.0
  %5985 = vmatmul.mubr.f32.gmra.mxu0 %v2284
  %v5986 = vpop.f32.mrf.mxu0
  %v5987 = vadd.f32 0.0, %v5986
  %v5988 = vpop.f32.mrf.mxu0
  %5989 = vmatprep.mubr.f32.mxu0 0.0
  %5990 = vmatmul.mubr.f32.gmra.mxu0 %v2287
  %v5991 = vpop.f32.mrf.mxu0
  %v5992 = vadd.f32 0.0, %v5991
  %v5993 = vpop.f32.mrf.mxu0
  %5994 = vdwg.mxu0
  %v5996 = vsel %vm868, %v5992, 0
  %5998 = vmatprep.subr.mxu0 0.0
  %5999 = vmatpush1.msra.mxu0 0.0
  %6000 = vmatprep.subr.mxu0 0.0
  %6001 = vmatpush1.msra.mxu0 0.0
  %6002 = vmatprep.subr.mxu0 0.0
  %6003 = vmatpush1.msra.mxu0 0.0
  %6004 = vmatprep.subr.mxu0 0.0
  %6005 = vmatpush1.msra.mxu0 0.0
  %6006 = vmatprep.subr.mxu0 0.0
  %6007 = vmatpush1.msra.mxu0 0.0
  %6008 = vmatprep.subr.mxu0 0.0
  %6009 = vmatpush1.msra.mxu0 0.0
  %6010 = vmatprep.subr.mxu0 0.0
  %6011 = vmatpush1.msra.mxu0 0.0
  %6012 = vmatprep.subr.mxu0 0.0
  %6013 = vmatpush1.msra.mxu0 0.0
  %6014 = vmatprep.subr.mxu0 0.0
  %6015 = vmatpush1.msra.mxu0 0.0
  %6016 = vmatprep.subr.mxu0 0.0
  %6017 = vmatpush1.msra.mxu0 0.0
  %6018 = vmatprep.subr.mxu0 0.0
  %6019 = vmatpush1.msra.mxu0 0.0
  %6020 = vmatprep.subr.mxu0 0.0
  %6021 = vmatpush1.msra.mxu0 0.0
  %6022 = vmatprep.subr.mxu0 0.0
  %6023 = vmatpush1.msra.mxu0 0.0
  %6024 = vmatprep.subr.mxu0 0.0
  %6025 = vmatpush1.msra.mxu0 0.0
  %6026 = vmatprep.subr.mxu0 0.0
  %6027 = vmatpush1.msra.mxu0 %v5996
  %6028 = vmatprep.subr.mxu0 0.0
  %6029 = vmatpush1.msra.mxu0 %v5987
  %6030 = vmatprep.subr.mxu0 0.0
  %6031 = vmatpush2.msra.mxu0 0.0
  %6032 = vmatprep.subr.mxu0 0.0
  %6033 = vmatpush2.msra.mxu0 0.0
  %6034 = vmatprep.subr.mxu0 0.0
  %6035 = vmatpush2.msra.mxu0 0.0
  %6036 = vmatprep.subr.mxu0 0.0
  %6037 = vmatpush2.msra.mxu0 0.0
  %6038 = vmatprep.subr.mxu0 0.0
  %6039 = vmatpush2.msra.mxu0 0.0
  %6040 = vmatprep.subr.mxu0 0.0
  %6041 = vmatpush2.msra.mxu0 0.0
  %6042 = vmatprep.subr.mxu0 0.0
  %6043 = vmatpush2.msra.mxu0 0.0
  %6044 = vmatprep.subr.mxu0 0.0
  %6045 = vmatpush2.msra.mxu0 0.0
  %6046 = vmatprep.subr.mxu0 0.0
  %6047 = vmatpush2.msra.mxu0 0.0
  %6048 = vmatprep.subr.mxu0 0.0
  %6049 = vmatpush2.msra.mxu0 0.0
  %6050 = vmatprep.subr.mxu0 0.0
  %6051 = vmatpush2.msra.mxu0 0.0
  %6052 = vmatprep.subr.mxu0 0.0
  %6053 = vmatpush2.msra.mxu0 0.0
  %6054 = vmatprep.subr.mxu0 0.0
  %6055 = vmatpush2.msra.mxu0 0.0
  %6056 = vmatprep.subr.mxu0 0.0
  %6057 = vmatpush2.msra.mxu0 0.0
  %6058 = vmatprep.subr.mxu0 0.0
  %6059 = vmatpush2.msra.mxu0 0.0
  %6060 = vmatprep.subr.mxu0 0.0
  %6061 = vmatpush2.msra.mxu0 0.0
  %6062 = vmatprep.mubr.f32.mxu0 0.0
  %6063 = vmatmul.mubr.f32.gmra.mxu0 %v830
  %v6064 = vpop.f32.mrf.mxu0
  %v6065 = vadd.f32 0.0, %v6064
  %v6066 = vpop.f32.mrf.mxu0
  %6067 = vmatprep.mubr.f32.mxu0 0.0
  %6068 = vmatmul.mubr.f32.gmra.mxu0 %v833
  %v6069 = vpop.f32.mrf.mxu0
  %v6070 = vadd.f32 0.0, %v6069
  %v6071 = vpop.f32.mrf.mxu0
  %6072 = vmatprep.mubr.f32.mxu0 0.0
  %6073 = vmatmul.mubr.f32.gmra.mxu0 %v836
  %v6074 = vpop.f32.mrf.mxu0
  %v6075 = vadd.f32 0.0, %v6074
  %v6076 = vpop.f32.mrf.mxu0
  %6077 = vmatprep.mubr.f32.mxu0 0.0
  %6078 = vmatmul.mubr.f32.gmra.mxu0 %v839
  %v6079 = vpop.f32.mrf.mxu0
  %v6080 = vadd.f32 0.0, %v6079
  %v6081 = vpop.f32.mrf.mxu0
  %6082 = vmatprep.mubr.f32.mxu0 0.0
  %6083 = vmatmul.mubr.f32.gmra.mxu0 %v842
  %v6084 = vpop.f32.mrf.mxu0
  %v6085 = vadd.f32 0.0, %v6084
  %v6086 = vpop.f32.mrf.mxu0
  %6087 = vmatprep.mubr.f32.mxu0 0.0
  %6088 = vmatmul.mubr.f32.gmra.mxu0 %v845
  %v6089 = vpop.f32.mrf.mxu0
  %v6090 = vadd.f32 0.0, %v6089
  %v6091 = vpop.f32.mrf.mxu0
  %6092 = vmatprep.mubr.f32.mxu0 0.0
  %6093 = vmatmul.mubr.f32.gmra.mxu0 %v848
  %v6094 = vpop.f32.mrf.mxu0
  %v6095 = vadd.f32 0.0, %v6094
  %v6096 = vpop.f32.mrf.mxu0
  %6097 = vmatprep.mubr.f32.mxu0 0.0
  %6098 = vmatmul.mubr.f32.gmra.mxu0 %v851
  %v6099 = vpop.f32.mrf.mxu0
  %v6100 = vadd.f32 0.0, %v6099
  %v6101 = vpop.f32.mrf.mxu0
  %6102 = vmatprep.mubr.f32.mxu0 0.0
  %6103 = vmatmul.mubr.f32.gmra.mxu0 %v854
  %v6104 = vpop.f32.mrf.mxu0
  %v6105 = vadd.f32 0.0, %v6104
  %v6106 = vpop.f32.mrf.mxu0
  %6107 = vmatprep.mubr.f32.mxu0 0.0
  %6108 = vmatmul.mubr.f32.gmra.mxu0 %v857
  %v6109 = vpop.f32.mrf.mxu0
  %v6110 = vadd.f32 0.0, %v6109
  %v6111 = vpop.f32.mrf.mxu0
  %6112 = vmatprep.mubr.f32.mxu0 0.0
  %6113 = vmatmul.mubr.f32.gmra.mxu0 %v860
  %v6114 = vpop.f32.mrf.mxu0
  %v6115 = vadd.f32 0.0, %v6114
  %v6116 = vpop.f32.mrf.mxu0
  %6117 = vmatprep.mubr.f32.mxu0 0.0
  %6118 = vmatmul.mubr.f32.gmra.mxu0 %v863
  %v6119 = vpop.f32.mrf.mxu0
  %v6120 = vadd.f32 0.0, %v6119
  %v6121 = vpop.f32.mrf.mxu0
  %6122 = vmatprep.mubr.f32.mxu0 0.0
  %6123 = vmatmul.mubr.f32.gmra.mxu0 %v866
  %v6124 = vpop.f32.mrf.mxu0
  %v6125 = vadd.f32 0.0, %v6124
  %v6126 = vpop.f32.mrf.mxu0
  %6127 = vdwg.mxu0
  %v6128 = vrcp.pop %v6065
  %v6129 = vrcp.pop %v6070
  %v6130 = vrcp.pop %v6075
  %v6131 = vrcp.pop %v6080
  %v6132 = vrcp.pop %v6085
  %v6133 = vrcp.pop %v6090
  %v6134 = vrcp.pop %v6095
  %v6135 = vrcp.pop %v6100
  %v6136 = vrcp.pop %v6105
  %v6137 = vrcp.pop %v6110
  %v6138 = vrcp.pop %v6115
  %v6139 = vrcp.pop %v6120
  %v6140 = vrcp.pop %v6125
  %v6141 = vmul.f32 %v5892, %v6128
  %v6142 = vmul.f32 %v5894, %v6129
  %v6143 = vmul.f32 %v5896, %v6130
  %v6144 = vmul.f32 %v5898, %v6131
  %v6145 = vmul.f32 %v5900, %v6132
  %v6146 = vmul.f32 %v5902, %v6133
  %v6147 = vmul.f32 %v5904, %v6134
  %v6148 = vmul.f32 %v5906, %v6135
  %v6149 = vmul.f32 %v5908, %v6136
  %v6150 = vmul.f32 %v5910, %v6137
  %v6151 = vmul.f32 %v5912, %v6138
  %v6152 = vmul.f32 %v5914, %v6139
  %v6153 = vmul.f32 %v5916, %v6140
  %v6155 = vsel %vm2184, %v6141, 0
  %v6158 = vsel %vm2184, %v6142, 0
  %v6161 = vsel %vm2184, %v6143, 0
  %v6164 = vsel %vm2184, %v6144, 0
  %v6167 = vsel %vm2184, %v6145, 0
  %v6170 = vsel %vm2184, %v6146, 0
  %v6173 = vsel %vm2184, %v6147, 0
  %v6176 = vsel %vm2184, %v6148, 0
  %v6179 = vsel %vm2184, %v6149, 0
  %v6182 = vsel %vm2184, %v6150, 0
  %v6185 = vsel %vm2184, %v6151, 0
  %v6188 = vsel %vm2184, %v6152, 0
  %v6191 = vsel %vm2184, %v6153, 0
  %6193 = vmatprep.subr.mxu0 0.0
  %6194 = vmatpush1.msra.mxu0 0.0
  %6195 = vmatprep.subr.mxu0 0.0
  %6196 = vmatpush1.msra.mxu0 0.0
  %6197 = vmatprep.subr.mxu0 0.0
  %6198 = vmatpush1.msra.mxu0 0.0
  %6199 = vmatprep.subr.mxu0 0.0
  %6200 = vmatpush1.msra.mxu0 0.0
  %6201 = vmatprep.subr.mxu0 0.0
  %6202 = vmatpush1.msra.mxu0 0.0
  %6203 = vmatprep.subr.mxu0 0.0
  %6204 = vmatpush1.msra.mxu0 0.0
  %6205 = vmatprep.subr.mxu0 0.0
  %6206 = vmatpush1.msra.mxu0 0.0
  %6207 = vmatprep.subr.mxu0 0.0
  %6208 = vmatpush1.msra.mxu0 0.0
  %6209 = vmatprep.subr.mxu0 0.0
  %6210 = vmatpush1.msra.mxu0 0.0
  %6211 = vmatprep.subr.mxu0 0.0
  %6212 = vmatpush1.msra.mxu0 0.0
  %6213 = vmatprep.subr.mxu0 0.0
  %6214 = vmatpush1.msra.mxu0 0.0
  %6215 = vmatprep.subr.mxu0 0.0
  %6216 = vmatpush1.msra.mxu0 0.0
  %6217 = vmatprep.subr.mxu0 0.0
  %6218 = vmatpush1.msra.mxu0 0.0
  %6219 = vmatprep.subr.mxu0 0.0
  %6220 = vmatpush1.msra.mxu0 0.0
  %6221 = vmatprep.subr.mxu0 0.0
  %6222 = vmatpush1.msra.mxu0 0.0
  %6223 = vmatprep.subr.mxu0 0.0
  %6224 = vmatpush1.msra.mxu0 %v2567
  %6225 = vmatprep.subr.mxu0 0.0
  %6226 = vmatpush2.msra.mxu0 0.0
  %6227 = vmatprep.subr.mxu0 0.0
  %6228 = vmatpush2.msra.mxu0 0.0
  %6229 = vmatprep.subr.mxu0 0.0
  %6230 = vmatpush2.msra.mxu0 0.0
  %6231 = vmatprep.subr.mxu0 0.0
  %6232 = vmatpush2.msra.mxu0 0.0
  %6233 = vmatprep.subr.mxu0 0.0
  %6234 = vmatpush2.msra.mxu0 0.0
  %6235 = vmatprep.subr.mxu0 0.0
  %6236 = vmatpush2.msra.mxu0 0.0
  %6237 = vmatprep.subr.mxu0 0.0
  %6238 = vmatpush2.msra.mxu0 0.0
  %6239 = vmatprep.subr.mxu0 0.0
  %6240 = vmatpush2.msra.mxu0 0.0
  %6241 = vmatprep.subr.mxu0 0.0
  %6242 = vmatpush2.msra.mxu0 0.0
  %6243 = vmatprep.subr.mxu0 0.0
  %6244 = vmatpush2.msra.mxu0 0.0
  %6245 = vmatprep.subr.mxu0 0.0
  %6246 = vmatpush2.msra.mxu0 0.0
  %6247 = vmatprep.subr.mxu0 0.0
  %6248 = vmatpush2.msra.mxu0 0.0
  %6249 = vmatprep.subr.mxu0 0.0
  %6250 = vmatpush2.msra.mxu0 0.0
  %6251 = vmatprep.subr.mxu0 0.0
  %6252 = vmatpush2.msra.mxu0 0.0
  %6253 = vmatprep.subr.mxu0 0.0
  %6254 = vmatpush2.msra.mxu0 0.0
  %6255 = vmatprep.subr.mxu0 0.0
  %6256 = vmatpush2.msra.mxu0 0.0
  %6257 = vmatprep.mubr.f32.mxu0 0.0
  %6258 = vmatmul.mubr.f32.gmra.mxu0 %v6155
  %v6259 = vpop.f32.mrf.mxu0
  %v6260 = vadd.f32 0.0, %v6259
  %v6261 = vpop.f32.mrf.mxu0
  %6262 = vmatprep.mubr.f32.mxu0 0.0
  %6263 = vmatmul.mubr.f32.gmra.mxu0 %v6158
  %v6264 = vpop.f32.mrf.mxu0
  %v6265 = vadd.f32 0.0, %v6264
  %v6266 = vpop.f32.mrf.mxu0
  %6267 = vmatprep.mubr.f32.mxu0 0.0
  %6268 = vmatmul.mubr.f32.gmra.mxu0 %v6161
  %v6269 = vpop.f32.mrf.mxu0
  %v6270 = vadd.f32 0.0, %v6269
  %v6271 = vpop.f32.mrf.mxu0
  %6272 = vmatprep.mubr.f32.mxu0 0.0
  %6273 = vmatmul.mubr.f32.gmra.mxu0 %v6164
  %v6274 = vpop.f32.mrf.mxu0
  %v6275 = vadd.f32 0.0, %v6274
  %v6276 = vpop.f32.mrf.mxu0
  %6277 = vmatprep.mubr.f32.mxu0 0.0
  %6278 = vmatmul.mubr.f32.gmra.mxu0 %v6167
  %v6279 = vpop.f32.mrf.mxu0
  %v6280 = vadd.f32 0.0, %v6279
  %v6281 = vpop.f32.mrf.mxu0
  %6282 = vmatprep.mubr.f32.mxu0 0.0
  %6283 = vmatmul.mubr.f32.gmra.mxu0 %v6170
  %v6284 = vpop.f32.mrf.mxu0
  %v6285 = vadd.f32 0.0, %v6284
  %v6286 = vpop.f32.mrf.mxu0
  %6287 = vmatprep.mubr.f32.mxu0 0.0
  %6288 = vmatmul.mubr.f32.gmra.mxu0 %v6173
  %v6289 = vpop.f32.mrf.mxu0
  %v6290 = vadd.f32 0.0, %v6289
  %v6291 = vpop.f32.mrf.mxu0
  %6292 = vmatprep.mubr.f32.mxu0 0.0
  %6293 = vmatmul.mubr.f32.gmra.mxu0 %v6176
  %v6294 = vpop.f32.mrf.mxu0
  %v6295 = vadd.f32 0.0, %v6294
  %v6296 = vpop.f32.mrf.mxu0
  %6297 = vmatprep.mubr.f32.mxu0 0.0
  %6298 = vmatmul.mubr.f32.gmra.mxu0 %v6179
  %v6299 = vpop.f32.mrf.mxu0
  %v6300 = vadd.f32 0.0, %v6299
  %v6301 = vpop.f32.mrf.mxu0
  %6302 = vmatprep.mubr.f32.mxu0 0.0
  %6303 = vmatmul.mubr.f32.gmra.mxu0 %v6182
  %v6304 = vpop.f32.mrf.mxu0
  %v6305 = vadd.f32 0.0, %v6304
  %v6306 = vpop.f32.mrf.mxu0
  %6307 = vmatprep.mubr.f32.mxu0 0.0
  %6308 = vmatmul.mubr.f32.gmra.mxu0 %v6185
  %v6309 = vpop.f32.mrf.mxu0
  %v6310 = vadd.f32 0.0, %v6309
  %v6311 = vpop.f32.mrf.mxu0
  %6312 = vmatprep.mubr.f32.mxu0 0.0
  %6313 = vmatmul.mubr.f32.gmra.mxu0 %v6188
  %v6314 = vpop.f32.mrf.mxu0
  %v6315 = vadd.f32 0.0, %v6314
  %v6316 = vpop.f32.mrf.mxu0
  %6317 = vmatprep.mubr.f32.mxu0 0.0
  %6318 = vmatmul.mubr.f32.gmra.mxu0 %v6191
  %v6319 = vpop.f32.mrf.mxu0
  %v6320 = vadd.f32 0.0, %v6319
  %v6321 = vpop.f32.mrf.mxu0
  %6322 = vdwg.mxu0
  %v6323 = vmul.f32 %v6260, %v5114
  %v6324 = vmul.f32 %v6265, %v5119
  %v6325 = vmul.f32 %v6270, %v5124
  %v6326 = vmul.f32 %v6275, %v5129
  %v6327 = vmul.f32 %v6280, %v5134
  %v6328 = vmul.f32 %v6285, %v5139
  %v6329 = vmul.f32 %v6290, %v5144
  %v6330 = vmul.f32 %v6295, %v5149
  %v6331 = vmul.f32 %v6300, %v5154
  %v6332 = vmul.f32 %v6305, %v5159
  %v6333 = vmul.f32 %v6310, %v5164
  %v6334 = vmul.f32 %v6315, %v5169
  %v6335 = vmul.f32 %v6320, %v5174
  %v6337 = vsel %vm1868, %v6335, 0
  %6339 = vmatprep.subr.mxu0 0.0
  %6340 = vmatpush1.msra.mxu0 0.0
  %6341 = vmatprep.subr.mxu0 0.0
  %6342 = vmatpush1.msra.mxu0 0.0
  %6343 = vmatprep.subr.mxu0 0.0
  %6344 = vmatpush1.msra.mxu0 0.0
  %6345 = vmatprep.subr.mxu0 0.0
  %6346 = vmatpush1.msra.mxu0 %v6337
  %6347 = vmatprep.subr.mxu0 0.0
  %6348 = vmatpush1.msra.mxu0 %v6334
  %6349 = vmatprep.subr.mxu0 0.0
  %6350 = vmatpush1.msra.mxu0 %v6333
  %6351 = vmatprep.subr.mxu0 0.0
  %6352 = vmatpush1.msra.mxu0 %v6332
  %6353 = vmatprep.subr.mxu0 0.0
  %6354 = vmatpush1.msra.mxu0 %v6331
  %6355 = vmatprep.subr.mxu0 0.0
  %6356 = vmatpush1.msra.mxu0 %v6330
  %6357 = vmatprep.subr.mxu0 0.0
  %6358 = vmatpush1.msra.mxu0 %v6329
  %6359 = vmatprep.subr.mxu0 0.0
  %6360 = vmatpush1.msra.mxu0 %v6328
  %6361 = vmatprep.subr.mxu0 0.0
  %6362 = vmatpush1.msra.mxu0 %v6327
  %6363 = vmatprep.subr.mxu0 0.0
  %6364 = vmatpush1.msra.mxu0 %v6326
  %6365 = vmatprep.subr.mxu0 0.0
  %6366 = vmatpush1.msra.mxu0 %v6325
  %6367 = vmatprep.subr.mxu0 0.0
  %6368 = vmatpush1.msra.mxu0 %v6324
  %6369 = vmatprep.subr.mxu0 0.0
  %6370 = vmatpush1.msra.mxu0 %v6323
  %6371 = vmatprep.subr.mxu0 0.0
  %6372 = vmatpush2.msra.mxu0 0.0
  %6373 = vmatprep.subr.mxu0 0.0
  %6374 = vmatpush2.msra.mxu0 0.0
  %6375 = vmatprep.subr.mxu0 0.0
  %6376 = vmatpush2.msra.mxu0 0.0
  %6377 = vmatprep.subr.mxu0 0.0
  %6378 = vmatpush2.msra.mxu0 0.0
  %6379 = vmatprep.subr.mxu0 0.0
  %6380 = vmatpush2.msra.mxu0 0.0
  %6381 = vmatprep.subr.mxu0 0.0
  %6382 = vmatpush2.msra.mxu0 0.0
  %6383 = vmatprep.subr.mxu0 0.0
  %6384 = vmatpush2.msra.mxu0 0.0
  %6385 = vmatprep.subr.mxu0 0.0
  %6386 = vmatpush2.msra.mxu0 0.0
  %6387 = vmatprep.subr.mxu0 0.0
  %6388 = vmatpush2.msra.mxu0 0.0
  %6389 = vmatprep.subr.mxu0 0.0
  %6390 = vmatpush2.msra.mxu0 0.0
  %6391 = vmatprep.subr.mxu0 0.0
  %6392 = vmatpush2.msra.mxu0 0.0
  %6393 = vmatprep.subr.mxu0 0.0
  %6394 = vmatpush2.msra.mxu0 0.0
  %6395 = vmatprep.subr.mxu0 0.0
  %6396 = vmatpush2.msra.mxu0 0.0
  %6397 = vmatprep.subr.mxu0 0.0
  %6398 = vmatpush2.msra.mxu0 0.0
  %6399 = vmatprep.subr.mxu0 0.0
  %6400 = vmatpush2.msra.mxu0 0.0
  %6401 = vmatprep.subr.mxu0 0.0
  %6402 = vmatpush2.msra.mxu0 0.0
  %6403 = vmatprep.mubr.f32.mxu0 0.0
  %6404 = vmatmul.mubr.f32.gmra.mxu0 %v2284
  %v6405 = vpop.f32.mrf.mxu0
  %v6406 = vadd.f32 0.0, %v6405
  %v6407 = vpop.f32.mrf.mxu0
  %6408 = vmatprep.mubr.f32.mxu0 0.0
  %6409 = vmatmul.mubr.f32.gmra.mxu0 %v2287
  %v6410 = vpop.f32.mrf.mxu0
  %v6411 = vadd.f32 0.0, %v6410
  %v6412 = vpop.f32.mrf.mxu0
  %6413 = vdwg.mxu0
  %s6414 = scalar_lea.vmem %s35, 32
  %v6415 = vld [vmem:[%s6414] sm:$0xff]
  %v6416 = vld [vmem:[%s6414 + $0x8] sm:$0xff]
  %v6417 = vld [vmem:[%s6414 + $0x10] sm:$0xff]
  %v6418 = vld [vmem:[%s6414 + $0x18] sm:$0xff]
  %v6420 = vsel %vm375, %v6406, 0
  %v6423 = vsel %vm375, %v6411, 0
  %6425 = vmatprep.subr.mxu0 0.0
  %6426 = vmatpush1.msra.mxu0 0.0
  %6427 = vmatprep.subr.mxu0 0.0
  %6428 = vmatpush1.msra.mxu0 0.0
  %6429 = vmatprep.subr.mxu0 0.0
  %6430 = vmatpush1.msra.mxu0 0.0
  %6431 = vmatprep.subr.mxu0 0.0
  %6432 = vmatpush1.msra.mxu0 0.0
  %6433 = vmatprep.subr.mxu0 0.0
  %6434 = vmatpush1.msra.mxu0 0.0
  %6435 = vmatprep.subr.mxu0 0.0
  %6436 = vmatpush1.msra.mxu0 0.0
  %6437 = vmatprep.subr.mxu0 0.0
  %6438 = vmatpush1.msra.mxu0 0.0
  %6439 = vmatprep.subr.mxu0 0.0
  %6440 = vmatpush1.msra.mxu0 0.0
  %6441 = vmatprep.subr.mxu0 0.0
  %6442 = vmatpush1.msra.mxu0 0.0
  %6443 = vmatprep.subr.mxu0 0.0
  %6444 = vmatpush1.msra.mxu0 0.0
  %6445 = vmatprep.subr.mxu0 0.0
  %6446 = vmatpush1.msra.mxu0 0.0
  %6447 = vmatprep.subr.mxu0 0.0
  %6448 = vmatpush1.msra.mxu0 0.0
  %6449 = vmatprep.subr.mxu0 0.0
  %6450 = vmatpush1.msra.mxu0 %v6418
  %6451 = vmatprep.subr.mxu0 0.0
  %6452 = vmatpush1.msra.mxu0 %v6417
  %6453 = vmatprep.subr.mxu0 0.0
  %6454 = vmatpush1.msra.mxu0 %v6416
  %6455 = vmatprep.subr.mxu0 0.0
  %6456 = vmatpush1.msra.mxu0 %v6415
  %6457 = vmatprep.subr.mxu0 0.0
  %6458 = vmatpush2.msra.mxu0 0.0
  %6459 = vmatprep.subr.mxu0 0.0
  %6460 = vmatpush2.msra.mxu0 0.0
  %6461 = vmatprep.subr.mxu0 0.0
  %6462 = vmatpush2.msra.mxu0 0.0
  %6463 = vmatprep.subr.mxu0 0.0
  %6464 = vmatpush2.msra.mxu0 0.0
  %6465 = vmatprep.subr.mxu0 0.0
  %6466 = vmatpush2.msra.mxu0 0.0
  %6467 = vmatprep.subr.mxu0 0.0
  %6468 = vmatpush2.msra.mxu0 0.0
  %6469 = vmatprep.subr.mxu0 0.0
  %6470 = vmatpush2.msra.mxu0 0.0
  %6471 = vmatprep.subr.mxu0 0.0
  %6472 = vmatpush2.msra.mxu0 0.0
  %6473 = vmatprep.subr.mxu0 0.0
  %6474 = vmatpush2.msra.mxu0 0.0
  %6475 = vmatprep.subr.mxu0 0.0
  %6476 = vmatpush2.msra.mxu0 0.0
  %6477 = vmatprep.subr.mxu0 0.0
  %6478 = vmatpush2.msra.mxu0 0.0
  %6479 = vmatprep.subr.mxu0 0.0
  %6480 = vmatpush2.msra.mxu0 0.0
  %6481 = vmatprep.subr.mxu0 0.0
  %6482 = vmatpush2.msra.mxu0 0.0
  %6483 = vmatprep.subr.mxu0 0.0
  %6484 = vmatpush2.msra.mxu0 0.0
  %6485 = vmatprep.subr.mxu0 0.0
  %6486 = vmatpush2.msra.mxu0 0.0
  %6487 = vmatprep.subr.mxu0 0.0
  %6488 = vmatpush2.msra.mxu0 0.0
  %6489 = vmatprep.mubr.f32.mxu0 0.0
  %6490 = vmatmul.mubr.f32.gmra.mxu0 %v6420
  %v6491 = vpop.f32.mrf.mxu0
  %v6492 = vadd.f32 0.0, %v6491
  %v6493 = vpop.f32.mrf.mxu0
  %6494 = vmatprep.mubr.f32.mxu0 0.0
  %6495 = vmatmul.mubr.f32.gmra.mxu0 %v6423
  %v6496 = vpop.f32.mrf.mxu0
  %v6497 = vadd.f32 0.0, %v6496
  %v6498 = vpop.f32.mrf.mxu0
  %6499 = vdwg.mxu0
  %v6500 = vadd.f32 %v4398, %v6492
  %v6501 = vadd.f32 %v4399, %v6497
  %s6502 = scalar_lea.vmem %s37, 1
  %v6503 = vld [vmem:[%s6502] sm:$0x1]
  %v6505 = vlaneseq
  %v6506 = vshrl.u32 %v6505, 7
  %v6507 = vsub.s32 0, %v6506
  %v6508 = vrot.slane %v6503, %v6507
  %v6510 = vadd.f32 %v6500, %v6508
  %v6511 = vadd.f32 %v6501, %v6508
  %s6512 = scalar_lea.vmem %s39, 1
  %v6513 = vld [vmem:[%s6512] sm:$0x1]
  %s6514 = scalar_lea.vmem %s41, 1
  %v6515 = vld [vmem:[%s6514] sm:$0x1]
  %v6516 = vsel %vm375, %v6510, 0.0
  %6517 = vadd.xlane.f32.xlu0 %v6516
  %v6518 = vpop.xlane.xlu0 %6517
  %v6519 = vsel %vm379, %v6511, 0.0
  %6520 = vadd.xlane.f32.xlu0 %v6519
  %v6521 = vpop.xlane.xlu0 %6520
  %v6522 = vmul.f32 %v6518, %v383
  %v6523 = vmul.f32 %v6521, %v383
  %v6524 = vsub.f32 %v6510, %v6522
  %v6525 = vsub.f32 %v6511, %v6523
  %v6526 = vmul.f32 %v6524, %v6524
  %v6527 = vmul.f32 %v6525, %v6525
  %v6528 = vsel %vm375, %v6526, 0.0
  %6529 = vadd.xlane.f32.xlu0 %v6528
  %v6530 = vpop.xlane.xlu0 %6529
  %v6531 = vsel %vm379, %v6527, 0.0
  %6532 = vadd.xlane.f32.xlu0 %v6531
  %v6533 = vpop.xlane.xlu0 %6532
  %v6534 = vmul.f32 %v6530, %v383
  %v6535 = vmul.f32 %v6533, %v383
  %v6536 = vadd.f32 %v6534, 1e-05
  %v6537 = vadd.f32 %v6535, 1e-05
  %v6538 = vrsqrt.pop %v6536
  %v6539 = vrsqrt.pop %v6537
  %v6540 = vmul.f32 %v6524, %v6538
  %v6541 = vmul.f32 %v6525, %v6539
  %v6543 = vlaneseq
  %v6544 = vshrl.u32 %v6543, 7
  %v6545 = vsub.s32 0, %v6544
  %v6546 = vrot.slane %v6513, %v6545
  %v6548 = vmul.f32 %v6540, %v6546
  %v6549 = vmul.f32 %v6541, %v6546
  %v6551 = vlaneseq
  %v6552 = vshrl.u32 %v6551, 7
  %v6553 = vsub.s32 0, %v6552
  %v6554 = vrot.slane %v6515, %v6553
  %v6556 = vadd.f32 %v6548, %v6554
  %v6557 = vadd.f32 %v6549, %v6554
  %s6558 = scalar_lea.vmem %s43, 32
  %v6559 = vld [vmem:[%s6558] sm:$0xff]
  %v6560 = vld [vmem:[%s6558 + $0x8] sm:$0xff]
  %v6561 = vld [vmem:[%s6558 + $0x10] sm:$0xff]
  %v6562 = vld [vmem:[%s6558 + $0x18] sm:$0xff]
  %s6563 = scalar_lea.vmem %s45, 1
  %v6564 = vld [vmem:[%s6563] sm:$0x1]
  %v6566 = vlaneseq
  %v6567 = vshrl.u32 %v6566, 7
  %v6568 = vsub.s32 0, %v6567
  %v6569 = vrot.slane %v6564, %v6568
  %v6572 = vsel %vm375, %v6556, 0
  %v6575 = vsel %vm375, %v6557, 0
  %6577 = vmatprep.subr.mxu0 0.0
  %6578 = vmatpush1.msra.mxu0 0.0
  %6579 = vmatprep.subr.mxu0 0.0
  %6580 = vmatpush1.msra.mxu0 0.0
  %6581 = vmatprep.subr.mxu0 0.0
  %6582 = vmatpush1.msra.mxu0 0.0
  %6583 = vmatprep.subr.mxu0 0.0
  %6584 = vmatpush1.msra.mxu0 0.0
  %6585 = vmatprep.subr.mxu0 0.0
  %6586 = vmatpush1.msra.mxu0 0.0
  %6587 = vmatprep.subr.mxu0 0.0
  %6588 = vmatpush1.msra.mxu0 0.0
  %6589 = vmatprep.subr.mxu0 0.0
  %6590 = vmatpush1.msra.mxu0 0.0
  %6591 = vmatprep.subr.mxu0 0.0
  %6592 = vmatpush1.msra.mxu0 0.0
  %6593 = vmatprep.subr.mxu0 0.0
  %6594 = vmatpush1.msra.mxu0 0.0
  %6595 = vmatprep.subr.mxu0 0.0
  %6596 = vmatpush1.msra.mxu0 0.0
  %6597 = vmatprep.subr.mxu0 0.0
  %6598 = vmatpush1.msra.mxu0 0.0
  %6599 = vmatprep.subr.mxu0 0.0
  %6600 = vmatpush1.msra.mxu0 0.0
  %6601 = vmatprep.subr.mxu0 0.0
  %6602 = vmatpush1.msra.mxu0 %v6562
  %6603 = vmatprep.subr.mxu0 0.0
  %6604 = vmatpush1.msra.mxu0 %v6561
  %6605 = vmatprep.subr.mxu0 0.0
  %6606 = vmatpush1.msra.mxu0 %v6560
  %6607 = vmatprep.subr.mxu0 0.0
  %6608 = vmatpush1.msra.mxu0 %v6559
  %6609 = vmatprep.subr.mxu0 0.0
  %6610 = vmatpush2.msra.mxu0 0.0
  %6611 = vmatprep.subr.mxu0 0.0
  %6612 = vmatpush2.msra.mxu0 0.0
  %6613 = vmatprep.subr.mxu0 0.0
  %6614 = vmatpush2.msra.mxu0 0.0
  %6615 = vmatprep.subr.mxu0 0.0
  %6616 = vmatpush2.msra.mxu0 0.0
  %6617 = vmatprep.subr.mxu0 0.0
  %6618 = vmatpush2.msra.mxu0 0.0
  %6619 = vmatprep.subr.mxu0 0.0
  %6620 = vmatpush2.msra.mxu0 0.0
  %6621 = vmatprep.subr.mxu0 0.0
  %6622 = vmatpush2.msra.mxu0 0.0
  %6623 = vmatprep.subr.mxu0 0.0
  %6624 = vmatpush2.msra.mxu0 0.0
  %6625 = vmatprep.subr.mxu0 0.0
  %6626 = vmatpush2.msra.mxu0 0.0
  %6627 = vmatprep.subr.mxu0 0.0
  %6628 = vmatpush2.msra.mxu0 0.0
  %6629 = vmatprep.subr.mxu0 0.0
  %6630 = vmatpush2.msra.mxu0 0.0
  %6631 = vmatprep.subr.mxu0 0.0
  %6632 = vmatpush2.msra.mxu0 0.0
  %6633 = vmatprep.subr.mxu0 0.0
  %6634 = vmatpush2.msra.mxu0 0.0
  %6635 = vmatprep.subr.mxu0 0.0
  %6636 = vmatpush2.msra.mxu0 0.0
  %6637 = vmatprep.subr.mxu0 0.0
  %6638 = vmatpush2.msra.mxu0 0.0
  %6639 = vmatprep.subr.mxu0 0.0
  %6640 = vmatpush2.msra.mxu0 0.0
  %6641 = vmatprep.mubr.f32.mxu0 0.0
  %6642 = vmatmul.mubr.f32.gmra.mxu0 %v6572
  %v6643 = vpop.f32.mrf.mxu0
  %v6644 = vadd.f32 %v6569, %v6643
  %v6645 = vpop.f32.mrf.mxu0
  %6646 = vmatprep.mubr.f32.mxu0 0.0
  %6647 = vmatmul.mubr.f32.gmra.mxu0 %v6575
  %v6648 = vpop.f32.mrf.mxu0
  %v6649 = vadd.f32 %v6569, %v6648
  %v6650 = vpop.f32.mrf.mxu0
  %6651 = vdwg.mxu0
  %v6652 = vsub.f32 0.0, %v6644
  %v6653 = vsub.f32 0.0, %v6649
  %v6654 = vmul.f32 %v6652, 1.442695
  %v6655 = vpow.pop %v6654
  %v6656 = vmul.f32 %v6653, 1.442695
  %v6657 = vpow.pop %v6656
  %v6658 = vadd.f32 %v6655, 1.0
  %v6659 = vadd.f32 %v6657, 1.0
  %v6660 = vrcp.pop %v6658
  %v6661 = vmul.f32 1.0, %v6660
  %v6662 = vrcp.pop %v6659
  %v6663 = vmul.f32 1.0, %v6662
  %6666 = vrot.lane.b32.xlu0 %v6661, 96
  %v6667 = vpop.permute.xlu0 %6666
  %6668 = vrot.lane.b32.xlu0 %v6663, 96
  %v6669 = vpop.permute.xlu0 %6668
  %v6672 = vmul.f32 %v6644, %v6667
  %v6673 = vmul.f32 %v6649, %v6669
  %s6674 = scalar_lea.vmem %s47, 8
  %v6675 = vld [vmem:[%s6674] sm:$0x7f]
  %v6677 = vsel %vm868, %v6673, 0
  %6679 = vmatprep.subr.mxu0 0.0
  %6680 = vmatpush1.msra.mxu0 0.0
  %6681 = vmatprep.subr.mxu0 0.0
  %6682 = vmatpush1.msra.mxu0 0.0
  %6683 = vmatprep.subr.mxu0 0.0
  %6684 = vmatpush1.msra.mxu0 0.0
  %6685 = vmatprep.subr.mxu0 0.0
  %6686 = vmatpush1.msra.mxu0 0.0
  %6687 = vmatprep.subr.mxu0 0.0
  %6688 = vmatpush1.msra.mxu0 0.0
  %6689 = vmatprep.subr.mxu0 0.0
  %6690 = vmatpush1.msra.mxu0 0.0
  %6691 = vmatprep.subr.mxu0 0.0
  %6692 = vmatpush1.msra.mxu0 0.0
  %6693 = vmatprep.subr.mxu0 0.0
  %6694 = vmatpush1.msra.mxu0 0.0
  %6695 = vmatprep.subr.mxu0 0.0
  %6696 = vmatpush1.msra.mxu0 0.0
  %6697 = vmatprep.subr.mxu0 0.0
  %6698 = vmatpush1.msra.mxu0 0.0
  %6699 = vmatprep.subr.mxu0 0.0
  %6700 = vmatpush1.msra.mxu0 0.0
  %6701 = vmatprep.subr.mxu0 0.0
  %6702 = vmatpush1.msra.mxu0 0.0
  %6703 = vmatprep.subr.mxu0 0.0
  %6704 = vmatpush1.msra.mxu0 0.0
  %6705 = vmatprep.subr.mxu0 0.0
  %6706 = vmatpush1.msra.mxu0 0.0
  %6707 = vmatprep.subr.mxu0 0.0
  %6708 = vmatpush1.msra.mxu0 %v6677
  %6709 = vmatprep.subr.mxu0 0.0
  %6710 = vmatpush1.msra.mxu0 %v6672
  %6711 = vmatprep.subr.mxu0 0.0
  %6712 = vmatpush2.msra.mxu0 0.0
  %6713 = vmatprep.subr.mxu0 0.0
  %6714 = vmatpush2.msra.mxu0 0.0
  %6715 = vmatprep.subr.mxu0 0.0
  %6716 = vmatpush2.msra.mxu0 0.0
  %6717 = vmatprep.subr.mxu0 0.0
  %6718 = vmatpush2.msra.mxu0 0.0
  %6719 = vmatprep.subr.mxu0 0.0
  %6720 = vmatpush2.msra.mxu0 0.0
  %6721 = vmatprep.subr.mxu0 0.0
  %6722 = vmatpush2.msra.mxu0 0.0
  %6723 = vmatprep.subr.mxu0 0.0
  %6724 = vmatpush2.msra.mxu0 0.0
  %6725 = vmatprep.subr.mxu0 0.0
  %6726 = vmatpush2.msra.mxu0 0.0
  %6727 = vmatprep.subr.mxu0 0.0
  %6728 = vmatpush2.msra.mxu0 0.0
  %6729 = vmatprep.subr.mxu0 0.0
  %6730 = vmatpush2.msra.mxu0 0.0
  %6731 = vmatprep.subr.mxu0 0.0
  %6732 = vmatpush2.msra.mxu0 0.0
  %6733 = vmatprep.subr.mxu0 0.0
  %6734 = vmatpush2.msra.mxu0 0.0
  %6735 = vmatprep.subr.mxu0 0.0
  %6736 = vmatpush2.msra.mxu0 0.0
  %6737 = vmatprep.subr.mxu0 0.0
  %6738 = vmatpush2.msra.mxu0 0.0
  %6739 = vmatprep.subr.mxu0 0.0
  %6740 = vmatpush2.msra.mxu0 0.0
  %6741 = vmatprep.subr.mxu0 0.0
  %6742 = vmatpush2.msra.mxu0 0.0
  %6743 = vmatprep.mubr.f32.mxu0 0.0
  %6744 = vmatmul.mubr.f32.gmra.mxu0 %v3048
  %v6745 = vpop.f32.mrf.mxu0
  %v6746 = vadd.f32 0.0, %v6745
  %v6747 = vpop.f32.mrf.mxu0
  %6748 = vmatprep.mubr.f32.mxu0 0.0
  %6749 = vmatmul.mubr.f32.gmra.mxu0 %v3051
  %v6750 = vpop.f32.mrf.mxu0
  %v6751 = vadd.f32 0.0, %v6750
  %v6752 = vpop.f32.mrf.mxu0
  %6753 = vdwg.mxu0
  %v6754 = vlaneseq
  %v6755 = vshrl.u32 %v6754, 7
  %v6756 = vsub.s32 0, %v6755
  %v6757 = vrot.slane %v6675, %v6756
  %v6758 = vmul.f32 %v6746, %v6757
  %v6759 = vmul.f32 %v6751, %v6757
  %v6760 = vadd.f32 %v6758, 0.0
  %v6761 = vadd.f32 %v6759, 0.0
  %6762 = vmatprep.subr.mxu0 0.0
  %6763 = vmatpush1.msra.mxu0 0.0
  %6764 = vmatprep.subr.mxu0 0.0
  %6765 = vmatpush1.msra.mxu0 0.0
  %6766 = vmatprep.subr.mxu0 0.0
  %6767 = vmatpush1.msra.mxu0 0.0
  %6768 = vmatprep.subr.mxu0 0.0
  %6769 = vmatpush1.msra.mxu0 0.0
  %6770 = vmatprep.subr.mxu0 0.0
  %6771 = vmatpush1.msra.mxu0 0.0
  %6772 = vmatprep.subr.mxu0 0.0
  %6773 = vmatpush1.msra.mxu0 0.0
  %6774 = vmatprep.subr.mxu0 0.0
  %6775 = vmatpush1.msra.mxu0 0.0
  %6776 = vmatprep.subr.mxu0 0.0
  %6777 = vmatpush1.msra.mxu0 0.0
  %6778 = vmatprep.subr.mxu0 0.0
  %6779 = vmatpush1.msra.mxu0 0.0
  %6780 = vmatprep.subr.mxu0 0.0
  %6781 = vmatpush1.msra.mxu0 0.0
  %6782 = vmatprep.subr.mxu0 0.0
  %6783 = vmatpush1.msra.mxu0 0.0
  %6784 = vmatprep.subr.mxu0 0.0
  %6785 = vmatpush1.msra.mxu0 0.0
  %6786 = vmatprep.subr.mxu0 0.0
  %6787 = vmatpush1.msra.mxu0 0.0
  %6788 = vmatprep.subr.mxu0 0.0
  %6789 = vmatpush1.msra.mxu0 0.0
  %6790 = vmatprep.subr.mxu0 0.0
  %6791 = vmatpush1.msra.mxu0 %v6677
  %6792 = vmatprep.subr.mxu0 0.0
  %6793 = vmatpush1.msra.mxu0 %v6672
  %6794 = vmatprep.subr.mxu0 0.0
  %6795 = vmatpush2.msra.mxu0 0.0
  %6796 = vmatprep.subr.mxu0 0.0
  %6797 = vmatpush2.msra.mxu0 0.0
  %6798 = vmatprep.subr.mxu0 0.0
  %6799 = vmatpush2.msra.mxu0 0.0
  %6800 = vmatprep.subr.mxu0 0.0
  %6801 = vmatpush2.msra.mxu0 0.0
  %6802 = vmatprep.subr.mxu0 0.0
  %6803 = vmatpush2.msra.mxu0 0.0
  %6804 = vmatprep.subr.mxu0 0.0
  %6805 = vmatpush2.msra.mxu0 0.0
  %6806 = vmatprep.subr.mxu0 0.0
  %6807 = vmatpush2.msra.mxu0 0.0
  %6808 = vmatprep.subr.mxu0 0.0
  %6809 = vmatpush2.msra.mxu0 0.0
  %6810 = vmatprep.subr.mxu0 0.0
  %6811 = vmatpush2.msra.mxu0 0.0
  %6812 = vmatprep.subr.mxu0 0.0
  %6813 = vmatpush2.msra.mxu0 0.0
  %6814 = vmatprep.subr.mxu0 0.0
  %6815 = vmatpush2.msra.mxu0 0.0
  %6816 = vmatprep.subr.mxu0 0.0
  %6817 = vmatpush2.msra.mxu0 0.0
  %6818 = vmatprep.subr.mxu0 0.0
  %6819 = vmatpush2.msra.mxu0 0.0
  %6820 = vmatprep.subr.mxu0 0.0
  %6821 = vmatpush2.msra.mxu0 0.0
  %6822 = vmatprep.subr.mxu0 0.0
  %6823 = vmatpush2.msra.mxu0 0.0
  %6824 = vmatprep.subr.mxu0 0.0
  %6825 = vmatpush2.msra.mxu0 0.0
  %6826 = vmatprep.mubr.f32.mxu0 0.0
  %6827 = vmatmul.mubr.f32.gmra.mxu0 %v3143
  %v6828 = vpop.f32.mrf.mxu0
  %v6829 = vadd.f32 0.0, %v6828
  %v6830 = vpop.f32.mrf.mxu0
  %6831 = vmatprep.mubr.f32.mxu0 0.0
  %6832 = vmatmul.mubr.f32.gmra.mxu0 %v3146
  %v6833 = vpop.f32.mrf.mxu0
  %v6834 = vadd.f32 0.0, %v6833
  %v6835 = vpop.f32.mrf.mxu0
  %6836 = vdwg.mxu0
  %v6837 = vlaneseq
  %v6838 = vshrl.u32 %v6837, 7
  %v6839 = vsub.s32 1, %v6838
  %v6840 = vrot.slane %v6675, %v6839
  %v6841 = vmul.f32 %v6829, %v6840
  %v6842 = vmul.f32 %v6834, %v6840
  %v6843 = vadd.f32 %v6760, %v6841
  %v6844 = vadd.f32 %v6761, %v6842
  %6845 = vmatprep.subr.mxu0 0.0
  %6846 = vmatpush1.msra.mxu0 0.0
  %6847 = vmatprep.subr.mxu0 0.0
  %6848 = vmatpush1.msra.mxu0 0.0
  %6849 = vmatprep.subr.mxu0 0.0
  %6850 = vmatpush1.msra.mxu0 0.0
  %6851 = vmatprep.subr.mxu0 0.0
  %6852 = vmatpush1.msra.mxu0 0.0
  %6853 = vmatprep.subr.mxu0 0.0
  %6854 = vmatpush1.msra.mxu0 0.0
  %6855 = vmatprep.subr.mxu0 0.0
  %6856 = vmatpush1.msra.mxu0 0.0
  %6857 = vmatprep.subr.mxu0 0.0
  %6858 = vmatpush1.msra.mxu0 0.0
  %6859 = vmatprep.subr.mxu0 0.0
  %6860 = vmatpush1.msra.mxu0 0.0
  %6861 = vmatprep.subr.mxu0 0.0
  %6862 = vmatpush1.msra.mxu0 0.0
  %6863 = vmatprep.subr.mxu0 0.0
  %6864 = vmatpush1.msra.mxu0 0.0
  %6865 = vmatprep.subr.mxu0 0.0
  %6866 = vmatpush1.msra.mxu0 0.0
  %6867 = vmatprep.subr.mxu0 0.0
  %6868 = vmatpush1.msra.mxu0 0.0
  %6869 = vmatprep.subr.mxu0 0.0
  %6870 = vmatpush1.msra.mxu0 0.0
  %6871 = vmatprep.subr.mxu0 0.0
  %6872 = vmatpush1.msra.mxu0 0.0
  %6873 = vmatprep.subr.mxu0 0.0
  %6874 = vmatpush1.msra.mxu0 %v6677
  %6875 = vmatprep.subr.mxu0 0.0
  %6876 = vmatpush1.msra.mxu0 %v6672
  %6877 = vmatprep.subr.mxu0 0.0
  %6878 = vmatpush2.msra.mxu0 0.0
  %6879 = vmatprep.subr.mxu0 0.0
  %6880 = vmatpush2.msra.mxu0 0.0
  %6881 = vmatprep.subr.mxu0 0.0
  %6882 = vmatpush2.msra.mxu0 0.0
  %6883 = vmatprep.subr.mxu0 0.0
  %6884 = vmatpush2.msra.mxu0 0.0
  %6885 = vmatprep.subr.mxu0 0.0
  %6886 = vmatpush2.msra.mxu0 0.0
  %6887 = vmatprep.subr.mxu0 0.0
  %6888 = vmatpush2.msra.mxu0 0.0
  %6889 = vmatprep.subr.mxu0 0.0
  %6890 = vmatpush2.msra.mxu0 0.0
  %6891 = vmatprep.subr.mxu0 0.0
  %6892 = vmatpush2.msra.mxu0 0.0
  %6893 = vmatprep.subr.mxu0 0.0
  %6894 = vmatpush2.msra.mxu0 0.0
  %6895 = vmatprep.subr.mxu0 0.0
  %6896 = vmatpush2.msra.mxu0 0.0
  %6897 = vmatprep.subr.mxu0 0.0
  %6898 = vmatpush2.msra.mxu0 0.0
  %6899 = vmatprep.subr.mxu0 0.0
  %6900 = vmatpush2.msra.mxu0 0.0
  %6901 = vmatprep.subr.mxu0 0.0
  %6902 = vmatpush2.msra.mxu0 0.0
  %6903 = vmatprep.subr.mxu0 0.0
  %6904 = vmatpush2.msra.mxu0 0.0
  %6905 = vmatprep.subr.mxu0 0.0
  %6906 = vmatpush2.msra.mxu0 0.0
  %6907 = vmatprep.subr.mxu0 0.0
  %6908 = vmatpush2.msra.mxu0 0.0
  %6909 = vmatprep.mubr.f32.mxu0 0.0
  %6910 = vmatmul.mubr.f32.gmra.mxu0 %v3235
  %v6911 = vpop.f32.mrf.mxu0
  %v6912 = vadd.f32 0.0, %v6911
  %v6913 = vpop.f32.mrf.mxu0
  %6914 = vmatprep.mubr.f32.mxu0 0.0
  %6915 = vmatmul.mubr.f32.gmra.mxu0 %v3238
  %v6916 = vpop.f32.mrf.mxu0
  %v6917 = vadd.f32 0.0, %v6916
  %v6918 = vpop.f32.mrf.mxu0
  %6919 = vdwg.mxu0
  %v6920 = vlaneseq
  %v6921 = vshrl.u32 %v6920, 7
  %v6922 = vsub.s32 2, %v6921
  %v6923 = vrot.slane %v6675, %v6922
  %v6924 = vmul.f32 %v6912, %v6923
  %v6925 = vmul.f32 %v6917, %v6923
  %v6926 = vadd.f32 %v6843, %v6924
  %v6927 = vadd.f32 %v6844, %v6925
  %6928 = vmatprep.subr.mxu0 0.0
  %6929 = vmatpush1.msra.mxu0 0.0
  %6930 = vmatprep.subr.mxu0 0.0
  %6931 = vmatpush1.msra.mxu0 0.0
  %6932 = vmatprep.subr.mxu0 0.0
  %6933 = vmatpush1.msra.mxu0 0.0
  %6934 = vmatprep.subr.mxu0 0.0
  %6935 = vmatpush1.msra.mxu0 0.0
  %6936 = vmatprep.subr.mxu0 0.0
  %6937 = vmatpush1.msra.mxu0 0.0
  %6938 = vmatprep.subr.mxu0 0.0
  %6939 = vmatpush1.msra.mxu0 0.0
  %6940 = vmatprep.subr.mxu0 0.0
  %6941 = vmatpush1.msra.mxu0 0.0
  %6942 = vmatprep.subr.mxu0 0.0
  %6943 = vmatpush1.msra.mxu0 0.0
  %6944 = vmatprep.subr.mxu0 0.0
  %6945 = vmatpush1.msra.mxu0 0.0
  %6946 = vmatprep.subr.mxu0 0.0
  %6947 = vmatpush1.msra.mxu0 0.0
  %6948 = vmatprep.subr.mxu0 0.0
  %6949 = vmatpush1.msra.mxu0 0.0
  %6950 = vmatprep.subr.mxu0 0.0
  %6951 = vmatpush1.msra.mxu0 0.0
  %6952 = vmatprep.subr.mxu0 0.0
  %6953 = vmatpush1.msra.mxu0 0.0
  %6954 = vmatprep.subr.mxu0 0.0
  %6955 = vmatpush1.msra.mxu0 0.0
  %6956 = vmatprep.subr.mxu0 0.0
  %6957 = vmatpush1.msra.mxu0 %v6677
  %6958 = vmatprep.subr.mxu0 0.0
  %6959 = vmatpush1.msra.mxu0 %v6672
  %6960 = vmatprep.subr.mxu0 0.0
  %6961 = vmatpush2.msra.mxu0 0.0
  %6962 = vmatprep.subr.mxu0 0.0
  %6963 = vmatpush2.msra.mxu0 0.0
  %6964 = vmatprep.subr.mxu0 0.0
  %6965 = vmatpush2.msra.mxu0 0.0
  %6966 = vmatprep.subr.mxu0 0.0
  %6967 = vmatpush2.msra.mxu0 0.0
  %6968 = vmatprep.subr.mxu0 0.0
  %6969 = vmatpush2.msra.mxu0 0.0
  %6970 = vmatprep.subr.mxu0 0.0
  %6971 = vmatpush2.msra.mxu0 0.0
  %6972 = vmatprep.subr.mxu0 0.0
  %6973 = vmatpush2.msra.mxu0 0.0
  %6974 = vmatprep.subr.mxu0 0.0
  %6975 = vmatpush2.msra.mxu0 0.0
  %6976 = vmatprep.subr.mxu0 0.0
  %6977 = vmatpush2.msra.mxu0 0.0
  %6978 = vmatprep.subr.mxu0 0.0
  %6979 = vmatpush2.msra.mxu0 0.0
  %6980 = vmatprep.subr.mxu0 0.0
  %6981 = vmatpush2.msra.mxu0 0.0
  %6982 = vmatprep.subr.mxu0 0.0
  %6983 = vmatpush2.msra.mxu0 0.0
  %6984 = vmatprep.subr.mxu0 0.0
  %6985 = vmatpush2.msra.mxu0 0.0
  %6986 = vmatprep.subr.mxu0 0.0
  %6987 = vmatpush2.msra.mxu0 0.0
  %6988 = vmatprep.subr.mxu0 0.0
  %6989 = vmatpush2.msra.mxu0 0.0
  %6990 = vmatprep.subr.mxu0 0.0
  %6991 = vmatpush2.msra.mxu0 0.0
  %6992 = vmatprep.mubr.f32.mxu0 0.0
  %6993 = vmatmul.mubr.f32.gmra.mxu0 %v3327
  %v6994 = vpop.f32.mrf.mxu0
  %v6995 = vadd.f32 0.0, %v6994
  %v6996 = vpop.f32.mrf.mxu0
  %6997 = vmatprep.mubr.f32.mxu0 0.0
  %6998 = vmatmul.mubr.f32.gmra.mxu0 %v3330
  %v6999 = vpop.f32.mrf.mxu0
  %v7000 = vadd.f32 0.0, %v6999
  %v7001 = vpop.f32.mrf.mxu0
  %7002 = vdwg.mxu0
  %v7003 = vlaneseq
  %v7004 = vshrl.u32 %v7003, 7
  %v7005 = vsub.s32 3, %v7004
  %v7006 = vrot.slane %v6675, %v7005
  %v7007 = vmul.f32 %v6995, %v7006
  %v7008 = vmul.f32 %v7000, %v7006
  %v7009 = vadd.f32 %v6926, %v7007
  %v7010 = vadd.f32 %v6927, %v7008
  %7011 = vmatprep.subr.mxu0 0.0
  %7012 = vmatpush1.msra.mxu0 0.0
  %7013 = vmatprep.subr.mxu0 0.0
  %7014 = vmatpush1.msra.mxu0 0.0
  %7015 = vmatprep.subr.mxu0 0.0
  %7016 = vmatpush1.msra.mxu0 0.0
  %7017 = vmatprep.subr.mxu0 0.0
  %7018 = vmatpush1.msra.mxu0 0.0
  %7019 = vmatprep.subr.mxu0 0.0
  %7020 = vmatpush1.msra.mxu0 0.0
  %7021 = vmatprep.subr.mxu0 0.0
  %7022 = vmatpush1.msra.mxu0 0.0
  %7023 = vmatprep.subr.mxu0 0.0
  %7024 = vmatpush1.msra.mxu0 0.0
  %7025 = vmatprep.subr.mxu0 0.0
  %7026 = vmatpush1.msra.mxu0 0.0
  %7027 = vmatprep.subr.mxu0 0.0
  %7028 = vmatpush1.msra.mxu0 0.0
  %7029 = vmatprep.subr.mxu0 0.0
  %7030 = vmatpush1.msra.mxu0 0.0
  %7031 = vmatprep.subr.mxu0 0.0
  %7032 = vmatpush1.msra.mxu0 0.0
  %7033 = vmatprep.subr.mxu0 0.0
  %7034 = vmatpush1.msra.mxu0 0.0
  %7035 = vmatprep.subr.mxu0 0.0
  %7036 = vmatpush1.msra.mxu0 0.0
  %7037 = vmatprep.subr.mxu0 0.0
  %7038 = vmatpush1.msra.mxu0 0.0
  %7039 = vmatprep.subr.mxu0 0.0
  %7040 = vmatpush1.msra.mxu0 %v6677
  %7041 = vmatprep.subr.mxu0 0.0
  %7042 = vmatpush1.msra.mxu0 %v6672
  %7043 = vmatprep.subr.mxu0 0.0
  %7044 = vmatpush2.msra.mxu0 0.0
  %7045 = vmatprep.subr.mxu0 0.0
  %7046 = vmatpush2.msra.mxu0 0.0
  %7047 = vmatprep.subr.mxu0 0.0
  %7048 = vmatpush2.msra.mxu0 0.0
  %7049 = vmatprep.subr.mxu0 0.0
  %7050 = vmatpush2.msra.mxu0 0.0
  %7051 = vmatprep.subr.mxu0 0.0
  %7052 = vmatpush2.msra.mxu0 0.0
  %7053 = vmatprep.subr.mxu0 0.0
  %7054 = vmatpush2.msra.mxu0 0.0
  %7055 = vmatprep.subr.mxu0 0.0
  %7056 = vmatpush2.msra.mxu0 0.0
  %7057 = vmatprep.subr.mxu0 0.0
  %7058 = vmatpush2.msra.mxu0 0.0
  %7059 = vmatprep.subr.mxu0 0.0
  %7060 = vmatpush2.msra.mxu0 0.0
  %7061 = vmatprep.subr.mxu0 0.0
  %7062 = vmatpush2.msra.mxu0 0.0
  %7063 = vmatprep.subr.mxu0 0.0
  %7064 = vmatpush2.msra.mxu0 0.0
  %7065 = vmatprep.subr.mxu0 0.0
  %7066 = vmatpush2.msra.mxu0 0.0
  %7067 = vmatprep.subr.mxu0 0.0
  %7068 = vmatpush2.msra.mxu0 0.0
  %7069 = vmatprep.subr.mxu0 0.0
  %7070 = vmatpush2.msra.mxu0 0.0
  %7071 = vmatprep.subr.mxu0 0.0
  %7072 = vmatpush2.msra.mxu0 0.0
  %7073 = vmatprep.subr.mxu0 0.0
  %7074 = vmatpush2.msra.mxu0 0.0
  %7075 = vmatprep.mubr.f32.mxu0 0.0
  %7076 = vmatmul.mubr.f32.gmra.mxu0 %v3419
  %v7077 = vpop.f32.mrf.mxu0
  %v7078 = vadd.f32 0.0, %v7077
  %v7079 = vpop.f32.mrf.mxu0
  %7080 = vmatprep.mubr.f32.mxu0 0.0
  %7081 = vmatmul.mubr.f32.gmra.mxu0 %v3422
  %v7082 = vpop.f32.mrf.mxu0
  %v7083 = vadd.f32 0.0, %v7082
  %v7084 = vpop.f32.mrf.mxu0
  %7085 = vdwg.mxu0
  %v7086 = vlaneseq
  %v7087 = vshrl.u32 %v7086, 7
  %v7088 = vsub.s32 4, %v7087
  %v7089 = vrot.slane %v6675, %v7088
  %v7090 = vmul.f32 %v7078, %v7089
  %v7091 = vmul.f32 %v7083, %v7089
  %v7092 = vadd.f32 %v7009, %v7090
  %v7093 = vadd.f32 %v7010, %v7091
  %7094 = vmatprep.subr.mxu0 0.0
  %7095 = vmatpush1.msra.mxu0 0.0
  %7096 = vmatprep.subr.mxu0 0.0
  %7097 = vmatpush1.msra.mxu0 0.0
  %7098 = vmatprep.subr.mxu0 0.0
  %7099 = vmatpush1.msra.mxu0 0.0
  %7100 = vmatprep.subr.mxu0 0.0
  %7101 = vmatpush1.msra.mxu0 0.0
  %7102 = vmatprep.subr.mxu0 0.0
  %7103 = vmatpush1.msra.mxu0 0.0
  %7104 = vmatprep.subr.mxu0 0.0
  %7105 = vmatpush1.msra.mxu0 0.0
  %7106 = vmatprep.subr.mxu0 0.0
  %7107 = vmatpush1.msra.mxu0 0.0
  %7108 = vmatprep.subr.mxu0 0.0
  %7109 = vmatpush1.msra.mxu0 0.0
  %7110 = vmatprep.subr.mxu0 0.0
  %7111 = vmatpush1.msra.mxu0 0.0
  %7112 = vmatprep.subr.mxu0 0.0
  %7113 = vmatpush1.msra.mxu0 0.0
  %7114 = vmatprep.subr.mxu0 0.0
  %7115 = vmatpush1.msra.mxu0 0.0
  %7116 = vmatprep.subr.mxu0 0.0
  %7117 = vmatpush1.msra.mxu0 0.0
  %7118 = vmatprep.subr.mxu0 0.0
  %7119 = vmatpush1.msra.mxu0 0.0
  %7120 = vmatprep.subr.mxu0 0.0
  %7121 = vmatpush1.msra.mxu0 0.0
  %7122 = vmatprep.subr.mxu0 0.0
  %7123 = vmatpush1.msra.mxu0 %v6677
  %7124 = vmatprep.subr.mxu0 0.0
  %7125 = vmatpush1.msra.mxu0 %v6672
  %7126 = vmatprep.subr.mxu0 0.0
  %7127 = vmatpush2.msra.mxu0 0.0
  %7128 = vmatprep.subr.mxu0 0.0
  %7129 = vmatpush2.msra.mxu0 0.0
  %7130 = vmatprep.subr.mxu0 0.0
  %7131 = vmatpush2.msra.mxu0 0.0
  %7132 = vmatprep.subr.mxu0 0.0
  %7133 = vmatpush2.msra.mxu0 0.0
  %7134 = vmatprep.subr.mxu0 0.0
  %7135 = vmatpush2.msra.mxu0 0.0
  %7136 = vmatprep.subr.mxu0 0.0
  %7137 = vmatpush2.msra.mxu0 0.0
  %7138 = vmatprep.subr.mxu0 0.0
  %7139 = vmatpush2.msra.mxu0 0.0
  %7140 = vmatprep.subr.mxu0 0.0
  %7141 = vmatpush2.msra.mxu0 0.0
  %7142 = vmatprep.subr.mxu0 0.0
  %7143 = vmatpush2.msra.mxu0 0.0
  %7144 = vmatprep.subr.mxu0 0.0
  %7145 = vmatpush2.msra.mxu0 0.0
  %7146 = vmatprep.subr.mxu0 0.0
  %7147 = vmatpush2.msra.mxu0 0.0
  %7148 = vmatprep.subr.mxu0 0.0
  %7149 = vmatpush2.msra.mxu0 0.0
  %7150 = vmatprep.subr.mxu0 0.0
  %7151 = vmatpush2.msra.mxu0 0.0
  %7152 = vmatprep.subr.mxu0 0.0
  %7153 = vmatpush2.msra.mxu0 0.0
  %7154 = vmatprep.subr.mxu0 0.0
  %7155 = vmatpush2.msra.mxu0 0.0
  %7156 = vmatprep.subr.mxu0 0.0
  %7157 = vmatpush2.msra.mxu0 0.0
  %7158 = vmatprep.mubr.f32.mxu0 0.0
  %7159 = vmatmul.mubr.f32.gmra.mxu0 %v3511
  %v7160 = vpop.f32.mrf.mxu0
  %v7161 = vadd.f32 0.0, %v7160
  %v7162 = vpop.f32.mrf.mxu0
  %7163 = vmatprep.mubr.f32.mxu0 0.0
  %7164 = vmatmul.mubr.f32.gmra.mxu0 %v3514
  %v7165 = vpop.f32.mrf.mxu0
  %v7166 = vadd.f32 0.0, %v7165
  %v7167 = vpop.f32.mrf.mxu0
  %7168 = vdwg.mxu0
  %v7169 = vlaneseq
  %v7170 = vshrl.u32 %v7169, 7
  %v7171 = vsub.s32 5, %v7170
  %v7172 = vrot.slane %v6675, %v7171
  %v7173 = vmul.f32 %v7161, %v7172
  %v7174 = vmul.f32 %v7166, %v7172
  %v7175 = vadd.f32 %v7092, %v7173
  %v7176 = vadd.f32 %v7093, %v7174
  %7177 = vmatprep.subr.mxu0 0.0
  %7178 = vmatpush1.msra.mxu0 0.0
  %7179 = vmatprep.subr.mxu0 0.0
  %7180 = vmatpush1.msra.mxu0 0.0
  %7181 = vmatprep.subr.mxu0 0.0
  %7182 = vmatpush1.msra.mxu0 0.0
  %7183 = vmatprep.subr.mxu0 0.0
  %7184 = vmatpush1.msra.mxu0 0.0
  %7185 = vmatprep.subr.mxu0 0.0
  %7186 = vmatpush1.msra.mxu0 0.0
  %7187 = vmatprep.subr.mxu0 0.0
  %7188 = vmatpush1.msra.mxu0 0.0
  %7189 = vmatprep.subr.mxu0 0.0
  %7190 = vmatpush1.msra.mxu0 0.0
  %7191 = vmatprep.subr.mxu0 0.0
  %7192 = vmatpush1.msra.mxu0 0.0
  %7193 = vmatprep.subr.mxu0 0.0
  %7194 = vmatpush1.msra.mxu0 0.0
  %7195 = vmatprep.subr.mxu0 0.0
  %7196 = vmatpush1.msra.mxu0 0.0
  %7197 = vmatprep.subr.mxu0 0.0
  %7198 = vmatpush1.msra.mxu0 0.0
  %7199 = vmatprep.subr.mxu0 0.0
  %7200 = vmatpush1.msra.mxu0 0.0
  %7201 = vmatprep.subr.mxu0 0.0
  %7202 = vmatpush1.msra.mxu0 0.0
  %7203 = vmatprep.subr.mxu0 0.0
  %7204 = vmatpush1.msra.mxu0 0.0
  %7205 = vmatprep.subr.mxu0 0.0
  %7206 = vmatpush1.msra.mxu0 %v6677
  %7207 = vmatprep.subr.mxu0 0.0
  %7208 = vmatpush1.msra.mxu0 %v6672
  %7209 = vmatprep.subr.mxu0 0.0
  %7210 = vmatpush2.msra.mxu0 0.0
  %7211 = vmatprep.subr.mxu0 0.0
  %7212 = vmatpush2.msra.mxu0 0.0
  %7213 = vmatprep.subr.mxu0 0.0
  %7214 = vmatpush2.msra.mxu0 0.0
  %7215 = vmatprep.subr.mxu0 0.0
  %7216 = vmatpush2.msra.mxu0 0.0
  %7217 = vmatprep.subr.mxu0 0.0
  %7218 = vmatpush2.msra.mxu0 0.0
  %7219 = vmatprep.subr.mxu0 0.0
  %7220 = vmatpush2.msra.mxu0 0.0
  %7221 = vmatprep.subr.mxu0 0.0
  %7222 = vmatpush2.msra.mxu0 0.0
  %7223 = vmatprep.subr.mxu0 0.0
  %7224 = vmatpush2.msra.mxu0 0.0
  %7225 = vmatprep.subr.mxu0 0.0
  %7226 = vmatpush2.msra.mxu0 0.0
  %7227 = vmatprep.subr.mxu0 0.0
  %7228 = vmatpush2.msra.mxu0 0.0
  %7229 = vmatprep.subr.mxu0 0.0
  %7230 = vmatpush2.msra.mxu0 0.0
  %7231 = vmatprep.subr.mxu0 0.0
  %7232 = vmatpush2.msra.mxu0 0.0
  %7233 = vmatprep.subr.mxu0 0.0
  %7234 = vmatpush2.msra.mxu0 0.0
  %7235 = vmatprep.subr.mxu0 0.0
  %7236 = vmatpush2.msra.mxu0 0.0
  %7237 = vmatprep.subr.mxu0 0.0
  %7238 = vmatpush2.msra.mxu0 0.0
  %7239 = vmatprep.subr.mxu0 0.0
  %7240 = vmatpush2.msra.mxu0 0.0
  %7241 = vmatprep.mubr.f32.mxu0 0.0
  %7242 = vmatmul.mubr.f32.gmra.mxu0 %v3603
  %v7243 = vpop.f32.mrf.mxu0
  %v7244 = vadd.f32 0.0, %v7243
  %v7245 = vpop.f32.mrf.mxu0
  %7246 = vmatprep.mubr.f32.mxu0 0.0
  %7247 = vmatmul.mubr.f32.gmra.mxu0 %v3606
  %v7248 = vpop.f32.mrf.mxu0
  %v7249 = vadd.f32 0.0, %v7248
  %v7250 = vpop.f32.mrf.mxu0
  %7251 = vdwg.mxu0
  %v7252 = vlaneseq
  %v7253 = vshrl.u32 %v7252, 7
  %v7254 = vsub.s32 6, %v7253
  %v7255 = vrot.slane %v6675, %v7254
  %v7256 = vmul.f32 %v7244, %v7255
  %v7257 = vmul.f32 %v7249, %v7255
  %v7258 = vadd.f32 %v7175, %v7256
  %v7259 = vadd.f32 %v7176, %v7257
  %v7260 = vsel %vm375, %v7258, 0.0
  %v7261 = vsel %vm379, %v7259, 0.0
  %v7262 = vadd.f32 %v7260, %v7261
  %v7263 = vrot.slane %v7262, 4
  %v7264 = vadd.f32 %v7262, %v7263
  %v7265 = vrot.slane %v7264, 2
  %v7266 = vadd.f32 %v7264, %v7265
  %v7267 = vrot.slane %v7266, 1
  %v7268 = vadd.f32 %v7266, %v7267
  %v7269 = vmul.f32 %v7268, %v3700
  %v7270 = vsub.f32 %v7258, %v7269
  %v7271 = vsub.f32 %v7259, %v7269
  %v7272 = vmul.f32 %v7270, %v7270
  %v7273 = vmul.f32 %v7271, %v7271
  %v7274 = vsel %vm375, %v7272, 0.0
  %v7275 = vsel %vm379, %v7273, 0.0
  %v7276 = vadd.f32 %v7274, %v7275
  %v7277 = vrot.slane %v7276, 4
  %v7278 = vadd.f32 %v7276, %v7277
  %v7279 = vrot.slane %v7278, 2
  %v7280 = vadd.f32 %v7278, %v7279
  %v7281 = vrot.slane %v7280, 1
  %v7282 = vadd.f32 %v7280, %v7281
  %v7283 = vmul.f32 %v7282, %v3700
  %v7284 = vadd.f32 %v7283, 1e-05
  %v7285 = vrsqrt.pop %v7284
  %v7286 = vmul.f32 %v7270, %v7285
  %v7287 = vmul.f32 %v7271, %v7285
  %s7288 = scalar_lea.vmem %s49, 1
  %v7289 = vld [vmem:[%s7288] sm:$0x1]
  %v7291 = vlaneseq
  %v7292 = vshrl.u32 %v7291, 7
  %v7293 = vsub.s32 0, %v7292
  %v7294 = vrot.slane %v7289, %v7293
  %v7296 = vmul.f32 %v7286, %v7294
  %v7297 = vmul.f32 %v7287, %v7294
  %s7298 = scalar_lea.vmem %s51, 1
  %v7299 = vld [vmem:[%s7298] sm:$0x1]
  %v7301 = vlaneseq
  %v7302 = vshrl.u32 %v7301, 7
  %v7303 = vsub.s32 0, %v7302
  %v7304 = vrot.slane %v7299, %v7303
  %v7306 = vadd.f32 %v7296, %v7304
  %v7307 = vadd.f32 %v7297, %v7304
  %v7308 = vsub.f32 0.0, %v7306
  %v7309 = vsub.f32 0.0, %v7307
  %v7310 = vmul.f32 %v7308, 1.442695
  %v7311 = vpow.pop %v7310
  %v7312 = vmul.f32 %v7309, 1.442695
  %v7313 = vpow.pop %v7312
  %v7314 = vadd.f32 %v7311, 1.0
  %v7315 = vadd.f32 %v7313, 1.0
  %v7316 = vrcp.pop %v7314
  %v7317 = vmul.f32 1.0, %v7316
  %v7318 = vrcp.pop %v7315
  %v7319 = vmul.f32 1.0, %v7318
  %v7320 = vmul.f32 %v7306, %v7317
  %v7321 = vmul.f32 %v7307, %v7319
  %s7322 = scalar_lea.vmem %s53, 32
  %v7323 = vld [vmem:[%s7322] sm:$0xff]
  %v7324 = vld [vmem:[%s7322 + $0x8] sm:$0xff]
  %v7325 = vld [vmem:[%s7322 + $0x10] sm:$0xff]
  %v7326 = vld [vmem:[%s7322 + $0x18] sm:$0xff]
  %s7327 = scalar_lea.vmem %s55, 1
  %v7328 = vld [vmem:[%s7327] sm:$0x1]
  %v7330 = vlaneseq
  %v7331 = vshrl.u32 %v7330, 7
  %v7332 = vsub.s32 0, %v7331
  %v7333 = vrot.slane %v7328, %v7332
  %v7336 = vsel %vm375, %v7320, 0
  %v7339 = vsel %vm375, %v7321, 0
  %7341 = vmatprep.subr.mxu0 0.0
  %7342 = vmatpush1.msra.mxu0 0.0
  %7343 = vmatprep.subr.mxu0 0.0
  %7344 = vmatpush1.msra.mxu0 0.0
  %7345 = vmatprep.subr.mxu0 0.0
  %7346 = vmatpush1.msra.mxu0 0.0
  %7347 = vmatprep.subr.mxu0 0.0
  %7348 = vmatpush1.msra.mxu0 0.0
  %7349 = vmatprep.subr.mxu0 0.0
  %7350 = vmatpush1.msra.mxu0 0.0
  %7351 = vmatprep.subr.mxu0 0.0
  %7352 = vmatpush1.msra.mxu0 0.0
  %7353 = vmatprep.subr.mxu0 0.0
  %7354 = vmatpush1.msra.mxu0 0.0
  %7355 = vmatprep.subr.mxu0 0.0
  %7356 = vmatpush1.msra.mxu0 0.0
  %7357 = vmatprep.subr.mxu0 0.0
  %7358 = vmatpush1.msra.mxu0 0.0
  %7359 = vmatprep.subr.mxu0 0.0
  %7360 = vmatpush1.msra.mxu0 0.0
  %7361 = vmatprep.subr.mxu0 0.0
  %7362 = vmatpush1.msra.mxu0 0.0
  %7363 = vmatprep.subr.mxu0 0.0
  %7364 = vmatpush1.msra.mxu0 0.0
  %7365 = vmatprep.subr.mxu0 0.0
  %7366 = vmatpush1.msra.mxu0 %v7326
  %7367 = vmatprep.subr.mxu0 0.0
  %7368 = vmatpush1.msra.mxu0 %v7325
  %7369 = vmatprep.subr.mxu0 0.0
  %7370 = vmatpush1.msra.mxu0 %v7324
  %7371 = vmatprep.subr.mxu0 0.0
  %7372 = vmatpush1.msra.mxu0 %v7323
  %7373 = vmatprep.subr.mxu0 0.0
  %7374 = vmatpush2.msra.mxu0 0.0
  %7375 = vmatprep.subr.mxu0 0.0
  %7376 = vmatpush2.msra.mxu0 0.0
  %7377 = vmatprep.subr.mxu0 0.0
  %7378 = vmatpush2.msra.mxu0 0.0
  %7379 = vmatprep.subr.mxu0 0.0
  %7380 = vmatpush2.msra.mxu0 0.0
  %7381 = vmatprep.subr.mxu0 0.0
  %7382 = vmatpush2.msra.mxu0 0.0
  %7383 = vmatprep.subr.mxu0 0.0
  %7384 = vmatpush2.msra.mxu0 0.0
  %7385 = vmatprep.subr.mxu0 0.0
  %7386 = vmatpush2.msra.mxu0 0.0
  %7387 = vmatprep.subr.mxu0 0.0
  %7388 = vmatpush2.msra.mxu0 0.0
  %7389 = vmatprep.subr.mxu0 0.0
  %7390 = vmatpush2.msra.mxu0 0.0
  %7391 = vmatprep.subr.mxu0 0.0
  %7392 = vmatpush2.msra.mxu0 0.0
  %7393 = vmatprep.subr.mxu0 0.0
  %7394 = vmatpush2.msra.mxu0 0.0
  %7395 = vmatprep.subr.mxu0 0.0
  %7396 = vmatpush2.msra.mxu0 0.0
  %7397 = vmatprep.subr.mxu0 0.0
  %7398 = vmatpush2.msra.mxu0 0.0
  %7399 = vmatprep.subr.mxu0 0.0
  %7400 = vmatpush2.msra.mxu0 0.0
  %7401 = vmatprep.subr.mxu0 0.0
  %7402 = vmatpush2.msra.mxu0 0.0
  %7403 = vmatprep.subr.mxu0 0.0
  %7404 = vmatpush2.msra.mxu0 0.0
  %7405 = vmatprep.mubr.f32.mxu0 0.0
  %7406 = vmatmul.mubr.f32.gmra.mxu0 %v7336
  %v7407 = vpop.f32.mrf.mxu0
  %v7408 = vadd.f32 %v7333, %v7407
  %v7409 = vpop.f32.mrf.mxu0
  %7410 = vmatprep.mubr.f32.mxu0 0.0
  %7411 = vmatmul.mubr.f32.gmra.mxu0 %v7339
  %v7412 = vpop.f32.mrf.mxu0
  %v7413 = vadd.f32 %v7333, %v7412
  %v7414 = vpop.f32.mrf.mxu0
  %7415 = vdwg.mxu0
  %v7416 = vadd.f32 %v6510, %v7408
  %v7417 = vadd.f32 %v6511, %v7413
  %s7418 = scalar_lea.vmem %s57, 1
  %v7419 = vld [vmem:[%s7418] sm:$0x1]
  %s7420 = scalar_lea.vmem %s59, 1
  %v7421 = vld [vmem:[%s7420] sm:$0x1]
  %s7422 = scalar_lea.vmem %s61, 32
  %v7423 = vld [vmem:[%s7422] sm:$0xff]
  %v7424 = vld [vmem:[%s7422 + $0x8] sm:$0xff]
  %v7425 = vld [vmem:[%s7422 + $0x10] sm:$0xff]
  %v7426 = vld [vmem:[%s7422 + $0x18] sm:$0xff]
  %s7427 = scalar_lea.vmem %s63, 1
  %v7428 = vld [vmem:[%s7427] sm:$0x1]
  %s7429 = scalar_lea.vmem %s65, 128
  %v7430 = vld [vmem:[%s7429] sm:$0xff]
  %v7431 = vld [vmem:[%s7429 + $0x8] sm:$0xff]
  %v7432 = vld [vmem:[%s7429 + $0x10] sm:$0xff]
  %v7433 = vld [vmem:[%s7429 + $0x18] sm:$0xff]
  %v7434 = vld [vmem:[%s7429 + $0x20] sm:$0xff]
  %v7435 = vld [vmem:[%s7429 + $0x28] sm:$0xff]
  %v7436 = vld [vmem:[%s7429 + $0x30] sm:$0xff]
  %v7437 = vld [vmem:[%s7429 + $0x38] sm:$0xff]
  %v7438 = vld [vmem:[%s7429 + $0x40] sm:$0xff]
  %v7439 = vld [vmem:[%s7429 + $0x48] sm:$0xff]
  %v7440 = vld [vmem:[%s7429 + $0x50] sm:$0xff]
  %v7441 = vld [vmem:[%s7429 + $0x58] sm:$0xff]
  %v7442 = vld [vmem:[%s7429 + $0x60] sm:$0xff]
  %v7443 = vld [vmem:[%s7429 + $0x68] sm:$0xff]
  %v7444 = vld [vmem:[%s7429 + $0x70] sm:$0xff]
  %v7445 = vld [vmem:[%s7429 + $0x78] sm:$0xff]
  %s7446 = scalar_lea.vmem %s67, 1
  %v7447 = vld [vmem:[%s7446] sm:$0x1]
  %v7448 = vsel %vm375, %v7416, 0.0
  %7449 = vadd.xlane.f32.xlu0 %v7448
  %v7450 = vpop.xlane.xlu0 %7449
  %v7451 = vsel %vm379, %v7417, 0.0
  %7452 = vadd.xlane.f32.xlu0 %v7451
  %v7453 = vpop.xlane.xlu0 %7452
  %v7454 = vmul.f32 %v7450, %v383
  %v7455 = vmul.f32 %v7453, %v383
  %v7456 = vsub.f32 %v7416, %v7454
  %v7457 = vsub.f32 %v7417, %v7455
  %v7458 = vmul.f32 %v7456, %v7456
  %v7459 = vmul.f32 %v7457, %v7457
  %v7460 = vsel %vm375, %v7458, 0.0
  %7461 = vadd.xlane.f32.xlu0 %v7460
  %v7462 = vpop.xlane.xlu0 %7461
  %v7463 = vsel %vm379, %v7459, 0.0
  %7464 = vadd.xlane.f32.xlu0 %v7463
  %v7465 = vpop.xlane.xlu0 %7464
  %v7466 = vmul.f32 %v7462, %v383
  %v7467 = vmul.f32 %v7465, %v383
  %v7468 = vadd.f32 %v7466, 1e-05
  %v7469 = vadd.f32 %v7467, 1e-05
  %v7470 = vrsqrt.pop %v7468
  %v7471 = vrsqrt.pop %v7469
  %v7472 = vmul.f32 %v7456, %v7470
  %v7473 = vmul.f32 %v7457, %v7471
  %v7475 = vlaneseq
  %v7476 = vshrl.u32 %v7475, 7
  %v7477 = vsub.s32 0, %v7476
  %v7478 = vrot.slane %v7419, %v7477
  %v7480 = vmul.f32 %v7472, %v7478
  %v7481 = vmul.f32 %v7473, %v7478
  %v7483 = vlaneseq
  %v7484 = vshrl.u32 %v7483, 7
  %v7485 = vsub.s32 0, %v7484
  %v7486 = vrot.slane %v7421, %v7485
  %v7488 = vadd.f32 %v7480, %v7486
  %v7489 = vadd.f32 %v7481, %v7486
  %v7491 = vlaneseq
  %v7492 = vshrl.u32 %v7491, 7
  %v7493 = vsub.s32 0, %v7492
  %v7494 = vrot.slane %v7428, %v7493
  %v7497 = vsel %vm375, %v7488, 0
  %v7500 = vsel %vm375, %v7489, 0
  %7502 = vmatprep.subr.mxu0 0.0
  %7503 = vmatpush1.msra.mxu0 0.0
  %7504 = vmatprep.subr.mxu0 0.0
  %7505 = vmatpush1.msra.mxu0 0.0
  %7506 = vmatprep.subr.mxu0 0.0
  %7507 = vmatpush1.msra.mxu0 0.0
  %7508 = vmatprep.subr.mxu0 0.0
  %7509 = vmatpush1.msra.mxu0 0.0
  %7510 = vmatprep.subr.mxu0 0.0
  %7511 = vmatpush1.msra.mxu0 0.0
  %7512 = vmatprep.subr.mxu0 0.0
  %7513 = vmatpush1.msra.mxu0 0.0
  %7514 = vmatprep.subr.mxu0 0.0
  %7515 = vmatpush1.msra.mxu0 0.0
  %7516 = vmatprep.subr.mxu0 0.0
  %7517 = vmatpush1.msra.mxu0 0.0
  %7518 = vmatprep.subr.mxu0 0.0
  %7519 = vmatpush1.msra.mxu0 0.0
  %7520 = vmatprep.subr.mxu0 0.0
  %7521 = vmatpush1.msra.mxu0 0.0
  %7522 = vmatprep.subr.mxu0 0.0
  %7523 = vmatpush1.msra.mxu0 0.0
  %7524 = vmatprep.subr.mxu0 0.0
  %7525 = vmatpush1.msra.mxu0 0.0
  %7526 = vmatprep.subr.mxu0 0.0
  %7527 = vmatpush1.msra.mxu0 %v7426
  %7528 = vmatprep.subr.mxu0 0.0
  %7529 = vmatpush1.msra.mxu0 %v7425
  %7530 = vmatprep.subr.mxu0 0.0
  %7531 = vmatpush1.msra.mxu0 %v7424
  %7532 = vmatprep.subr.mxu0 0.0
  %7533 = vmatpush1.msra.mxu0 %v7423
  %7534 = vmatprep.subr.mxu0 0.0
  %7535 = vmatpush2.msra.mxu0 0.0
  %7536 = vmatprep.subr.mxu0 0.0
  %7537 = vmatpush2.msra.mxu0 0.0
  %7538 = vmatprep.subr.mxu0 0.0
  %7539 = vmatpush2.msra.mxu0 0.0
  %7540 = vmatprep.subr.mxu0 0.0
  %7541 = vmatpush2.msra.mxu0 0.0
  %7542 = vmatprep.subr.mxu0 0.0
  %7543 = vmatpush2.msra.mxu0 0.0
  %7544 = vmatprep.subr.mxu0 0.0
  %7545 = vmatpush2.msra.mxu0 0.0
  %7546 = vmatprep.subr.mxu0 0.0
  %7547 = vmatpush2.msra.mxu0 0.0
  %7548 = vmatprep.subr.mxu0 0.0
  %7549 = vmatpush2.msra.mxu0 0.0
  %7550 = vmatprep.subr.mxu0 0.0
  %7551 = vmatpush2.msra.mxu0 0.0
  %7552 = vmatprep.subr.mxu0 0.0
  %7553 = vmatpush2.msra.mxu0 0.0
  %7554 = vmatprep.subr.mxu0 0.0
  %7555 = vmatpush2.msra.mxu0 0.0
  %7556 = vmatprep.subr.mxu0 0.0
  %7557 = vmatpush2.msra.mxu0 0.0
  %7558 = vmatprep.subr.mxu0 0.0
  %7559 = vmatpush2.msra.mxu0 0.0
  %7560 = vmatprep.subr.mxu0 0.0
  %7561 = vmatpush2.msra.mxu0 0.0
  %7562 = vmatprep.subr.mxu0 0.0
  %7563 = vmatpush2.msra.mxu0 0.0
  %7564 = vmatprep.subr.mxu0 0.0
  %7565 = vmatpush2.msra.mxu0 0.0
  %7566 = vmatprep.mubr.f32.mxu0 0.0
  %7567 = vmatmul.mubr.f32.gmra.mxu0 %v7497
  %v7568 = vpop.f32.mrf.mxu0
  %v7569 = vadd.f32 %v7494, %v7568
  %v7570 = vpop.f32.mrf.mxu0
  %7571 = vmatprep.mubr.f32.mxu0 0.0
  %7572 = vmatmul.mubr.f32.gmra.mxu0 %v7500
  %v7573 = vpop.f32.mrf.mxu0
  %v7574 = vadd.f32 %v7494, %v7573
  %v7575 = vpop.f32.mrf.mxu0
  %7576 = vdwg.mxu0
  %v7577 = vsub.f32 0.0, %v7569
  %v7578 = vsub.f32 0.0, %v7574
  %v7579 = vmul.f32 %v7577, 1.442695
  %v7580 = vpow.pop %v7579
  %v7581 = vmul.f32 %v7578, 1.442695
  %v7582 = vpow.pop %v7581
  %v7583 = vadd.f32 %v7580, 1.0
  %v7584 = vadd.f32 %v7582, 1.0
  %v7585 = vrcp.pop %v7583
  %v7586 = vmul.f32 1.0, %v7585
  %v7587 = vrcp.pop %v7584
  %v7588 = vmul.f32 1.0, %v7587
  %v7589 = vmul.f32 %v7569, %v7586
  %v7590 = vmul.f32 %v7574, %v7588
  %v7592 = vlaneseq
  %v7593 = vshrl.u32 %v7592, 7
  %v7594 = vsub.s32 0, %v7593
  %v7595 = vrot.slane %v7447, %v7594
  %7597 = vmatprep.subr.mxu0 0.0
  %7598 = vmatpush1.msra.mxu0 %v7445
  %7599 = vmatprep.subr.mxu0 0.0
  %7600 = vmatpush1.msra.mxu0 %v7444
  %7601 = vmatprep.subr.mxu0 0.0
  %7602 = vmatpush1.msra.mxu0 %v7443
  %7603 = vmatprep.subr.mxu0 0.0
  %7604 = vmatpush1.msra.mxu0 %v7442
  %7605 = vmatprep.subr.mxu0 0.0
  %7606 = vmatpush1.msra.mxu0 %v7441
  %7607 = vmatprep.subr.mxu0 0.0
  %7608 = vmatpush1.msra.mxu0 %v7440
  %7609 = vmatprep.subr.mxu0 0.0
  %7610 = vmatpush1.msra.mxu0 %v7439
  %7611 = vmatprep.subr.mxu0 0.0
  %7612 = vmatpush1.msra.mxu0 %v7438
  %7613 = vmatprep.subr.mxu0 0.0
  %7614 = vmatpush1.msra.mxu0 %v7437
  %7615 = vmatprep.subr.mxu0 0.0
  %7616 = vmatpush1.msra.mxu0 %v7436
  %7617 = vmatprep.subr.mxu0 0.0
  %7618 = vmatpush1.msra.mxu0 %v7435
  %7619 = vmatprep.subr.mxu0 0.0
  %7620 = vmatpush1.msra.mxu0 %v7434
  %7621 = vmatprep.subr.mxu0 0.0
  %7622 = vmatpush1.msra.mxu0 %v7433
  %7623 = vmatprep.subr.mxu0 0.0
  %7624 = vmatpush1.msra.mxu0 %v7432
  %7625 = vmatprep.subr.mxu0 0.0
  %7626 = vmatpush1.msra.mxu0 %v7431
  %7627 = vmatprep.subr.mxu0 0.0
  %7628 = vmatpush1.msra.mxu0 %v7430
  %7629 = vmatprep.subr.mxu0 0.0
  %7630 = vmatpush2.msra.mxu0 0.0
  %7631 = vmatprep.subr.mxu0 0.0
  %7632 = vmatpush2.msra.mxu0 0.0
  %7633 = vmatprep.subr.mxu0 0.0
  %7634 = vmatpush2.msra.mxu0 0.0
  %7635 = vmatprep.subr.mxu0 0.0
  %7636 = vmatpush2.msra.mxu0 0.0
  %7637 = vmatprep.subr.mxu0 0.0
  %7638 = vmatpush2.msra.mxu0 0.0
  %7639 = vmatprep.subr.mxu0 0.0
  %7640 = vmatpush2.msra.mxu0 0.0
  %7641 = vmatprep.subr.mxu0 0.0
  %7642 = vmatpush2.msra.mxu0 0.0
  %7643 = vmatprep.subr.mxu0 0.0
  %7644 = vmatpush2.msra.mxu0 0.0
  %7645 = vmatprep.subr.mxu0 0.0
  %7646 = vmatpush2.msra.mxu0 0.0
  %7647 = vmatprep.subr.mxu0 0.0
  %7648 = vmatpush2.msra.mxu0 0.0
  %7649 = vmatprep.subr.mxu0 0.0
  %7650 = vmatpush2.msra.mxu0 0.0
  %7651 = vmatprep.subr.mxu0 0.0
  %7652 = vmatpush2.msra.mxu0 0.0
  %7653 = vmatprep.subr.mxu0 0.0
  %7654 = vmatpush2.msra.mxu0 0.0
  %7655 = vmatprep.subr.mxu0 0.0
  %7656 = vmatpush2.msra.mxu0 0.0
  %7657 = vmatprep.subr.mxu0 0.0
  %7658 = vmatpush2.msra.mxu0 0.0
  %7659 = vmatprep.subr.mxu0 0.0
  %7660 = vmatpush2.msra.mxu0 0.0
  %7661 = vmatprep.mubr.f32.mxu0 0.0
  %7662 = vmatmul.mubr.f32.gmra.mxu0 %v7589
  %v7663 = vpop.f32.mrf.mxu0
  %v7664 = vadd.f32 %v7595, %v7663
  %v7665 = vpop.f32.mrf.mxu0
  %7666 = vmatprep.mubr.f32.mxu0 0.0
  %7667 = vmatmul.mubr.f32.gmra.mxu0 %v7590
  %v7668 = vpop.f32.mrf.mxu0
  %v7669 = vadd.f32 %v7595, %v7668
  %v7670 = vpop.f32.mrf.mxu0
  %7671 = vdwg.mxu0
  %v7672 = vmul.f32 %v7664, 0.5
  %v7673 = vmul.f32 %v7669, 0.5
  %v7674 = vadd.f32 %v7416, %v7672
  %v7675 = vadd.f32 %v7417, %v7673
  %s7676 = scalar_lea.vmem %s69, 1
  %v7677 = vld [vmem:[%s7676] sm:$0x1]
  %s7678 = scalar_lea.vmem %s71, 1
  %v7679 = vld [vmem:[%s7678] sm:$0x1]
  %v7680 = vsel %vm375, %v7674, 0.0
  %7681 = vadd.xlane.f32.xlu0 %v7680
  %v7682 = vpop.xlane.xlu0 %7681
  %v7683 = vsel %vm379, %v7675, 0.0
  %7684 = vadd.xlane.f32.xlu0 %v7683
  %v7685 = vpop.xlane.xlu0 %7684
  %v7686 = vmul.f32 %v7682, %v383
  %v7687 = vmul.f32 %v7685, %v383
  %v7688 = vsub.f32 %v7674, %v7686
  %v7689 = vsub.f32 %v7675, %v7687
  %v7690 = vmul.f32 %v7688, %v7688
  %v7691 = vmul.f32 %v7689, %v7689
  %v7692 = vsel %vm375, %v7690, 0.0
  %7693 = vadd.xlane.f32.xlu0 %v7692
  %v7694 = vpop.xlane.xlu0 %7693
  %v7695 = vsel %vm379, %v7691, 0.0
  %7696 = vadd.xlane.f32.xlu0 %v7695
  %v7697 = vpop.xlane.xlu0 %7696
  %v7698 = vmul.f32 %v7694, %v383
  %v7699 = vmul.f32 %v7697, %v383
  %v7700 = vadd.f32 %v7698, 1e-05
  %v7701 = vadd.f32 %v7699, 1e-05
  %v7702 = vrsqrt.pop %v7700
  %v7703 = vrsqrt.pop %v7701
  %v7704 = vmul.f32 %v7688, %v7702
  %v7705 = vmul.f32 %v7689, %v7703
  %v7707 = vlaneseq
  %v7708 = vshrl.u32 %v7707, 7
  %v7709 = vsub.s32 0, %v7708
  %v7710 = vrot.slane %v7677, %v7709
  %v7712 = vmul.f32 %v7704, %v7710
  %v7713 = vmul.f32 %v7705, %v7710
  %v7715 = vlaneseq
  %v7716 = vshrl.u32 %v7715, 7
  %v7717 = vsub.s32 0, %v7716
  %v7718 = vrot.slane %v7679, %v7717
  %v7720 = vadd.f32 %v7712, %v7718
  %v7721 = vadd.f32 %v7713, %v7718
  %7722 = vst.msk [vmem:[%s91] sm:$0xff] %vm375, %v7720
  %7723 = vst.msk [vmem:[%s91 + $0x8] sm:$0x3f] %vm379, %v7721
  %v7724 = vld [vmem:[%s89] sm:$0xff]
  %v7725 = vld [vmem:[%s89 + $0x8] sm:$0xff]
  %v7726 = vld [vmem:[%s89 + $0x10] sm:$0xff]
  %v7727 = vld [vmem:[%s89 + $0x18] sm:$0xff]
  %v7729 = vsel %vm375, %v7720, 0
  %v7732 = vsel %vm375, %v7721, 0
  %7734 = vmatprep.subr.mxu0 0.0
  %7735 = vmatpush1.msra.mxu0 0.0
  %7736 = vmatprep.subr.mxu0 0.0
  %7737 = vmatpush1.msra.mxu0 0.0
  %7738 = vmatprep.subr.mxu0 0.0
  %7739 = vmatpush1.msra.mxu0 0.0
  %7740 = vmatprep.subr.mxu0 0.0
  %7741 = vmatpush1.msra.mxu0 0.0
  %7742 = vmatprep.subr.mxu0 0.0
  %7743 = vmatpush1.msra.mxu0 0.0
  %7744 = vmatprep.subr.mxu0 0.0
  %7745 = vmatpush1.msra.mxu0 0.0
  %7746 = vmatprep.subr.mxu0 0.0
  %7747 = vmatpush1.msra.mxu0 0.0
  %7748 = vmatprep.subr.mxu0 0.0
  %7749 = vmatpush1.msra.mxu0 0.0
  %7750 = vmatprep.subr.mxu0 0.0
  %7751 = vmatpush1.msra.mxu0 0.0
  %7752 = vmatprep.subr.mxu0 0.0
  %7753 = vmatpush1.msra.mxu0 0.0
  %7754 = vmatprep.subr.mxu0 0.0
  %7755 = vmatpush1.msra.mxu0 0.0
  %7756 = vmatprep.subr.mxu0 0.0
  %7757 = vmatpush1.msra.mxu0 0.0
  %7758 = vmatprep.subr.mxu0 0.0
  %7759 = vmatpush1.msra.mxu0 %v7727
  %7760 = vmatprep.subr.mxu0 0.0
  %7761 = vmatpush1.msra.mxu0 %v7726
  %7762 = vmatprep.subr.mxu0 0.0
  %7763 = vmatpush1.msra.mxu0 %v7725
  %7764 = vmatprep.subr.mxu0 0.0
  %7765 = vmatpush1.msra.mxu0 %v7724
  %7766 = vmatprep.subr.mxu0 0.0
  %7767 = vmatpush2.msra.mxu0 0.0
  %7768 = vmatprep.subr.mxu0 0.0
  %7769 = vmatpush2.msra.mxu0 0.0
  %7770 = vmatprep.subr.mxu0 0.0
  %7771 = vmatpush2.msra.mxu0 0.0
  %7772 = vmatprep.subr.mxu0 0.0
  %7773 = vmatpush2.msra.mxu0 0.0
  %7774 = vmatprep.subr.mxu0 0.0
  %7775 = vmatpush2.msra.mxu0 0.0
  %7776 = vmatprep.subr.mxu0 0.0
  %7777 = vmatpush2.msra.mxu0 0.0
  %7778 = vmatprep.subr.mxu0 0.0
  %7779 = vmatpush2.msra.mxu0 0.0
  %7780 = vmatprep.subr.mxu0 0.0
  %7781 = vmatpush2.msra.mxu0 0.0
  %7782 = vmatprep.subr.mxu0 0.0
  %7783 = vmatpush2.msra.mxu0 0.0
  %7784 = vmatprep.subr.mxu0 0.0
  %7785 = vmatpush2.msra.mxu0 0.0
  %7786 = vmatprep.subr.mxu0 0.0
  %7787 = vmatpush2.msra.mxu0 0.0
  %7788 = vmatprep.subr.mxu0 0.0
  %7789 = vmatpush2.msra.mxu0 0.0
  %7790 = vmatprep.subr.mxu0 0.0
  %7791 = vmatpush2.msra.mxu0 0.0
  %7792 = vmatprep.subr.mxu0 0.0
  %7793 = vmatpush2.msra.mxu0 0.0
  %7794 = vmatprep.subr.mxu0 0.0
  %7795 = vmatpush2.msra.mxu0 0.0
  %7796 = vmatprep.subr.mxu0 0.0
  %7797 = vmatpush2.msra.mxu0 0.0
  %7798 = vmatprep.mubr.f32.mxu0 0.0
  %7799 = vmatmul.mubr.f32.gmra.mxu0 %v7729
  %v7800 = vpop.f32.mrf.mxu0
  %v7801 = vadd.f32 0.0, %v7800
  %v7802 = vpop.f32.mrf.mxu0
  %7803 = vmatprep.mubr.f32.mxu0 0.0
  %7804 = vmatmul.mubr.f32.gmra.mxu0 %v7732
  %v7805 = vpop.f32.mrf.mxu0
  %v7806 = vadd.f32 0.0, %v7805
  %v7807 = vpop.f32.mrf.mxu0
  %7808 = vdwg.mxu0
  %vm7809 = vcmask 80896
  %7810 = vst.msk [vmem:[%s93] sm:$0xff] %vm7809, %v7801
  %vm7811 = vcmask 78848
  %7812 = vst.msk [vmem:[%s93 + $0x8] sm:$0x3f] %vm7811, %v7806
  %v7813 = vsel %vm7809, %v7801, -inf
  %7814 = vmax.xlane.f32.xlu0 %v7813
  %v7815 = vpop.xlane.xlu0 %7814
  %v7816 = vsel %vm7811, %v7806, -inf
  %7817 = vmax.xlane.f32.xlu0 %v7816
  %v7818 = vpop.xlane.xlu0 %7817
  %v7819 = vsub.f32 %v7801, %v7815
  %v7820 = vsub.f32 %v7806, %v7818
  %v7821 = vmul.f32 %v7819, 1.442695
  %v7822 = vpow.pop %v7821
  %v7823 = vmul.f32 %v7820, 1.442695
  %v7824 = vpow.pop %v7823
  %v7825 = vsel %vm7809, %v7822, 0.0
  %7826 = vadd.xlane.f32.xlu0 %v7825
  %v7827 = vpop.xlane.xlu0 %7826
  %v7828 = vsel %vm7811, %v7824, 0.0
  %7829 = vadd.xlane.f32.xlu0 %v7828
  %v7830 = vpop.xlane.xlu0 %7829
  %v7831 = vlog2.pop %v7827
  %v7832 = vmul.f32 %v7831, 0.6931472
  %v7833 = vlog2.pop %v7830
  %v7834 = vmul.f32 %v7833, 0.6931472
  %v7835 = vsub.f32 %v7819, %v7832
  %v7836 = vsub.f32 %v7820, %v7834
  %7837 = vst.msk [vmem:[%s95] sm:$0xff] %vm7809, %v7835
  %7838 = vst.msk [vmem:[%s95 + $0x8] sm:$0x3f] %vm7811, %v7836
  // Predicated region
  $region182: #{run.5} parent=0 // pred_check
    _
  $region183: #{run.5} parent=0 // pred_check_branch
    %7840 = sbr.rel (0) target = $region185
  $region184: #{run.5} parent=0 // pred_region
    _
  $region185: #{run.5} parent=0 // pred_fallthru
    _
  // Predicated region
  $region186: #{run.5} parent=0 // pred_check
    _
  $region187: #{run.5} parent=0 // pred_check_branch
    %7842 = sbr.rel (0) target = $region189
  $region188: #{run.5} parent=0 // pred_region
    _
  $region189: #{run.5} parent=0 // pred_fallthru
    _
  // Predicated region
  $region190: #{run.5} parent=0 // pred_check
    _
  $region191: #{run.5} parent=0 // pred_check_branch
    %7844 = sbr.rel (0) target = $region193
  $region192: #{run.5} parent=0 // pred_region
    _
  $region193: #{run.5} parent=0 // pred_fallthru
    _
  // Predicated region
  $region194: #{run.5} parent=0 // pred_check
    _
  $region195: #{run.5} parent=0 // pred_check_branch
    %7846 = sbr.rel (0) target = $region197
  $region196: #{run.5} parent=0 // pred_region
    _
  $region197: #{run.5} parent=0 // pred_fallthru
    _
  // Predicated region
  $region198: #{run.5} parent=0 // pred_check
    _
  $region199: #{run.5} parent=0 // pred_check_branch
    %7848 = sbr.rel (0) target = $region201
  $region200: #{run.5} parent=0 // pred_region
    _
  $region201: #{run.5} parent=0 // pred_fallthru
    _
  // Predicated region
  $region202: #{run.5} parent=0 // pred_check
    _
  $region203: #{run.5} parent=0 // pred_check_branch
    %7850 = sbr.rel (0) target = $region205
  $region204: #{run.5} parent=0 // pred_region
    _
  $region205: #{run.5} parent=0 // pred_fallthru
    _

</llo_original>
